<compile_context>
chip_gen: v6e
topology: v6e:2x2x1
jax: 0.10.0
libtpu: 0.0.40
codegen_flags: <defaults>
</compile_context>

<pallas_src>
import functools
import math

import jax
import jax.numpy as jnp
from jax import lax
from jax.experimental import pallas as pl
from jax.experimental.pallas import tpu as pltpu


def _sigmoid(x):
    return 1.0 / (1.0 + jnp.exp(-x))


def _tile(dim, candidates):
    """Largest candidate that strictly subdivides `dim`, else the full dim."""
    for c in candidates:
        if c < dim and dim % c == 0:
            return c
    return dim


_ROW_TILES = (512, 256, 128, 64, 32, 16, 8)
_COL_TILES = (256, 128)   # 256-wide N tiles fill the v6e/v7x 256x256 MXU


# ----------------------- fused (LN +) GEMM (+ epilogue) ----------------------

def _fused_linear_kernel(*refs, act, has_ln, has_res, glu, res_scale, half):
    idx = 0
    x_ref = refs[idx]; idx += 1
    if has_ln:
        g_ref = refs[idx]; bln_ref = refs[idx + 1]; idx += 2
    w_ref = refs[idx]; idx += 1
    bias_ref = refs[idx]; idx += 1
    if has_res:
        r_ref = refs[idx]; idx += 1
    o_ref = refs[idx]

    x = x_ref[...]
    if has_ln:
        xf = x.astype(jnp.float32)
        mu = jnp.mean(xf, axis=-1, keepdims=True)
        xc = xf - mu
        var = jnp.mean(xc * xc, axis=-1, keepdims=True)
        xf = xc * lax.rsqrt(var + 1e-5) * g_ref[...] + bln_ref[...]
        x = xf.astype(jnp.bfloat16)

    y = jnp.dot(x, w_ref[...], preferred_element_type=jnp.float32)
    y = y + bias_ref[...]

    if act == "relu":
        y = jnp.maximum(y, 0.0)
    elif act == "swish":
        y = y * _sigmoid(y)

    if glu:
        y = y[:, :half] * _sigmoid(y[:, half:])

    if has_res:
        y = r_ref[...].astype(jnp.float32) + res_scale * y

    o_ref[...] = y.astype(o_ref.dtype)


def fused_linear(x, w, b=None, *, act="none", ln=None, residual=None,
                 res_scale=1.0, glu=False, out_dtype=jnp.bfloat16):
    """Tiled bf16 GEMM with optional fused LayerNorm prologue, activation,
    GLU epilogue and residual add."""
    n, din = x.shape
    dout = w.shape[1]
    x = x.astype(jnp.bfloat16)
    w = w.astype(jnp.bfloat16)
    bias = (jnp.zeros((1, dout), jnp.float32) if b is None
            else b.reshape(1, dout).astype(jnp.float32))

    tm = _tile(n, _ROW_TILES)
    tn = dout if glu else _tile(dout, _COL_TILES)
    d_out_cols = dout // 2 if glu else dout
    tn_out = d_out_cols if glu else tn
    grid = (n // tm, dout // tn)

    in_specs = [pl.BlockSpec((tm, din), lambda i, j: (i, 0))]
    args = [x]
    if ln is not None:
        gamma, beta = ln
        in_specs += [pl.BlockSpec((1, din), lambda i, j: (0, 0)),
                     pl.BlockSpec((1, din), lambda i, j: (0, 0))]
        args += [gamma.reshape(1, din).astype(jnp.float32),
                 beta.reshape(1, din).astype(jnp.float32)]
    in_specs += [pl.BlockSpec((din, tn), lambda i, j: (0, j)),
                 pl.BlockSpec((1, tn), lambda i, j: (0, j))]
    args += [w, bias]
    if residual is not None:
        in_specs += [pl.BlockSpec((tm, tn_out), lambda i, j: (i, j))]
        args += [residual.astype(jnp.bfloat16)]

    kern = functools.partial(
        _fused_linear_kernel, act=act, has_ln=ln is not None,
        has_res=residual is not None, glu=glu,
        res_scale=float(res_scale), half=d_out_cols)

    return pl.pallas_call(
        kern,
        grid=grid,
        in_specs=in_specs,
        out_specs=pl.BlockSpec((tm, tn_out), lambda i, j: (i, j)),
        out_shape=jax.ShapeDtypeStruct((n, d_out_cols), out_dtype),
        compiler_params=pltpu.CompilerParams(
            dimension_semantics=("parallel", "parallel")),
    )(*args)


# ------------------------------ layernorm ------------------------------------

def _layernorm_kernel(x_ref, g_ref, b_ref, o_ref):
    x = x_ref[...].astype(jnp.float32)
    mu = jnp.mean(x, axis=-1, keepdims=True)
    xc = x - mu
    var = jnp.mean(xc * xc, axis=-1, keepdims=True)
    o_ref[...] = (xc * lax.rsqrt(var + 1e-5) * g_ref[...]
                  + b_ref[...]).astype(o_ref.dtype)


def pallas_layernorm(x, gamma, beta, out_dtype=jnp.bfloat16):
    n, c = x.shape
    tm = _tile(n, _ROW_TILES)
    return pl.pallas_call(
        _layernorm_kernel,
        grid=(n // tm,),
        in_specs=[pl.BlockSpec((tm, c), lambda i: (i, 0)),
                  pl.BlockSpec((1, c), lambda i: (0, 0)),
                  pl.BlockSpec((1, c), lambda i: (0, 0))],
        out_specs=pl.BlockSpec((tm, c), lambda i: (i, 0)),
        out_shape=jax.ShapeDtypeStruct((n, c), out_dtype),
        compiler_params=pltpu.CompilerParams(
            dimension_semantics=("parallel",)),
    )(x, gamma.reshape(1, c).astype(jnp.float32),
      beta.reshape(1, c).astype(jnp.float32))


# --------------------------- attention kernels --------------------------------

def _pos_score_kernel(qkv_ref, pe_ref, vb_ref, o_ref, *, num_heads, dh):
    # pos_score[h] = (q_h + v_bias_h) @ pe_h^T  (per batch block, heads packed)
    for h in range(num_heads):
        q = qkv_ref[0, :, h * dh:(h + 1) * dh].astype(jnp.float32)
        q = (q + vb_ref[h:h + 1, :]).astype(jnp.bfloat16)
        pe_h = pe_ref[:, h * dh:(h + 1) * dh]
        s = lax.dot_general(q, pe_h, (((1,), (1,)), ((), ())),
                            preferred_element_type=jnp.float32)
        o_ref[0, h, :, :] = s.astype(o_ref.dtype)


def pallas_pos_scores(qkv, pe, v_bias, num_heads):
    b, t, c3 = qkv.shape
    c = c3 // 3
    dh = c // num_heads
    return pl.pallas_call(
        functools.partial(_pos_score_kernel, num_heads=num_heads, dh=dh),
        grid=(b,),
        in_specs=[pl.BlockSpec((1, t, c3), lambda i: (i, 0, 0)),
                  pl.BlockSpec((t, c), lambda i: (0, 0)),
                  pl.BlockSpec((num_heads, dh), lambda i: (0, 0))],
        out_specs=pl.BlockSpec((1, num_heads, t, t), lambda i: (i, 0, 0, 0)),
        out_shape=jax.ShapeDtypeStruct((b, num_heads, t, t), jnp.bfloat16),
        compiler_params=pltpu.CompilerParams(
            dimension_semantics=("parallel",)),
    )(qkv, pe.astype(jnp.bfloat16), v_bias.astype(jnp.float32))


def _attention_kernel(qkv_ref, pos_ref, ub_ref, o_ref, *, num_heads, dh, d_model):
    # Fused content-score + (pre-shifted) pos-score + softmax + P@V per batch,
    # all heads packed; (T, T) scores live only in VMEM/vregs.
    scale = 1.0 / math.sqrt(d_model)
    c = num_heads * dh
    for h in range(num_heads):
        q = qkv_ref[0, :, h * dh:(h + 1) * dh].astype(jnp.float32)
        k = qkv_ref[0, :, c + h * dh:c + (h + 1) * dh]
        v = qkv_ref[0, :, 2 * c + h * dh:2 * c + (h + 1) * dh]
        qu = (q + ub_ref[h:h + 1, :]).astype(jnp.bfloat16)
        s = lax.dot_general(qu, k, (((1,), (1,)), ((), ())),
                            preferred_element_type=jnp.float32)
        s = (s + pos_ref[0, h, :, :].astype(jnp.float32)) * scale
        m = jnp.max(s, axis=-1, keepdims=True)
        e = jnp.exp(s - m)
        denom = jnp.sum(e, axis=-1, keepdims=True)
        p = e * pl.reciprocal(denom, approx=True)
        ctx = jnp.dot(p.astype(jnp.bfloat16), v,
                      preferred_element_type=jnp.float32)
        o_ref[0, :, h * dh:(h + 1) * dh] = ctx.astype(o_ref.dtype)


def pallas_attention(qkv, pos_shifted, u_bias, num_heads, d_model):
    b, t, c3 = qkv.shape
    c = c3 // 3
    dh = c // num_heads
    return pl.pallas_call(
        functools.partial(_attention_kernel, num_heads=num_heads, dh=dh,
                          d_model=d_model),
        grid=(b,),
        in_specs=[pl.BlockSpec((1, t, c3), lambda i: (i, 0, 0)),
                  pl.BlockSpec((1, num_heads, t, t), lambda i: (i, 0, 0, 0)),
                  pl.BlockSpec((num_heads, dh), lambda i: (0, 0))],
        out_specs=pl.BlockSpec((1, t, c), lambda i: (i, 0, 0)),
        out_shape=jax.ShapeDtypeStruct((b, t, c), jnp.bfloat16),
        compiler_params=pltpu.CompilerParams(
            dimension_semantics=("parallel",)),
    )(qkv, pos_shifted, u_bias.astype(jnp.float32))


# ------------------ depthwise conv + BatchNorm + Swish ------------------------

def _dwconv_bn_swish_kernel(x_ref, w_ref, b_ref, s_ref, t_ref, o_ref,
                            *, ksize, t_out):
    x = x_ref[0].astype(jnp.float32)                     # (T + K - 1, C)
    acc = x[0:t_out, :] * w_ref[0:1, :]
    for k in range(1, ksize):                            # small static K
        acc = acc + x[k:k + t_out, :] * w_ref[k:k + 1, :]
    y = acc + b_ref[...]
    y = y * s_ref[...] + t_ref[...]                      # folded BatchNorm
    o_ref[0, :, :] = (y * _sigmoid(y)).astype(o_ref.dtype)


def pallas_depthwise_conv_bn_swish(x, w, b, bn_scale, bn_shift):
    # PyTorch Conv1d(C, C, K, groups=C, padding=(K-1)//2) + BN(eval) + Swish.
    # NOTE: "same length" output assumes odd K (matches the reference config).
    bsz, t, c = x.shape
    k = w.shape[0]
    pad = (k - 1) // 2
    xp = jnp.pad(x.astype(jnp.bfloat16), ((0, 0), (pad, pad), (0, 0)))
    return pl.pallas_call(
        functools.partial(_dwconv_bn_swish_kernel, ksize=k, t_out=t),
        grid=(bsz,),
        in_specs=[pl.BlockSpec((1, t + 2 * pad, c), lambda i: (i, 0, 0)),
                  pl.BlockSpec((k, c), lambda i: (0, 0)),
                  pl.BlockSpec((1, c), lambda i: (0, 0)),
                  pl.BlockSpec((1, c), lambda i: (0, 0)),
                  pl.BlockSpec((1, c), lambda i: (0, 0))],
        out_specs=pl.BlockSpec((1, t, c), lambda i: (i, 0, 0)),
        out_shape=jax.ShapeDtypeStruct((bsz, t, c), jnp.bfloat16),
        compiler_params=pltpu.CompilerParams(
            dimension_semantics=("parallel",)),
    )(xp, w.reshape(k, c).astype(jnp.float32),
      b.reshape(1, c).astype(jnp.float32),
      bn_scale.reshape(1, c).astype(jnp.float32),
      bn_shift.reshape(1, c).astype(jnp.float32))


# ------------------------------ glue / modules --------------------------------

def conv2d_im2col_relu(x, w, b, stride=2, pad=1):
    # x: (B, Cin, H, W) NCHW; w: (Cout, Cin, KH, KW).  im2col + fused GEMM.
    bsz, cin, h, wdt = x.shape
    cout, _, kh, kw = w.shape
    xp = jnp.pad(x, ((0, 0), (0, 0), (pad, pad), (pad, pad)))
    ho = (h + 2 * pad - kh) // stride + 1
    wo = (wdt + 2 * pad - kw) // stride + 1
    cols = []
    for i in range(kh):
        for j in range(kw):
            cols.append(xp[:, :, i:i + (ho - 1) * stride + 1:stride,
                              j:j + (wo - 1) * stride + 1:stride])
    patches = jnp.stack(cols, axis=-1)                   # (B,Cin,Ho,Wo,KH*KW)
    patches = jnp.transpose(patches, (0, 2, 3, 1, 4))    # (B,Ho,Wo,Cin,KH*KW)
    patches = patches.reshape(bsz * ho * wo, cin * kh * kw)
    wmat = w.reshape(cout, cin * kh * kw).T
    y = fused_linear(patches, wmat, b, act="relu")
    return y.reshape(bsz, ho, wo, cout).transpose(0, 3, 1, 2)


def sinusoidal_positional_encoding(length, d_model):
    pos = jnp.arange(length, dtype=jnp.float32)[:, None]
    idx = jnp.arange(0, d_model, 2, dtype=jnp.float32)[None, :]
    div = jnp.exp(idx * (-math.log(10000.0) / d_model))
    pe = jnp.zeros((length, d_model), jnp.float32)
    pe = pe.at[:, 0::2].set(jnp.sin(pos * div))
    pe = pe.at[:, 1::2].set(jnp.cos(pos * div))
    return pe


def _relative_shift(pos_score):
    # Exact Transformer-XL shift (pad column / reshape / drop first row); runs
    # in XLA on a bf16 tensor between the two attention kernels.
    b, h, t1, t2 = pos_score.shape
    zeros = jnp.zeros((b, h, t1, 1), pos_score.dtype)
    padded = jnp.concatenate([zeros, pos_score], axis=-1)
    padded = padded.reshape(b, h, t2 + 1, t1)
    return padded[:, :, 1:].reshape(b, h, t1, t2)


def feed_forward_module(p, x2d, res_factor):
    h = fused_linear(x2d, p["w1"], p["b1"], act="swish",
                     ln=(p["ln_g"], p["ln_b"]))
    return fused_linear(h, p["w2"], p["b2"],
                        residual=x2d, res_scale=res_factor)


def mhsa_module(p, x2d, bsz, t, num_heads):
    c = x2d.shape[1]
    qkv = fused_linear(x2d, p["wqkv"], p["bqkv"],
                       ln=(p["ln_g"], p["ln_b"]))               # (B*T, 3C)
    pe = sinusoidal_positional_encoding(t, c)
    pe_proj = fused_linear(pe, p["wp"], None)                   # (T, C), once
    qkv3 = qkv.reshape(bsz, t, 3 * c)
    pos = pallas_pos_scores(qkv3, pe_proj, p["v_bias"], num_heads)
    pos = _relative_shift(pos)
    ctx = pallas_attention(qkv3, pos, p["u_bias"], num_heads, c)  # (B, T, C)
    return fused_linear(ctx.reshape(bsz * t, c), p["wo"], p["bo"],
                        residual=x2d, res_scale=1.0)


def conv_module(p, x2d, bsz, t):
    c = x2d.shape[1]
    h = fused_linear(x2d, p["pw1_w"], p["pw1_b"],
                     ln=(p["ln_g"], p["ln_b"]), glu=True)       # LN+pw1+GLU
    h = pallas_depthwise_conv_bn_swish(h.reshape(bsz, t, c), p["dw_w"],
                                       p["dw_b"], p["bn_scale"], p["bn_shift"])
    return fused_linear(h.reshape(bsz * t, c), p["pw2_w"], p["pw2_b"],
                        residual=x2d, res_scale=1.0)


def conformer_block(p, x, num_heads, ff_res=0.5):
    bsz, t, c = x.shape
    x2d = x.reshape(bsz * t, c).astype(jnp.bfloat16)
    x2d = feed_forward_module(p["ff1"], x2d, ff_res)
    x2d = mhsa_module(p["mhsa"], x2d, bsz, t, num_heads)
    x2d = conv_module(p["conv"], x2d, bsz, t)
    x2d = feed_forward_module(p["ff2"], x2d, ff_res)
    x2d = pallas_layernorm(x2d, p["ln_g"], p["ln_b"])
    return x2d.reshape(bsz, t, c)


def conv_subsampling(p, x, lengths):
    bsz = x.shape[0]
    h = x[:, None, :, :].astype(jnp.bfloat16)
    h = conv2d_im2col_relu(h, p["conv1_w"], p["conv1_b"], stride=2, pad=1)
    h = conv2d_im2col_relu(h, p["conv2_w"], p["conv2_b"], stride=2, pad=1)
    _, c2, t2, f2 = h.shape
    h = jnp.transpose(h, (0, 2, 1, 3)).reshape(bsz * t2, c2 * f2)
    h = fused_linear(h, p["out_w"], p["out_b"]).reshape(bsz, t2, -1)
    out_lengths = lengths
    for _ in range(2):
        out_lengths = (out_lengths + 2 * 1 - 3) // 2 + 1
    return h, out_lengths


def conformer_forward(params, inputs, input_lengths, *, num_heads, ff_res=0.5):
    # SpecAugment / dropout are inference identities; no attention mask is
    # applied (the reference block calls MHSA without a mask).
    x, out_lengths = conv_subsampling(params["subsample"], inputs, input_lengths)
    for blk in params["blocks"]:
        x = conformer_block(blk, x, num_heads, ff_res)
    return x.astype(jnp.float32), out_lengths


# --------------------------- deterministic init --------------------------------

def _linear_init(key, din, dout):
    kw, kb = jax.random.split(key)
    bound = 1.0 / math.sqrt(din)
    w = jax.random.uniform(kw, (din, dout), jnp.float32, -bound, bound)
    b = jax.random.uniform(kb, (dout,), jnp.float32, -bound, bound)
    return w, b


def init_block(key, c, num_heads, ff_expansion, conv_expansion, ksize):
    dh = c // num_heads
    ks = jax.random.split(key, 14)

    def ff(k):
        w1, b1 = _linear_init(jax.random.fold_in(k, 0), c, c * ff_expansion)
        w2, b2 = _linear_init(jax.random.fold_in(k, 1), c * ff_expansion, c)
        return dict(ln_g=jnp.ones((c,)), ln_b=jnp.zeros((c,)),
                    w1=w1.astype(jnp.bfloat16), b1=b1,
                    w2=w2.astype(jnp.bfloat16), b2=b2)

    wq, bq = _linear_init(ks[0], c, c)
    wk, bk = _linear_init(ks[1], c, c)
    wv, bv = _linear_init(ks[2], c, c)
    wp, _ = _linear_init(ks[3], c, c)            # pos_proj has no bias
    wo, bo = _linear_init(ks[4], c, c)
    mhsa = dict(ln_g=jnp.ones((c,)), ln_b=jnp.zeros((c,)),
                wqkv=jnp.concatenate([wq, wk, wv], axis=1).astype(jnp.bfloat16),
                bqkv=jnp.concatenate([bq, bk, bv]),
                wp=wp.astype(jnp.bfloat16),
                wo=wo.astype(jnp.bfloat16), bo=bo,
                u_bias=0.02 * jax.random.normal(ks[5], (num_heads, dh)),
                v_bias=0.02 * jax.random.normal(ks[6], (num_heads, dh)))

    pw1_w, pw1_b = _linear_init(ks[7], c, c * conv_expansion)
    pw2_w, pw2_b = _linear_init(ks[8], c, c)
    # BatchNorm1d (eval mode) folded into per-channel scale/shift.
    eps = 1e-5
    bn_g, bn_b = jnp.ones((c,)), jnp.zeros((c,))
    bn_rm, bn_rv = jnp.zeros((c,)), jnp.ones((c,))
    bn_scale = bn_g / jnp.sqrt(bn_rv + eps)
    bn_shift = bn_b - bn_rm * bn_scale
    conv = dict(ln_g=jnp.ones((c,)), ln_b=jnp.zeros((c,)),
                pw1_w=pw1_w.astype(jnp.bfloat16), pw1_b=pw1_b,
                dw_w=0.1 * jax.random.normal(ks[9], (ksize, c)),
                dw_b=jnp.zeros((c,)),
                bn_scale=bn_scale, bn_shift=bn_shift,
                pw2_w=pw2_w.astype(jnp.bfloat16), pw2_b=pw2_b)

    return dict(ff1=ff(ks[10]), mhsa=mhsa, conv=conv, ff2=ff(ks[11]),
                ln_g=jnp.ones((c,)), ln_b=jnp.zeros((c,)))


def init_params(key, input_dim, encoder_dim, num_layers, num_heads,
                ff_expansion, conv_expansion, ksize):
    c = encoder_dim
    ks = jax.random.split(key, num_layers + 4)
    f1 = (input_dim + 2 - 3) // 2 + 1
    f2 = (f1 + 2 - 3) // 2 + 1
    out_w, out_b = _linear_init(ks[2], c * f2, c)
    sub = dict(
        conv1_w=(1.0 / 3.0) * jax.random.normal(ks[0], (c, 1, 3, 3)),
        conv1_b=jnp.zeros((c,)),
        conv2_w=(1.0 / math.sqrt(9 * c)) * jax.random.normal(ks[1], (c, c, 3, 3)),
        conv2_b=jnp.zeros((c,)),
        out_w=out_w.astype(jnp.bfloat16), out_b=out_b)
    blocks = [init_block(ks[3 + i], c, num_heads, ff_expansion,
                         conv_expansion, ksize) for i in range(num_layers)]
    return dict(subsample=sub, blocks=blocks)


# ------------------------------------ main --------------------------------------

if __name__ == "__main__":
    B, T, D_IN = 2, 32, 16
    ENC, LAYERS, HEADS = 32, 2, 4
    FF_EXP, CONV_EXP, KSIZE = 4, 2, 7

    key = jax.random.PRNGKey(0)
    k_in, k_p = jax.random.split(key)
    inputs = jax.random.normal(k_in, (B, T, D_IN), jnp.float32)
    input_lengths = jnp.array([T, T - 4], dtype=jnp.int32)

    params = init_params(k_p, D_IN, ENC, LAYERS, HEADS, FF_EXP, CONV_EXP, KSIZE)

    fwd = jax.jit(functools.partial(conformer_forward, num_heads=HEADS))
    out, out_lens = fwd(params, inputs, input_lengths)
    out = jax.block_until_ready(out)
    out_lens = jax.block_until_ready(out_lens)

    assert out.shape == (B, 8, ENC), out.shape
    assert out_lens.shape == (B,)
    assert bool(jnp.all(jnp.isfinite(out)))
    print("KERNEL_OK")
</pallas_src>

<mosaic_0001>
module attributes {stable_mosaic.version = 11 : i64} {
  func.func @_fused_linear_kernel(%arg0: i32, %arg1: i32, %arg2: memref<128x9xbf16, #tpu.memory_space<vmem>>, %arg3: memref<9x32xbf16, #tpu.memory_space<vmem>>, %arg4: memref<1x32xf32, #tpu.memory_space<vmem>>, %arg5: memref<128x32xbf16, #tpu.memory_space<vmem>>) attributes {dimension_semantics = [#tpu.dimension_semantics<parallel>, #tpu.dimension_semantics<parallel>], iteration_bounds = array<i64: 2, 1>, scalar_prefetch = 0 : i64, scratch_operands = 0 : i64, tpu.core_type = #tpu.core_type<tc>, window_params = [{transform_indices = @transform_0, window_bounds = array<i64: 128, 9>}, {transform_indices = @transform_1, window_bounds = array<i64: 9, 32>}, {transform_indices = @transform_2, window_bounds = array<i64: 1, 32>}, {transform_indices = @transform_3, window_bounds = array<i64: 128, 32>}]} {
    %c0 = arith.constant 0 : index
    %c0_0 = arith.constant 0 : index
    %0 = vector.load %arg2[%c0, %c0_0] : memref<128x9xbf16, #tpu.memory_space<vmem>>, vector<128x9xbf16>
    %c0_1 = arith.constant 0 : index
    %c0_2 = arith.constant 0 : index
    %1 = vector.load %arg3[%c0_1, %c0_2] : memref<9x32xbf16, #tpu.memory_space<vmem>>, vector<9x32xbf16>
    %cst = arith.constant dense<0.000000e+00> : vector<128x32xf32>
    %2 = tpu.matmul %0, %1, %cst {dimension_numbers = #tpu.dot_dimension_numbers<[1], [0], [0], [1], [0, 0, 1, 1], [], []>} : vector<128x9xbf16>, vector<9x32xbf16>, vector<128x32xf32> -> vector<128x32xf32>
    %c0_3 = arith.constant 0 : index
    %c0_4 = arith.constant 0 : index
    %3 = vector.load %arg4[%c0_3, %c0_4] : memref<1x32xf32, #tpu.memory_space<vmem>>, vector<1x32xf32>
    %4 = vector.broadcast %3 : vector<1x32xf32> to vector<128x32xf32>
    %5 = arith.addf %2, %4 : vector<128x32xf32>
    %cst_5 = arith.constant 0.000000e+00 : f32
    %6 = vector.broadcast %cst_5 : f32 to vector<128x32xf32>
    %7 = arith.maximumf %5, %6 : vector<128x32xf32>
    %8 = arith.truncf %7 : vector<128x32xf32> to vector<128x32xbf16>
    %c0_6 = arith.constant 0 : index
    %c0_7 = arith.constant 0 : index
    %9 = vector.load %arg5[%c0_6, %c0_7] : memref<128x32xbf16, #tpu.memory_space<vmem>>, vector<128x32xbf16>
    tpu.vector_store %arg5[%c0_6, %c0_7], %8 {strides = array<i32>} : memref<128x32xbf16, #tpu.memory_space<vmem>>, vector<128x32xbf16>,
    return
  }
  func.func @transform_0(%arg0: i32, %arg1: i32) -> (i32, i32) {
    %c0_i32 = arith.constant 0 : i32
    %c0_i32_0 = arith.constant 0 : i32
    return %arg0, %c0_i32 : i32, i32
  }
  func.func @transform_1(%arg0: i32, %arg1: i32) -> (i32, i32) {
    %c0_i32 = arith.constant 0 : i32
    %c0_i32_0 = arith.constant 0 : i32
    return %c0_i32, %arg1 : i32, i32
  }
  func.func @transform_2(%arg0: i32, %arg1: i32) -> (i32, i32) {
    %c0_i32 = arith.constant 0 : i32
    %c0_i32_0 = arith.constant 0 : i32
    return %c0_i32, %arg1 : i32, i32
  }
  func.func @transform_3(%arg0: i32, %arg1: i32) -> (i32, i32) {
    %c0_i32 = arith.constant 0 : i32
    return %arg0, %arg1 : i32, i32
  }
}

module attributes {stable_mosaic.version = 11 : i64} {
  func.func @_fused_linear_kernel(%arg0: i32, %arg1: i32, %arg2: memref<32x288xbf16, #tpu.memory_space<vmem>>, %arg3: memref<288x32xbf16, #tpu.memory_space<vmem>>, %arg4: memref<1x32xf32, #tpu.memory_space<vmem>>, %arg5: memref<32x32xbf16, #tpu.memory_space<vmem>>) attributes {dimension_semantics = [#tpu.dimension_semantics<parallel>, #tpu.dimension_semantics<parallel>], iteration_bounds = array<i64: 2, 1>, scalar_prefetch = 0 : i64, scratch_operands = 0 : i64, tpu.core_type = #tpu.core_type<tc>, window_params = [{transform_indices = @transform_0, window_bounds = array<i64: 32, 288>}, {transform_indices = @transform_1, window_bounds = array<i64: 288, 32>}, {transform_indices = @transform_2, window_bounds = array<i64: 1, 32>}, {transform_indices = @transform_3, window_bounds = array<i64: 32, 32>}]} {
    %c0 = arith.constant 0 : index
    %c0_0 = arith.constant 0 : index
    %0 = vector.load %arg2[%c0, %c0_0] : memref<32x288xbf16, #tpu.memory_space<vmem>>, vector<32x288xbf16>
    %c0_1 = arith.constant 0 : index
    %c0_2 = arith.constant 0 : index
    %1 = vector.load %arg3[%c0_1, %c0_2] : memref<288x32xbf16, #tpu.memory_space<vmem>>, vector<288x32xbf16>
    %cst = arith.constant dense<0.000000e+00> : vector<32x32xf32>
    %2 = tpu.matmul %0, %1, %cst {dimension_numbers = #tpu.dot_dimension_numbers<[1], [0], [0], [1], [0, 0, 1, 1], [], []>} : vector<32x288xbf16>, vector<288x32xbf16>, vector<32x32xf32> -> vector<32x32xf32>
    %c0_3 = arith.constant 0 : index
    %c0_4 = arith.constant 0 : index
    %3 = vector.load %arg4[%c0_3, %c0_4] : memref<1x32xf32, #tpu.memory_space<vmem>>, vector<1x32xf32>
    %4 = vector.broadcast %3 : vector<1x32xf32> to vector<32x32xf32>
    %5 = arith.addf %2, %4 : vector<32x32xf32>
    %cst_5 = arith.constant 0.000000e+00 : f32
    %6 = vector.broadcast %cst_5 : f32 to vector<32x32xf32>
    %7 = arith.maximumf %5, %6 : vector<32x32xf32>
    %8 = arith.truncf %7 : vector<32x32xf32> to vector<32x32xbf16>
    %c0_6 = arith.constant 0 : index
    %c0_7 = arith.constant 0 : index
    %9 = vector.load %arg5[%c0_6, %c0_7] : memref<32x32xbf16, #tpu.memory_space<vmem>>, vector<32x32xbf16>
    tpu.vector_store %arg5[%c0_6, %c0_7], %8 {strides = array<i32>} : memref<32x32xbf16, #tpu.memory_space<vmem>>, vector<32x32xbf16>,
    return
  }
  func.func @transform_0(%arg0: i32, %arg1: i32) -> (i32, i32) {
    %c0_i32 = arith.constant 0 : i32
    %c0_i32_0 = arith.constant 0 : i32
    return %arg0, %c0_i32 : i32, i32
  }
  func.func @transform_1(%arg0: i32, %arg1: i32) -> (i32, i32) {
    %c0_i32 = arith.constant 0 : i32
    %c0_i32_0 = arith.constant 0 : i32
    return %c0_i32, %arg1 : i32, i32
  }
  func.func @transform_2(%arg0: i32, %arg1: i32) -> (i32, i32) {
    %c0_i32 = arith.constant 0 : i32
    %c0_i32_0 = arith.constant 0 : i32
    return %c0_i32, %arg1 : i32, i32
  }
  func.func @transform_3(%arg0: i32, %arg1: i32) -> (i32, i32) {
    %c0_i32 = arith.constant 0 : i32
    return %arg0, %arg1 : i32, i32
  }
}

module attributes {stable_mosaic.version = 11 : i64} {
  func.func @_fused_linear_kernel(%arg0: i32, %arg1: i32, %arg2: memref<8x128xbf16, #tpu.memory_space<vmem>>, %arg3: memref<128x32xbf16, #tpu.memory_space<vmem>>, %arg4: memref<1x32xf32, #tpu.memory_space<vmem>>, %arg5: memref<8x32xbf16, #tpu.memory_space<vmem>>) attributes {dimension_semantics = [#tpu.dimension_semantics<parallel>, #tpu.dimension_semantics<parallel>], iteration_bounds = array<i64: 2, 1>, scalar_prefetch = 0 : i64, scratch_operands = 0 : i64, tpu.core_type = #tpu.core_type<tc>, window_params = [{transform_indices = @transform_0, window_bounds = array<i64: 8, 128>}, {transform_indices = @transform_1, window_bounds = array<i64: 128, 32>}, {transform_indices = @transform_2, window_bounds = array<i64: 1, 32>}, {transform_indices = @transform_3, window_bounds = array<i64: 8, 32>}]} {
    %c0 = arith.constant 0 : index
    %c0_0 = arith.constant 0 : index
    %0 = vector.load %arg2[%c0, %c0_0] : memref<8x128xbf16, #tpu.memory_space<vmem>>, vector<8x128xbf16>
    %c0_1 = arith.constant 0 : index
    %c0_2 = arith.constant 0 : index
    %1 = vector.load %arg3[%c0_1, %c0_2] : memref<128x32xbf16, #tpu.memory_space<vmem>>, vector<128x32xbf16>
    %cst = arith.constant dense<0.000000e+00> : vector<8x32xf32>
    %2 = tpu.matmul %0, %1, %cst {dimension_numbers = #tpu.dot_dimension_numbers<[1], [0], [0], [1], [0, 0, 1, 1], [], []>} : vector<8x128xbf16>, vector<128x32xbf16>, vector<8x32xf32> -> vector<8x32xf32>
    %c0_3 = arith.constant 0 : index
    %c0_4 = arith.constant 0 : index
    %3 = vector.load %arg4[%c0_3, %c0_4] : memref<1x32xf32, #tpu.memory_space<vmem>>, vector<1x32xf32>
    %4 = vector.broadcast %3 : vector<1x32xf32> to vector<8x32xf32>
    %5 = arith.addf %2, %4 : vector<8x32xf32>
    %6 = arith.truncf %5 : vector<8x32xf32> to vector<8x32xbf16>
    %c0_5 = arith.constant 0 : index
    %c0_6 = arith.constant 0 : index
    %7 = vector.load %arg5[%c0_5, %c0_6] : memref<8x32xbf16, #tpu.memory_space<vmem>>, vector<8x32xbf16>
    tpu.vector_store %arg5[%c0_5, %c0_6], %6 {strides = array<i32>} : memref<8x32xbf16, #tpu.memory_space<vmem>>, vector<8x32xbf16>,
    return
  }
  func.func @transform_0(%arg0: i32, %arg1: i32) -> (i32, i32) {
    %c0_i32 = arith.constant 0 : i32
    %c0_i32_0 = arith.constant 0 : i32
    return %arg0, %c0_i32 : i32, i32
  }
  func.func @transform_1(%arg0: i32, %arg1: i32) -> (i32, i32) {
    %c0_i32 = arith.constant 0 : i32
    %c0_i32_0 = arith.constant 0 : i32
    return %c0_i32, %arg1 : i32, i32
  }
  func.func @transform_2(%arg0: i32, %arg1: i32) -> (i32, i32) {
    %c0_i32 = arith.constant 0 : i32
    %c0_i32_0 = arith.constant 0 : i32
    return %c0_i32, %arg1 : i32, i32
  }
  func.func @transform_3(%arg0: i32, %arg1: i32) -> (i32, i32) {
    %c0_i32 = arith.constant 0 : i32
    return %arg0, %arg1 : i32, i32
  }
}

module attributes {stable_mosaic.version = 11 : i64} {
  func.func @_fused_linear_kernel(%arg0: i32, %arg1: i32, %arg2: memref<8x128xbf16, #tpu.memory_space<vmem>>, %arg3: memref<128x32xbf16, #tpu.memory_space<vmem>>, %arg4: memref<1x32xf32, #tpu.memory_space<vmem>>, %arg5: memref<8x32xbf16, #tpu.memory_space<vmem>>, %arg6: memref<8x32xbf16, #tpu.memory_space<vmem>>) attributes {dimension_semantics = [#tpu.dimension_semantics<parallel>, #tpu.dimension_semantics<parallel>], iteration_bounds = array<i64: 2, 1>, scalar_prefetch = 0 : i64, scratch_operands = 0 : i64, tpu.core_type = #tpu.core_type<tc>, window_params = [{transform_indices = @transform_0, window_bounds = array<i64: 8, 128>}, {transform_indices = @transform_1, window_bounds = array<i64: 128, 32>}, {transform_indices = @transform_2, window_bounds = array<i64: 1, 32>}, {transform_indices = @transform_3, window_bounds = array<i64: 8, 32>}, {transform_indices = @transform_4, window_bounds = array<i64: 8, 32>}]} {
    %c0 = arith.constant 0 : index
    %c0_0 = arith.constant 0 : index
    %0 = vector.load %arg2[%c0, %c0_0] : memref<8x128xbf16, #tpu.memory_space<vmem>>, vector<8x128xbf16>
    %c0_1 = arith.constant 0 : index
    %c0_2 = arith.constant 0 : index
    %1 = vector.load %arg3[%c0_1, %c0_2] : memref<128x32xbf16, #tpu.memory_space<vmem>>, vector<128x32xbf16>
    %cst = arith.constant dense<0.000000e+00> : vector<8x32xf32>
    %2 = tpu.matmul %0, %1, %cst {dimension_numbers = #tpu.dot_dimension_numbers<[1], [0], [0], [1], [0, 0, 1, 1], [], []>} : vector<8x128xbf16>, vector<128x32xbf16>, vector<8x32xf32> -> vector<8x32xf32>
    %c0_3 = arith.constant 0 : index
    %c0_4 = arith.constant 0 : index
    %3 = vector.load %arg4[%c0_3, %c0_4] : memref<1x32xf32, #tpu.memory_space<vmem>>, vector<1x32xf32>
    %4 = vector.broadcast %3 : vector<1x32xf32> to vector<8x32xf32>
    %5 = arith.addf %2, %4 : vector<8x32xf32>
    %c0_5 = arith.constant 0 : index
    %c0_6 = arith.constant 0 : index
    %6 = vector.load %arg5[%c0_5, %c0_6] : memref<8x32xbf16, #tpu.memory_space<vmem>>, vector<8x32xbf16>
    %7 = arith.extf %6 : vector<8x32xbf16> to vector<8x32xf32>
    %cst_7 = arith.constant 5.000000e-01 : f32
    %8 = vector.broadcast %cst_7 : f32 to vector<8x32xf32>
    %9 = arith.mulf %8, %5 : vector<8x32xf32>
    %10 = arith.addf %7, %9 : vector<8x32xf32>
    %11 = arith.truncf %10 : vector<8x32xf32> to vector<8x32xbf16>
    %c0_8 = arith.constant 0 : index
    %c0_9 = arith.constant 0 : index
    %12 = vector.load %arg6[%c0_8, %c0_9] : memref<8x32xbf16, #tpu.memory_space<vmem>>, vector<8x32xbf16>
    tpu.vector_store %arg6[%c0_8, %c0_9], %11 {strides = array<i32>} : memref<8x32xbf16, #tpu.memory_space<vmem>>, vector<8x32xbf16>,
    return
  }
  func.func @transform_0(%arg0: i32, %arg1: i32) -> (i32, i32) {
    %c0_i32 = arith.constant 0 : i32
    %c0_i32_0 = arith.constant 0 : i32
    return %arg0, %c0_i32 : i32, i32
  }
  func.func @transform_1(%arg0: i32, %arg1: i32) -> (i32, i32) {
    %c0_i32 = arith.constant 0 : i32
    %c0_i32_0 = arith.constant 0 : i32
    return %c0_i32, %arg1 : i32, i32
  }
  func.func @transform_2(%arg0: i32, %arg1: i32) -> (i32, i32) {
    %c0_i32 = arith.constant 0 : i32
    %c0_i32_0 = arith.constant 0 : i32
    return %c0_i32, %arg1 : i32, i32
  }
  func.func @transform_3(%arg0: i32, %arg1: i32) -> (i32, i32) {
    %c0_i32 = arith.constant 0 : i32
    return %arg0, %arg1 : i32, i32
  }
  func.func @transform_4(%arg0: i32, %arg1: i32) -> (i32, i32) {
    %c0_i32 = arith.constant 0 : i32
    return %arg0, %arg1 : i32, i32
  }
}

module attributes {stable_mosaic.version = 11 : i64} {
  func.func @_fused_linear_kernel(%arg0: i32, %arg1: i32, %arg2: memref<8x32xbf16, #tpu.memory_space<vmem>>, %arg3: memref<1x32xf32, #tpu.memory_space<vmem>>, %arg4: memref<1x32xf32, #tpu.memory_space<vmem>>, %arg5: memref<32x128xbf16, #tpu.memory_space<vmem>>, %arg6: memref<1x128xf32, #tpu.memory_space<vmem>>, %arg7: memref<8x128xbf16, #tpu.memory_space<vmem>>) attributes {dimension_semantics = [#tpu.dimension_semantics<parallel>, #tpu.dimension_semantics<parallel>], iteration_bounds = array<i64: 2, 1>, scalar_prefetch = 0 : i64, scratch_operands = 0 : i64, tpu.core_type = #tpu.core_type<tc>, window_params = [{transform_indices = @transform_0, window_bounds = array<i64: 8, 32>}, {pipeline_mode = #tpu.pipeline_mode<synchronous>, transform_indices = @transform_1, window_bounds = array<i64: 1, 32>}, {pipeline_mode = #tpu.pipeline_mode<synchronous>, transform_indices = @transform_2, window_bounds = array<i64: 1, 32>}, {transform_indices = @transform_3, window_bounds = array<i64: 32, 128>}, {transform_indices = @transform_4, window_bounds = array<i64: 1, 128>}, {transform_indices = @transform_5, window_bounds = array<i64: 8, 128>}]} {
    %c0 = arith.constant 0 : index
    %c0_0 = arith.constant 0 : index
    %0 = vector.load %arg2[%c0, %c0_0] : memref<8x32xbf16, #tpu.memory_space<vmem>>, vector<8x32xbf16>
    %1 = arith.extf %0 : vector<8x32xbf16> to vector<8x32xf32>
    %cst = arith.constant dense<0.000000e+00> : vector<8xf32>
    %2 = vector.multi_reduction <add>, %1, %cst [1] : vector<8x32xf32> to vector<8xf32>
    %3 = vector.shape_cast %2 : vector<8xf32> to vector<8x1xf32>
    %cst_1 = arith.constant 3.200000e+01 : f32
    %4 = vector.broadcast %cst_1 : f32 to vector<8x1xf32>
    %5 = arith.divf %3, %4 : vector<8x1xf32>
    %6 = vector.broadcast %5 : vector<8x1xf32> to vector<8x32xf32>
    %7 = arith.subf %1, %6 : vector<8x32xf32>
    %8 = arith.mulf %7, %7 : vector<8x32xf32>
    %cst_2 = arith.constant dense<0.000000e+00> : vector<8xf32>
    %9 = vector.multi_reduction <add>, %8, %cst_2 [1] : vector<8x32xf32> to vector<8xf32>
    %10 = vector.shape_cast %9 : vector<8xf32> to vector<8x1xf32>
    %cst_3 = arith.constant 3.200000e+01 : f32
    %11 = vector.broadcast %cst_3 : f32 to vector<8x1xf32>
    %12 = arith.divf %10, %11 : vector<8x1xf32>
    %cst_4 = arith.constant 9.99999974E-6 : f32
    %13 = vector.broadcast %cst_4 : f32 to vector<8x1xf32>
    %14 = arith.addf %12, %13 : vector<8x1xf32>
    %15 = math.rsqrt %14 : vector<8x1xf32>
    %16 = vector.broadcast %15 : vector<8x1xf32> to vector<8x32xf32>
    %17 = arith.mulf %7, %16 : vector<8x32xf32>
    %c0_5 = arith.constant 0 : index
    %c0_6 = arith.constant 0 : index
    %18 = vector.load %arg3[%c0_5, %c0_6] : memref<1x32xf32, #tpu.memory_space<vmem>>, vector<1x32xf32>
    %19 = vector.broadcast %18 : vector<1x32xf32> to vector<8x32xf32>
    %20 = arith.mulf %17, %19 : vector<8x32xf32>
    %c0_7 = arith.constant 0 : index
    %c0_8 = arith.constant 0 : index
    %21 = vector.load %arg4[%c0_7, %c0_8] : memref<1x32xf32, #tpu.memory_space<vmem>>, vector<1x32xf32>
    %22 = vector.broadcast %21 : vector<1x32xf32> to vector<8x32xf32>
    %23 = arith.addf %20, %22 : vector<8x32xf32>
    %24 = arith.truncf %23 : vector<8x32xf32> to vector<8x32xbf16>
    %c0_9 = arith.constant 0 : index
    %c0_10 = arith.constant 0 : index
    %25 = vector.load %arg5[%c0_9, %c0_10] : memref<32x128xbf16, #tpu.memory_space<vmem>>, vector<32x128xbf16>
    %cst_11 = arith.constant dense<0.000000e+00> : vector<8x128xf32>
    %26 = tpu.matmul %24, %25, %cst_11 {dimension_numbers = #tpu.dot_dimension_numbers<[1], [0], [0], [1], [0, 0, 1, 1], [], []>} : vector<8x32xbf16>, vector<32x128xbf16>, vector<8x128xf32> -> vector<8x128xf32>
    %c0_12 = arith.constant 0 : index
    %c0_13 = arith.constant 0 : index
    %27 = vector.load %arg6[%c0_12, %c0_13] : memref<1x128xf32, #tpu.memory_space<vmem>>, vector<1x128xf32>
    %28 = vector.broadcast %27 : vector<1x128xf32> to vector<8x128xf32>
    %29 = arith.addf %26, %28 : vector<8x128xf32>
    %cst_14 = arith.constant 0.000000e+00 : f32
    %30 = vector.broadcast %cst_14 : f32 to vector<8x128xf32>
    %31 = arith.subf %30, %29 : vector<8x128xf32>
    %32 = math.exp %31 : vector<8x128xf32>
    %cst_15 = arith.constant 1.000000e+00 : f32
    %33 = vector.broadcast %cst_15 : f32 to vector<8x128xf32>
    %34 = arith.addf %33, %32 : vector<8x128xf32>
    %cst_16 = arith.constant 1.000000e+00 : f32
    %35 = vector.broadcast %cst_16 : f32 to vector<8x128xf32>
    %36 = arith.divf %35, %34 : vector<8x128xf32>
    %37 = arith.mulf %29, %36 : vector<8x128xf32>
    %38 = arith.truncf %37 : vector<8x128xf32> to vector<8x128xbf16>
    %c0_17 = arith.constant 0 : index
    %c0_18 = arith.constant 0 : index
    %39 = vector.load %arg7[%c0_17, %c0_18] : memref<8x128xbf16, #tpu.memory_space<vmem>>, vector<8x128xbf16>
    tpu.vector_store %arg7[%c0_17, %c0_18], %38 {strides = array<i32>} : memref<8x128xbf16, #tpu.memory_space<vmem>>, vector<8x128xbf16>,
    return
  }
  func.func @transform_0(%arg0: i32, %arg1: i32) -> (i32, i32) {
    %c0_i32 = arith.constant 0 : i32
    %c0_i32_0 = arith.constant 0 : i32
    return %arg0, %c0_i32 : i32, i32
  }
  func.func @transform_1(%arg0: i32, %arg1: i32) -> (i32, i32) {
    %c0_i32 = arith.constant 0 : i32
    %c0_i32_0 = arith.constant 0 : i32
    %c0_i32_1 = arith.constant 0 : i32
    return %c0_i32, %c0_i32_0 : i32, i32
  }
  func.func @transform_2(%arg0: i32, %arg1: i32) -> (i32, i32) {
    %c0_i32 = arith.constant 0 : i32
    %c0_i32_0 = arith.constant 0 : i32
    %c0_i32_1 = arith.constant 0 : i32
    return %c0_i32, %c0_i32_0 : i32, i32
  }
  func.func @transform_3(%arg0: i32, %arg1: i32) -> (i32, i32) {
    %c0_i32 = arith.constant 0 : i32
    %c0_i32_0 = arith.constant 0 : i32
    return %c0_i32, %arg1 : i32, i32
  }
  func.func @transform_4(%arg0: i32, %arg1: i32) -> (i32, i32) {
    %c0_i32 = arith.constant 0 : i32
    %c0_i32_0 = arith.constant 0 : i32
    return %c0_i32, %arg1 : i32, i32
  }
  func.func @transform_5(%arg0: i32, %arg1: i32) -> (i32, i32) {
    %c0_i32 = arith.constant 0 : i32
    return %arg0, %arg1 : i32, i32
  }
}

module attributes {stable_mosaic.version = 11 : i64} {
  func.func @_fused_linear_kernel(%arg0: i32, %arg1: i32, %arg2: memref<8x32xbf16, #tpu.memory_space<vmem>>, %arg3: memref<1x32xf32, #tpu.memory_space<vmem>>, %arg4: memref<1x32xf32, #tpu.memory_space<vmem>>, %arg5: memref<32x96xbf16, #tpu.memory_space<vmem>>, %arg6: memref<1x96xf32, #tpu.memory_space<vmem>>, %arg7: memref<8x96xbf16, #tpu.memory_space<vmem>>) attributes {dimension_semantics = [#tpu.dimension_semantics<parallel>, #tpu.dimension_semantics<parallel>], iteration_bounds = array<i64: 2, 1>, scalar_prefetch = 0 : i64, scratch_operands = 0 : i64, tpu.core_type = #tpu.core_type<tc>, window_params = [{transform_indices = @transform_0, window_bounds = array<i64: 8, 32>}, {pipeline_mode = #tpu.pipeline_mode<synchronous>, transform_indices = @transform_1, window_bounds = array<i64: 1, 32>}, {pipeline_mode = #tpu.pipeline_mode<synchronous>, transform_indices = @transform_2, window_bounds = array<i64: 1, 32>}, {transform_indices = @transform_3, window_bounds = array<i64: 32, 96>}, {transform_indices = @transform_4, window_bounds = array<i64: 1, 96>}, {transform_indices = @transform_5, window_bounds = array<i64: 8, 96>}]} {
    %c0 = arith.constant 0 : index
    %c0_0 = arith.constant 0 : index
    %0 = vector.load %arg2[%c0, %c0_0] : memref<8x32xbf16, #tpu.memory_space<vmem>>, vector<8x32xbf16>
    %1 = arith.extf %0 : vector<8x32xbf16> to vector<8x32xf32>
    %cst = arith.constant dense<0.000000e+00> : vector<8xf32>
    %2 = vector.multi_reduction <add>, %1, %cst [1] : vector<8x32xf32> to vector<8xf32>
    %3 = vector.shape_cast %2 : vector<8xf32> to vector<8x1xf32>
    %cst_1 = arith.constant 3.200000e+01 : f32
    %4 = vector.broadcast %cst_1 : f32 to vector<8x1xf32>
    %5 = arith.divf %3, %4 : vector<8x1xf32>
    %6 = vector.broadcast %5 : vector<8x1xf32> to vector<8x32xf32>
    %7 = arith.subf %1, %6 : vector<8x32xf32>
    %8 = arith.mulf %7, %7 : vector<8x32xf32>
    %cst_2 = arith.constant dense<0.000000e+00> : vector<8xf32>
    %9 = vector.multi_reduction <add>, %8, %cst_2 [1] : vector<8x32xf32> to vector<8xf32>
    %10 = vector.shape_cast %9 : vector<8xf32> to vector<8x1xf32>
    %cst_3 = arith.constant 3.200000e+01 : f32
    %11 = vector.broadcast %cst_3 : f32 to vector<8x1xf32>
    %12 = arith.divf %10, %11 : vector<8x1xf32>
    %cst_4 = arith.constant 9.99999974E-6 : f32
    %13 = vector.broadcast %cst_4 : f32 to vector<8x1xf32>
    %14 = arith.addf %12, %13 : vector<8x1xf32>
    %15 = math.rsqrt %14 : vector<8x1xf32>
    %16 = vector.broadcast %15 : vector<8x1xf32> to vector<8x32xf32>
    %17 = arith.mulf %7, %16 : vector<8x32xf32>
    %c0_5 = arith.constant 0 : index
    %c0_6 = arith.constant 0 : index
    %18 = vector.load %arg3[%c0_5, %c0_6] : memref<1x32xf32, #tpu.memory_space<vmem>>, vector<1x32xf32>
    %19 = vector.broadcast %18 : vector<1x32xf32> to vector<8x32xf32>
    %20 = arith.mulf %17, %19 : vector<8x32xf32>
    %c0_7 = arith.constant 0 : index
    %c0_8 = arith.constant 0 : index
    %21 = vector.load %arg4[%c0_7, %c0_8] : memref<1x32xf32, #tpu.memory_space<vmem>>, vector<1x32xf32>
    %22 = vector.broadcast %21 : vector<1x32xf32> to vector<8x32xf32>
    %23 = arith.addf %20, %22 : vector<8x32xf32>
    %24 = arith.truncf %23 : vector<8x32xf32> to vector<8x32xbf16>
    %c0_9 = arith.constant 0 : index
    %c0_10 = arith.constant 0 : index
    %25 = vector.load %arg5[%c0_9, %c0_10] : memref<32x96xbf16, #tpu.memory_space<vmem>>, vector<32x96xbf16>
    %cst_11 = arith.constant dense<0.000000e+00> : vector<8x96xf32>
    %26 = tpu.matmul %24, %25, %cst_11 {dimension_numbers = #tpu.dot_dimension_numbers<[1], [0], [0], [1], [0, 0, 1, 1], [], []>} : vector<8x32xbf16>, vector<32x96xbf16>, vector<8x96xf32> -> vector<8x96xf32>
    %c0_12 = arith.constant 0 : index
    %c0_13 = arith.constant 0 : index
    %27 = vector.load %arg6[%c0_12, %c0_13] : memref<1x96xf32, #tpu.memory_space<vmem>>, vector<1x96xf32>
    %28 = vector.broadcast %27 : vector<1x96xf32> to vector<8x96xf32>
    %29 = arith.addf %26, %28 : vector<8x96xf32>
    %30 = arith.truncf %29 : vector<8x96xf32> to vector<8x96xbf16>
    %c0_14 = arith.constant 0 : index
    %c0_15 = arith.constant 0 : index
    %31 = vector.load %arg7[%c0_14, %c0_15] : memref<8x96xbf16, #tpu.memory_space<vmem>>, vector<8x96xbf16>
    tpu.vector_store %arg7[%c0_14, %c0_15], %30 {strides = array<i32>} : memref<8x96xbf16, #tpu.memory_space<vmem>>, vector<8x96xbf16>,
    return
  }
  func.func @transform_0(%arg0: i32, %arg1: i32) -> (i32, i32) {
    %c0_i32 = arith.constant 0 : i32
    %c0_i32_0 = arith.constant 0 : i32
    return %arg0, %c0_i32 : i32, i32
  }
  func.func @transform_1(%arg0: i32, %arg1: i32) -> (i32, i32) {
    %c0_i32 = arith.constant 0 : i32
    %c0_i32_0 = arith.constant 0 : i32
    %c0_i32_1 = arith.constant 0 : i32
    return %c0_i32, %c0_i32_0 : i32, i32
  }
  func.func @transform_2(%arg0: i32, %arg1: i32) -> (i32, i32) {
    %c0_i32 = arith.constant 0 : i32
    %c0_i32_0 = arith.constant 0 : i32
    %c0_i32_1 = arith.constant 0 : i32
    return %c0_i32, %c0_i32_0 : i32, i32
  }
  func.func @transform_3(%arg0: i32, %arg1: i32) -> (i32, i32) {
    %c0_i32 = arith.constant 0 : i32
    %c0_i32_0 = arith.constant 0 : i32
    return %c0_i32, %arg1 : i32, i32
  }
  func.func @transform_4(%arg0: i32, %arg1: i32) -> (i32, i32) {
    %c0_i32 = arith.constant 0 : i32
    %c0_i32_0 = arith.constant 0 : i32
    return %c0_i32, %arg1 : i32, i32
  }
  func.func @transform_5(%arg0: i32, %arg1: i32) -> (i32, i32) {
    %c0_i32 = arith.constant 0 : i32
    return %arg0, %arg1 : i32, i32
  }
}

module attributes {stable_mosaic.version = 11 : i64} {
  func.func @_fused_linear_kernel(%arg0: i32, %arg1: i32, %arg2: memref<8x32xbf16, #tpu.memory_space<vmem>>, %arg3: memref<32x32xbf16, #tpu.memory_space<vmem>>, %arg4: memref<1x32xf32, #tpu.memory_space<vmem>>, %arg5: memref<8x32xbf16, #tpu.memory_space<vmem>>) attributes {dimension_semantics = [#tpu.dimension_semantics<parallel>, #tpu.dimension_semantics<parallel>], iteration_bounds = array<i64: 1, 1>, scalar_prefetch = 0 : i64, scratch_operands = 0 : i64, tpu.core_type = #tpu.core_type<tc>, window_params = [{transform_indices = @transform_0, window_bounds = array<i64: 8, 32>}, {transform_indices = @transform_1, window_bounds = array<i64: 32, 32>}, {transform_indices = @transform_2, window_bounds = array<i64: 1, 32>}, {transform_indices = @transform_3, window_bounds = array<i64: 8, 32>}]} {
    %c0 = arith.constant 0 : index
    %c0_0 = arith.constant 0 : index
    %0 = vector.load %arg2[%c0, %c0_0] : memref<8x32xbf16, #tpu.memory_space<vmem>>, vector<8x32xbf16>
    %c0_1 = arith.constant 0 : index
    %c0_2 = arith.constant 0 : index
    %1 = vector.load %arg3[%c0_1, %c0_2] : memref<32x32xbf16, #tpu.memory_space<vmem>>, vector<32x32xbf16>
    %cst = arith.constant dense<0.000000e+00> : vector<8x32xf32>
    %2 = tpu.matmul %0, %1, %cst {dimension_numbers = #tpu.dot_dimension_numbers<[1], [0], [0], [1], [0, 0, 1, 1], [], []>} : vector<8x32xbf16>, vector<32x32xbf16>, vector<8x32xf32> -> vector<8x32xf32>
    %c0_3 = arith.constant 0 : index
    %c0_4 = arith.constant 0 : index
    %3 = vector.load %arg4[%c0_3, %c0_4] : memref<1x32xf32, #tpu.memory_space<vmem>>, vector<1x32xf32>
    %4 = vector.broadcast %3 : vector<1x32xf32> to vector<8x32xf32>
    %5 = arith.addf %2, %4 : vector<8x32xf32>
    %6 = arith.truncf %5 : vector<8x32xf32> to vector<8x32xbf16>
    %c0_5 = arith.constant 0 : index
    %c0_6 = arith.constant 0 : index
    %7 = vector.load %arg5[%c0_5, %c0_6] : memref<8x32xbf16, #tpu.memory_space<vmem>>, vector<8x32xbf16>
    tpu.vector_store %arg5[%c0_5, %c0_6], %6 {strides = array<i32>} : memref<8x32xbf16, #tpu.memory_space<vmem>>, vector<8x32xbf16>,
    return
  }
  func.func @transform_0(%arg0: i32, %arg1: i32) -> (i32, i32) {
    %c0_i32 = arith.constant 0 : i32
    %c0_i32_0 = arith.constant 0 : i32
    return %arg0, %c0_i32 : i32, i32
  }
  func.func @transform_1(%arg0: i32, %arg1: i32) -> (i32, i32) {
    %c0_i32 = arith.constant 0 : i32
    %c0_i32_0 = arith.constant 0 : i32
    return %c0_i32, %arg1 : i32, i32
  }
  func.func @transform_2(%arg0: i32, %arg1: i32) -> (i32, i32) {
    %c0_i32 = arith.constant 0 : i32
    %c0_i32_0 = arith.constant 0 : i32
    return %c0_i32, %arg1 : i32, i32
  }
  func.func @transform_3(%arg0: i32, %arg1: i32) -> (i32, i32) {
    %c0_i32 = arith.constant 0 : i32
    return %arg0, %arg1 : i32, i32
  }
}

module attributes {stable_mosaic.version = 11 : i64} {
  func.func @_pos_score_kernel(%arg0: i32, %arg1: memref<1x8x96xbf16, #tpu.memory_space<vmem>>, %arg2: memref<8x32xbf16, #tpu.memory_space<vmem>>, %arg3: memref<4x8xf32, #tpu.memory_space<vmem>>, %arg4: memref<1x4x8x8xbf16, #tpu.memory_space<vmem>>) attributes {dimension_semantics = [#tpu.dimension_semantics<parallel>], iteration_bounds = array<i64: 2>, scalar_prefetch = 0 : i64, scratch_operands = 0 : i64, tpu.core_type = #tpu.core_type<tc>, window_params = [{transform_indices = @transform_0, window_bounds = array<i64: 1, 8, 96>}, {pipeline_mode = #tpu.pipeline_mode<synchronous>, transform_indices = @transform_1, window_bounds = array<i64: 8, 32>}, {pipeline_mode = #tpu.pipeline_mode<synchronous>, transform_indices = @transform_2, window_bounds = array<i64: 4, 8>}, {transform_indices = @transform_3, window_bounds = array<i64: 1, 4, 8, 8>}]} {
    %c0 = arith.constant 0 : index
    %c0_0 = arith.constant 0 : index
    %c0_1 = arith.constant 0 : index
    %0 = vector.load %arg1[%c0, %c0_0, %c0_1] : memref<1x8x96xbf16, #tpu.memory_space<vmem>>, vector<1x8x8xbf16>
    %1 = vector.shape_cast %0 : vector<1x8x8xbf16> to vector<8x8xbf16>
    %2 = arith.extf %1 : vector<8x8xbf16> to vector<8x8xf32>
    %c0_2 = arith.constant 0 : index
    %c0_3 = arith.constant 0 : index
    %3 = vector.load %arg3[%c0_2, %c0_3] : memref<4x8xf32, #tpu.memory_space<vmem>>, vector<1x8xf32>
    %4 = vector.broadcast %3 : vector<1x8xf32> to vector<8x8xf32>
    %5 = arith.addf %2, %4 : vector<8x8xf32>
    %6 = arith.truncf %5 : vector<8x8xf32> to vector<8x8xbf16>
    %c0_4 = arith.constant 0 : index
    %c0_5 = arith.constant 0 : index
    %7 = vector.load %arg2[%c0_4, %c0_5] : memref<8x32xbf16, #tpu.memory_space<vmem>>, vector<8x8xbf16>
    %cst = arith.constant dense<0.000000e+00> : vector<8x8xf32>
    %8 = tpu.matmul %6, %7, %cst {dimension_numbers = #tpu.dot_dimension_numbers<[1], [1], [0], [0], [0, 0, 1, 0], [], []>} : vector<8x8xbf16>, vector<8x8xbf16>, vector<8x8xf32> -> vector<8x8xf32>
    %9 = arith.truncf %8 : vector<8x8xf32> to vector<8x8xbf16>
    %c0_6 = arith.constant 0 : index
    %c0_7 = arith.constant 0 : index
    %c0_8 = arith.constant 0 : index
    %c0_9 = arith.constant 0 : index
    %10 = vector.load %arg4[%c0_6, %c0_7, %c0_8, %c0_9] : memref<1x4x8x8xbf16, #tpu.memory_space<vmem>>, vector<1x1x8x8xbf16>
    %11 = vector.shape_cast %10 : vector<1x1x8x8xbf16> to vector<8x8xbf16>
    %12 = vector.shape_cast %9 : vector<8x8xbf16> to vector<1x1x8x8xbf16>
    tpu.vector_store %arg4[%c0_6, %c0_7, %c0_8, %c0_9], %12 {strides = array<i32>} : memref<1x4x8x8xbf16, #tpu.memory_space<vmem>>, vector<1x1x8x8xbf16>,
    %c0_10 = arith.constant 0 : index
    %c0_11 = arith.constant 0 : index
    %c8 = arith.constant 8 : index
    %13 = vector.load %arg1[%c0_10, %c0_11, %c8] : memref<1x8x96xbf16, #tpu.memory_space<vmem>>, vector<1x8x8xbf16>
    %14 = vector.shape_cast %13 : vector<1x8x8xbf16> to vector<8x8xbf16>
    %15 = arith.extf %14 : vector<8x8xbf16> to vector<8x8xf32>
    %c1 = arith.constant 1 : index
    %c0_12 = arith.constant 0 : index
    %16 = vector.load %arg3[%c1, %c0_12] : memref<4x8xf32, #tpu.memory_space<vmem>>, vector<1x8xf32>
    %17 = vector.broadcast %16 : vector<1x8xf32> to vector<8x8xf32>
    %18 = arith.addf %15, %17 : vector<8x8xf32>
    %19 = arith.truncf %18 : vector<8x8xf32> to vector<8x8xbf16>
    %c0_13 = arith.constant 0 : index
    %c8_14 = arith.constant 8 : index
    %20 = vector.load %arg2[%c0_13, %c8_14] : memref<8x32xbf16, #tpu.memory_space<vmem>>, vector<8x8xbf16>
    %cst_15 = arith.constant dense<0.000000e+00> : vector<8x8xf32>
    %21 = tpu.matmul %19, %20, %cst_15 {dimension_numbers = #tpu.dot_dimension_numbers<[1], [1], [0], [0], [0, 0, 1, 0], [], []>} : vector<8x8xbf16>, vector<8x8xbf16>, vector<8x8xf32> -> vector<8x8xf32>
    %22 = arith.truncf %21 : vector<8x8xf32> to vector<8x8xbf16>
    %c0_16 = arith.constant 0 : index
    %c1_17 = arith.constant 1 : index
    %c0_18 = arith.constant 0 : index
    %c0_19 = arith.constant 0 : index
    %23 = vector.load %arg4[%c0_16, %c1_17, %c0_18, %c0_19] : memref<1x4x8x8xbf16, #tpu.memory_space<vmem>>, vector<1x1x8x8xbf16>
    %24 = vector.shape_cast %23 : vector<1x1x8x8xbf16> to vector<8x8xbf16>
    %25 = vector.shape_cast %22 : vector<8x8xbf16> to vector<1x1x8x8xbf16>
    tpu.vector_store %arg4[%c0_16, %c1_17, %c0_18, %c0_19], %25 {strides = array<i32>} : memref<1x4x8x8xbf16, #tpu.memory_space<vmem>>, vector<1x1x8x8xbf16>,
    %c0_20 = arith.constant 0 : index
    %c0_21 = arith.constant 0 : index
    %c16 = arith.constant 16 : index
    %26 = vector.load %arg1[%c0_20, %c0_21, %c16] : memref<1x8x96xbf16, #tpu.memory_space<vmem>>, vector<1x8x8xbf16>
    %27 = vector.shape_cast %26 : vector<1x8x8xbf16> to vector<8x8xbf16>
    %28 = arith.extf %27 : vector<8x8xbf16> to vector<8x8xf32>
    %c2 = arith.constant 2 : index
    %c0_22 = arith.constant 0 : index
    %29 = vector.load %arg3[%c2, %c0_22] : memref<4x8xf32, #tpu.memory_space<vmem>>, vector<1x8xf32>
    %30 = vector.broadcast %29 : vector<1x8xf32> to vector<8x8xf32>
    %31 = arith.addf %28, %30 : vector<8x8xf32>
    %32 = arith.truncf %31 : vector<8x8xf32> to vector<8x8xbf16>
    %c0_23 = arith.constant 0 : index
    %c16_24 = arith.constant 16 : index
    %33 = vector.load %arg2[%c0_23, %c16_24] : memref<8x32xbf16, #tpu.memory_space<vmem>>, vector<8x8xbf16>
    %cst_25 = arith.constant dense<0.000000e+00> : vector<8x8xf32>
    %34 = tpu.matmul %32, %33, %cst_25 {dimension_numbers = #tpu.dot_dimension_numbers<[1], [1], [0], [0], [0, 0, 1, 0], [], []>} : vector<8x8xbf16>, vector<8x8xbf16>, vector<8x8xf32> -> vector<8x8xf32>
    %35 = arith.truncf %34 : vector<8x8xf32> to vector<8x8xbf16>
    %c0_26 = arith.constant 0 : index
    %c2_27 = arith.constant 2 : index
    %c0_28 = arith.constant 0 : index
    %c0_29 = arith.constant 0 : index
    %36 = vector.load %arg4[%c0_26, %c2_27, %c0_28, %c0_29] : memref<1x4x8x8xbf16, #tpu.memory_space<vmem>>, vector<1x1x8x8xbf16>
    %37 = vector.shape_cast %36 : vector<1x1x8x8xbf16> to vector<8x8xbf16>
    %38 = vector.shape_cast %35 : vector<8x8xbf16> to vector<1x1x8x8xbf16>
    tpu.vector_store %arg4[%c0_26, %c2_27, %c0_28, %c0_29], %38 {strides = array<i32>} : memref<1x4x8x8xbf16, #tpu.memory_space<vmem>>, vector<1x1x8x8xbf16>,
    %c0_30 = arith.constant 0 : index
    %c0_31 = arith.constant 0 : index
    %c24 = arith.constant 24 : index
    %39 = vector.load %arg1[%c0_30, %c0_31, %c24] : memref<1x8x96xbf16, #tpu.memory_space<vmem>>, vector<1x8x8xbf16>
    %40 = vector.shape_cast %39 : vector<1x8x8xbf16> to vector<8x8xbf16>
    %41 = arith.extf %40 : vector<8x8xbf16> to vector<8x8xf32>
    %c3 = arith.constant 3 : index
    %c0_32 = arith.constant 0 : index
    %42 = vector.load %arg3[%c3, %c0_32] : memref<4x8xf32, #tpu.memory_space<vmem>>, vector<1x8xf32>
    %43 = vector.broadcast %42 : vector<1x8xf32> to vector<8x8xf32>
    %44 = arith.addf %41, %43 : vector<8x8xf32>
    %45 = arith.truncf %44 : vector<8x8xf32> to vector<8x8xbf16>
    %c0_33 = arith.constant 0 : index
    %c24_34 = arith.constant 24 : index
    %46 = vector.load %arg2[%c0_33, %c24_34] : memref<8x32xbf16, #tpu.memory_space<vmem>>, vector<8x8xbf16>
    %cst_35 = arith.constant dense<0.000000e+00> : vector<8x8xf32>
    %47 = tpu.matmul %45, %46, %cst_35 {dimension_numbers = #tpu.dot_dimension_numbers<[1], [1], [0], [0], [0, 0, 1, 0], [], []>} : vector<8x8xbf16>, vector<8x8xbf16>, vector<8x8xf32> -> vector<8x8xf32>
    %48 = arith.truncf %47 : vector<8x8xf32> to vector<8x8xbf16>
    %c0_36 = arith.constant 0 : index
    %c3_37 = arith.constant 3 : index
    %c0_38 = arith.constant 0 : index
    %c0_39 = arith.constant 0 : index
    %49 = vector.load %arg4[%c0_36, %c3_37, %c0_38, %c0_39] : memref<1x4x8x8xbf16, #tpu.memory_space<vmem>>, vector<1x1x8x8xbf16>
    %50 = vector.shape_cast %49 : vector<1x1x8x8xbf16> to vector<8x8xbf16>
    %51 = vector.shape_cast %48 : vector<8x8xbf16> to vector<1x1x8x8xbf16>
    tpu.vector_store %arg4[%c0_36, %c3_37, %c0_38, %c0_39], %51 {strides = array<i32>} : memref<1x4x8x8xbf16, #tpu.memory_space<vmem>>, vector<1x1x8x8xbf16>,
    return
  }
  func.func @transform_0(%arg0: i32) -> (i32, i32, i32) {
    %c0_i32 = arith.constant 0 : i32
    %c0_i32_0 = arith.constant 0 : i32
    %c0_i32_1 = arith.constant 0 : i32
    return %arg0, %c0_i32, %c0_i32_0 : i32, i32, i32
  }
  func.func @transform_1(%arg0: i32) -> (i32, i32) {
    %c0_i32 = arith.constant 0 : i32
    %c0_i32_0 = arith.constant 0 : i32
    %c0_i32_1 = arith.constant 0 : i32
    return %c0_i32, %c0_i32_0 : i32, i32
  }
  func.func @transform_2(%arg0: i32) -> (i32, i32) {
    %c0_i32 = arith.constant 0 : i32
    %c0_i32_0 = arith.constant 0 : i32
    %c0_i32_1 = arith.constant 0 : i32
    return %c0_i32, %c0_i32_0 : i32, i32
  }
  func.func @transform_3(%arg0: i32) -> (i32, i32, i32, i32) {
    %c0_i32 = arith.constant 0 : i32
    %c0_i32_0 = arith.constant 0 : i32
    %c0_i32_1 = arith.constant 0 : i32
    %c0_i32_2 = arith.constant 0 : i32
    return %arg0, %c0_i32, %c0_i32_0, %c0_i32_1 : i32, i32, i32, i32
  }
}

module attributes {stable_mosaic.version = 11 : i64} {
  func.func @_fused_linear_kernel(%arg0: i32, %arg1: i32, %arg2: memref<8x32xbf16, #tpu.memory_space<vmem>>, %arg3: memref<32x32xbf16, #tpu.memory_space<vmem>>, %arg4: memref<1x32xf32, #tpu.memory_space<vmem>>, %arg5: memref<8x32xbf16, #tpu.memory_space<vmem>>, %arg6: memref<8x32xbf16, #tpu.memory_space<vmem>>) attributes {dimension_semantics = [#tpu.dimension_semantics<parallel>, #tpu.dimension_semantics<parallel>], iteration_bounds = array<i64: 2, 1>, scalar_prefetch = 0 : i64, scratch_operands = 0 : i64, tpu.core_type = #tpu.core_type<tc>, window_params = [{transform_indices = @transform_0, window_bounds = array<i64: 8, 32>}, {transform_indices = @transform_1, window_bounds = array<i64: 32, 32>}, {transform_indices = @transform_2, window_bounds = array<i64: 1, 32>}, {transform_indices = @transform_3, window_bounds = array<i64: 8, 32>}, {transform_indices = @transform_4, window_bounds = array<i64: 8, 32>}]} {
    %c0 = arith.constant 0 : index
    %c0_0 = arith.constant 0 : index
    %0 = vector.load %arg2[%c0, %c0_0] : memref<8x32xbf16, #tpu.memory_space<vmem>>, vector<8x32xbf16>
    %c0_1 = arith.constant 0 : index
    %c0_2 = arith.constant 0 : index
    %1 = vector.load %arg3[%c0_1, %c0_2] : memref<32x32xbf16, #tpu.memory_space<vmem>>, vector<32x32xbf16>
    %cst = arith.constant dense<0.000000e+00> : vector<8x32xf32>
    %2 = tpu.matmul %0, %1, %cst {dimension_numbers = #tpu.dot_dimension_numbers<[1], [0], [0], [1], [0, 0, 1, 1], [], []>} : vector<8x32xbf16>, vector<32x32xbf16>, vector<8x32xf32> -> vector<8x32xf32>
    %c0_3 = arith.constant 0 : index
    %c0_4 = arith.constant 0 : index
    %3 = vector.load %arg4[%c0_3, %c0_4] : memref<1x32xf32, #tpu.memory_space<vmem>>, vector<1x32xf32>
    %4 = vector.broadcast %3 : vector<1x32xf32> to vector<8x32xf32>
    %5 = arith.addf %2, %4 : vector<8x32xf32>
    %c0_5 = arith.constant 0 : index
    %c0_6 = arith.constant 0 : index
    %6 = vector.load %arg5[%c0_5, %c0_6] : memref<8x32xbf16, #tpu.memory_space<vmem>>, vector<8x32xbf16>
    %7 = arith.extf %6 : vector<8x32xbf16> to vector<8x32xf32>
    %cst_7 = arith.constant 1.000000e+00 : f32
    %8 = vector.broadcast %cst_7 : f32 to vector<8x32xf32>
    %9 = arith.mulf %8, %5 : vector<8x32xf32>
    %10 = arith.addf %7, %9 : vector<8x32xf32>
    %11 = arith.truncf %10 : vector<8x32xf32> to vector<8x32xbf16>
    %c0_8 = arith.constant 0 : index
    %c0_9 = arith.constant 0 : index
    %12 = vector.load %arg6[%c0_8, %c0_9] : memref<8x32xbf16, #tpu.memory_space<vmem>>, vector<8x32xbf16>
    tpu.vector_store %arg6[%c0_8, %c0_9], %11 {strides = array<i32>} : memref<8x32xbf16, #tpu.memory_space<vmem>>, vector<8x32xbf16>,
    return
  }
  func.func @transform_0(%arg0: i32, %arg1: i32) -> (i32, i32) {
    %c0_i32 = arith.constant 0 : i32
    %c0_i32_0 = arith.constant 0 : i32
    return %arg0, %c0_i32 : i32, i32
  }
  func.func @transform_1(%arg0: i32, %arg1: i32) -> (i32, i32) {
    %c0_i32 = arith.constant 0 : i32
    %c0_i32_0 = arith.constant 0 : i32
    return %c0_i32, %arg1 : i32, i32
  }
  func.func @transform_2(%arg0: i32, %arg1: i32) -> (i32, i32) {
    %c0_i32 = arith.constant 0 : i32
    %c0_i32_0 = arith.constant 0 : i32
    return %c0_i32, %arg1 : i32, i32
  }
  func.func @transform_3(%arg0: i32, %arg1: i32) -> (i32, i32) {
    %c0_i32 = arith.constant 0 : i32
    return %arg0, %arg1 : i32, i32
  }
  func.func @transform_4(%arg0: i32, %arg1: i32) -> (i32, i32) {
    %c0_i32 = arith.constant 0 : i32
    return %arg0, %arg1 : i32, i32
  }
}

module attributes {stable_mosaic.version = 11 : i64} {
  func.func @_attention_kernel(%arg0: i32, %arg1: memref<1x8x96xbf16, #tpu.memory_space<vmem>>, %arg2: memref<1x4x8x8xbf16, #tpu.memory_space<vmem>>, %arg3: memref<4x8xf32, #tpu.memory_space<vmem>>, %arg4: memref<1x8x32xbf16, #tpu.memory_space<vmem>>) attributes {dimension_semantics = [#tpu.dimension_semantics<parallel>], iteration_bounds = array<i64: 2>, scalar_prefetch = 0 : i64, scratch_operands = 0 : i64, tpu.core_type = #tpu.core_type<tc>, window_params = [{transform_indices = @transform_0, window_bounds = array<i64: 1, 8, 96>}, {transform_indices = @transform_1, window_bounds = array<i64: 1, 4, 8, 8>}, {pipeline_mode = #tpu.pipeline_mode<synchronous>, transform_indices = @transform_2, window_bounds = array<i64: 4, 8>}, {transform_indices = @transform_3, window_bounds = array<i64: 1, 8, 32>}]} {
    %c0 = arith.constant 0 : index
    %c0_0 = arith.constant 0 : index
    %c0_1 = arith.constant 0 : index
    %0 = vector.load %arg1[%c0, %c0_0, %c0_1] : memref<1x8x96xbf16, #tpu.memory_space<vmem>>, vector<1x8x8xbf16>
    %1 = vector.shape_cast %0 : vector<1x8x8xbf16> to vector<8x8xbf16>
    %2 = arith.extf %1 : vector<8x8xbf16> to vector<8x8xf32>
    %c0_2 = arith.constant 0 : index
    %c0_3 = arith.constant 0 : index
    %c32 = arith.constant 32 : index
    %3 = vector.load %arg1[%c0_2, %c0_3, %c32] : memref<1x8x96xbf16, #tpu.memory_space<vmem>>, vector<1x8x8xbf16>
    %4 = vector.shape_cast %3 : vector<1x8x8xbf16> to vector<8x8xbf16>
    %c0_4 = arith.constant 0 : index
    %c0_5 = arith.constant 0 : index
    %c64 = arith.constant 64 : index
    %5 = vector.load %arg1[%c0_4, %c0_5, %c64] : memref<1x8x96xbf16, #tpu.memory_space<vmem>>, vector<1x8x8xbf16>
    %6 = vector.shape_cast %5 : vector<1x8x8xbf16> to vector<8x8xbf16>
    %c0_6 = arith.constant 0 : index
    %c0_7 = arith.constant 0 : index
    %7 = vector.load %arg3[%c0_6, %c0_7] : memref<4x8xf32, #tpu.memory_space<vmem>>, vector<1x8xf32>
    %8 = vector.broadcast %7 : vector<1x8xf32> to vector<8x8xf32>
    %9 = arith.addf %2, %8 : vector<8x8xf32>
    %10 = arith.truncf %9 : vector<8x8xf32> to vector<8x8xbf16>
    %cst = arith.constant dense<0.000000e+00> : vector<8x8xf32>
    %11 = tpu.matmul %10, %4, %cst {dimension_numbers = #tpu.dot_dimension_numbers<[1], [1], [0], [0], [0, 0, 1, 0], [], []>} : vector<8x8xbf16>, vector<8x8xbf16>, vector<8x8xf32> -> vector<8x8xf32>
    %c0_8 = arith.constant 0 : index
    %c0_9 = arith.constant 0 : index
    %c0_10 = arith.constant 0 : index
    %c0_11 = arith.constant 0 : index
    %12 = vector.load %arg2[%c0_8, %c0_9, %c0_10, %c0_11] : memref<1x4x8x8xbf16, #tpu.memory_space<vmem>>, vector<1x1x8x8xbf16>
    %13 = vector.shape_cast %12 : vector<1x1x8x8xbf16> to vector<8x8xbf16>
    %14 = arith.extf %13 : vector<8x8xbf16> to vector<8x8xf32>
    %15 = arith.addf %11, %14 : vector<8x8xf32>
    %cst_12 = arith.constant 0.176776692 : f32
    %16 = vector.broadcast %cst_12 : f32 to vector<8x8xf32>
    %17 = arith.mulf %15, %16 : vector<8x8xf32>
    %cst_13 = arith.constant dense<0xFF800000> : vector<8xf32>
    %18 = vector.multi_reduction <maximumf>, %17, %cst_13 [1] : vector<8x8xf32> to vector<8xf32>
    %19 = vector.shape_cast %18 : vector<8xf32> to vector<8x1xf32>
    %20 = vector.broadcast %19 : vector<8x1xf32> to vector<8x8xf32>
    %21 = arith.subf %17, %20 : vector<8x8xf32>
    %22 = math.exp %21 : vector<8x8xf32>
    %cst_14 = arith.constant dense<0.000000e+00> : vector<8xf32>
    %23 = vector.multi_reduction <add>, %22, %cst_14 [1] : vector<8x8xf32> to vector<8xf32>
    %24 = vector.shape_cast %23 : vector<8xf32> to vector<8x1xf32>
    %25 = tpu.reciprocal %24 {approx = true} : vector<8x1xf32> -> vector<8x1xf32>
    %26 = vector.broadcast %25 : vector<8x1xf32> to vector<8x8xf32>
    %27 = arith.mulf %22, %26 : vector<8x8xf32>
    %28 = arith.truncf %27 : vector<8x8xf32> to vector<8x8xbf16>
    %cst_15 = arith.constant dense<0.000000e+00> : vector<8x8xf32>
    %29 = tpu.matmul %28, %6, %cst_15 {dimension_numbers = #tpu.dot_dimension_numbers<[1], [0], [0], [1], [0, 0, 1, 1], [], []>} : vector<8x8xbf16>, vector<8x8xbf16>, vector<8x8xf32> -> vector<8x8xf32>
    %30 = arith.truncf %29 : vector<8x8xf32> to vector<8x8xbf16>
    %c0_16 = arith.constant 0 : index
    %c0_17 = arith.constant 0 : index
    %c0_18 = arith.constant 0 : index
    %31 = vector.load %arg4[%c0_16, %c0_17, %c0_18] : memref<1x8x32xbf16, #tpu.memory_space<vmem>>, vector<1x8x8xbf16>
    %32 = vector.shape_cast %31 : vector<1x8x8xbf16> to vector<8x8xbf16>
    %33 = vector.shape_cast %30 : vector<8x8xbf16> to vector<1x8x8xbf16>
    tpu.vector_store %arg4[%c0_16, %c0_17, %c0_18], %33 {strides = array<i32>} : memref<1x8x32xbf16, #tpu.memory_space<vmem>>, vector<1x8x8xbf16>,
    %c0_19 = arith.constant 0 : index
    %c0_20 = arith.constant 0 : index
    %c8 = arith.constant 8 : index
    %34 = vector.load %arg1[%c0_19, %c0_20, %c8] : memref<1x8x96xbf16, #tpu.memory_space<vmem>>, vector<1x8x8xbf16>
    %35 = vector.shape_cast %34 : vector<1x8x8xbf16> to vector<8x8xbf16>
    %36 = arith.extf %35 : vector<8x8xbf16> to vector<8x8xf32>
    %c0_21 = arith.constant 0 : index
    %c0_22 = arith.constant 0 : index
    %c40 = arith.constant 40 : index
    %37 = vector.load %arg1[%c0_21, %c0_22, %c40] : memref<1x8x96xbf16, #tpu.memory_space<vmem>>, vector<1x8x8xbf16>
    %38 = vector.shape_cast %37 : vector<1x8x8xbf16> to vector<8x8xbf16>
    %c0_23 = arith.constant 0 : index
    %c0_24 = arith.constant 0 : index
    %c72 = arith.constant 72 : index
    %39 = vector.load %arg1[%c0_23, %c0_24, %c72] : memref<1x8x96xbf16, #tpu.memory_space<vmem>>, vector<1x8x8xbf16>
    %40 = vector.shape_cast %39 : vector<1x8x8xbf16> to vector<8x8xbf16>
    %c1 = arith.constant 1 : index
    %c0_25 = arith.constant 0 : index
    %41 = vector.load %arg3[%c1, %c0_25] : memref<4x8xf32, #tpu.memory_space<vmem>>, vector<1x8xf32>
    %42 = vector.broadcast %41 : vector<1x8xf32> to vector<8x8xf32>
    %43 = arith.addf %36, %42 : vector<8x8xf32>
    %44 = arith.truncf %43 : vector<8x8xf32> to vector<8x8xbf16>
    %cst_26 = arith.constant dense<0.000000e+00> : vector<8x8xf32>
    %45 = tpu.matmul %44, %38, %cst_26 {dimension_numbers = #tpu.dot_dimension_numbers<[1], [1], [0], [0], [0, 0, 1, 0], [], []>} : vector<8x8xbf16>, vector<8x8xbf16>, vector<8x8xf32> -> vector<8x8xf32>
    %c0_27 = arith.constant 0 : index
    %c1_28 = arith.constant 1 : index
    %c0_29 = arith.constant 0 : index
    %c0_30 = arith.constant 0 : index
    %46 = vector.load %arg2[%c0_27, %c1_28, %c0_29, %c0_30] : memref<1x4x8x8xbf16, #tpu.memory_space<vmem>>, vector<1x1x8x8xbf16>
    %47 = vector.shape_cast %46 : vector<1x1x8x8xbf16> to vector<8x8xbf16>
    %48 = arith.extf %47 : vector<8x8xbf16> to vector<8x8xf32>
    %49 = arith.addf %45, %48 : vector<8x8xf32>
    %cst_31 = arith.constant 0.176776692 : f32
    %50 = vector.broadcast %cst_31 : f32 to vector<8x8xf32>
    %51 = arith.mulf %49, %50 : vector<8x8xf32>
    %cst_32 = arith.constant dense<0xFF800000> : vector<8xf32>
    %52 = vector.multi_reduction <maximumf>, %51, %cst_32 [1] : vector<8x8xf32> to vector<8xf32>
    %53 = vector.shape_cast %52 : vector<8xf32> to vector<8x1xf32>
    %54 = vector.broadcast %53 : vector<8x1xf32> to vector<8x8xf32>
    %55 = arith.subf %51, %54 : vector<8x8xf32>
    %56 = math.exp %55 : vector<8x8xf32>
    %cst_33 = arith.constant dense<0.000000e+00> : vector<8xf32>
    %57 = vector.multi_reduction <add>, %56, %cst_33 [1] : vector<8x8xf32> to vector<8xf32>
    %58 = vector.shape_cast %57 : vector<8xf32> to vector<8x1xf32>
    %59 = tpu.reciprocal %58 {approx = true} : vector<8x1xf32> -> vector<8x1xf32>
    %60 = vector.broadcast %59 : vector<8x1xf32> to vector<8x8xf32>
    %61 = arith.mulf %56, %60 : vector<8x8xf32>
    %62 = arith.truncf %61 : vector<8x8xf32> to vector<8x8xbf16>
    %cst_34 = arith.constant dense<0.000000e+00> : vector<8x8xf32>
    %63 = tpu.matmul %62, %40, %cst_34 {dimension_numbers = #tpu.dot_dimension_numbers<[1], [0], [0], [1], [0, 0, 1, 1], [], []>} : vector<8x8xbf16>, vector<8x8xbf16>, vector<8x8xf32> -> vector<8x8xf32>
    %64 = arith.truncf %63 : vector<8x8xf32> to vector<8x8xbf16>
    %c0_35 = arith.constant 0 : index
    %c0_36 = arith.constant 0 : index
    %c8_37 = arith.constant 8 : index
    %65 = vector.load %arg4[%c0_35, %c0_36, %c8_37] : memref<1x8x32xbf16, #tpu.memory_space<vmem>>, vector<1x8x8xbf16>
    %66 = vector.shape_cast %65 : vector<1x8x8xbf16> to vector<8x8xbf16>
    %67 = vector.shape_cast %64 : vector<8x8xbf16> to vector<1x8x8xbf16>
    tpu.vector_store %arg4[%c0_35, %c0_36, %c8_37], %67 {strides = array<i32>} : memref<1x8x32xbf16, #tpu.memory_space<vmem>>, vector<1x8x8xbf16>,
    %c0_38 = arith.constant 0 : index
    %c0_39 = arith.constant 0 : index
    %c16 = arith.constant 16 : index
    %68 = vector.load %arg1[%c0_38, %c0_39, %c16] : memref<1x8x96xbf16, #tpu.memory_space<vmem>>, vector<1x8x8xbf16>
    %69 = vector.shape_cast %68 : vector<1x8x8xbf16> to vector<8x8xbf16>
    %70 = arith.extf %69 : vector<8x8xbf16> to vector<8x8xf32>
    %c0_40 = arith.constant 0 : index
    %c0_41 = arith.constant 0 : index
    %c48 = arith.constant 48 : index
    %71 = vector.load %arg1[%c0_40, %c0_41, %c48] : memref<1x8x96xbf16, #tpu.memory_space<vmem>>, vector<1x8x8xbf16>
    %72 = vector.shape_cast %71 : vector<1x8x8xbf16> to vector<8x8xbf16>
    %c0_42 = arith.constant 0 : index
    %c0_43 = arith.constant 0 : index
    %c80 = arith.constant 80 : index
    %73 = vector.load %arg1[%c0_42, %c0_43, %c80] : memref<1x8x96xbf16, #tpu.memory_space<vmem>>, vector<1x8x8xbf16>
    %74 = vector.shape_cast %73 : vector<1x8x8xbf16> to vector<8x8xbf16>
    %c2 = arith.constant 2 : index
    %c0_44 = arith.constant 0 : index
    %75 = vector.load %arg3[%c2, %c0_44] : memref<4x8xf32, #tpu.memory_space<vmem>>, vector<1x8xf32>
    %76 = vector.broadcast %75 : vector<1x8xf32> to vector<8x8xf32>
    %77 = arith.addf %70, %76 : vector<8x8xf32>
    %78 = arith.truncf %77 : vector<8x8xf32> to vector<8x8xbf16>
    %cst_45 = arith.constant dense<0.000000e+00> : vector<8x8xf32>
    %79 = tpu.matmul %78, %72, %cst_45 {dimension_numbers = #tpu.dot_dimension_numbers<[1], [1], [0], [0], [0, 0, 1, 0], [], []>} : vector<8x8xbf16>, vector<8x8xbf16>, vector<8x8xf32> -> vector<8x8xf32>
    %c0_46 = arith.constant 0 : index
    %c2_47 = arith.constant 2 : index
    %c0_48 = arith.constant 0 : index
    %c0_49 = arith.constant 0 : index
    %80 = vector.load %arg2[%c0_46, %c2_47, %c0_48, %c0_49] : memref<1x4x8x8xbf16, #tpu.memory_space<vmem>>, vector<1x1x8x8xbf16>
    %81 = vector.shape_cast %80 : vector<1x1x8x8xbf16> to vector<8x8xbf16>
    %82 = arith.extf %81 : vector<8x8xbf16> to vector<8x8xf32>
    %83 = arith.addf %79, %82 : vector<8x8xf32>
    %cst_50 = arith.constant 0.176776692 : f32
    %84 = vector.broadcast %cst_50 : f32 to vector<8x8xf32>
    %85 = arith.mulf %83, %84 : vector<8x8xf32>
    %cst_51 = arith.constant dense<0xFF800000> : vector<8xf32>
    %86 = vector.multi_reduction <maximumf>, %85, %cst_51 [1] : vector<8x8xf32> to vector<8xf32>
    %87 = vector.shape_cast %86 : vector<8xf32> to vector<8x1xf32>
    %88 = vector.broadcast %87 : vector<8x1xf32> to vector<8x8xf32>
    %89 = arith.subf %85, %88 : vector<8x8xf32>
    %90 = math.exp %89 : vector<8x8xf32>
    %cst_52 = arith.constant dense<0.000000e+00> : vector<8xf32>
    %91 = vector.multi_reduction <add>, %90, %cst_52 [1] : vector<8x8xf32> to vector<8xf32>
    %92 = vector.shape_cast %91 : vector<8xf32> to vector<8x1xf32>
    %93 = tpu.reciprocal %92 {approx = true} : vector<8x1xf32> -> vector<8x1xf32>
    %94 = vector.broadcast %93 : vector<8x1xf32> to vector<8x8xf32>
    %95 = arith.mulf %90, %94 : vector<8x8xf32>
    %96 = arith.truncf %95 : vector<8x8xf32> to vector<8x8xbf16>
    %cst_53 = arith.constant dense<0.000000e+00> : vector<8x8xf32>
    %97 = tpu.matmul %96, %74, %cst_53 {dimension_numbers = #tpu.dot_dimension_numbers<[1], [0], [0], [1], [0, 0, 1, 1], [], []>} : vector<8x8xbf16>, vector<8x8xbf16>, vector<8x8xf32> -> vector<8x8xf32>
    %98 = arith.truncf %97 : vector<8x8xf32> to vector<8x8xbf16>
    %c0_54 = arith.constant 0 : index
    %c0_55 = arith.constant 0 : index
    %c16_56 = arith.constant 16 : index
    %99 = vector.load %arg4[%c0_54, %c0_55, %c16_56] : memref<1x8x32xbf16, #tpu.memory_space<vmem>>, vector<1x8x8xbf16>
    %100 = vector.shape_cast %99 : vector<1x8x8xbf16> to vector<8x8xbf16>
    %101 = vector.shape_cast %98 : vector<8x8xbf16> to vector<1x8x8xbf16>
    tpu.vector_store %arg4[%c0_54, %c0_55, %c16_56], %101 {strides = array<i32>} : memref<1x8x32xbf16, #tpu.memory_space<vmem>>, vector<1x8x8xbf16>,
    %c0_57 = arith.constant 0 : index
    %c0_58 = arith.constant 0 : index
    %c24 = arith.constant 24 : index
    %102 = vector.load %arg1[%c0_57, %c0_58, %c24] : memref<1x8x96xbf16, #tpu.memory_space<vmem>>, vector<1x8x8xbf16>
    %103 = vector.shape_cast %102 : vector<1x8x8xbf16> to vector<8x8xbf16>
    %104 = arith.extf %103 : vector<8x8xbf16> to vector<8x8xf32>
    %c0_59 = arith.constant 0 : index
    %c0_60 = arith.constant 0 : index
    %c56 = arith.constant 56 : index
    %105 = vector.load %arg1[%c0_59, %c0_60, %c56] : memref<1x8x96xbf16, #tpu.memory_space<vmem>>, vector<1x8x8xbf16>
    %106 = vector.shape_cast %105 : vector<1x8x8xbf16> to vector<8x8xbf16>
    %c0_61 = arith.constant 0 : index
    %c0_62 = arith.constant 0 : index
    %c88 = arith.constant 88 : index
    %107 = vector.load %arg1[%c0_61, %c0_62, %c88] : memref<1x8x96xbf16, #tpu.memory_space<vmem>>, vector<1x8x8xbf16>
    %108 = vector.shape_cast %107 : vector<1x8x8xbf16> to vector<8x8xbf16>
    %c3 = arith.constant 3 : index
    %c0_63 = arith.constant 0 : index
    %109 = vector.load %arg3[%c3, %c0_63] : memref<4x8xf32, #tpu.memory_space<vmem>>, vector<1x8xf32>
    %110 = vector.broadcast %109 : vector<1x8xf32> to vector<8x8xf32>
    %111 = arith.addf %104, %110 : vector<8x8xf32>
    %112 = arith.truncf %111 : vector<8x8xf32> to vector<8x8xbf16>
    %cst_64 = arith.constant dense<0.000000e+00> : vector<8x8xf32>
    %113 = tpu.matmul %112, %106, %cst_64 {dimension_numbers = #tpu.dot_dimension_numbers<[1], [1], [0], [0], [0, 0, 1, 0], [], []>} : vector<8x8xbf16>, vector<8x8xbf16>, vector<8x8xf32> -> vector<8x8xf32>
    %c0_65 = arith.constant 0 : index
    %c3_66 = arith.constant 3 : index
    %c0_67 = arith.constant 0 : index
    %c0_68 = arith.constant 0 : index
    %114 = vector.load %arg2[%c0_65, %c3_66, %c0_67, %c0_68] : memref<1x4x8x8xbf16, #tpu.memory_space<vmem>>, vector<1x1x8x8xbf16>
    %115 = vector.shape_cast %114 : vector<1x1x8x8xbf16> to vector<8x8xbf16>
    %116 = arith.extf %115 : vector<8x8xbf16> to vector<8x8xf32>
    %117 = arith.addf %113, %116 : vector<8x8xf32>
    %cst_69 = arith.constant 0.176776692 : f32
    %118 = vector.broadcast %cst_69 : f32 to vector<8x8xf32>
    %119 = arith.mulf %117, %118 : vector<8x8xf32>
    %cst_70 = arith.constant dense<0xFF800000> : vector<8xf32>
    %120 = vector.multi_reduction <maximumf>, %119, %cst_70 [1] : vector<8x8xf32> to vector<8xf32>
    %121 = vector.shape_cast %120 : vector<8xf32> to vector<8x1xf32>
    %122 = vector.broadcast %121 : vector<8x1xf32> to vector<8x8xf32>
    %123 = arith.subf %119, %122 : vector<8x8xf32>
    %124 = math.exp %123 : vector<8x8xf32>
    %cst_71 = arith.constant dense<0.000000e+00> : vector<8xf32>
    %125 = vector.multi_reduction <add>, %124, %cst_71 [1] : vector<8x8xf32> to vector<8xf32>
    %126 = vector.shape_cast %125 : vector<8xf32> to vector<8x1xf32>
    %127 = tpu.reciprocal %126 {approx = true} : vector<8x1xf32> -> vector<8x1xf32>
    %128 = vector.broadcast %127 : vector<8x1xf32> to vector<8x8xf32>
    %129 = arith.mulf %124, %128 : vector<8x8xf32>
    %130 = arith.truncf %129 : vector<8x8xf32> to vector<8x8xbf16>
    %cst_72 = arith.constant dense<0.000000e+00> : vector<8x8xf32>
    %131 = tpu.matmul %130, %108, %cst_72 {dimension_numbers = #tpu.dot_dimension_numbers<[1], [0], [0], [1], [0, 0, 1, 1], [], []>} : vector<8x8xbf16>, vector<8x8xbf16>, vector<8x8xf32> -> vector<8x8xf32>
    %132 = arith.truncf %131 : vector<8x8xf32> to vector<8x8xbf16>
    %c0_73 = arith.constant 0 : index
    %c0_74 = arith.constant 0 : index
    %c24_75 = arith.constant 24 : index
    %133 = vector.load %arg4[%c0_73, %c0_74, %c24_75] : memref<1x8x32xbf16, #tpu.memory_space<vmem>>, vector<1x8x8xbf16>
    %134 = vector.shape_cast %133 : vector<1x8x8xbf16> to vector<8x8xbf16>
    %135 = vector.shape_cast %132 : vector<8x8xbf16> to vector<1x8x8xbf16>
    tpu.vector_store %arg4[%c0_73, %c0_74, %c24_75], %135 {strides = array<i32>} : memref<1x8x32xbf16, #tpu.memory_space<vmem>>, vector<1x8x8xbf16>,
    return
  }
  func.func @transform_0(%arg0: i32) -> (i32, i32, i32) {
    %c0_i32 = arith.constant 0 : i32
    %c0_i32_0 = arith.constant 0 : i32
    %c0_i32_1 = arith.constant 0 : i32
    return %arg0, %c0_i32, %c0_i32_0 : i32, i32, i32
  }
  func.func @transform_1(%arg0: i32) -> (i32, i32, i32, i32) {
    %c0_i32 = arith.constant 0 : i32
    %c0_i32_0 = arith.constant 0 : i32
    %c0_i32_1 = arith.constant 0 : i32
    %c0_i32_2 = arith.constant 0 : i32
    return %arg0, %c0_i32, %c0_i32_0, %c0_i32_1 : i32, i32, i32, i32
  }
  func.func @transform_2(%arg0: i32) -> (i32, i32) {
    %c0_i32 = arith.constant 0 : i32
    %c0_i32_0 = arith.constant 0 : i32
    %c0_i32_1 = arith.constant 0 : i32
    return %c0_i32, %c0_i32_0 : i32, i32
  }
  func.func @transform_3(%arg0: i32) -> (i32, i32, i32) {
    %c0_i32 = arith.constant 0 : i32
    %c0_i32_0 = arith.constant 0 : i32
    %c0_i32_1 = arith.constant 0 : i32
    return %arg0, %c0_i32, %c0_i32_0 : i32, i32, i32
  }
}

module attributes {stable_mosaic.version = 11 : i64} {
  func.func @_fused_linear_kernel(%arg0: i32, %arg1: i32, %arg2: memref<8x32xbf16, #tpu.memory_space<vmem>>, %arg3: memref<1x32xf32, #tpu.memory_space<vmem>>, %arg4: memref<1x32xf32, #tpu.memory_space<vmem>>, %arg5: memref<32x64xbf16, #tpu.memory_space<vmem>>, %arg6: memref<1x64xf32, #tpu.memory_space<vmem>>, %arg7: memref<8x32xbf16, #tpu.memory_space<vmem>>) attributes {dimension_semantics = [#tpu.dimension_semantics<parallel>, #tpu.dimension_semantics<parallel>], iteration_bounds = array<i64: 2, 1>, scalar_prefetch = 0 : i64, scratch_operands = 0 : i64, tpu.core_type = #tpu.core_type<tc>, window_params = [{transform_indices = @transform_0, window_bounds = array<i64: 8, 32>}, {pipeline_mode = #tpu.pipeline_mode<synchronous>, transform_indices = @transform_1, window_bounds = array<i64: 1, 32>}, {pipeline_mode = #tpu.pipeline_mode<synchronous>, transform_indices = @transform_2, window_bounds = array<i64: 1, 32>}, {transform_indices = @transform_3, window_bounds = array<i64: 32, 64>}, {transform_indices = @transform_4, window_bounds = array<i64: 1, 64>}, {transform_indices = @transform_5, window_bounds = array<i64: 8, 32>}]} {
    %c0 = arith.constant 0 : index
    %c0_0 = arith.constant 0 : index
    %0 = vector.load %arg2[%c0, %c0_0] : memref<8x32xbf16, #tpu.memory_space<vmem>>, vector<8x32xbf16>
    %1 = arith.extf %0 : vector<8x32xbf16> to vector<8x32xf32>
    %cst = arith.constant dense<0.000000e+00> : vector<8xf32>
    %2 = vector.multi_reduction <add>, %1, %cst [1] : vector<8x32xf32> to vector<8xf32>
    %3 = vector.shape_cast %2 : vector<8xf32> to vector<8x1xf32>
    %cst_1 = arith.constant 3.200000e+01 : f32
    %4 = vector.broadcast %cst_1 : f32 to vector<8x1xf32>
    %5 = arith.divf %3, %4 : vector<8x1xf32>
    %6 = vector.broadcast %5 : vector<8x1xf32> to vector<8x32xf32>
    %7 = arith.subf %1, %6 : vector<8x32xf32>
    %8 = arith.mulf %7, %7 : vector<8x32xf32>
    %cst_2 = arith.constant dense<0.000000e+00> : vector<8xf32>
    %9 = vector.multi_reduction <add>, %8, %cst_2 [1] : vector<8x32xf32> to vector<8xf32>
    %10 = vector.shape_cast %9 : vector<8xf32> to vector<8x1xf32>
    %cst_3 = arith.constant 3.200000e+01 : f32
    %11 = vector.broadcast %cst_3 : f32 to vector<8x1xf32>
    %12 = arith.divf %10, %11 : vector<8x1xf32>
    %cst_4 = arith.constant 9.99999974E-6 : f32
    %13 = vector.broadcast %cst_4 : f32 to vector<8x1xf32>
    %14 = arith.addf %12, %13 : vector<8x1xf32>
    %15 = math.rsqrt %14 : vector<8x1xf32>
    %16 = vector.broadcast %15 : vector<8x1xf32> to vector<8x32xf32>
    %17 = arith.mulf %7, %16 : vector<8x32xf32>
    %c0_5 = arith.constant 0 : index
    %c0_6 = arith.constant 0 : index
    %18 = vector.load %arg3[%c0_5, %c0_6] : memref<1x32xf32, #tpu.memory_space<vmem>>, vector<1x32xf32>
    %19 = vector.broadcast %18 : vector<1x32xf32> to vector<8x32xf32>
    %20 = arith.mulf %17, %19 : vector<8x32xf32>
    %c0_7 = arith.constant 0 : index
    %c0_8 = arith.constant 0 : index
    %21 = vector.load %arg4[%c0_7, %c0_8] : memref<1x32xf32, #tpu.memory_space<vmem>>, vector<1x32xf32>
    %22 = vector.broadcast %21 : vector<1x32xf32> to vector<8x32xf32>
    %23 = arith.addf %20, %22 : vector<8x32xf32>
    %24 = arith.truncf %23 : vector<8x32xf32> to vector<8x32xbf16>
    %c0_9 = arith.constant 0 : index
    %c0_10 = arith.constant 0 : index
    %25 = vector.load %arg5[%c0_9, %c0_10] : memref<32x64xbf16, #tpu.memory_space<vmem>>, vector<32x64xbf16>
    %cst_11 = arith.constant dense<0.000000e+00> : vector<8x64xf32>
    %26 = tpu.matmul %24, %25, %cst_11 {dimension_numbers = #tpu.dot_dimension_numbers<[1], [0], [0], [1], [0, 0, 1, 1], [], []>} : vector<8x32xbf16>, vector<32x64xbf16>, vector<8x64xf32> -> vector<8x64xf32>
    %c0_12 = arith.constant 0 : index
    %c0_13 = arith.constant 0 : index
    %27 = vector.load %arg6[%c0_12, %c0_13] : memref<1x64xf32, #tpu.memory_space<vmem>>, vector<1x64xf32>
    %28 = vector.broadcast %27 : vector<1x64xf32> to vector<8x64xf32>
    %29 = arith.addf %26, %28 : vector<8x64xf32>
    %30 = vector.extract_strided_slice %29 {offsets = [0, 0], sizes = [8, 32], strides = [1, 1]} : vector<8x64xf32> to vector<8x32xf32>
    %31 = vector.extract_strided_slice %29 {offsets = [0, 32], sizes = [8, 32], strides = [1, 1]} : vector<8x64xf32> to vector<8x32xf32>
    %cst_14 = arith.constant 0.000000e+00 : f32
    %32 = vector.broadcast %cst_14 : f32 to vector<8x32xf32>
    %33 = arith.subf %32, %31 : vector<8x32xf32>
    %34 = math.exp %33 : vector<8x32xf32>
    %cst_15 = arith.constant 1.000000e+00 : f32
    %35 = vector.broadcast %cst_15 : f32 to vector<8x32xf32>
    %36 = arith.addf %35, %34 : vector<8x32xf32>
    %cst_16 = arith.constant 1.000000e+00 : f32
    %37 = vector.broadcast %cst_16 : f32 to vector<8x32xf32>
    %38 = arith.divf %37, %36 : vector<8x32xf32>
    %39 = arith.mulf %30, %38 : vector<8x32xf32>
    %40 = arith.truncf %39 : vector<8x32xf32> to vector<8x32xbf16>
    %c0_17 = arith.constant 0 : index
    %c0_18 = arith.constant 0 : index
    %41 = vector.load %arg7[%c0_17, %c0_18] : memref<8x32xbf16, #tpu.memory_space<vmem>>, vector<8x32xbf16>
    tpu.vector_store %arg7[%c0_17, %c0_18], %40 {strides = array<i32>} : memref<8x32xbf16, #tpu.memory_space<vmem>>, vector<8x32xbf16>,
    return
  }
  func.func @transform_0(%arg0: i32, %arg1: i32) -> (i32, i32) {
    %c0_i32 = arith.constant 0 : i32
    %c0_i32_0 = arith.constant 0 : i32
    return %arg0, %c0_i32 : i32, i32
  }
  func.func @transform_1(%arg0: i32, %arg1: i32) -> (i32, i32) {
    %c0_i32 = arith.constant 0 : i32
    %c0_i32_0 = arith.constant 0 : i32
    %c0_i32_1 = arith.constant 0 : i32
    return %c0_i32, %c0_i32_0 : i32, i32
  }
  func.func @transform_2(%arg0: i32, %arg1: i32) -> (i32, i32) {
    %c0_i32 = arith.constant 0 : i32
    %c0_i32_0 = arith.constant 0 : i32
    %c0_i32_1 = arith.constant 0 : i32
    return %c0_i32, %c0_i32_0 : i32, i32
  }
  func.func @transform_3(%arg0: i32, %arg1: i32) -> (i32, i32) {
    %c0_i32 = arith.constant 0 : i32
    %c0_i32_0 = arith.constant 0 : i32
    return %c0_i32, %arg1 : i32, i32
  }
  func.func @transform_4(%arg0: i32, %arg1: i32) -> (i32, i32) {
    %c0_i32 = arith.constant 0 : i32
    %c0_i32_0 = arith.constant 0 : i32
    return %c0_i32, %arg1 : i32, i32
  }
  func.func @transform_5(%arg0: i32, %arg1: i32) -> (i32, i32) {
    %c0_i32 = arith.constant 0 : i32
    return %arg0, %arg1 : i32, i32
  }
}

module attributes {stable_mosaic.version = 11 : i64} {
  func.func @_dwconv_bn_swish_kernel(%arg0: i32, %arg1: memref<1x14x32xbf16, #tpu.memory_space<vmem>>, %arg2: memref<7x32xf32, #tpu.memory_space<vmem>>, %arg3: memref<1x32xf32, #tpu.memory_space<vmem>>, %arg4: memref<1x32xf32, #tpu.memory_space<vmem>>, %arg5: memref<1x32xf32, #tpu.memory_space<vmem>>, %arg6: memref<1x8x32xbf16, #tpu.memory_space<vmem>>) attributes {dimension_semantics = [#tpu.dimension_semantics<parallel>], iteration_bounds = array<i64: 2>, scalar_prefetch = 0 : i64, scratch_operands = 0 : i64, tpu.core_type = #tpu.core_type<tc>, window_params = [{transform_indices = @transform_0, window_bounds = array<i64: 1, 14, 32>}, {pipeline_mode = #tpu.pipeline_mode<synchronous>, transform_indices = @transform_1, window_bounds = array<i64: 7, 32>}, {pipeline_mode = #tpu.pipeline_mode<synchronous>, transform_indices = @transform_2, window_bounds = array<i64: 1, 32>}, {pipeline_mode = #tpu.pipeline_mode<synchronous>, transform_indices = @transform_3, window_bounds = array<i64: 1, 32>}, {pipeline_mode = #tpu.pipeline_mode<synchronous>, transform_indices = @transform_4, window_bounds = array<i64: 1, 32>}, {transform_indices = @transform_5, window_bounds = array<i64: 1, 8, 32>}]} {
    %c0 = arith.constant 0 : index
    %c0_0 = arith.constant 0 : index
    %c0_1 = arith.constant 0 : index
    %0 = vector.load %arg1[%c0, %c0_0, %c0_1] : memref<1x14x32xbf16, #tpu.memory_space<vmem>>, vector<1x14x32xbf16>
    %1 = vector.shape_cast %0 : vector<1x14x32xbf16> to vector<14x32xbf16>
    %2 = arith.extf %1 : vector<14x32xbf16> to vector<14x32xf32>
    %3 = vector.extract_strided_slice %2 {offsets = [0, 0], sizes = [8, 32], strides = [1, 1]} : vector<14x32xf32> to vector<8x32xf32>
    %c0_2 = arith.constant 0 : index
    %c0_3 = arith.constant 0 : index
    %4 = vector.load %arg2[%c0_2, %c0_3] : memref<7x32xf32, #tpu.memory_space<vmem>>, vector<1x32xf32>
    %5 = vector.broadcast %4 : vector<1x32xf32> to vector<8x32xf32>
    %6 = arith.mulf %3, %5 : vector<8x32xf32>
    %7 = vector.extract_strided_slice %2 {offsets = [1, 0], sizes = [8, 32], strides = [1, 1]} : vector<14x32xf32> to vector<8x32xf32>
    %c1 = arith.constant 1 : index
    %c0_4 = arith.constant 0 : index
    %8 = vector.load %arg2[%c1, %c0_4] : memref<7x32xf32, #tpu.memory_space<vmem>>, vector<1x32xf32>
    %9 = vector.broadcast %8 : vector<1x32xf32> to vector<8x32xf32>
    %10 = arith.mulf %7, %9 : vector<8x32xf32>
    %11 = arith.addf %6, %10 : vector<8x32xf32>
    %12 = vector.extract_strided_slice %2 {offsets = [2, 0], sizes = [8, 32], strides = [1, 1]} : vector<14x32xf32> to vector<8x32xf32>
    %c2 = arith.constant 2 : index
    %c0_5 = arith.constant 0 : index
    %13 = vector.load %arg2[%c2, %c0_5] : memref<7x32xf32, #tpu.memory_space<vmem>>, vector<1x32xf32>
    %14 = vector.broadcast %13 : vector<1x32xf32> to vector<8x32xf32>
    %15 = arith.mulf %12, %14 : vector<8x32xf32>
    %16 = arith.addf %11, %15 : vector<8x32xf32>
    %17 = vector.extract_strided_slice %2 {offsets = [3, 0], sizes = [8, 32], strides = [1, 1]} : vector<14x32xf32> to vector<8x32xf32>
    %c3 = arith.constant 3 : index
    %c0_6 = arith.constant 0 : index
    %18 = vector.load %arg2[%c3, %c0_6] : memref<7x32xf32, #tpu.memory_space<vmem>>, vector<1x32xf32>
    %19 = vector.broadcast %18 : vector<1x32xf32> to vector<8x32xf32>
    %20 = arith.mulf %17, %19 : vector<8x32xf32>
    %21 = arith.addf %16, %20 : vector<8x32xf32>
    %22 = vector.extract_strided_slice %2 {offsets = [4, 0], sizes = [8, 32], strides = [1, 1]} : vector<14x32xf32> to vector<8x32xf32>
    %c4 = arith.constant 4 : index
    %c0_7 = arith.constant 0 : index
    %23 = vector.load %arg2[%c4, %c0_7] : memref<7x32xf32, #tpu.memory_space<vmem>>, vector<1x32xf32>
    %24 = vector.broadcast %23 : vector<1x32xf32> to vector<8x32xf32>
    %25 = arith.mulf %22, %24 : vector<8x32xf32>
    %26 = arith.addf %21, %25 : vector<8x32xf32>
    %27 = vector.extract_strided_slice %2 {offsets = [5, 0], sizes = [8, 32], strides = [1, 1]} : vector<14x32xf32> to vector<8x32xf32>
    %c5 = arith.constant 5 : index
    %c0_8 = arith.constant 0 : index
    %28 = vector.load %arg2[%c5, %c0_8] : memref<7x32xf32, #tpu.memory_space<vmem>>, vector<1x32xf32>
    %29 = vector.broadcast %28 : vector<1x32xf32> to vector<8x32xf32>
    %30 = arith.mulf %27, %29 : vector<8x32xf32>
    %31 = arith.addf %26, %30 : vector<8x32xf32>
    %32 = vector.extract_strided_slice %2 {offsets = [6, 0], sizes = [8, 32], strides = [1, 1]} : vector<14x32xf32> to vector<8x32xf32>
    %c6 = arith.constant 6 : index
    %c0_9 = arith.constant 0 : index
    %33 = vector.load %arg2[%c6, %c0_9] : memref<7x32xf32, #tpu.memory_space<vmem>>, vector<1x32xf32>
    %34 = vector.broadcast %33 : vector<1x32xf32> to vector<8x32xf32>
    %35 = arith.mulf %32, %34 : vector<8x32xf32>
    %36 = arith.addf %31, %35 : vector<8x32xf32>
    %c0_10 = arith.constant 0 : index
    %c0_11 = arith.constant 0 : index
    %37 = vector.load %arg3[%c0_10, %c0_11] : memref<1x32xf32, #tpu.memory_space<vmem>>, vector<1x32xf32>
    %38 = vector.broadcast %37 : vector<1x32xf32> to vector<8x32xf32>
    %39 = arith.addf %36, %38 : vector<8x32xf32>
    %c0_12 = arith.constant 0 : index
    %c0_13 = arith.constant 0 : index
    %40 = vector.load %arg4[%c0_12, %c0_13] : memref<1x32xf32, #tpu.memory_space<vmem>>, vector<1x32xf32>
    %41 = vector.broadcast %40 : vector<1x32xf32> to vector<8x32xf32>
    %42 = arith.mulf %39, %41 : vector<8x32xf32>
    %c0_14 = arith.constant 0 : index
    %c0_15 = arith.constant 0 : index
    %43 = vector.load %arg5[%c0_14, %c0_15] : memref<1x32xf32, #tpu.memory_space<vmem>>, vector<1x32xf32>
    %44 = vector.broadcast %43 : vector<1x32xf32> to vector<8x32xf32>
    %45 = arith.addf %42, %44 : vector<8x32xf32>
    %cst = arith.constant 0.000000e+00 : f32
    %46 = vector.broadcast %cst : f32 to vector<8x32xf32>
    %47 = arith.subf %46, %45 : vector<8x32xf32>
    %48 = math.exp %47 : vector<8x32xf32>
    %cst_16 = arith.constant 1.000000e+00 : f32
    %49 = vector.broadcast %cst_16 : f32 to vector<8x32xf32>
    %50 = arith.addf %49, %48 : vector<8x32xf32>
    %cst_17 = arith.constant 1.000000e+00 : f32
    %51 = vector.broadcast %cst_17 : f32 to vector<8x32xf32>
    %52 = arith.divf %51, %50 : vector<8x32xf32>
    %53 = arith.mulf %45, %52 : vector<8x32xf32>
    %54 = arith.truncf %53 : vector<8x32xf32> to vector<8x32xbf16>
    %c0_18 = arith.constant 0 : index
    %c0_19 = arith.constant 0 : index
    %c0_20 = arith.constant 0 : index
    %55 = vector.load %arg6[%c0_18, %c0_19, %c0_20] : memref<1x8x32xbf16, #tpu.memory_space<vmem>>, vector<1x8x32xbf16>
    %56 = vector.shape_cast %55 : vector<1x8x32xbf16> to vector<8x32xbf16>
    %57 = vector.shape_cast %54 : vector<8x32xbf16> to vector<1x8x32xbf16>
    tpu.vector_store %arg6[%c0_18, %c0_19, %c0_20], %57 {strides = array<i32>} : memref<1x8x32xbf16, #tpu.memory_space<vmem>>, vector<1x8x32xbf16>,
    return
  }
  func.func @transform_0(%arg0: i32) -> (i32, i32, i32) {
    %c0_i32 = arith.constant 0 : i32
    %c0_i32_0 = arith.constant 0 : i32
    %c0_i32_1 = arith.constant 0 : i32
    return %arg0, %c0_i32, %c0_i32_0 : i32, i32, i32
  }
  func.func @transform_1(%arg0: i32) -> (i32, i32) {
    %c0_i32 = arith.constant 0 : i32
    %c0_i32_0 = arith.constant 0 : i32
    %c0_i32_1 = arith.constant 0 : i32
    return %c0_i32, %c0_i32_0 : i32, i32
  }
  func.func @transform_2(%arg0: i32) -> (i32, i32) {
    %c0_i32 = arith.constant 0 : i32
    %c0_i32_0 = arith.constant 0 : i32
    %c0_i32_1 = arith.constant 0 : i32
    return %c0_i32, %c0_i32_0 : i32, i32
  }
  func.func @transform_3(%arg0: i32) -> (i32, i32) {
    %c0_i32 = arith.constant 0 : i32
    %c0_i32_0 = arith.constant 0 : i32
    %c0_i32_1 = arith.constant 0 : i32
    return %c0_i32, %c0_i32_0 : i32, i32
  }
  func.func @transform_4(%arg0: i32) -> (i32, i32) {
    %c0_i32 = arith.constant 0 : i32
    %c0_i32_0 = arith.constant 0 : i32
    %c0_i32_1 = arith.constant 0 : i32
    return %c0_i32, %c0_i32_0 : i32, i32
  }
  func.func @transform_5(%arg0: i32) -> (i32, i32, i32) {
    %c0_i32 = arith.constant 0 : i32
    %c0_i32_0 = arith.constant 0 : i32
    %c0_i32_1 = arith.constant 0 : i32
    return %arg0, %c0_i32, %c0_i32_0 : i32, i32, i32
  }
}

module attributes {stable_mosaic.version = 11 : i64} {
  func.func @_layernorm_kernel(%arg0: i32, %arg1: memref<8x32xbf16, #tpu.memory_space<vmem>>, %arg2: memref<1x32xf32, #tpu.memory_space<vmem>>, %arg3: memref<1x32xf32, #tpu.memory_space<vmem>>, %arg4: memref<8x32xbf16, #tpu.memory_space<vmem>>) attributes {dimension_semantics = [#tpu.dimension_semantics<parallel>], iteration_bounds = array<i64: 2>, scalar_prefetch = 0 : i64, scratch_operands = 0 : i64, tpu.core_type = #tpu.core_type<tc>, window_params = [{transform_indices = @transform_0, window_bounds = array<i64: 8, 32>}, {pipeline_mode = #tpu.pipeline_mode<synchronous>, transform_indices = @transform_1, window_bounds = array<i64: 1, 32>}, {pipeline_mode = #tpu.pipeline_mode<synchronous>, transform_indices = @transform_2, window_bounds = array<i64: 1, 32>}, {transform_indices = @transform_3, window_bounds = array<i64: 8, 32>}]} {
    %c0 = arith.constant 0 : index
    %c0_0 = arith.constant 0 : index
    %0 = vector.load %arg1[%c0, %c0_0] : memref<8x32xbf16, #tpu.memory_space<vmem>>, vector<8x32xbf16>
    %1 = arith.extf %0 : vector<8x32xbf16> to vector<8x32xf32>
    %cst = arith.constant dense<0.000000e+00> : vector<8xf32>
    %2 = vector.multi_reduction <add>, %1, %cst [1] : vector<8x32xf32> to vector<8xf32>
    %3 = vector.shape_cast %2 : vector<8xf32> to vector<8x1xf32>
    %cst_1 = arith.constant 3.200000e+01 : f32
    %4 = vector.broadcast %cst_1 : f32 to vector<8x1xf32>
    %5 = arith.divf %3, %4 : vector<8x1xf32>
    %6 = vector.broadcast %5 : vector<8x1xf32> to vector<8x32xf32>
    %7 = arith.subf %1, %6 : vector<8x32xf32>
    %8 = arith.mulf %7, %7 : vector<8x32xf32>
    %cst_2 = arith.constant dense<0.000000e+00> : vector<8xf32>
    %9 = vector.multi_reduction <add>, %8, %cst_2 [1] : vector<8x32xf32> to vector<8xf32>
    %10 = vector.shape_cast %9 : vector<8xf32> to vector<8x1xf32>
    %cst_3 = arith.constant 3.200000e+01 : f32
    %11 = vector.broadcast %cst_3 : f32 to vector<8x1xf32>
    %12 = arith.divf %10, %11 : vector<8x1xf32>
    %cst_4 = arith.constant 9.99999974E-6 : f32
    %13 = vector.broadcast %cst_4 : f32 to vector<8x1xf32>
    %14 = arith.addf %12, %13 : vector<8x1xf32>
    %15 = math.rsqrt %14 : vector<8x1xf32>
    %16 = vector.broadcast %15 : vector<8x1xf32> to vector<8x32xf32>
    %17 = arith.mulf %7, %16 : vector<8x32xf32>
    %c0_5 = arith.constant 0 : index
    %c0_6 = arith.constant 0 : index
    %18 = vector.load %arg2[%c0_5, %c0_6] : memref<1x32xf32, #tpu.memory_space<vmem>>, vector<1x32xf32>
    %19 = vector.broadcast %18 : vector<1x32xf32> to vector<8x32xf32>
    %20 = arith.mulf %17, %19 : vector<8x32xf32>
    %c0_7 = arith.constant 0 : index
    %c0_8 = arith.constant 0 : index
    %21 = vector.load %arg3[%c0_7, %c0_8] : memref<1x32xf32, #tpu.memory_space<vmem>>, vector<1x32xf32>
    %22 = vector.broadcast %21 : vector<1x32xf32> to vector<8x32xf32>
    %23 = arith.addf %20, %22 : vector<8x32xf32>
    %24 = arith.truncf %23 : vector<8x32xf32> to vector<8x32xbf16>
    %c0_9 = arith.constant 0 : index
    %c0_10 = arith.constant 0 : index
    %25 = vector.load %arg4[%c0_9, %c0_10] : memref<8x32xbf16, #tpu.memory_space<vmem>>, vector<8x32xbf16>
    tpu.vector_store %arg4[%c0_9, %c0_10], %24 {strides = array<i32>} : memref<8x32xbf16, #tpu.memory_space<vmem>>, vector<8x32xbf16>,
    return
  }
  func.func @transform_0(%arg0: i32) -> (i32, i32) {
    %c0_i32 = arith.constant 0 : i32
    %c0_i32_0 = arith.constant 0 : i32
    return %arg0, %c0_i32 : i32, i32
  }
  func.func @transform_1(%arg0: i32) -> (i32, i32) {
    %c0_i32 = arith.constant 0 : i32
    %c0_i32_0 = arith.constant 0 : i32
    %c0_i32_1 = arith.constant 0 : i32
    return %c0_i32, %c0_i32_0 : i32, i32
  }
  func.func @transform_2(%arg0: i32) -> (i32, i32) {
    %c0_i32 = arith.constant 0 : i32
    %c0_i32_0 = arith.constant 0 : i32
    %c0_i32_1 = arith.constant 0 : i32
    return %c0_i32, %c0_i32_0 : i32, i32
  }
  func.func @transform_3(%arg0: i32) -> (i32, i32) {
    %c0_i32 = arith.constant 0 : i32
    %c0_i32_0 = arith.constant 0 : i32
    return %arg0, %c0_i32 : i32, i32
  }
}

</mosaic_0001>

<llo_original>
// kernel: conformer_forward.29
$region0: #{conformer_forward.29}
  #allocation0 [shape = 'u32[]', space=smem, size = 0x4, offset = 0x4, fixed_abs, tag = 'smem constant byte address 0x4 - core index']
  #allocation1 [shape = 'u32[144,128]{1,0:T(1,128)}', space=vmem, size = 0x12000, scoped, tag = 'internal scratch']
  %s0 = inlined_call_operand.vmem [shape: bf16[256,9], index: 0, kind: input, shape index: {}]
  %s1 = inlined_call_operand.vmem [shape: bf16[9,32], index: 1, kind: input, shape index: {}]
  %s2 = inlined_call_operand.vmem [shape: f32[1,32], index: 2, kind: input, shape index: {}]
  %s3 = inlined_call_operand.vmem [shape: bf16[256,32], index: 3, kind: output, shape index: {}]
  %s4 = sld [smem:[#allocation0]]
  $region45: #{conformer_forward.29} parent=0
    _
  %s6 = ssub.s32 1, %s4
  %s7 = scalar_select 0, %s6, %s4
  loop: start=0, step=1, limit=4
  $region2: #{conformer_forward.29} parent=0 // loop_pre_header
    _
  $region3: #{conformer_forward.29} parent=0 // loop_header
    %s9 = sphi 0, %s13
    %p10 = scmp.ge.s32.totalorder %s9, 4
    %s16 = sphi 0, %s28
    %s17 = sphi 0, %s24
    %s18 = sphi 0, %s16
    %s19 = sphi 0, %s17
    %s20 = sphi 0, %s18
    %s21 = sphi 0, %s19
    %s31 = sphi 0, %s33
    %s34 = sphi 0, %s31
    %s35 = sphi 0, %s34
    %s51 = sphi 0, %s35
    %s57 = sphi 0, %s59
    %s60 = sphi 0, %s57
    %s61 = sphi 0, %s60
    %s77 = sphi 0, %s61
    %s83 = sphi 0, %s85
    %s86 = sphi 0, %s83
    %s87 = sphi 0, %s86
    %s103 = sphi 0, %s87
    %s111 = sphi 0, %s113
    %s114 = sphi 0, %s111
    %s115 = sphi 0, %s114
    %s131 = sphi 0, %s115
  $region4: #{conformer_forward.29} parent=0 // loop_header_branch
    %12 = sbr.rel (%p10) target = $region8
  $region5: #{conformer_forward.29} parent=0 // loop_body
    %s14 = ssub.s32 %s9, 1
    %s15 = ssub.s32 %s9, 2
    %s22 = sadd.s32 1, %s17
    %p23 = scmp.ge.s32.totalorder %s22, 1
    %s24 = scalar_select %p23, 0, %s22
    %s25 = sadd.s32 1, %s16
    %s26 = scalar_select %p23, %s25, %s16
    %p27 = scmp.ge.s32.totalorder %s26, 2
    %s28 = scalar_select %p27, 0, %s26
    %s29 = ssub.s32 %s16, %s28
    %p30 = scmp.eq.s32.totalorder %s29, 0
    %s32 = sadd.s32 %s31, 1
    %s33 = scalar_select %p30, %s31, %s32
    %p36 = pneg %p30
    %p37 = scmp.eq.s32.totalorder %s9, 1
    %p38 = por %p36, %p37
    %p39 = scmp.ne.s32.totalorder %s31, %s34
    %p40 = scmp.eq.s32.totalorder %s9, 0
    %p41 = por %p39, %p40
    %p42 = scmp.ne.s32.totalorder %s31, %s34
    %p43 = scmp.eq.s32.totalorder %s14, 1
    %p44 = por %p42, %p43
    %p45 = scmp.ne.s32.totalorder %s34, %s35
    %p46 = scmp.eq.s32.totalorder %s14, 0
    %p47 = por %p45, %p46
    %p48 = scmp.ne.s32.totalorder %s34, %s35
    %p49 = scmp.eq.s32.totalorder %s15, 1
    %p50 = por %p48, %p49
    %p52 = scmp.ne.s32.totalorder %s35, %s51
    %p53 = scmp.eq.s32.totalorder %s15, 0
    %p54 = por %p52, %p53
    %s55 = ssub.s32 %s17, %s24
    %p56 = scmp.eq.s32.totalorder %s55, 0
    %s58 = sadd.s32 %s57, 1
    %s59 = scalar_select %p56, %s57, %s58
    %p62 = pneg %p56
    %p63 = scmp.eq.s32.totalorder %s9, 1
    %p64 = por %p62, %p63
    %p65 = scmp.ne.s32.totalorder %s57, %s60
    %p66 = scmp.eq.s32.totalorder %s9, 0
    %p67 = por %p65, %p66
    %p68 = scmp.ne.s32.totalorder %s57, %s60
    %p69 = scmp.eq.s32.totalorder %s14, 1
    %p70 = por %p68, %p69
    %p71 = scmp.ne.s32.totalorder %s60, %s61
    %p72 = scmp.eq.s32.totalorder %s14, 0
    %p73 = por %p71, %p72
    %p74 = scmp.ne.s32.totalorder %s60, %s61
    %p75 = scmp.eq.s32.totalorder %s15, 1
    %p76 = por %p74, %p75
    %p78 = scmp.ne.s32.totalorder %s61, %s77
    %p79 = scmp.eq.s32.totalorder %s15, 0
    %p80 = por %p78, %p79
    %s81 = ssub.s32 %s17, %s24
    %p82 = scmp.eq.s32.totalorder %s81, 0
    %s84 = sadd.s32 %s83, 1
    %s85 = scalar_select %p82, %s83, %s84
    %p88 = pneg %p82
    %p89 = scmp.eq.s32.totalorder %s9, 1
    %p90 = por %p88, %p89
    %p91 = scmp.ne.s32.totalorder %s83, %s86
    %p92 = scmp.eq.s32.totalorder %s9, 0
    %p93 = por %p91, %p92
    %p94 = scmp.ne.s32.totalorder %s83, %s86
    %p95 = scmp.eq.s32.totalorder %s14, 1
    %p96 = por %p94, %p95
    %p97 = scmp.ne.s32.totalorder %s86, %s87
    %p98 = scmp.eq.s32.totalorder %s14, 0
    %p99 = por %p97, %p98
    %p100 = scmp.ne.s32.totalorder %s86, %s87
    %p101 = scmp.eq.s32.totalorder %s15, 1
    %p102 = por %p100, %p101
    %p104 = scmp.ne.s32.totalorder %s87, %s103
    %p105 = scmp.eq.s32.totalorder %s15, 0
    %p106 = por %p104, %p105
    %s107 = ssub.s32 %s16, %s28
    %s108 = ssub.s32 %s17, %s24
    %s109 = sor.u32 %s107, %s108
    %p110 = scmp.eq.s32.totalorder %s109, 0
    %s112 = sadd.s32 %s111, 1
    %s113 = scalar_select %p110, %s111, %s112
    %p116 = pneg %p110
    %p117 = scmp.eq.s32.totalorder %s9, 1
    %p118 = por %p116, %p117
    %p119 = scmp.ne.s32.totalorder %s111, %s114
    %p120 = scmp.eq.s32.totalorder %s9, 0
    %p121 = por %p119, %p120
    %p122 = scmp.ne.s32.totalorder %s111, %s114
    %p123 = scmp.eq.s32.totalorder %s14, 1
    %p124 = por %p122, %p123
    %p125 = scmp.ne.s32.totalorder %s114, %s115
    %p126 = scmp.eq.s32.totalorder %s14, 0
    %p127 = por %p125, %p126
    %p128 = scmp.ne.s32.totalorder %s114, %s115
    %p129 = scmp.eq.s32.totalorder %s15, 1
    %p130 = por %p128, %p129
    %p132 = scmp.ne.s32.totalorder %s115, %s131
    %p133 = scmp.eq.s32.totalorder %s15, 0
    %p134 = por %p132, %p133
    %p135 = scmp.le.s32.totalorder 1, %s9
    %p136 = scmp.lt.s32.totalorder %s9, 3
    %p137 = pnand %p135, %p136
    %p138 = pneg %p137
    // Predicated region
    $region9: #{conformer_forward.29} parent=5 // pred_check
      _
    $region10: #{conformer_forward.29} parent=5 // pred_check_branch
      %140 = sbr.rel (%p137) target = $region12
    $region11: #{conformer_forward.29} parent=5 // pred_region
      %s141 = ssub.s32 %s9, 1
      // Predicated region
      $region13: #{conformer_forward.29} parent=11 // pred_check
        %p142 = pneg %p73
      $region14: #{conformer_forward.29} parent=11 // pred_check_branch
        %144 = sbr.rel (%p142) target = $region16
      $region15: #{conformer_forward.29} parent=11 // pred_region
        %p145 = scmp.lt.s32.totalorder %s19, 0
        %s146 = scalar_select %p145, %s19, 0
        %s147 = smul.addr %s146, 4
        %s148 = scalar_lea.vmem %s1, %s147
      $region16: #{conformer_forward.29} parent=11 // pred_fallthru
        _
      // Predicated region
      $region17: #{conformer_forward.29} parent=11 // pred_check
        %p149 = pneg %p99
      $region18: #{conformer_forward.29} parent=11 // pred_check_branch
        %151 = sbr.rel (%p149) target = $region20
      $region19: #{conformer_forward.29} parent=11 // pred_region
        %p152 = scmp.lt.s32.totalorder %s19, 0
        %s153 = scalar_select %p152, %s19, 0
        %s154 = scalar_lea.vmem %s2, %s153
      $region20: #{conformer_forward.29} parent=11 // pred_fallthru
        _
    $region12: #{conformer_forward.29} parent=5 // pred_fallthru
      _
    %p155 = scmp.lt.s32.totalorder %s9, 2
    // Predicated region
    $region21: #{conformer_forward.29} parent=5 // pred_check
      %p156 = pneg %p155
    $region22: #{conformer_forward.29} parent=5 // pred_check_branch
      %158 = sbr.rel (%p156) target = $region24
    $region23: #{conformer_forward.29} parent=5 // pred_region
      // Predicated region
      $region25: #{conformer_forward.29} parent=23 // pred_check
        %p159 = pneg %p41
      $region26: #{conformer_forward.29} parent=23 // pred_check_branch
        %161 = sbr.rel (%p159) target = $region28
      $region27: #{conformer_forward.29} parent=23 // pred_region
        %s162 = smul.u32 16, %s16
        %p163 = scmp.lt.s32.totalorder %s162, 31
        %s164 = scalar_select %p163, %s162, 31
        %s165 = smul.addr %s164, 4
        %s166 = scalar_lea.vmem %s0, %s165
        %s167 = smul.u32 16, %s16
      $region28: #{conformer_forward.29} parent=23 // pred_fallthru
        _
    $region24: #{conformer_forward.29} parent=5 // pred_fallthru
      _
    %p168 = scmp.le.s32.totalorder 1, %s9
    %p169 = scmp.lt.s32.totalorder %s9, 3
    %p170 = pnand %p168, %p169
    %p171 = pneg %p170
    // Predicated region
    $region29: #{conformer_forward.29} parent=5 // pred_check
      _
    $region30: #{conformer_forward.29} parent=5 // pred_check_branch
      %173 = sbr.rel (%p170) target = $region32
    $region31: #{conformer_forward.29} parent=5 // pred_region
      %s174 = ssub.s32 %s9, 1
      %s175 = smul.u32 16, %s18
      %p176 = scmp.lt.s32.totalorder %s175, 31
      %s177 = scalar_select %p176, %s175, 31
      %s178 = smul.addr %s177, 4
      %s179 = scalar_lea.vmem %s0, %s178
      %p180 = pneg %p47
      %p181 = pneg %p44
      %p182 = scmp.lt.s32.totalorder %s19, 0
      %s183 = scalar_select %p182, %s19, 0
      %s184 = smul.addr %s183, 4
      %s185 = scalar_lea.vmem %s1, %s184
      %p186 = pneg %p73
      %p187 = pneg %p70
      %p188 = scmp.lt.s32.totalorder %s19, 0
      %s189 = scalar_select %p188, %s19, 0
      %s190 = scalar_lea.vmem %s2, %s189
      %p191 = pneg %p99
      %p192 = pneg %p96
      %p193 = pneg %p127
      %p194 = pneg %p124
      %s195 = smul.u32 16, %s18
      %p196 = scmp.lt.s32.totalorder %s195, 31
      %s197 = scalar_select %p196, %s195, 31
      %p198 = scmp.lt.s32.totalorder %s19, 0
      %s199 = scalar_select %p198, %s19, 0
      %s200 = sadd.s32 %s199, %s197
      %s201 = smul.addr %s200, 4
      %s202 = scalar_lea.vmem %s3, %s201
      %s203 = smul.u32 16, %s18
      %p204 = scmp.lt.s32.totalorder %s203, 31
      %s205 = scalar_select %p204, %s203, 31
      %s206 = smul.addr %s205, 4
      %s207 = scalar_lea.vmem %s0, %s206
      %s208 = smul.u32 16, %s18
      %p209 = scmp.lt.s32.totalorder %s19, 0
      %s210 = scalar_select %p209, %s19, 0
      %s211 = smul.addr %s210, 4
      %s212 = scalar_lea.vmem %s1, %s211
      %p213 = scmp.lt.s32.totalorder %s19, 0
      %s214 = scalar_select %p213, %s19, 0
      %s215 = scalar_lea.vmem %s2, %s214
      %s216 = smul.u32 16, %s18
      %p217 = scmp.lt.s32.totalorder %s216, 31
      %s218 = scalar_select %p217, %s216, 31
      %p219 = scmp.lt.s32.totalorder %s19, 0
      %s220 = scalar_select %p219, %s19, 0
      %s221 = sadd.s32 %s220, %s218
      %s222 = smul.addr %s221, 4
      %s223 = scalar_lea.vmem %s3, %s222
      %s224 = smul.u32 16, %s18
      %v226 = vld [vmem:[%s207] sm:$0xf]
      %v227 = vld [vmem:[%s207 + $0x4] sm:$0xf]
      %v228 = vld [vmem:[%s207 + $0x8] sm:$0xf]
      %v229 = vld [vmem:[%s207 + $0xc] sm:$0xf]
      %v230 = vld [vmem:[%s207 + $0x10] sm:$0xf]
      %v231 = vld [vmem:[%s207 + $0x14] sm:$0xf]
      %v232 = vld [vmem:[%s207 + $0x18] sm:$0xf]
      %v233 = vld [vmem:[%s207 + $0x1c] sm:$0xf]
      %v234 = vld [vmem:[%s207 + $0x20] sm:$0xf]
      %v235 = vld [vmem:[%s207 + $0x24] sm:$0xf]
      %v236 = vld [vmem:[%s207 + $0x28] sm:$0xf]
      %v237 = vld [vmem:[%s207 + $0x2c] sm:$0xf]
      %v238 = vld [vmem:[%s207 + $0x30] sm:$0xf]
      %v239 = vld [vmem:[%s207 + $0x34] sm:$0xf]
      %v240 = vld [vmem:[%s207 + $0x38] sm:$0xf]
      %v241 = vld [vmem:[%s207 + $0x3c] sm:$0xf]
      %v242 = vld [vmem:[%s212] sm:$0xf]
      %v243 = vld [vmem:[%s212 + $0x4] sm:$0x1]
      %v244 = vld [vmem:[%s215] sm:$0x1]
      %v246 = vlaneseq
      %v247 = vshrl.u32 %v246, 7
      %v248 = vsub.s32 0, %v247
      %v249 = vrot.slane %v244, %v248
      %v267 = vunpack.c.l.b16 %v226
      %v268 = vunpack.c.l.b16 %v227
      %v269 = vunpack.c.l.b16 %v228
      %v270 = vunpack.c.l.b16 %v229
      %v271 = vunpack.c.l.b16 %v230
      %v272 = vunpack.c.l.b16 %v231
      %v273 = vunpack.c.l.b16 %v232
      %v274 = vunpack.c.l.b16 %v233
      %v275 = vunpack.c.l.b16 %v234
      %v276 = vunpack.c.l.b16 %v235
      %v277 = vunpack.c.l.b16 %v236
      %v278 = vunpack.c.l.b16 %v237
      %v279 = vunpack.c.l.b16 %v238
      %v280 = vunpack.c.l.b16 %v239
      %v281 = vunpack.c.l.b16 %v240
      %v282 = vunpack.c.l.b16 %v241
      %v283 = vpack.c.b16 %v268, %v267
      %v284 = vpack.c.b16 %v270, %v269
      %v285 = vpack.c.b16 %v272, %v271
      %v286 = vpack.c.b16 %v274, %v273
      %v287 = vpack.c.b16 %v276, %v275
      %v288 = vpack.c.b16 %v278, %v277
      %v289 = vpack.c.b16 %v280, %v279
      %v290 = vpack.c.b16 %v282, %v281
      %v293 = vunpack.c.l.b16 %v242
      %v294 = vunpack.c.l.b16 %v243
      %v295 = vpack.c.b16 %v294, %v293
      %vm296 = vcmask 72704
      %v298 = vsel %vm296, %v283, 0
      %v301 = vsel %vm296, %v284, 0
      %v304 = vsel %vm296, %v285, 0
      %v307 = vsel %vm296, %v286, 0
      %v310 = vsel %vm296, %v287, 0
      %v313 = vsel %vm296, %v288, 0
      %v316 = vsel %vm296, %v289, 0
      %v319 = vsel %vm296, %v290, 0
      %vm321 = vcmask 1043456
      %vm322 = vcmask 1044480
      %v323 = vsel %vm321, 4294967295, 65535
      %v324 = vsel %vm322, %v323, 0
      %v326 = vand.u32 %v295, %v324
      %328 = vmatprep.subr.bf16.mxu0 0
      %329 = vmatpush1.bf16.msra.mxu0 0
      %330 = vmatprep.subr.bf16.mxu0 0
      %331 = vmatpush1.bf16.msra.mxu0 0
      %332 = vmatprep.subr.bf16.mxu0 0
      %333 = vmatpush1.bf16.msra.mxu0 0
      %334 = vmatprep.subr.bf16.mxu0 0
      %335 = vmatpush1.bf16.msra.mxu0 0
      %336 = vmatprep.subr.bf16.mxu0 0
      %337 = vmatpush1.bf16.msra.mxu0 0
      %338 = vmatprep.subr.bf16.mxu0 0
      %339 = vmatpush1.bf16.msra.mxu0 0
      %340 = vmatprep.subr.bf16.mxu0 0
      %341 = vmatpush1.bf16.msra.mxu0 0
      %342 = vmatprep.subr.bf16.mxu0 0
      %343 = vmatpush1.bf16.msra.mxu0 %v326
      %344 = vmatprep.subr.bf16.mxu0 0
      %345 = vmatpush2.bf16.msra.mxu0 0
      %346 = vmatprep.subr.bf16.mxu0 0
      %347 = vmatpush2.bf16.msra.mxu0 0
      %348 = vmatprep.subr.bf16.mxu0 0
      %349 = vmatpush2.bf16.msra.mxu0 0
      %350 = vmatprep.subr.bf16.mxu0 0
      %351 = vmatpush2.bf16.msra.mxu0 0
      %352 = vmatprep.subr.bf16.mxu0 0
      %353 = vmatpush2.bf16.msra.mxu0 0
      %354 = vmatprep.subr.bf16.mxu0 0
      %355 = vmatpush2.bf16.msra.mxu0 0
      %356 = vmatprep.subr.bf16.mxu0 0
      %357 = vmatpush2.bf16.msra.mxu0 0
      %358 = vmatprep.subr.bf16.mxu0 0
      %359 = vmatpush2.bf16.msra.mxu0 0
      %360 = vmatprep.mubr.bf16.mxu0 0
      %361 = vmatmul.mubr.bf16.gmra.mxu0 %v298
      %v362 = vpop.f32.mrf.mxu0
      %v363 = vadd.f32 %v249, %v362
      %v364 = vpop.f32.mrf.mxu0
      %v365 = vpop.f32.mrf.mxu0
      %v366 = vadd.f32 %v249, %v365
      %v367 = vpop.f32.mrf.mxu0
      %368 = vmatprep.mubr.bf16.mxu0 0
      %369 = vmatmul.mubr.bf16.gmra.mxu0 %v301
      %v370 = vpop.f32.mrf.mxu0
      %v371 = vadd.f32 %v249, %v370
      %v372 = vpop.f32.mrf.mxu0
      %v373 = vpop.f32.mrf.mxu0
      %v374 = vadd.f32 %v249, %v373
      %v375 = vpop.f32.mrf.mxu0
      %376 = vmatprep.mubr.bf16.mxu0 0
      %377 = vmatmul.mubr.bf16.gmra.mxu0 %v304
      %v378 = vpop.f32.mrf.mxu0
      %v379 = vadd.f32 %v249, %v378
      %v380 = vpop.f32.mrf.mxu0
      %v381 = vpop.f32.mrf.mxu0
      %v382 = vadd.f32 %v249, %v381
      %v383 = vpop.f32.mrf.mxu0
      %384 = vmatprep.mubr.bf16.mxu0 0
      %385 = vmatmul.mubr.bf16.gmra.mxu0 %v307
      %v386 = vpop.f32.mrf.mxu0
      %v387 = vadd.f32 %v249, %v386
      %v388 = vpop.f32.mrf.mxu0
      %v389 = vpop.f32.mrf.mxu0
      %v390 = vadd.f32 %v249, %v389
      %v391 = vpop.f32.mrf.mxu0
      %392 = vmatprep.mubr.bf16.mxu0 0
      %393 = vmatmul.mubr.bf16.gmra.mxu0 %v310
      %v394 = vpop.f32.mrf.mxu0
      %v395 = vadd.f32 %v249, %v394
      %v396 = vpop.f32.mrf.mxu0
      %v397 = vpop.f32.mrf.mxu0
      %v398 = vadd.f32 %v249, %v397
      %v399 = vpop.f32.mrf.mxu0
      %400 = vmatprep.mubr.bf16.mxu0 0
      %401 = vmatmul.mubr.bf16.gmra.mxu0 %v313
      %v402 = vpop.f32.mrf.mxu0
      %v403 = vadd.f32 %v249, %v402
      %v404 = vpop.f32.mrf.mxu0
      %v405 = vpop.f32.mrf.mxu0
      %v406 = vadd.f32 %v249, %v405
      %v407 = vpop.f32.mrf.mxu0
      %408 = vmatprep.mubr.bf16.mxu0 0
      %409 = vmatmul.mubr.bf16.gmra.mxu0 %v316
      %v410 = vpop.f32.mrf.mxu0
      %v411 = vadd.f32 %v249, %v410
      %v412 = vpop.f32.mrf.mxu0
      %v413 = vpop.f32.mrf.mxu0
      %v414 = vadd.f32 %v249, %v413
      %v415 = vpop.f32.mrf.mxu0
      %416 = vmatprep.mubr.bf16.mxu0 0
      %417 = vmatmul.mubr.bf16.gmra.mxu0 %v319
      %v418 = vpop.f32.mrf.mxu0
      %v419 = vadd.f32 %v249, %v418
      %v420 = vpop.f32.mrf.mxu0
      %v421 = vpop.f32.mrf.mxu0
      %v422 = vadd.f32 %v249, %v421
      %v423 = vpop.f32.mrf.mxu0
      %424 = vdwg.mxu0
      %v425 = vmax.f32 %v363, 0.0
      %v426 = vmax.f32 %v366, 0.0
      %v427 = vmax.f32 %v371, 0.0
      %v428 = vmax.f32 %v374, 0.0
      %v429 = vmax.f32 %v379, 0.0
      %v430 = vmax.f32 %v382, 0.0
      %v431 = vmax.f32 %v387, 0.0
      %v432 = vmax.f32 %v390, 0.0
      %v433 = vmax.f32 %v395, 0.0
      %v434 = vmax.f32 %v398, 0.0
      %v435 = vmax.f32 %v403, 0.0
      %v436 = vmax.f32 %v406, 0.0
      %v437 = vmax.f32 %v411, 0.0
      %v438 = vmax.f32 %v414, 0.0
      %v439 = vmax.f32 %v419, 0.0
      %v440 = vmax.f32 %v422, 0.0
      %v441 = vpack.c.bf16 %v426, %v425
      %v442 = vpack.c.bf16 %v428, %v427
      %v443 = vpack.c.bf16 %v430, %v429
      %v444 = vpack.c.bf16 %v432, %v431
      %v445 = vpack.c.bf16 %v434, %v433
      %v446 = vpack.c.bf16 %v436, %v435
      %v447 = vpack.c.bf16 %v438, %v437
      %v448 = vpack.c.bf16 %v440, %v439
      %v457 = vunpack.c.l.b16 %v441
      %v458 = vunpack.c.h.b16 %v441
      %v459 = vunpack.c.l.b16 %v442
      %v460 = vunpack.c.h.b16 %v442
      %v461 = vunpack.c.l.b16 %v443
      %v462 = vunpack.c.h.b16 %v443
      %v463 = vunpack.c.l.b16 %v444
      %v464 = vunpack.c.h.b16 %v444
      %v465 = vunpack.c.l.b16 %v445
      %v466 = vunpack.c.h.b16 %v445
      %v467 = vunpack.c.l.b16 %v446
      %v468 = vunpack.c.h.b16 %v446
      %v469 = vunpack.c.l.b16 %v447
      %v470 = vunpack.c.h.b16 %v447
      %v471 = vunpack.c.l.b16 %v448
      %v472 = vunpack.c.h.b16 %v448
      %v473 = vpack.c.b16 %v457, %v457
      %v474 = vpack.c.b16 %v458, %v458
      %v475 = vpack.c.b16 %v459, %v459
      %v476 = vpack.c.b16 %v460, %v460
      %v477 = vpack.c.b16 %v461, %v461
      %v478 = vpack.c.b16 %v462, %v462
      %v479 = vpack.c.b16 %v463, %v463
      %v480 = vpack.c.b16 %v464, %v464
      %v481 = vpack.c.b16 %v465, %v465
      %v482 = vpack.c.b16 %v466, %v466
      %v483 = vpack.c.b16 %v467, %v467
      %v484 = vpack.c.b16 %v468, %v468
      %v485 = vpack.c.b16 %v469, %v469
      %v486 = vpack.c.b16 %v470, %v470
      %v487 = vpack.c.b16 %v471, %v471
      %v488 = vpack.c.b16 %v472, %v472
      %vm505 = vcmask 257024
      %506 = vst.msk [vmem:[%s223] sm:$0xf] %vm505, %v473
      %507 = vst.msk [vmem:[%s223 + $0x4] sm:$0xf] %vm505, %v474
      %508 = vst.msk [vmem:[%s223 + $0x8] sm:$0xf] %vm505, %v475
      %509 = vst.msk [vmem:[%s223 + $0xc] sm:$0xf] %vm505, %v476
      %510 = vst.msk [vmem:[%s223 + $0x10] sm:$0xf] %vm505, %v477
      %511 = vst.msk [vmem:[%s223 + $0x14] sm:$0xf] %vm505, %v478
      %512 = vst.msk [vmem:[%s223 + $0x18] sm:$0xf] %vm505, %v479
      %513 = vst.msk [vmem:[%s223 + $0x1c] sm:$0xf] %vm505, %v480
      %514 = vst.msk [vmem:[%s223 + $0x20] sm:$0xf] %vm505, %v481
      %515 = vst.msk [vmem:[%s223 + $0x24] sm:$0xf] %vm505, %v482
      %516 = vst.msk [vmem:[%s223 + $0x28] sm:$0xf] %vm505, %v483
      %517 = vst.msk [vmem:[%s223 + $0x2c] sm:$0xf] %vm505, %v484
      %518 = vst.msk [vmem:[%s223 + $0x30] sm:$0xf] %vm505, %v485
      %519 = vst.msk [vmem:[%s223 + $0x34] sm:$0xf] %vm505, %v486
      %520 = vst.msk [vmem:[%s223 + $0x38] sm:$0xf] %vm505, %v487
      %521 = vst.msk [vmem:[%s223 + $0x3c] sm:$0xf] %vm505, %v488
      %s522 = smul.u32 16, %s18
      %p523 = scmp.lt.s32.totalorder %s522, 31
      %s524 = scalar_select %p523, %s522, 31
      %p525 = scmp.lt.s32.totalorder %s19, 0
      %s526 = scalar_select %p525, %s19, 0
      %s527 = sadd.s32 %s526, %s524
      %s528 = smul.addr %s527, 4
      %s529 = scalar_lea.vmem %s3, %s528
      // Predicated region
      $region33: #{conformer_forward.29} parent=31 // pred_check
        %p530 = pneg %p124
      $region34: #{conformer_forward.29} parent=31 // pred_check_branch
        %532 = sbr.rel (%p530) target = $region36
      $region35: #{conformer_forward.29} parent=31 // pred_region
        %s533 = smul.u32 16, %s18
      $region36: #{conformer_forward.29} parent=31 // pred_fallthru
        _
    $region32: #{conformer_forward.29} parent=5 // pred_fallthru
      _
    %p534 = scmp.le.s32.totalorder 2, %s9
    // Predicated region
    $region37: #{conformer_forward.29} parent=5 // pred_check
      %p535 = pneg %p534
    $region38: #{conformer_forward.29} parent=5 // pred_check_branch
      %537 = sbr.rel (%p535) target = $region40
    $region39: #{conformer_forward.29} parent=5 // pred_region
      %s538 = ssub.s32 %s9, 2
      // Predicated region
      $region41: #{conformer_forward.29} parent=39 // pred_check
        %p539 = pneg %p130
      $region42: #{conformer_forward.29} parent=39 // pred_check_branch
        %541 = sbr.rel (%p539) target = $region44
      $region43: #{conformer_forward.29} parent=39 // pred_region
        %s542 = smul.u32 16, %s20
        %p543 = scmp.lt.s32.totalorder %s542, 31
        %s544 = scalar_select %p543, %s542, 31
        %p545 = scmp.lt.s32.totalorder %s21, 0
        %s546 = scalar_select %p545, %s21, 0
        %s547 = sadd.s32 %s546, %s544
        %s548 = smul.addr %s547, 4
        %s549 = scalar_lea.vmem %s3, %s548
      $region44: #{conformer_forward.29} parent=39 // pred_fallthru
        _
    $region40: #{conformer_forward.29} parent=5 // pred_fallthru
      _
  $region6: #{conformer_forward.29} parent=0 // loop_footer
    %s13 = sadd.s32 1, %s9
  $region7: #{conformer_forward.29} parent=0 // loop_footer_branch
    %8 = sbr.rel target = $region3
  $region8: #{conformer_forward.29} parent=0 // loop_exit
    _

// kernel: conformer_forward.30
$region0: #{conformer_forward.30}
  #allocation0 [shape = 'u32[]', space=smem, size = 0x4, offset = 0x4, fixed_abs, tag = 'smem constant byte address 0x4 - core index']
  #allocation1 [shape = 'u32[144,128]{1,0:T(1,128)}', space=vmem, size = 0x12000, scoped, tag = 'internal scratch']
  %s0 = inlined_call_operand.vmem [shape: bf16[64,288], index: 0, kind: input, shape index: {}]
  %s1 = inlined_call_operand.vmem [shape: bf16[288,32], index: 1, kind: input, shape index: {}]
  %s2 = inlined_call_operand.vmem [shape: f32[1,32], index: 2, kind: input, shape index: {}]
  %s3 = inlined_call_operand.vmem [shape: bf16[64,32], index: 3, kind: output, shape index: {}]
  %s4 = sld [smem:[#allocation0]]
  $region45: #{conformer_forward.30} parent=0
    _
  %s6 = ssub.s32 1, %s4
  %s7 = scalar_select 0, %s6, %s4
  loop: start=0, step=1, limit=4
  $region2: #{conformer_forward.30} parent=0 // loop_pre_header
    _
  $region3: #{conformer_forward.30} parent=0 // loop_header
    %s9 = sphi 0, %s13
    %p10 = scmp.ge.s32.totalorder %s9, 4
    %s16 = sphi 0, %s28
    %s17 = sphi 0, %s24
    %s18 = sphi 0, %s16
    %s19 = sphi 0, %s17
    %s20 = sphi 0, %s18
    %s21 = sphi 0, %s19
    %s31 = sphi 0, %s33
    %s34 = sphi 0, %s31
    %s35 = sphi 0, %s34
    %s51 = sphi 0, %s35
    %s57 = sphi 0, %s59
    %s60 = sphi 0, %s57
    %s61 = sphi 0, %s60
    %s77 = sphi 0, %s61
    %s83 = sphi 0, %s85
    %s86 = sphi 0, %s83
    %s87 = sphi 0, %s86
    %s103 = sphi 0, %s87
    %s111 = sphi 0, %s113
    %s114 = sphi 0, %s111
    %s115 = sphi 0, %s114
    %s131 = sphi 0, %s115
  $region4: #{conformer_forward.30} parent=0 // loop_header_branch
    %12 = sbr.rel (%p10) target = $region8
  $region5: #{conformer_forward.30} parent=0 // loop_body
    %s14 = ssub.s32 %s9, 1
    %s15 = ssub.s32 %s9, 2
    %s22 = sadd.s32 1, %s17
    %p23 = scmp.ge.s32.totalorder %s22, 1
    %s24 = scalar_select %p23, 0, %s22
    %s25 = sadd.s32 1, %s16
    %s26 = scalar_select %p23, %s25, %s16
    %p27 = scmp.ge.s32.totalorder %s26, 2
    %s28 = scalar_select %p27, 0, %s26
    %s29 = ssub.s32 %s16, %s28
    %p30 = scmp.eq.s32.totalorder %s29, 0
    %s32 = sadd.s32 %s31, 1
    %s33 = scalar_select %p30, %s31, %s32
    %p36 = pneg %p30
    %p37 = scmp.eq.s32.totalorder %s9, 1
    %p38 = por %p36, %p37
    %p39 = scmp.ne.s32.totalorder %s31, %s34
    %p40 = scmp.eq.s32.totalorder %s9, 0
    %p41 = por %p39, %p40
    %p42 = scmp.ne.s32.totalorder %s31, %s34
    %p43 = scmp.eq.s32.totalorder %s14, 1
    %p44 = por %p42, %p43
    %p45 = scmp.ne.s32.totalorder %s34, %s35
    %p46 = scmp.eq.s32.totalorder %s14, 0
    %p47 = por %p45, %p46
    %p48 = scmp.ne.s32.totalorder %s34, %s35
    %p49 = scmp.eq.s32.totalorder %s15, 1
    %p50 = por %p48, %p49
    %p52 = scmp.ne.s32.totalorder %s35, %s51
    %p53 = scmp.eq.s32.totalorder %s15, 0
    %p54 = por %p52, %p53
    %s55 = ssub.s32 %s17, %s24
    %p56 = scmp.eq.s32.totalorder %s55, 0
    %s58 = sadd.s32 %s57, 1
    %s59 = scalar_select %p56, %s57, %s58
    %p62 = pneg %p56
    %p63 = scmp.eq.s32.totalorder %s9, 1
    %p64 = por %p62, %p63
    %p65 = scmp.ne.s32.totalorder %s57, %s60
    %p66 = scmp.eq.s32.totalorder %s9, 0
    %p67 = por %p65, %p66
    %p68 = scmp.ne.s32.totalorder %s57, %s60
    %p69 = scmp.eq.s32.totalorder %s14, 1
    %p70 = por %p68, %p69
    %p71 = scmp.ne.s32.totalorder %s60, %s61
    %p72 = scmp.eq.s32.totalorder %s14, 0
    %p73 = por %p71, %p72
    %p74 = scmp.ne.s32.totalorder %s60, %s61
    %p75 = scmp.eq.s32.totalorder %s15, 1
    %p76 = por %p74, %p75
    %p78 = scmp.ne.s32.totalorder %s61, %s77
    %p79 = scmp.eq.s32.totalorder %s15, 0
    %p80 = por %p78, %p79
    %s81 = ssub.s32 %s17, %s24
    %p82 = scmp.eq.s32.totalorder %s81, 0
    %s84 = sadd.s32 %s83, 1
    %s85 = scalar_select %p82, %s83, %s84
    %p88 = pneg %p82
    %p89 = scmp.eq.s32.totalorder %s9, 1
    %p90 = por %p88, %p89
    %p91 = scmp.ne.s32.totalorder %s83, %s86
    %p92 = scmp.eq.s32.totalorder %s9, 0
    %p93 = por %p91, %p92
    %p94 = scmp.ne.s32.totalorder %s83, %s86
    %p95 = scmp.eq.s32.totalorder %s14, 1
    %p96 = por %p94, %p95
    %p97 = scmp.ne.s32.totalorder %s86, %s87
    %p98 = scmp.eq.s32.totalorder %s14, 0
    %p99 = por %p97, %p98
    %p100 = scmp.ne.s32.totalorder %s86, %s87
    %p101 = scmp.eq.s32.totalorder %s15, 1
    %p102 = por %p100, %p101
    %p104 = scmp.ne.s32.totalorder %s87, %s103
    %p105 = scmp.eq.s32.totalorder %s15, 0
    %p106 = por %p104, %p105
    %s107 = ssub.s32 %s16, %s28
    %s108 = ssub.s32 %s17, %s24
    %s109 = sor.u32 %s107, %s108
    %p110 = scmp.eq.s32.totalorder %s109, 0
    %s112 = sadd.s32 %s111, 1
    %s113 = scalar_select %p110, %s111, %s112
    %p116 = pneg %p110
    %p117 = scmp.eq.s32.totalorder %s9, 1
    %p118 = por %p116, %p117
    %p119 = scmp.ne.s32.totalorder %s111, %s114
    %p120 = scmp.eq.s32.totalorder %s9, 0
    %p121 = por %p119, %p120
    %p122 = scmp.ne.s32.totalorder %s111, %s114
    %p123 = scmp.eq.s32.totalorder %s14, 1
    %p124 = por %p122, %p123
    %p125 = scmp.ne.s32.totalorder %s114, %s115
    %p126 = scmp.eq.s32.totalorder %s14, 0
    %p127 = por %p125, %p126
    %p128 = scmp.ne.s32.totalorder %s114, %s115
    %p129 = scmp.eq.s32.totalorder %s15, 1
    %p130 = por %p128, %p129
    %p132 = scmp.ne.s32.totalorder %s115, %s131
    %p133 = scmp.eq.s32.totalorder %s15, 0
    %p134 = por %p132, %p133
    %p135 = scmp.le.s32.totalorder 1, %s9
    %p136 = scmp.lt.s32.totalorder %s9, 3
    %p137 = pnand %p135, %p136
    %p138 = pneg %p137
    // Predicated region
    $region9: #{conformer_forward.30} parent=5 // pred_check
      _
    $region10: #{conformer_forward.30} parent=5 // pred_check_branch
      %140 = sbr.rel (%p137) target = $region12
    $region11: #{conformer_forward.30} parent=5 // pred_region
      %s141 = ssub.s32 %s9, 1
      // Predicated region
      $region13: #{conformer_forward.30} parent=11 // pred_check
        %p142 = pneg %p73
      $region14: #{conformer_forward.30} parent=11 // pred_check_branch
        %144 = sbr.rel (%p142) target = $region16
      $region15: #{conformer_forward.30} parent=11 // pred_region
        %p145 = scmp.lt.s32.totalorder %s19, 0
        %s146 = scalar_select %p145, %s19, 0
        %s147 = smul.addr %s146, 4
        %s148 = scalar_lea.vmem %s1, %s147
      $region16: #{conformer_forward.30} parent=11 // pred_fallthru
        _
      // Predicated region
      $region17: #{conformer_forward.30} parent=11 // pred_check
        %p149 = pneg %p99
      $region18: #{conformer_forward.30} parent=11 // pred_check_branch
        %151 = sbr.rel (%p149) target = $region20
      $region19: #{conformer_forward.30} parent=11 // pred_region
        %p152 = scmp.lt.s32.totalorder %s19, 0
        %s153 = scalar_select %p152, %s19, 0
        %s154 = scalar_lea.vmem %s2, %s153
      $region20: #{conformer_forward.30} parent=11 // pred_fallthru
        _
    $region12: #{conformer_forward.30} parent=5 // pred_fallthru
      _
    %p155 = scmp.lt.s32.totalorder %s9, 2
    // Predicated region
    $region21: #{conformer_forward.30} parent=5 // pred_check
      %p156 = pneg %p155
    $region22: #{conformer_forward.30} parent=5 // pred_check_branch
      %158 = sbr.rel (%p156) target = $region24
    $region23: #{conformer_forward.30} parent=5 // pred_region
      // Predicated region
      $region25: #{conformer_forward.30} parent=23 // pred_check
        %p159 = pneg %p41
      $region26: #{conformer_forward.30} parent=23 // pred_check_branch
        %161 = sbr.rel (%p159) target = $region28
      $region27: #{conformer_forward.30} parent=23 // pred_region
        %s162 = smul.u32 4, %s16
        %p163 = scmp.lt.s32.totalorder %s162, 7
        %s164 = scalar_select %p163, %s162, 7
        %s165 = smul.addr %s164, 3
        %s166 = smul.addr %s165, 4
        %s167 = scalar_lea.vmem %s0, %s166
        %s168 = smul.u32 4, %s16
      $region28: #{conformer_forward.30} parent=23 // pred_fallthru
        _
    $region24: #{conformer_forward.30} parent=5 // pred_fallthru
      _
    %p169 = scmp.le.s32.totalorder 1, %s9
    %p170 = scmp.lt.s32.totalorder %s9, 3
    %p171 = pnand %p169, %p170
    %p172 = pneg %p171
    // Predicated region
    $region29: #{conformer_forward.30} parent=5 // pred_check
      _
    $region30: #{conformer_forward.30} parent=5 // pred_check_branch
      %174 = sbr.rel (%p171) target = $region32
    $region31: #{conformer_forward.30} parent=5 // pred_region
      %s175 = ssub.s32 %s9, 1
      %s176 = smul.u32 4, %s18
      %p177 = scmp.lt.s32.totalorder %s176, 7
      %s178 = scalar_select %p177, %s176, 7
      %s179 = smul.addr %s178, 3
      %s180 = smul.addr %s179, 4
      %s181 = scalar_lea.vmem %s0, %s180
      %p182 = pneg %p47
      %p183 = pneg %p44
      %p184 = scmp.lt.s32.totalorder %s19, 0
      %s185 = scalar_select %p184, %s19, 0
      %s186 = smul.addr %s185, 4
      %s187 = scalar_lea.vmem %s1, %s186
      %p188 = pneg %p73
      %p189 = pneg %p70
      %p190 = scmp.lt.s32.totalorder %s19, 0
      %s191 = scalar_select %p190, %s19, 0
      %s192 = scalar_lea.vmem %s2, %s191
      %p193 = pneg %p99
      %p194 = pneg %p96
      %p195 = pneg %p127
      %p196 = pneg %p124
      %s197 = smul.u32 4, %s18
      %p198 = scmp.lt.s32.totalorder %s197, 7
      %s199 = scalar_select %p198, %s197, 7
      %p200 = scmp.lt.s32.totalorder %s19, 0
      %s201 = scalar_select %p200, %s19, 0
      %s202 = sadd.s32 %s201, %s199
      %s203 = smul.addr %s202, 4
      %s204 = scalar_lea.vmem %s3, %s203
      %s205 = smul.u32 4, %s18
      %p206 = scmp.lt.s32.totalorder %s205, 7
      %s207 = scalar_select %p206, %s205, 7
      %s208 = smul.addr %s207, 3
      %s209 = smul.addr %s208, 4
      %s210 = scalar_lea.vmem %s0, %s209
      %s211 = smul.u32 4, %s18
      %p212 = scmp.lt.s32.totalorder %s19, 0
      %s213 = scalar_select %p212, %s19, 0
      %s214 = smul.addr %s213, 4
      %s215 = scalar_lea.vmem %s1, %s214
      %p216 = scmp.lt.s32.totalorder %s19, 0
      %s217 = scalar_select %p216, %s19, 0
      %s218 = scalar_lea.vmem %s2, %s217
      %s219 = smul.u32 4, %s18
      %p220 = scmp.lt.s32.totalorder %s219, 7
      %s221 = scalar_select %p220, %s219, 7
      %p222 = scmp.lt.s32.totalorder %s19, 0
      %s223 = scalar_select %p222, %s19, 0
      %s224 = sadd.s32 %s223, %s221
      %s225 = smul.addr %s224, 4
      %s226 = scalar_lea.vmem %s3, %s225
      %s227 = smul.u32 4, %s18
      %v229 = vld [vmem:[%s210] sm:$0xff]
      %v230 = vld [vmem:[%s210 + $0x8] sm:$0xf]
      %v231 = vld [vmem:[%s210 + $0xc] sm:$0xff]
      %v232 = vld [vmem:[%s210 + $0x14] sm:$0xf]
      %v233 = vld [vmem:[%s210 + $0x18] sm:$0xff]
      %v234 = vld [vmem:[%s210 + $0x20] sm:$0xf]
      %v235 = vld [vmem:[%s210 + $0x24] sm:$0xff]
      %v236 = vld [vmem:[%s210 + $0x2c] sm:$0xf]
      %v237 = vld [vmem:[%s215] sm:$0xf]
      %v238 = vld [vmem:[%s215 + $0x4] sm:$0xf]
      %v239 = vld [vmem:[%s215 + $0x8] sm:$0xf]
      %v240 = vld [vmem:[%s215 + $0xc] sm:$0xf]
      %v241 = vld [vmem:[%s215 + $0x10] sm:$0xf]
      %v242 = vld [vmem:[%s215 + $0x14] sm:$0xf]
      %v243 = vld [vmem:[%s215 + $0x18] sm:$0xf]
      %v244 = vld [vmem:[%s215 + $0x1c] sm:$0xf]
      %v245 = vld [vmem:[%s215 + $0x20] sm:$0xf]
      %v246 = vld [vmem:[%s215 + $0x24] sm:$0xf]
      %v247 = vld [vmem:[%s215 + $0x28] sm:$0xf]
      %v248 = vld [vmem:[%s215 + $0x2c] sm:$0xf]
      %v249 = vld [vmem:[%s215 + $0x30] sm:$0xf]
      %v250 = vld [vmem:[%s215 + $0x34] sm:$0xf]
      %v251 = vld [vmem:[%s215 + $0x38] sm:$0xf]
      %v252 = vld [vmem:[%s215 + $0x3c] sm:$0xf]
      %v253 = vld [vmem:[%s215 + $0x40] sm:$0xf]
      %v254 = vld [vmem:[%s215 + $0x44] sm:$0xf]
      %v255 = vld [vmem:[%s215 + $0x48] sm:$0xf]
      %v256 = vld [vmem:[%s215 + $0x4c] sm:$0xf]
      %v257 = vld [vmem:[%s215 + $0x50] sm:$0xf]
      %v258 = vld [vmem:[%s215 + $0x54] sm:$0xf]
      %v259 = vld [vmem:[%s215 + $0x58] sm:$0xf]
      %v260 = vld [vmem:[%s215 + $0x5c] sm:$0xf]
      %v261 = vld [vmem:[%s215 + $0x60] sm:$0xf]
      %v262 = vld [vmem:[%s215 + $0x64] sm:$0xf]
      %v263 = vld [vmem:[%s215 + $0x68] sm:$0xf]
      %v264 = vld [vmem:[%s215 + $0x6c] sm:$0xf]
      %v265 = vld [vmem:[%s215 + $0x70] sm:$0xf]
      %v266 = vld [vmem:[%s215 + $0x74] sm:$0xf]
      %v267 = vld [vmem:[%s215 + $0x78] sm:$0xf]
      %v268 = vld [vmem:[%s215 + $0x7c] sm:$0xf]
      %v269 = vld [vmem:[%s215 + $0x80] sm:$0xf]
      %v270 = vld [vmem:[%s215 + $0x84] sm:$0xf]
      %v271 = vld [vmem:[%s215 + $0x88] sm:$0xf]
      %v272 = vld [vmem:[%s215 + $0x8c] sm:$0xf]
      %v273 = vld [vmem:[%s218] sm:$0x1]
      %v275 = vlaneseq
      %v276 = vshrl.u32 %v275, 7
      %v277 = vsub.s32 0, %v276
      %v278 = vrot.slane %v273, %v277
      %v288 = vunpack.c.l.b16 %v229
      %v289 = vunpack.c.h.b16 %v229
      %v290 = vunpack.c.l.b16 %v230
      %v291 = vunpack.c.l.b16 %v231
      %v292 = vunpack.c.h.b16 %v231
      %v293 = vunpack.c.l.b16 %v232
      %v294 = vunpack.c.l.b16 %v233
      %v295 = vunpack.c.h.b16 %v233
      %v296 = vunpack.c.l.b16 %v234
      %v297 = vunpack.c.l.b16 %v235
      %v298 = vunpack.c.h.b16 %v235
      %v299 = vunpack.c.l.b16 %v236
      %v300 = vpack.c.b16 %v291, %v288
      %v301 = vpack.c.b16 %v292, %v289
      %v302 = vpack.c.b16 %v293, %v290
      %v303 = vpack.c.b16 %v297, %v294
      %v304 = vpack.c.b16 %v298, %v295
      %v305 = vpack.c.b16 %v299, %v296
      %v346 = vunpack.c.l.b16 %v237
      %v347 = vunpack.c.l.b16 %v238
      %v348 = vunpack.c.l.b16 %v239
      %v349 = vunpack.c.l.b16 %v240
      %v350 = vunpack.c.l.b16 %v241
      %v351 = vunpack.c.l.b16 %v242
      %v352 = vunpack.c.l.b16 %v243
      %v353 = vunpack.c.l.b16 %v244
      %v354 = vunpack.c.l.b16 %v245
      %v355 = vunpack.c.l.b16 %v246
      %v356 = vunpack.c.l.b16 %v247
      %v357 = vunpack.c.l.b16 %v248
      %v358 = vunpack.c.l.b16 %v249
      %v359 = vunpack.c.l.b16 %v250
      %v360 = vunpack.c.l.b16 %v251
      %v361 = vunpack.c.l.b16 %v252
      %v362 = vunpack.c.l.b16 %v253
      %v363 = vunpack.c.l.b16 %v254
      %v364 = vunpack.c.l.b16 %v255
      %v365 = vunpack.c.l.b16 %v256
      %v366 = vunpack.c.l.b16 %v257
      %v367 = vunpack.c.l.b16 %v258
      %v368 = vunpack.c.l.b16 %v259
      %v369 = vunpack.c.l.b16 %v260
      %v370 = vunpack.c.l.b16 %v261
      %v371 = vunpack.c.l.b16 %v262
      %v372 = vunpack.c.l.b16 %v263
      %v373 = vunpack.c.l.b16 %v264
      %v374 = vunpack.c.l.b16 %v265
      %v375 = vunpack.c.l.b16 %v266
      %v376 = vunpack.c.l.b16 %v267
      %v377 = vunpack.c.l.b16 %v268
      %v378 = vunpack.c.l.b16 %v269
      %v379 = vunpack.c.l.b16 %v270
      %v380 = vunpack.c.l.b16 %v271
      %v381 = vunpack.c.l.b16 %v272
      %v382 = vpack.c.b16 %v347, %v346
      %v383 = vpack.c.b16 %v349, %v348
      %v384 = vpack.c.b16 %v351, %v350
      %v385 = vpack.c.b16 %v353, %v352
      %v386 = vpack.c.b16 %v355, %v354
      %v387 = vpack.c.b16 %v357, %v356
      %v388 = vpack.c.b16 %v359, %v358
      %v389 = vpack.c.b16 %v361, %v360
      %v390 = vpack.c.b16 %v363, %v362
      %v391 = vpack.c.b16 %v365, %v364
      %v392 = vpack.c.b16 %v367, %v366
      %v393 = vpack.c.b16 %v369, %v368
      %v394 = vpack.c.b16 %v371, %v370
      %v395 = vpack.c.b16 %v373, %v372
      %v396 = vpack.c.b16 %v375, %v374
      %v397 = vpack.c.b16 %v377, %v376
      %v398 = vpack.c.b16 %v379, %v378
      %v399 = vpack.c.b16 %v381, %v380
      %vm418 = vcmask 261120
      %v420 = vsel %vm418, %v302, 0
      %v423 = vsel %vm418, %v305, 0
      %425 = vmatprep.subr.bf16.mxu0 0
      %426 = vmatpush1.bf16.msra.mxu0 %v389
      %427 = vmatprep.subr.bf16.mxu0 0
      %428 = vmatpush1.bf16.msra.mxu0 %v388
      %429 = vmatprep.subr.bf16.mxu0 0
      %430 = vmatpush1.bf16.msra.mxu0 %v387
      %431 = vmatprep.subr.bf16.mxu0 0
      %432 = vmatpush1.bf16.msra.mxu0 %v386
      %433 = vmatprep.subr.bf16.mxu0 0
      %434 = vmatpush1.bf16.msra.mxu0 %v385
      %435 = vmatprep.subr.bf16.mxu0 0
      %436 = vmatpush1.bf16.msra.mxu0 %v384
      %437 = vmatprep.subr.bf16.mxu0 0
      %438 = vmatpush1.bf16.msra.mxu0 %v383
      %439 = vmatprep.subr.bf16.mxu0 0
      %440 = vmatpush1.bf16.msra.mxu0 %v382
      %441 = vmatprep.subr.bf16.mxu0 0
      %442 = vmatpush2.bf16.msra.mxu0 %v397
      %443 = vmatprep.subr.bf16.mxu0 0
      %444 = vmatpush2.bf16.msra.mxu0 %v396
      %445 = vmatprep.subr.bf16.mxu0 0
      %446 = vmatpush2.bf16.msra.mxu0 %v395
      %447 = vmatprep.subr.bf16.mxu0 0
      %448 = vmatpush2.bf16.msra.mxu0 %v394
      %449 = vmatprep.subr.bf16.mxu0 0
      %450 = vmatpush2.bf16.msra.mxu0 %v393
      %451 = vmatprep.subr.bf16.mxu0 0
      %452 = vmatpush2.bf16.msra.mxu0 %v392
      %453 = vmatprep.subr.bf16.mxu0 0
      %454 = vmatpush2.bf16.msra.mxu0 %v391
      %455 = vmatprep.subr.bf16.mxu0 0
      %456 = vmatpush2.bf16.msra.mxu0 %v390
      %457 = vmatprep.mubr.bf16.mxu0 %v301
      %458 = vmatmul.mubr.bf16.gmra.mxu0 %v300
      %v459 = vpop.f32.mrf.mxu0
      %v460 = vadd.f32 %v278, %v459
      %v461 = vpop.f32.mrf.mxu0
      %v462 = vpop.f32.mrf.mxu0
      %v463 = vadd.f32 %v278, %v462
      %v464 = vpop.f32.mrf.mxu0
      %465 = vmatprep.mubr.bf16.mxu0 %v304
      %466 = vmatmul.mubr.bf16.gmra.mxu0 %v303
      %v467 = vpop.f32.mrf.mxu0
      %v468 = vadd.f32 %v278, %v467
      %v469 = vpop.f32.mrf.mxu0
      %v470 = vpop.f32.mrf.mxu0
      %v471 = vadd.f32 %v278, %v470
      %v472 = vpop.f32.mrf.mxu0
      %473 = vdwg.mxu0
      %474 = vmatprep.subr.bf16.mxu0 0
      %475 = vmatpush1.bf16.msra.mxu0 0
      %476 = vmatprep.subr.bf16.mxu0 0
      %477 = vmatpush1.bf16.msra.mxu0 0
      %478 = vmatprep.subr.bf16.mxu0 0
      %479 = vmatpush1.bf16.msra.mxu0 0
      %480 = vmatprep.subr.bf16.mxu0 0
      %481 = vmatpush1.bf16.msra.mxu0 0
      %482 = vmatprep.subr.bf16.mxu0 0
      %483 = vmatpush1.bf16.msra.mxu0 0
      %484 = vmatprep.subr.bf16.mxu0 0
      %485 = vmatpush1.bf16.msra.mxu0 0
      %486 = vmatprep.subr.bf16.mxu0 0
      %487 = vmatpush1.bf16.msra.mxu0 %v399
      %488 = vmatprep.subr.bf16.mxu0 0
      %489 = vmatpush1.bf16.msra.mxu0 %v398
      %490 = vmatprep.subr.bf16.mxu0 0
      %491 = vmatpush2.bf16.msra.mxu0 0
      %492 = vmatprep.subr.bf16.mxu0 0
      %493 = vmatpush2.bf16.msra.mxu0 0
      %494 = vmatprep.subr.bf16.mxu0 0
      %495 = vmatpush2.bf16.msra.mxu0 0
      %496 = vmatprep.subr.bf16.mxu0 0
      %497 = vmatpush2.bf16.msra.mxu0 0
      %498 = vmatprep.subr.bf16.mxu0 0
      %499 = vmatpush2.bf16.msra.mxu0 0
      %500 = vmatprep.subr.bf16.mxu0 0
      %501 = vmatpush2.bf16.msra.mxu0 0
      %502 = vmatprep.subr.bf16.mxu0 0
      %503 = vmatpush2.bf16.msra.mxu0 0
      %504 = vmatprep.subr.bf16.mxu0 0
      %505 = vmatpush2.bf16.msra.mxu0 0
      %506 = vmatprep.mubr.bf16.mxu0 0
      %507 = vmatmul.mubr.bf16.gmra.mxu0 %v420
      %v508 = vpop.f32.mrf.mxu0
      %v509 = vadd.f32 %v460, %v508
      %v510 = vpop.f32.mrf.mxu0
      %v511 = vpop.f32.mrf.mxu0
      %v512 = vadd.f32 %v463, %v511
      %v513 = vpop.f32.mrf.mxu0
      %514 = vmatprep.mubr.bf16.mxu0 0
      %515 = vmatmul.mubr.bf16.gmra.mxu0 %v423
      %v516 = vpop.f32.mrf.mxu0
      %v517 = vadd.f32 %v468, %v516
      %v518 = vpop.f32.mrf.mxu0
      %v519 = vpop.f32.mrf.mxu0
      %v520 = vadd.f32 %v471, %v519
      %v521 = vpop.f32.mrf.mxu0
      %522 = vdwg.mxu0
      %v523 = vmax.f32 %v509, 0.0
      %v524 = vmax.f32 %v512, 0.0
      %v525 = vmax.f32 %v517, 0.0
      %v526 = vmax.f32 %v520, 0.0
      %v527 = vpack.c.bf16 %v524, %v523
      %v528 = vpack.c.bf16 %v526, %v525
      %v531 = vunpack.c.l.b16 %v527
      %v532 = vunpack.c.h.b16 %v527
      %v533 = vunpack.c.l.b16 %v528
      %v534 = vunpack.c.h.b16 %v528
      %v535 = vpack.c.b16 %v531, %v531
      %v536 = vpack.c.b16 %v532, %v532
      %v537 = vpack.c.b16 %v533, %v533
      %v538 = vpack.c.b16 %v534, %v534
      %vm543 = vcmask 257024
      %544 = vst.msk [vmem:[%s226] sm:$0xf] %vm543, %v535
      %545 = vst.msk [vmem:[%s226 + $0x4] sm:$0xf] %vm543, %v536
      %546 = vst.msk [vmem:[%s226 + $0x8] sm:$0xf] %vm543, %v537
      %547 = vst.msk [vmem:[%s226 + $0xc] sm:$0xf] %vm543, %v538
      %s548 = smul.u32 4, %s18
      %p549 = scmp.lt.s32.totalorder %s548, 7
      %s550 = scalar_select %p549, %s548, 7
      %p551 = scmp.lt.s32.totalorder %s19, 0
      %s552 = scalar_select %p551, %s19, 0
      %s553 = sadd.s32 %s552, %s550
      %s554 = smul.addr %s553, 4
      %s555 = scalar_lea.vmem %s3, %s554
      // Predicated region
      $region33: #{conformer_forward.30} parent=31 // pred_check
        %p556 = pneg %p124
      $region34: #{conformer_forward.30} parent=31 // pred_check_branch
        %558 = sbr.rel (%p556) target = $region36
      $region35: #{conformer_forward.30} parent=31 // pred_region
        %s559 = smul.u32 4, %s18
      $region36: #{conformer_forward.30} parent=31 // pred_fallthru
        _
    $region32: #{conformer_forward.30} parent=5 // pred_fallthru
      _
    %p560 = scmp.le.s32.totalorder 2, %s9
    // Predicated region
    $region37: #{conformer_forward.30} parent=5 // pred_check
      %p561 = pneg %p560
    $region38: #{conformer_forward.30} parent=5 // pred_check_branch
      %563 = sbr.rel (%p561) target = $region40
    $region39: #{conformer_forward.30} parent=5 // pred_region
      %s564 = ssub.s32 %s9, 2
      // Predicated region
      $region41: #{conformer_forward.30} parent=39 // pred_check
        %p565 = pneg %p130
      $region42: #{conformer_forward.30} parent=39 // pred_check_branch
        %567 = sbr.rel (%p565) target = $region44
      $region43: #{conformer_forward.30} parent=39 // pred_region
        %s568 = smul.u32 4, %s20
        %p569 = scmp.lt.s32.totalorder %s568, 7
        %s570 = scalar_select %p569, %s568, 7
        %p571 = scmp.lt.s32.totalorder %s21, 0
        %s572 = scalar_select %p571, %s21, 0
        %s573 = sadd.s32 %s572, %s570
        %s574 = smul.addr %s573, 4
        %s575 = scalar_lea.vmem %s3, %s574
      $region44: #{conformer_forward.30} parent=39 // pred_fallthru
        _
    $region40: #{conformer_forward.30} parent=5 // pred_fallthru
      _
  $region6: #{conformer_forward.30} parent=0 // loop_footer
    %s13 = sadd.s32 1, %s9
  $region7: #{conformer_forward.30} parent=0 // loop_footer_branch
    %8 = sbr.rel target = $region3
  $region8: #{conformer_forward.30} parent=0 // loop_exit
    _

// kernel: conformer_forward.31
$region0: #{conformer_forward.31}
  #allocation0 [shape = 'u32[]', space=smem, size = 0x4, offset = 0x4, fixed_abs, tag = 'smem constant byte address 0x4 - core index']
  #allocation1 [shape = 'u32[144,128]{1,0:T(1,128)}', space=vmem, size = 0x12000, scoped, tag = 'internal scratch']
  %s0 = inlined_call_operand.vmem [shape: bf16[16,128], index: 0, kind: input, shape index: {}]
  %s1 = inlined_call_operand.vmem [shape: bf16[128,32], index: 1, kind: input, shape index: {}]
  %s2 = inlined_call_operand.vmem [shape: f32[1,32], index: 2, kind: input, shape index: {}]
  %s3 = inlined_call_operand.vmem [shape: bf16[16,32], index: 3, kind: output, shape index: {}]
  %s4 = sld [smem:[#allocation0]]
  $region45: #{conformer_forward.31} parent=0
    _
  %s6 = ssub.s32 1, %s4
  %s7 = scalar_select 0, %s6, %s4
  loop: start=0, step=1, limit=4
  $region2: #{conformer_forward.31} parent=0 // loop_pre_header
    _
  $region3: #{conformer_forward.31} parent=0 // loop_header
    %s9 = sphi 0, %s13
    %p10 = scmp.ge.s32.totalorder %s9, 4
    %s16 = sphi 0, %s28
    %s17 = sphi 0, %s24
    %s18 = sphi 0, %s16
    %s19 = sphi 0, %s17
    %s20 = sphi 0, %s18
    %s21 = sphi 0, %s19
    %s31 = sphi 0, %s33
    %s34 = sphi 0, %s31
    %s35 = sphi 0, %s34
    %s51 = sphi 0, %s35
    %s57 = sphi 0, %s59
    %s60 = sphi 0, %s57
    %s61 = sphi 0, %s60
    %s77 = sphi 0, %s61
    %s83 = sphi 0, %s85
    %s86 = sphi 0, %s83
    %s87 = sphi 0, %s86
    %s103 = sphi 0, %s87
    %s111 = sphi 0, %s113
    %s114 = sphi 0, %s111
    %s115 = sphi 0, %s114
    %s131 = sphi 0, %s115
  $region4: #{conformer_forward.31} parent=0 // loop_header_branch
    %12 = sbr.rel (%p10) target = $region8
  $region5: #{conformer_forward.31} parent=0 // loop_body
    %s14 = ssub.s32 %s9, 1
    %s15 = ssub.s32 %s9, 2
    %s22 = sadd.s32 1, %s17
    %p23 = scmp.ge.s32.totalorder %s22, 1
    %s24 = scalar_select %p23, 0, %s22
    %s25 = sadd.s32 1, %s16
    %s26 = scalar_select %p23, %s25, %s16
    %p27 = scmp.ge.s32.totalorder %s26, 2
    %s28 = scalar_select %p27, 0, %s26
    %s29 = ssub.s32 %s16, %s28
    %p30 = scmp.eq.s32.totalorder %s29, 0
    %s32 = sadd.s32 %s31, 1
    %s33 = scalar_select %p30, %s31, %s32
    %p36 = pneg %p30
    %p37 = scmp.eq.s32.totalorder %s9, 1
    %p38 = por %p36, %p37
    %p39 = scmp.ne.s32.totalorder %s31, %s34
    %p40 = scmp.eq.s32.totalorder %s9, 0
    %p41 = por %p39, %p40
    %p42 = scmp.ne.s32.totalorder %s31, %s34
    %p43 = scmp.eq.s32.totalorder %s14, 1
    %p44 = por %p42, %p43
    %p45 = scmp.ne.s32.totalorder %s34, %s35
    %p46 = scmp.eq.s32.totalorder %s14, 0
    %p47 = por %p45, %p46
    %p48 = scmp.ne.s32.totalorder %s34, %s35
    %p49 = scmp.eq.s32.totalorder %s15, 1
    %p50 = por %p48, %p49
    %p52 = scmp.ne.s32.totalorder %s35, %s51
    %p53 = scmp.eq.s32.totalorder %s15, 0
    %p54 = por %p52, %p53
    %s55 = ssub.s32 %s17, %s24
    %p56 = scmp.eq.s32.totalorder %s55, 0
    %s58 = sadd.s32 %s57, 1
    %s59 = scalar_select %p56, %s57, %s58
    %p62 = pneg %p56
    %p63 = scmp.eq.s32.totalorder %s9, 1
    %p64 = por %p62, %p63
    %p65 = scmp.ne.s32.totalorder %s57, %s60
    %p66 = scmp.eq.s32.totalorder %s9, 0
    %p67 = por %p65, %p66
    %p68 = scmp.ne.s32.totalorder %s57, %s60
    %p69 = scmp.eq.s32.totalorder %s14, 1
    %p70 = por %p68, %p69
    %p71 = scmp.ne.s32.totalorder %s60, %s61
    %p72 = scmp.eq.s32.totalorder %s14, 0
    %p73 = por %p71, %p72
    %p74 = scmp.ne.s32.totalorder %s60, %s61
    %p75 = scmp.eq.s32.totalorder %s15, 1
    %p76 = por %p74, %p75
    %p78 = scmp.ne.s32.totalorder %s61, %s77
    %p79 = scmp.eq.s32.totalorder %s15, 0
    %p80 = por %p78, %p79
    %s81 = ssub.s32 %s17, %s24
    %p82 = scmp.eq.s32.totalorder %s81, 0
    %s84 = sadd.s32 %s83, 1
    %s85 = scalar_select %p82, %s83, %s84
    %p88 = pneg %p82
    %p89 = scmp.eq.s32.totalorder %s9, 1
    %p90 = por %p88, %p89
    %p91 = scmp.ne.s32.totalorder %s83, %s86
    %p92 = scmp.eq.s32.totalorder %s9, 0
    %p93 = por %p91, %p92
    %p94 = scmp.ne.s32.totalorder %s83, %s86
    %p95 = scmp.eq.s32.totalorder %s14, 1
    %p96 = por %p94, %p95
    %p97 = scmp.ne.s32.totalorder %s86, %s87
    %p98 = scmp.eq.s32.totalorder %s14, 0
    %p99 = por %p97, %p98
    %p100 = scmp.ne.s32.totalorder %s86, %s87
    %p101 = scmp.eq.s32.totalorder %s15, 1
    %p102 = por %p100, %p101
    %p104 = scmp.ne.s32.totalorder %s87, %s103
    %p105 = scmp.eq.s32.totalorder %s15, 0
    %p106 = por %p104, %p105
    %s107 = ssub.s32 %s16, %s28
    %s108 = ssub.s32 %s17, %s24
    %s109 = sor.u32 %s107, %s108
    %p110 = scmp.eq.s32.totalorder %s109, 0
    %s112 = sadd.s32 %s111, 1
    %s113 = scalar_select %p110, %s111, %s112
    %p116 = pneg %p110
    %p117 = scmp.eq.s32.totalorder %s9, 1
    %p118 = por %p116, %p117
    %p119 = scmp.ne.s32.totalorder %s111, %s114
    %p120 = scmp.eq.s32.totalorder %s9, 0
    %p121 = por %p119, %p120
    %p122 = scmp.ne.s32.totalorder %s111, %s114
    %p123 = scmp.eq.s32.totalorder %s14, 1
    %p124 = por %p122, %p123
    %p125 = scmp.ne.s32.totalorder %s114, %s115
    %p126 = scmp.eq.s32.totalorder %s14, 0
    %p127 = por %p125, %p126
    %p128 = scmp.ne.s32.totalorder %s114, %s115
    %p129 = scmp.eq.s32.totalorder %s15, 1
    %p130 = por %p128, %p129
    %p132 = scmp.ne.s32.totalorder %s115, %s131
    %p133 = scmp.eq.s32.totalorder %s15, 0
    %p134 = por %p132, %p133
    %p135 = scmp.le.s32.totalorder 1, %s9
    %p136 = scmp.lt.s32.totalorder %s9, 3
    %p137 = pnand %p135, %p136
    %p138 = pneg %p137
    // Predicated region
    $region9: #{conformer_forward.31} parent=5 // pred_check
      _
    $region10: #{conformer_forward.31} parent=5 // pred_check_branch
      %140 = sbr.rel (%p137) target = $region12
    $region11: #{conformer_forward.31} parent=5 // pred_region
      %s141 = ssub.s32 %s9, 1
      // Predicated region
      $region13: #{conformer_forward.31} parent=11 // pred_check
        %p142 = pneg %p73
      $region14: #{conformer_forward.31} parent=11 // pred_check_branch
        %144 = sbr.rel (%p142) target = $region16
      $region15: #{conformer_forward.31} parent=11 // pred_region
        %p145 = scmp.lt.s32.totalorder %s19, 0
        %s146 = scalar_select %p145, %s19, 0
        %s147 = smul.addr %s146, 4
        %s148 = scalar_lea.vmem %s1, %s147
      $region16: #{conformer_forward.31} parent=11 // pred_fallthru
        _
      // Predicated region
      $region17: #{conformer_forward.31} parent=11 // pred_check
        %p149 = pneg %p99
      $region18: #{conformer_forward.31} parent=11 // pred_check_branch
        %151 = sbr.rel (%p149) target = $region20
      $region19: #{conformer_forward.31} parent=11 // pred_region
        %p152 = scmp.lt.s32.totalorder %s19, 0
        %s153 = scalar_select %p152, %s19, 0
        %s154 = scalar_lea.vmem %s2, %s153
      $region20: #{conformer_forward.31} parent=11 // pred_fallthru
        _
    $region12: #{conformer_forward.31} parent=5 // pred_fallthru
      _
    %p155 = scmp.lt.s32.totalorder %s9, 2
    // Predicated region
    $region21: #{conformer_forward.31} parent=5 // pred_check
      %p156 = pneg %p155
    $region22: #{conformer_forward.31} parent=5 // pred_check_branch
      %158 = sbr.rel (%p156) target = $region24
    $region23: #{conformer_forward.31} parent=5 // pred_region
      // Predicated region
      $region25: #{conformer_forward.31} parent=23 // pred_check
        %p159 = pneg %p41
      $region26: #{conformer_forward.31} parent=23 // pred_check_branch
        %161 = sbr.rel (%p159) target = $region28
      $region27: #{conformer_forward.31} parent=23 // pred_region
        %p162 = scmp.lt.s32.totalorder %s16, 1
        %s163 = scalar_select %p162, %s16, 1
        %s164 = smul.addr %s163, 4
        %s165 = scalar_lea.vmem %s0, %s164
      $region28: #{conformer_forward.31} parent=23 // pred_fallthru
        _
    $region24: #{conformer_forward.31} parent=5 // pred_fallthru
      _
    %p166 = scmp.le.s32.totalorder 1, %s9
    %p167 = scmp.lt.s32.totalorder %s9, 3
    %p168 = pnand %p166, %p167
    %p169 = pneg %p168
    // Predicated region
    $region29: #{conformer_forward.31} parent=5 // pred_check
      _
    $region30: #{conformer_forward.31} parent=5 // pred_check_branch
      %171 = sbr.rel (%p168) target = $region32
    $region31: #{conformer_forward.31} parent=5 // pred_region
      %s172 = ssub.s32 %s9, 1
      %p173 = scmp.lt.s32.totalorder %s18, 1
      %s174 = scalar_select %p173, %s18, 1
      %s175 = smul.addr %s174, 4
      %s176 = scalar_lea.vmem %s0, %s175
      %p177 = pneg %p47
      %p178 = pneg %p44
      %p179 = scmp.lt.s32.totalorder %s19, 0
      %s180 = scalar_select %p179, %s19, 0
      %s181 = smul.addr %s180, 4
      %s182 = scalar_lea.vmem %s1, %s181
      %p183 = pneg %p73
      %p184 = pneg %p70
      %p185 = scmp.lt.s32.totalorder %s19, 0
      %s186 = scalar_select %p185, %s19, 0
      %s187 = scalar_lea.vmem %s2, %s186
      %p188 = pneg %p99
      %p189 = pneg %p96
      %p190 = pneg %p127
      %p191 = pneg %p124
      %p192 = scmp.lt.s32.totalorder %s18, 1
      %s193 = scalar_select %p192, %s18, 1
      %p194 = scmp.lt.s32.totalorder %s19, 0
      %s195 = scalar_select %p194, %s19, 0
      %s196 = sadd.s32 %s195, %s193
      %s197 = smul.addr %s196, 4
      %s198 = scalar_lea.vmem %s3, %s197
      %p199 = scmp.lt.s32.totalorder %s18, 1
      %s200 = scalar_select %p199, %s18, 1
      %s201 = smul.addr %s200, 4
      %s202 = scalar_lea.vmem %s0, %s201
      %p203 = scmp.lt.s32.totalorder %s19, 0
      %s204 = scalar_select %p203, %s19, 0
      %s205 = smul.addr %s204, 4
      %s206 = scalar_lea.vmem %s1, %s205
      %p207 = scmp.lt.s32.totalorder %s19, 0
      %s208 = scalar_select %p207, %s19, 0
      %s209 = scalar_lea.vmem %s2, %s208
      %p210 = scmp.lt.s32.totalorder %s18, 1
      %s211 = scalar_select %p210, %s18, 1
      %p212 = scmp.lt.s32.totalorder %s19, 0
      %s213 = scalar_select %p212, %s19, 0
      %s214 = sadd.s32 %s213, %s211
      %s215 = smul.addr %s214, 4
      %s216 = scalar_lea.vmem %s3, %s215
      %v218 = vld [vmem:[%s202] sm:$0xf]
      %v219 = vld [vmem:[%s206] sm:$0xf]
      %v220 = vld [vmem:[%s206 + $0x4] sm:$0xf]
      %v221 = vld [vmem:[%s206 + $0x8] sm:$0xf]
      %v222 = vld [vmem:[%s206 + $0xc] sm:$0xf]
      %v223 = vld [vmem:[%s206 + $0x10] sm:$0xf]
      %v224 = vld [vmem:[%s206 + $0x14] sm:$0xf]
      %v225 = vld [vmem:[%s206 + $0x18] sm:$0xf]
      %v226 = vld [vmem:[%s206 + $0x1c] sm:$0xf]
      %v227 = vld [vmem:[%s206 + $0x20] sm:$0xf]
      %v228 = vld [vmem:[%s206 + $0x24] sm:$0xf]
      %v229 = vld [vmem:[%s206 + $0x28] sm:$0xf]
      %v230 = vld [vmem:[%s206 + $0x2c] sm:$0xf]
      %v231 = vld [vmem:[%s206 + $0x30] sm:$0xf]
      %v232 = vld [vmem:[%s206 + $0x34] sm:$0xf]
      %v233 = vld [vmem:[%s206 + $0x38] sm:$0xf]
      %v234 = vld [vmem:[%s206 + $0x3c] sm:$0xf]
      %v235 = vld [vmem:[%s209] sm:$0x1]
      %v237 = vlaneseq
      %v238 = vshrl.u32 %v237, 7
      %v239 = vsub.s32 0, %v238
      %v240 = vrot.slane %v235, %v239
      %v258 = vunpack.c.l.b16 %v219
      %v259 = vunpack.c.l.b16 %v220
      %v260 = vunpack.c.l.b16 %v221
      %v261 = vunpack.c.l.b16 %v222
      %v262 = vunpack.c.l.b16 %v223
      %v263 = vunpack.c.l.b16 %v224
      %v264 = vunpack.c.l.b16 %v225
      %v265 = vunpack.c.l.b16 %v226
      %v266 = vunpack.c.l.b16 %v227
      %v267 = vunpack.c.l.b16 %v228
      %v268 = vunpack.c.l.b16 %v229
      %v269 = vunpack.c.l.b16 %v230
      %v270 = vunpack.c.l.b16 %v231
      %v271 = vunpack.c.l.b16 %v232
      %v272 = vunpack.c.l.b16 %v233
      %v273 = vunpack.c.l.b16 %v234
      %v274 = vpack.c.b16 %v259, %v258
      %v275 = vpack.c.b16 %v261, %v260
      %v276 = vpack.c.b16 %v263, %v262
      %v277 = vpack.c.b16 %v265, %v264
      %v278 = vpack.c.b16 %v267, %v266
      %v279 = vpack.c.b16 %v269, %v268
      %v280 = vpack.c.b16 %v271, %v270
      %v281 = vpack.c.b16 %v273, %v272
      %290 = vmatprep.subr.bf16.mxu0 0
      %291 = vmatpush1.bf16.msra.mxu0 %v281
      %292 = vmatprep.subr.bf16.mxu0 0
      %293 = vmatpush1.bf16.msra.mxu0 %v280
      %294 = vmatprep.subr.bf16.mxu0 0
      %295 = vmatpush1.bf16.msra.mxu0 %v279
      %296 = vmatprep.subr.bf16.mxu0 0
      %297 = vmatpush1.bf16.msra.mxu0 %v278
      %298 = vmatprep.subr.bf16.mxu0 0
      %299 = vmatpush1.bf16.msra.mxu0 %v277
      %300 = vmatprep.subr.bf16.mxu0 0
      %301 = vmatpush1.bf16.msra.mxu0 %v276
      %302 = vmatprep.subr.bf16.mxu0 0
      %303 = vmatpush1.bf16.msra.mxu0 %v275
      %304 = vmatprep.subr.bf16.mxu0 0
      %305 = vmatpush1.bf16.msra.mxu0 %v274
      %306 = vmatprep.subr.bf16.mxu0 0
      %307 = vmatpush2.bf16.msra.mxu0 0
      %308 = vmatprep.subr.bf16.mxu0 0
      %309 = vmatpush2.bf16.msra.mxu0 0
      %310 = vmatprep.subr.bf16.mxu0 0
      %311 = vmatpush2.bf16.msra.mxu0 0
      %312 = vmatprep.subr.bf16.mxu0 0
      %313 = vmatpush2.bf16.msra.mxu0 0
      %314 = vmatprep.subr.bf16.mxu0 0
      %315 = vmatpush2.bf16.msra.mxu0 0
      %316 = vmatprep.subr.bf16.mxu0 0
      %317 = vmatpush2.bf16.msra.mxu0 0
      %318 = vmatprep.subr.bf16.mxu0 0
      %319 = vmatpush2.bf16.msra.mxu0 0
      %320 = vmatprep.subr.bf16.mxu0 0
      %321 = vmatpush2.bf16.msra.mxu0 0
      %322 = vmatprep.mubr.bf16.mxu0 0
      %323 = vmatmul.mubr.bf16.gmra.mxu0 %v218
      %v324 = vpop.f32.mrf.mxu0
      %v325 = vadd.f32 %v240, %v324
      %v326 = vpop.f32.mrf.mxu0
      %v327 = vpop.f32.mrf.mxu0
      %v328 = vpop.f32.mrf.mxu0
      %329 = vdwg.mxu0
      %v330 = vpack.c.bf16 %v325, %v325
      %vm331 = vcmask 257024
      %332 = vst.msk [vmem:[%s216] sm:$0xf] %vm331, %v330
      %p333 = scmp.lt.s32.totalorder %s18, 1
      %s334 = scalar_select %p333, %s18, 1
      %p335 = scmp.lt.s32.totalorder %s19, 0
      %s336 = scalar_select %p335, %s19, 0
      %s337 = sadd.s32 %s336, %s334
      %s338 = smul.addr %s337, 4
      %s339 = scalar_lea.vmem %s3, %s338
      // Predicated region
      $region33: #{conformer_forward.31} parent=31 // pred_check
        %p340 = pneg %p124
      $region34: #{conformer_forward.31} parent=31 // pred_check_branch
        %342 = sbr.rel (%p340) target = $region36
      $region35: #{conformer_forward.31} parent=31 // pred_region
        _
      $region36: #{conformer_forward.31} parent=31 // pred_fallthru
        _
    $region32: #{conformer_forward.31} parent=5 // pred_fallthru
      _
    %p343 = scmp.le.s32.totalorder 2, %s9
    // Predicated region
    $region37: #{conformer_forward.31} parent=5 // pred_check
      %p344 = pneg %p343
    $region38: #{conformer_forward.31} parent=5 // pred_check_branch
      %346 = sbr.rel (%p344) target = $region40
    $region39: #{conformer_forward.31} parent=5 // pred_region
      %s347 = ssub.s32 %s9, 2
      // Predicated region
      $region41: #{conformer_forward.31} parent=39 // pred_check
        %p348 = pneg %p130
      $region42: #{conformer_forward.31} parent=39 // pred_check_branch
        %350 = sbr.rel (%p348) target = $region44
      $region43: #{conformer_forward.31} parent=39 // pred_region
        %p351 = scmp.lt.s32.totalorder %s20, 1
        %s352 = scalar_select %p351, %s20, 1
        %p353 = scmp.lt.s32.totalorder %s21, 0
        %s354 = scalar_select %p353, %s21, 0
        %s355 = sadd.s32 %s354, %s352
        %s356 = smul.addr %s355, 4
        %s357 = scalar_lea.vmem %s3, %s356
      $region44: #{conformer_forward.31} parent=39 // pred_fallthru
        _
    $region40: #{conformer_forward.31} parent=5 // pred_fallthru
      _
  $region6: #{conformer_forward.31} parent=0 // loop_footer
    %s13 = sadd.s32 1, %s9
  $region7: #{conformer_forward.31} parent=0 // loop_footer_branch
    %8 = sbr.rel target = $region3
  $region8: #{conformer_forward.31} parent=0 // loop_exit
    _

// kernel: conformer_forward.33
$region0: #{conformer_forward.33}
  #allocation0 [shape = 'u32[]', space=smem, size = 0x4, offset = 0x4, fixed_abs, tag = 'smem constant byte address 0x4 - core index']
  #allocation1 [shape = 'u32[144,128]{1,0:T(1,128)}', space=vmem, size = 0x12000, scoped, tag = 'internal scratch']
  %s0 = inlined_call_operand.vmem [shape: bf16[16,128], index: 0, kind: input, shape index: {}]
  %s1 = inlined_call_operand.vmem [shape: bf16[128,32], index: 1, kind: input, shape index: {}]
  %s2 = inlined_call_operand.vmem [shape: f32[1,32], index: 2, kind: input, shape index: {}]
  %s3 = inlined_call_operand.vmem [shape: bf16[16,32], index: 3, kind: input, shape index: {}]
  %s4 = inlined_call_operand.vmem [shape: bf16[16,32], index: 4, kind: output, shape index: {}]
  %s5 = sld [smem:[#allocation0]]
  $region49: #{conformer_forward.33} parent=0
    _
  %s7 = ssub.s32 1, %s5
  %s8 = scalar_select 0, %s7, %s5
  loop: start=0, step=1, limit=4
  $region2: #{conformer_forward.33} parent=0 // loop_pre_header
    _
  $region3: #{conformer_forward.33} parent=0 // loop_header
    %s10 = sphi 0, %s14
    %p11 = scmp.ge.s32.totalorder %s10, 4
    %s17 = sphi 0, %s29
    %s18 = sphi 0, %s25
    %s19 = sphi 0, %s17
    %s20 = sphi 0, %s18
    %s21 = sphi 0, %s19
    %s22 = sphi 0, %s20
    %s32 = sphi 0, %s34
    %s35 = sphi 0, %s32
    %s36 = sphi 0, %s35
    %s52 = sphi 0, %s36
    %s58 = sphi 0, %s60
    %s61 = sphi 0, %s58
    %s62 = sphi 0, %s61
    %s78 = sphi 0, %s62
    %s84 = sphi 0, %s86
    %s87 = sphi 0, %s84
    %s88 = sphi 0, %s87
    %s104 = sphi 0, %s88
    %s112 = sphi 0, %s114
    %s115 = sphi 0, %s112
    %s116 = sphi 0, %s115
    %s132 = sphi 0, %s116
    %s140 = sphi 0, %s142
    %s143 = sphi 0, %s140
    %s144 = sphi 0, %s143
    %s160 = sphi 0, %s144
  $region4: #{conformer_forward.33} parent=0 // loop_header_branch
    %13 = sbr.rel (%p11) target = $region8
  $region5: #{conformer_forward.33} parent=0 // loop_body
    %s15 = ssub.s32 %s10, 1
    %s16 = ssub.s32 %s10, 2
    %s23 = sadd.s32 1, %s18
    %p24 = scmp.ge.s32.totalorder %s23, 1
    %s25 = scalar_select %p24, 0, %s23
    %s26 = sadd.s32 1, %s17
    %s27 = scalar_select %p24, %s26, %s17
    %p28 = scmp.ge.s32.totalorder %s27, 2
    %s29 = scalar_select %p28, 0, %s27
    %s30 = ssub.s32 %s17, %s29
    %p31 = scmp.eq.s32.totalorder %s30, 0
    %s33 = sadd.s32 %s32, 1
    %s34 = scalar_select %p31, %s32, %s33
    %p37 = pneg %p31
    %p38 = scmp.eq.s32.totalorder %s10, 1
    %p39 = por %p37, %p38
    %p40 = scmp.ne.s32.totalorder %s32, %s35
    %p41 = scmp.eq.s32.totalorder %s10, 0
    %p42 = por %p40, %p41
    %p43 = scmp.ne.s32.totalorder %s32, %s35
    %p44 = scmp.eq.s32.totalorder %s15, 1
    %p45 = por %p43, %p44
    %p46 = scmp.ne.s32.totalorder %s35, %s36
    %p47 = scmp.eq.s32.totalorder %s15, 0
    %p48 = por %p46, %p47
    %p49 = scmp.ne.s32.totalorder %s35, %s36
    %p50 = scmp.eq.s32.totalorder %s16, 1
    %p51 = por %p49, %p50
    %p53 = scmp.ne.s32.totalorder %s36, %s52
    %p54 = scmp.eq.s32.totalorder %s16, 0
    %p55 = por %p53, %p54
    %s56 = ssub.s32 %s18, %s25
    %p57 = scmp.eq.s32.totalorder %s56, 0
    %s59 = sadd.s32 %s58, 1
    %s60 = scalar_select %p57, %s58, %s59
    %p63 = pneg %p57
    %p64 = scmp.eq.s32.totalorder %s10, 1
    %p65 = por %p63, %p64
    %p66 = scmp.ne.s32.totalorder %s58, %s61
    %p67 = scmp.eq.s32.totalorder %s10, 0
    %p68 = por %p66, %p67
    %p69 = scmp.ne.s32.totalorder %s58, %s61
    %p70 = scmp.eq.s32.totalorder %s15, 1
    %p71 = por %p69, %p70
    %p72 = scmp.ne.s32.totalorder %s61, %s62
    %p73 = scmp.eq.s32.totalorder %s15, 0
    %p74 = por %p72, %p73
    %p75 = scmp.ne.s32.totalorder %s61, %s62
    %p76 = scmp.eq.s32.totalorder %s16, 1
    %p77 = por %p75, %p76
    %p79 = scmp.ne.s32.totalorder %s62, %s78
    %p80 = scmp.eq.s32.totalorder %s16, 0
    %p81 = por %p79, %p80
    %s82 = ssub.s32 %s18, %s25
    %p83 = scmp.eq.s32.totalorder %s82, 0
    %s85 = sadd.s32 %s84, 1
    %s86 = scalar_select %p83, %s84, %s85
    %p89 = pneg %p83
    %p90 = scmp.eq.s32.totalorder %s10, 1
    %p91 = por %p89, %p90
    %p92 = scmp.ne.s32.totalorder %s84, %s87
    %p93 = scmp.eq.s32.totalorder %s10, 0
    %p94 = por %p92, %p93
    %p95 = scmp.ne.s32.totalorder %s84, %s87
    %p96 = scmp.eq.s32.totalorder %s15, 1
    %p97 = por %p95, %p96
    %p98 = scmp.ne.s32.totalorder %s87, %s88
    %p99 = scmp.eq.s32.totalorder %s15, 0
    %p100 = por %p98, %p99
    %p101 = scmp.ne.s32.totalorder %s87, %s88
    %p102 = scmp.eq.s32.totalorder %s16, 1
    %p103 = por %p101, %p102
    %p105 = scmp.ne.s32.totalorder %s88, %s104
    %p106 = scmp.eq.s32.totalorder %s16, 0
    %p107 = por %p105, %p106
    %s108 = ssub.s32 %s17, %s29
    %s109 = ssub.s32 %s18, %s25
    %s110 = sor.u32 %s108, %s109
    %p111 = scmp.eq.s32.totalorder %s110, 0
    %s113 = sadd.s32 %s112, 1
    %s114 = scalar_select %p111, %s112, %s113
    %p117 = pneg %p111
    %p118 = scmp.eq.s32.totalorder %s10, 1
    %p119 = por %p117, %p118
    %p120 = scmp.ne.s32.totalorder %s112, %s115
    %p121 = scmp.eq.s32.totalorder %s10, 0
    %p122 = por %p120, %p121
    %p123 = scmp.ne.s32.totalorder %s112, %s115
    %p124 = scmp.eq.s32.totalorder %s15, 1
    %p125 = por %p123, %p124
    %p126 = scmp.ne.s32.totalorder %s115, %s116
    %p127 = scmp.eq.s32.totalorder %s15, 0
    %p128 = por %p126, %p127
    %p129 = scmp.ne.s32.totalorder %s115, %s116
    %p130 = scmp.eq.s32.totalorder %s16, 1
    %p131 = por %p129, %p130
    %p133 = scmp.ne.s32.totalorder %s116, %s132
    %p134 = scmp.eq.s32.totalorder %s16, 0
    %p135 = por %p133, %p134
    %s136 = ssub.s32 %s17, %s29
    %s137 = ssub.s32 %s18, %s25
    %s138 = sor.u32 %s136, %s137
    %p139 = scmp.eq.s32.totalorder %s138, 0
    %s141 = sadd.s32 %s140, 1
    %s142 = scalar_select %p139, %s140, %s141
    %p145 = pneg %p139
    %p146 = scmp.eq.s32.totalorder %s10, 1
    %p147 = por %p145, %p146
    %p148 = scmp.ne.s32.totalorder %s140, %s143
    %p149 = scmp.eq.s32.totalorder %s10, 0
    %p150 = por %p148, %p149
    %p151 = scmp.ne.s32.totalorder %s140, %s143
    %p152 = scmp.eq.s32.totalorder %s15, 1
    %p153 = por %p151, %p152
    %p154 = scmp.ne.s32.totalorder %s143, %s144
    %p155 = scmp.eq.s32.totalorder %s15, 0
    %p156 = por %p154, %p155
    %p157 = scmp.ne.s32.totalorder %s143, %s144
    %p158 = scmp.eq.s32.totalorder %s16, 1
    %p159 = por %p157, %p158
    %p161 = scmp.ne.s32.totalorder %s144, %s160
    %p162 = scmp.eq.s32.totalorder %s16, 0
    %p163 = por %p161, %p162
    %p164 = scmp.le.s32.totalorder 1, %s10
    %p165 = scmp.lt.s32.totalorder %s10, 3
    %p166 = pnand %p164, %p165
    %p167 = pneg %p166
    // Predicated region
    $region9: #{conformer_forward.33} parent=5 // pred_check
      _
    $region10: #{conformer_forward.33} parent=5 // pred_check_branch
      %169 = sbr.rel (%p166) target = $region12
    $region11: #{conformer_forward.33} parent=5 // pred_region
      %s170 = ssub.s32 %s10, 1
      // Predicated region
      $region13: #{conformer_forward.33} parent=11 // pred_check
        %p171 = pneg %p74
      $region14: #{conformer_forward.33} parent=11 // pred_check_branch
        %173 = sbr.rel (%p171) target = $region16
      $region15: #{conformer_forward.33} parent=11 // pred_region
        %p174 = scmp.lt.s32.totalorder %s20, 0
        %s175 = scalar_select %p174, %s20, 0
        %s176 = smul.addr %s175, 4
        %s177 = scalar_lea.vmem %s1, %s176
      $region16: #{conformer_forward.33} parent=11 // pred_fallthru
        _
      // Predicated region
      $region17: #{conformer_forward.33} parent=11 // pred_check
        %p178 = pneg %p100
      $region18: #{conformer_forward.33} parent=11 // pred_check_branch
        %180 = sbr.rel (%p178) target = $region20
      $region19: #{conformer_forward.33} parent=11 // pred_region
        %p181 = scmp.lt.s32.totalorder %s20, 0
        %s182 = scalar_select %p181, %s20, 0
        %s183 = scalar_lea.vmem %s2, %s182
      $region20: #{conformer_forward.33} parent=11 // pred_fallthru
        _
    $region12: #{conformer_forward.33} parent=5 // pred_fallthru
      _
    %p184 = scmp.lt.s32.totalorder %s10, 2
    // Predicated region
    $region21: #{conformer_forward.33} parent=5 // pred_check
      %p185 = pneg %p184
    $region22: #{conformer_forward.33} parent=5 // pred_check_branch
      %187 = sbr.rel (%p185) target = $region24
    $region23: #{conformer_forward.33} parent=5 // pred_region
      // Predicated region
      $region25: #{conformer_forward.33} parent=23 // pred_check
        %p188 = pneg %p42
      $region26: #{conformer_forward.33} parent=23 // pred_check_branch
        %190 = sbr.rel (%p188) target = $region28
      $region27: #{conformer_forward.33} parent=23 // pred_region
        %p191 = scmp.lt.s32.totalorder %s17, 1
        %s192 = scalar_select %p191, %s17, 1
        %s193 = smul.addr %s192, 4
        %s194 = scalar_lea.vmem %s0, %s193
      $region28: #{conformer_forward.33} parent=23 // pred_fallthru
        _
      // Predicated region
      $region29: #{conformer_forward.33} parent=23 // pred_check
        %p195 = pneg %p122
      $region30: #{conformer_forward.33} parent=23 // pred_check_branch
        %197 = sbr.rel (%p195) target = $region32
      $region31: #{conformer_forward.33} parent=23 // pred_region
        %p198 = scmp.lt.s32.totalorder %s17, 1
        %s199 = scalar_select %p198, %s17, 1
        %p200 = scmp.lt.s32.totalorder %s18, 0
        %s201 = scalar_select %p200, %s18, 0
        %s202 = sadd.s32 %s201, %s199
        %s203 = smul.addr %s202, 4
        %s204 = scalar_lea.vmem %s3, %s203
      $region32: #{conformer_forward.33} parent=23 // pred_fallthru
        _
    $region24: #{conformer_forward.33} parent=5 // pred_fallthru
      _
    %p205 = scmp.le.s32.totalorder 1, %s10
    %p206 = scmp.lt.s32.totalorder %s10, 3
    %p207 = pnand %p205, %p206
    %p208 = pneg %p207
    // Predicated region
    $region33: #{conformer_forward.33} parent=5 // pred_check
      _
    $region34: #{conformer_forward.33} parent=5 // pred_check_branch
      %210 = sbr.rel (%p207) target = $region36
    $region35: #{conformer_forward.33} parent=5 // pred_region
      %s211 = ssub.s32 %s10, 1
      %p212 = scmp.lt.s32.totalorder %s19, 1
      %s213 = scalar_select %p212, %s19, 1
      %s214 = smul.addr %s213, 4
      %s215 = scalar_lea.vmem %s0, %s214
      %p216 = pneg %p48
      %p217 = pneg %p45
      %p218 = scmp.lt.s32.totalorder %s20, 0
      %s219 = scalar_select %p218, %s20, 0
      %s220 = smul.addr %s219, 4
      %s221 = scalar_lea.vmem %s1, %s220
      %p222 = pneg %p74
      %p223 = pneg %p71
      %p224 = scmp.lt.s32.totalorder %s20, 0
      %s225 = scalar_select %p224, %s20, 0
      %s226 = scalar_lea.vmem %s2, %s225
      %p227 = pneg %p100
      %p228 = pneg %p97
      %p229 = scmp.lt.s32.totalorder %s19, 1
      %s230 = scalar_select %p229, %s19, 1
      %p231 = scmp.lt.s32.totalorder %s20, 0
      %s232 = scalar_select %p231, %s20, 0
      %s233 = sadd.s32 %s232, %s230
      %s234 = smul.addr %s233, 4
      %s235 = scalar_lea.vmem %s3, %s234
      %p236 = pneg %p128
      %p237 = pneg %p125
      %p238 = pneg %p156
      %p239 = pneg %p153
      %p240 = scmp.lt.s32.totalorder %s19, 1
      %s241 = scalar_select %p240, %s19, 1
      %p242 = scmp.lt.s32.totalorder %s20, 0
      %s243 = scalar_select %p242, %s20, 0
      %s244 = sadd.s32 %s243, %s241
      %s245 = smul.addr %s244, 4
      %s246 = scalar_lea.vmem %s4, %s245
      %p247 = scmp.lt.s32.totalorder %s19, 1
      %s248 = scalar_select %p247, %s19, 1
      %s249 = smul.addr %s248, 4
      %s250 = scalar_lea.vmem %s0, %s249
      %p251 = scmp.lt.s32.totalorder %s20, 0
      %s252 = scalar_select %p251, %s20, 0
      %s253 = smul.addr %s252, 4
      %s254 = scalar_lea.vmem %s1, %s253
      %p255 = scmp.lt.s32.totalorder %s20, 0
      %s256 = scalar_select %p255, %s20, 0
      %s257 = scalar_lea.vmem %s2, %s256
      %p258 = scmp.lt.s32.totalorder %s19, 1
      %s259 = scalar_select %p258, %s19, 1
      %p260 = scmp.lt.s32.totalorder %s20, 0
      %s261 = scalar_select %p260, %s20, 0
      %s262 = sadd.s32 %s261, %s259
      %s263 = smul.addr %s262, 4
      %s264 = scalar_lea.vmem %s3, %s263
      %p265 = scmp.lt.s32.totalorder %s19, 1
      %s266 = scalar_select %p265, %s19, 1
      %p267 = scmp.lt.s32.totalorder %s20, 0
      %s268 = scalar_select %p267, %s20, 0
      %s269 = sadd.s32 %s268, %s266
      %s270 = smul.addr %s269, 4
      %s271 = scalar_lea.vmem %s4, %s270
      %v273 = vld [vmem:[%s250] sm:$0xf]
      %v274 = vld [vmem:[%s254] sm:$0xf]
      %v275 = vld [vmem:[%s254 + $0x4] sm:$0xf]
      %v276 = vld [vmem:[%s254 + $0x8] sm:$0xf]
      %v277 = vld [vmem:[%s254 + $0xc] sm:$0xf]
      %v278 = vld [vmem:[%s254 + $0x10] sm:$0xf]
      %v279 = vld [vmem:[%s254 + $0x14] sm:$0xf]
      %v280 = vld [vmem:[%s254 + $0x18] sm:$0xf]
      %v281 = vld [vmem:[%s254 + $0x1c] sm:$0xf]
      %v282 = vld [vmem:[%s254 + $0x20] sm:$0xf]
      %v283 = vld [vmem:[%s254 + $0x24] sm:$0xf]
      %v284 = vld [vmem:[%s254 + $0x28] sm:$0xf]
      %v285 = vld [vmem:[%s254 + $0x2c] sm:$0xf]
      %v286 = vld [vmem:[%s254 + $0x30] sm:$0xf]
      %v287 = vld [vmem:[%s254 + $0x34] sm:$0xf]
      %v288 = vld [vmem:[%s254 + $0x38] sm:$0xf]
      %v289 = vld [vmem:[%s254 + $0x3c] sm:$0xf]
      %v290 = vld [vmem:[%s257] sm:$0x1]
      %v292 = vlaneseq
      %v293 = vshrl.u32 %v292, 7
      %v294 = vsub.s32 0, %v293
      %v295 = vrot.slane %v290, %v294
      %v313 = vunpack.c.l.b16 %v274
      %v314 = vunpack.c.l.b16 %v275
      %v315 = vunpack.c.l.b16 %v276
      %v316 = vunpack.c.l.b16 %v277
      %v317 = vunpack.c.l.b16 %v278
      %v318 = vunpack.c.l.b16 %v279
      %v319 = vunpack.c.l.b16 %v280
      %v320 = vunpack.c.l.b16 %v281
      %v321 = vunpack.c.l.b16 %v282
      %v322 = vunpack.c.l.b16 %v283
      %v323 = vunpack.c.l.b16 %v284
      %v324 = vunpack.c.l.b16 %v285
      %v325 = vunpack.c.l.b16 %v286
      %v326 = vunpack.c.l.b16 %v287
      %v327 = vunpack.c.l.b16 %v288
      %v328 = vunpack.c.l.b16 %v289
      %v329 = vpack.c.b16 %v314, %v313
      %v330 = vpack.c.b16 %v316, %v315
      %v331 = vpack.c.b16 %v318, %v317
      %v332 = vpack.c.b16 %v320, %v319
      %v333 = vpack.c.b16 %v322, %v321
      %v334 = vpack.c.b16 %v324, %v323
      %v335 = vpack.c.b16 %v326, %v325
      %v336 = vpack.c.b16 %v328, %v327
      %345 = vmatprep.subr.bf16.mxu0 0
      %346 = vmatpush1.bf16.msra.mxu0 %v336
      %347 = vmatprep.subr.bf16.mxu0 0
      %348 = vmatpush1.bf16.msra.mxu0 %v335
      %349 = vmatprep.subr.bf16.mxu0 0
      %350 = vmatpush1.bf16.msra.mxu0 %v334
      %351 = vmatprep.subr.bf16.mxu0 0
      %352 = vmatpush1.bf16.msra.mxu0 %v333
      %353 = vmatprep.subr.bf16.mxu0 0
      %354 = vmatpush1.bf16.msra.mxu0 %v332
      %355 = vmatprep.subr.bf16.mxu0 0
      %356 = vmatpush1.bf16.msra.mxu0 %v331
      %357 = vmatprep.subr.bf16.mxu0 0
      %358 = vmatpush1.bf16.msra.mxu0 %v330
      %359 = vmatprep.subr.bf16.mxu0 0
      %360 = vmatpush1.bf16.msra.mxu0 %v329
      %361 = vmatprep.subr.bf16.mxu0 0
      %362 = vmatpush2.bf16.msra.mxu0 0
      %363 = vmatprep.subr.bf16.mxu0 0
      %364 = vmatpush2.bf16.msra.mxu0 0
      %365 = vmatprep.subr.bf16.mxu0 0
      %366 = vmatpush2.bf16.msra.mxu0 0
      %367 = vmatprep.subr.bf16.mxu0 0
      %368 = vmatpush2.bf16.msra.mxu0 0
      %369 = vmatprep.subr.bf16.mxu0 0
      %370 = vmatpush2.bf16.msra.mxu0 0
      %371 = vmatprep.subr.bf16.mxu0 0
      %372 = vmatpush2.bf16.msra.mxu0 0
      %373 = vmatprep.subr.bf16.mxu0 0
      %374 = vmatpush2.bf16.msra.mxu0 0
      %375 = vmatprep.subr.bf16.mxu0 0
      %376 = vmatpush2.bf16.msra.mxu0 0
      %377 = vmatprep.mubr.bf16.mxu0 0
      %378 = vmatmul.mubr.bf16.gmra.mxu0 %v273
      %v379 = vpop.f32.mrf.mxu0
      %v380 = vadd.f32 %v295, %v379
      %v381 = vpop.f32.mrf.mxu0
      %v382 = vpop.f32.mrf.mxu0
      %v383 = vpop.f32.mrf.mxu0
      %384 = vdwg.mxu0
      %v385 = vld [vmem:[%s264] sm:$0xf]
      %v386 = vunpack.c.l.bf16 %v385
      %v387 = vmul.f32 %v380, 0.5
      %v388 = vadd.f32 %v386, %v387
      %v389 = vpack.c.bf16 %v388, %v388
      %vm390 = vcmask 257024
      %391 = vst.msk [vmem:[%s271] sm:$0xf] %vm390, %v389
      %p392 = scmp.lt.s32.totalorder %s19, 1
      %s393 = scalar_select %p392, %s19, 1
      %p394 = scmp.lt.s32.totalorder %s20, 0
      %s395 = scalar_select %p394, %s20, 0
      %s396 = sadd.s32 %s395, %s393
      %s397 = smul.addr %s396, 4
      %s398 = scalar_lea.vmem %s4, %s397
      // Predicated region
      $region37: #{conformer_forward.33} parent=35 // pred_check
        %p399 = pneg %p153
      $region38: #{conformer_forward.33} parent=35 // pred_check_branch
        %401 = sbr.rel (%p399) target = $region40
      $region39: #{conformer_forward.33} parent=35 // pred_region
        _
      $region40: #{conformer_forward.33} parent=35 // pred_fallthru
        _
    $region36: #{conformer_forward.33} parent=5 // pred_fallthru
      _
    %p402 = scmp.le.s32.totalorder 2, %s10
    // Predicated region
    $region41: #{conformer_forward.33} parent=5 // pred_check
      %p403 = pneg %p402
    $region42: #{conformer_forward.33} parent=5 // pred_check_branch
      %405 = sbr.rel (%p403) target = $region44
    $region43: #{conformer_forward.33} parent=5 // pred_region
      %s406 = ssub.s32 %s10, 2
      // Predicated region
      $region45: #{conformer_forward.33} parent=43 // pred_check
        %p407 = pneg %p159
      $region46: #{conformer_forward.33} parent=43 // pred_check_branch
        %409 = sbr.rel (%p407) target = $region48
      $region47: #{conformer_forward.33} parent=43 // pred_region
        %p410 = scmp.lt.s32.totalorder %s21, 1
        %s411 = scalar_select %p410, %s21, 1
        %p412 = scmp.lt.s32.totalorder %s22, 0
        %s413 = scalar_select %p412, %s22, 0
        %s414 = sadd.s32 %s413, %s411
        %s415 = smul.addr %s414, 4
        %s416 = scalar_lea.vmem %s4, %s415
      $region48: #{conformer_forward.33} parent=43 // pred_fallthru
        _
    $region44: #{conformer_forward.33} parent=5 // pred_fallthru
      _
  $region6: #{conformer_forward.33} parent=0 // loop_footer
    %s14 = sadd.s32 1, %s10
  $region7: #{conformer_forward.33} parent=0 // loop_footer_branch
    %9 = sbr.rel target = $region3
  $region8: #{conformer_forward.33} parent=0 // loop_exit
    _

// kernel: conformer_forward.32
$region0: #{conformer_forward.32}
  #allocation0 [shape = 'u32[]', space=smem, size = 0x4, offset = 0x4, fixed_abs, tag = 'smem constant byte address 0x4 - core index']
  #allocation1 [shape = 'u32[144,128]{1,0:T(1,128)}', space=vmem, size = 0x12000, scoped, tag = 'internal scratch']
  %s0 = inlined_call_operand.vmem [shape: bf16[16,32], index: 0, kind: input, shape index: {}]
  %s1 = inlined_call_operand.vmem [shape: f32[1,32], index: 1, kind: input, shape index: {}]
  %s2 = inlined_call_operand.vmem [shape: f32[1,32], index: 2, kind: input, shape index: {}]
  %s3 = inlined_call_operand.vmem [shape: bf16[32,128], index: 3, kind: input, shape index: {}]
  %s4 = inlined_call_operand.vmem [shape: f32[1,128], index: 4, kind: input, shape index: {}]
  %s5 = inlined_call_operand.vmem [shape: bf16[16,128], index: 5, kind: output, shape index: {}]
  %s6 = sld [smem:[#allocation0]]
  $region53: #{conformer_forward.32} parent=0
    _
  %s8 = ssub.s32 1, %s6
  %s9 = scalar_select 0, %s8, %s6
  loop: start=0, step=1, limit=4
  $region2: #{conformer_forward.32} parent=0 // loop_pre_header
    _
  $region3: #{conformer_forward.32} parent=0 // loop_header
    %s11 = sphi 0, %s15
    %p12 = scmp.ge.s32.totalorder %s11, 4
    %s18 = sphi 0, %s30
    %s19 = sphi 0, %s26
    %s20 = sphi 0, %s18
    %s21 = sphi 0, %s19
    %s22 = sphi 0, %s20
    %s23 = sphi 0, %s21
    %s33 = sphi 0, %s35
    %s36 = sphi 0, %s33
    %s37 = sphi 0, %s36
    %s53 = sphi 0, %s37
    %s57 = sphi 0, %s57
    %s59 = sphi 0, %s57
    %s60 = sphi 0, %s59
    %s74 = sphi 0, %s60
    %s78 = sphi 0, %s78
    %s80 = sphi 0, %s78
    %s81 = sphi 0, %s80
    %s95 = sphi 0, %s81
    %s101 = sphi 0, %s103
    %s104 = sphi 0, %s101
    %s105 = sphi 0, %s104
    %s121 = sphi 0, %s105
    %s127 = sphi 0, %s129
    %s130 = sphi 0, %s127
    %s131 = sphi 0, %s130
    %s147 = sphi 0, %s131
    %s155 = sphi 0, %s157
    %s158 = sphi 0, %s155
    %s159 = sphi 0, %s158
    %s175 = sphi 0, %s159
  $region4: #{conformer_forward.32} parent=0 // loop_header_branch
    %14 = sbr.rel (%p12) target = $region8
  $region5: #{conformer_forward.32} parent=0 // loop_body
    %s16 = ssub.s32 %s11, 1
    %s17 = ssub.s32 %s11, 2
    %s24 = sadd.s32 1, %s19
    %p25 = scmp.ge.s32.totalorder %s24, 1
    %s26 = scalar_select %p25, 0, %s24
    %s27 = sadd.s32 1, %s18
    %s28 = scalar_select %p25, %s27, %s18
    %p29 = scmp.ge.s32.totalorder %s28, 2
    %s30 = scalar_select %p29, 0, %s28
    %s31 = ssub.s32 %s18, %s30
    %p32 = scmp.eq.s32.totalorder %s31, 0
    %s34 = sadd.s32 %s33, 1
    %s35 = scalar_select %p32, %s33, %s34
    %p38 = pneg %p32
    %p39 = scmp.eq.s32.totalorder %s11, 1
    %p40 = por %p38, %p39
    %p41 = scmp.ne.s32.totalorder %s33, %s36
    %p42 = scmp.eq.s32.totalorder %s11, 0
    %p43 = por %p41, %p42
    %p44 = scmp.ne.s32.totalorder %s33, %s36
    %p45 = scmp.eq.s32.totalorder %s16, 1
    %p46 = por %p44, %p45
    %p47 = scmp.ne.s32.totalorder %s36, %s37
    %p48 = scmp.eq.s32.totalorder %s16, 0
    %p49 = por %p47, %p48
    %p50 = scmp.ne.s32.totalorder %s36, %s37
    %p51 = scmp.eq.s32.totalorder %s17, 1
    %p52 = por %p50, %p51
    %p54 = scmp.ne.s32.totalorder %s37, %s53
    %p55 = scmp.eq.s32.totalorder %s17, 0
    %p56 = por %p54, %p55
    %s58 = sadd.s32 %s57, 1
    %p61 = scmp.eq.s32.totalorder %s11, 1
    %p62 = scmp.ne.s32.totalorder %s57, %s59
    %p63 = scmp.eq.s32.totalorder %s11, 0
    %p64 = por %p62, %p63
    %p65 = scmp.ne.s32.totalorder %s57, %s59
    %p66 = scmp.eq.s32.totalorder %s16, 1
    %p67 = por %p65, %p66
    %p68 = scmp.ne.s32.totalorder %s59, %s60
    %p69 = scmp.eq.s32.totalorder %s16, 0
    %p70 = por %p68, %p69
    %p71 = scmp.ne.s32.totalorder %s59, %s60
    %p72 = scmp.eq.s32.totalorder %s17, 1
    %p73 = por %p71, %p72
    %p75 = scmp.ne.s32.totalorder %s60, %s74
    %p76 = scmp.eq.s32.totalorder %s17, 0
    %p77 = por %p75, %p76
    %s79 = sadd.s32 %s78, 1
    %p82 = scmp.eq.s32.totalorder %s11, 1
    %p83 = scmp.ne.s32.totalorder %s78, %s80
    %p84 = scmp.eq.s32.totalorder %s11, 0
    %p85 = por %p83, %p84
    %p86 = scmp.ne.s32.totalorder %s78, %s80
    %p87 = scmp.eq.s32.totalorder %s16, 1
    %p88 = por %p86, %p87
    %p89 = scmp.ne.s32.totalorder %s80, %s81
    %p90 = scmp.eq.s32.totalorder %s16, 0
    %p91 = por %p89, %p90
    %p92 = scmp.ne.s32.totalorder %s80, %s81
    %p93 = scmp.eq.s32.totalorder %s17, 1
    %p94 = por %p92, %p93
    %p96 = scmp.ne.s32.totalorder %s81, %s95
    %p97 = scmp.eq.s32.totalorder %s17, 0
    %p98 = por %p96, %p97
    %s99 = ssub.s32 %s19, %s26
    %p100 = scmp.eq.s32.totalorder %s99, 0
    %s102 = sadd.s32 %s101, 1
    %s103 = scalar_select %p100, %s101, %s102
    %p106 = pneg %p100
    %p107 = scmp.eq.s32.totalorder %s11, 1
    %p108 = por %p106, %p107
    %p109 = scmp.ne.s32.totalorder %s101, %s104
    %p110 = scmp.eq.s32.totalorder %s11, 0
    %p111 = por %p109, %p110
    %p112 = scmp.ne.s32.totalorder %s101, %s104
    %p113 = scmp.eq.s32.totalorder %s16, 1
    %p114 = por %p112, %p113
    %p115 = scmp.ne.s32.totalorder %s104, %s105
    %p116 = scmp.eq.s32.totalorder %s16, 0
    %p117 = por %p115, %p116
    %p118 = scmp.ne.s32.totalorder %s104, %s105
    %p119 = scmp.eq.s32.totalorder %s17, 1
    %p120 = por %p118, %p119
    %p122 = scmp.ne.s32.totalorder %s105, %s121
    %p123 = scmp.eq.s32.totalorder %s17, 0
    %p124 = por %p122, %p123
    %s125 = ssub.s32 %s19, %s26
    %p126 = scmp.eq.s32.totalorder %s125, 0
    %s128 = sadd.s32 %s127, 1
    %s129 = scalar_select %p126, %s127, %s128
    %p132 = pneg %p126
    %p133 = scmp.eq.s32.totalorder %s11, 1
    %p134 = por %p132, %p133
    %p135 = scmp.ne.s32.totalorder %s127, %s130
    %p136 = scmp.eq.s32.totalorder %s11, 0
    %p137 = por %p135, %p136
    %p138 = scmp.ne.s32.totalorder %s127, %s130
    %p139 = scmp.eq.s32.totalorder %s16, 1
    %p140 = por %p138, %p139
    %p141 = scmp.ne.s32.totalorder %s130, %s131
    %p142 = scmp.eq.s32.totalorder %s16, 0
    %p143 = por %p141, %p142
    %p144 = scmp.ne.s32.totalorder %s130, %s131
    %p145 = scmp.eq.s32.totalorder %s17, 1
    %p146 = por %p144, %p145
    %p148 = scmp.ne.s32.totalorder %s131, %s147
    %p149 = scmp.eq.s32.totalorder %s17, 0
    %p150 = por %p148, %p149
    %s151 = ssub.s32 %s18, %s30
    %s152 = ssub.s32 %s19, %s26
    %s153 = sor.u32 %s151, %s152
    %p154 = scmp.eq.s32.totalorder %s153, 0
    %s156 = sadd.s32 %s155, 1
    %s157 = scalar_select %p154, %s155, %s156
    %p160 = pneg %p154
    %p161 = scmp.eq.s32.totalorder %s11, 1
    %p162 = por %p160, %p161
    %p163 = scmp.ne.s32.totalorder %s155, %s158
    %p164 = scmp.eq.s32.totalorder %s11, 0
    %p165 = por %p163, %p164
    %p166 = scmp.ne.s32.totalorder %s155, %s158
    %p167 = scmp.eq.s32.totalorder %s16, 1
    %p168 = por %p166, %p167
    %p169 = scmp.ne.s32.totalorder %s158, %s159
    %p170 = scmp.eq.s32.totalorder %s16, 0
    %p171 = por %p169, %p170
    %p172 = scmp.ne.s32.totalorder %s158, %s159
    %p173 = scmp.eq.s32.totalorder %s17, 1
    %p174 = por %p172, %p173
    %p176 = scmp.ne.s32.totalorder %s159, %s175
    %p177 = scmp.eq.s32.totalorder %s17, 0
    %p178 = por %p176, %p177
    %p179 = scmp.le.s32.totalorder 1, %s11
    %p180 = scmp.lt.s32.totalorder %s11, 3
    %p181 = pnand %p179, %p180
    %p182 = pneg %p181
    // Predicated region
    $region9: #{conformer_forward.32} parent=5 // pred_check
      _
    $region10: #{conformer_forward.32} parent=5 // pred_check_branch
      %184 = sbr.rel (%p181) target = $region12
    $region11: #{conformer_forward.32} parent=5 // pred_region
      %s185 = ssub.s32 %s11, 1
      // Predicated region
      $region13: #{conformer_forward.32} parent=11 // pred_check
        %p186 = pneg %p70
      $region14: #{conformer_forward.32} parent=11 // pred_check_branch
        %188 = sbr.rel (%p186) target = $region16
      $region15: #{conformer_forward.32} parent=11 // pred_region
        _
      $region16: #{conformer_forward.32} parent=11 // pred_fallthru
        _
      // Predicated region
      $region17: #{conformer_forward.32} parent=11 // pred_check
        %p189 = pneg %p91
      $region18: #{conformer_forward.32} parent=11 // pred_check_branch
        %191 = sbr.rel (%p189) target = $region20
      $region19: #{conformer_forward.32} parent=11 // pred_region
        _
      $region20: #{conformer_forward.32} parent=11 // pred_fallthru
        _
      // Predicated region
      $region21: #{conformer_forward.32} parent=11 // pred_check
        %p192 = pneg %p117
      $region22: #{conformer_forward.32} parent=11 // pred_check_branch
        %194 = sbr.rel (%p192) target = $region24
      $region23: #{conformer_forward.32} parent=11 // pred_region
        %p195 = scmp.lt.s32.totalorder %s21, 0
        %s196 = scalar_select %p195, %s21, 0
        %s197 = smul.addr %s196, 4
        %s198 = scalar_lea.vmem %s3, %s197
      $region24: #{conformer_forward.32} parent=11 // pred_fallthru
        _
      // Predicated region
      $region25: #{conformer_forward.32} parent=11 // pred_check
        %p199 = pneg %p143
      $region26: #{conformer_forward.32} parent=11 // pred_check_branch
        %201 = sbr.rel (%p199) target = $region28
      $region27: #{conformer_forward.32} parent=11 // pred_region
        %p202 = scmp.lt.s32.totalorder %s21, 0
        %s203 = scalar_select %p202, %s21, 0
        %s204 = scalar_lea.vmem %s4, %s203
      $region28: #{conformer_forward.32} parent=11 // pred_fallthru
        _
    $region12: #{conformer_forward.32} parent=5 // pred_fallthru
      _
    %p205 = scmp.lt.s32.totalorder %s11, 2
    // Predicated region
    $region29: #{conformer_forward.32} parent=5 // pred_check
      %p206 = pneg %p205
    $region30: #{conformer_forward.32} parent=5 // pred_check_branch
      %208 = sbr.rel (%p206) target = $region32
    $region31: #{conformer_forward.32} parent=5 // pred_region
      // Predicated region
      $region33: #{conformer_forward.32} parent=31 // pred_check
        %p209 = pneg %p43
      $region34: #{conformer_forward.32} parent=31 // pred_check_branch
        %211 = sbr.rel (%p209) target = $region36
      $region35: #{conformer_forward.32} parent=31 // pred_region
        %p212 = scmp.lt.s32.totalorder %s18, 1
        %s213 = scalar_select %p212, %s18, 1
        %s214 = smul.addr %s213, 4
        %s215 = scalar_lea.vmem %s0, %s214
      $region36: #{conformer_forward.32} parent=31 // pred_fallthru
        _
    $region32: #{conformer_forward.32} parent=5 // pred_fallthru
      _
    %p216 = scmp.le.s32.totalorder 1, %s11
    %p217 = scmp.lt.s32.totalorder %s11, 3
    %p218 = pnand %p216, %p217
    %p219 = pneg %p218
    // Predicated region
    $region37: #{conformer_forward.32} parent=5 // pred_check
      _
    $region38: #{conformer_forward.32} parent=5 // pred_check_branch
      %221 = sbr.rel (%p218) target = $region40
    $region39: #{conformer_forward.32} parent=5 // pred_region
      %s222 = ssub.s32 %s11, 1
      %p223 = scmp.lt.s32.totalorder %s20, 1
      %s224 = scalar_select %p223, %s20, 1
      %s225 = smul.addr %s224, 4
      %s226 = scalar_lea.vmem %s0, %s225
      %p227 = pneg %p49
      %p228 = pneg %p46
      %p229 = pneg %p70
      %p230 = pneg %p67
      %p231 = pneg %p91
      %p232 = pneg %p88
      %p233 = scmp.lt.s32.totalorder %s21, 0
      %s234 = scalar_select %p233, %s21, 0
      %s235 = smul.addr %s234, 4
      %s236 = scalar_lea.vmem %s3, %s235
      %p237 = pneg %p117
      %p238 = pneg %p114
      %p239 = scmp.lt.s32.totalorder %s21, 0
      %s240 = scalar_select %p239, %s21, 0
      %s241 = scalar_lea.vmem %s4, %s240
      %p242 = pneg %p143
      %p243 = pneg %p140
      %p244 = pneg %p171
      %p245 = pneg %p168
      %p246 = scmp.lt.s32.totalorder %s20, 1
      %s247 = scalar_select %p246, %s20, 1
      %p248 = scmp.lt.s32.totalorder %s21, 0
      %s249 = scalar_select %p248, %s21, 0
      %s250 = sadd.s32 %s249, %s247
      %s251 = smul.addr %s250, 4
      %s252 = scalar_lea.vmem %s5, %s251
      %p253 = scmp.lt.s32.totalorder %s20, 1
      %s254 = scalar_select %p253, %s20, 1
      %s255 = smul.addr %s254, 4
      %s256 = scalar_lea.vmem %s0, %s255
      %p257 = scmp.lt.s32.totalorder %s21, 0
      %s258 = scalar_select %p257, %s21, 0
      %s259 = smul.addr %s258, 4
      %s260 = scalar_lea.vmem %s3, %s259
      %p261 = scmp.lt.s32.totalorder %s21, 0
      %s262 = scalar_select %p261, %s21, 0
      %s263 = scalar_lea.vmem %s4, %s262
      %p264 = scmp.lt.s32.totalorder %s20, 1
      %s265 = scalar_select %p264, %s20, 1
      %p266 = scmp.lt.s32.totalorder %s21, 0
      %s267 = scalar_select %p266, %s21, 0
      %s268 = sadd.s32 %s267, %s265
      %s269 = smul.addr %s268, 4
      %s270 = scalar_lea.vmem %s5, %s269
      %v272 = vld [vmem:[%s256] sm:$0xf]
      %v273 = vunpack.c.l.bf16 %v272
      %vm274 = vcmask 261120
      %v275 = vsel %vm274, %v273, 0.0
      %276 = vadd.xlane.f32.xlu0 %v275
      %v277 = vpop.xlane.xlu0 %276
      %v278 = vrcp.pop 32.0
      %v279 = vmul.f32 %v277, %v278
      %v280 = vsub.f32 %v273, %v279
      %v281 = vmul.f32 %v280, %v280
      %v282 = vsel %vm274, %v281, 0.0
      %283 = vadd.xlane.f32.xlu0 %v282
      %v284 = vpop.xlane.xlu0 %283
      %v285 = vmul.f32 %v284, %v278
      %v286 = vadd.f32 %v285, 1e-05
      %v287 = vrsqrt.pop %v286
      %v288 = vmul.f32 %v280, %v287
      %v289 = vld [vmem:[%s1] sm:$0x1]
      %v291 = vlaneseq
      %v292 = vshrl.u32 %v291, 7
      %v293 = vsub.s32 0, %v292
      %v294 = vrot.slane %v289, %v293
      %v296 = vmul.f32 %v288, %v294
      %v297 = vld [vmem:[%s2] sm:$0x1]
      %v299 = vlaneseq
      %v300 = vshrl.u32 %v299, 7
      %v301 = vsub.s32 0, %v300
      %v302 = vrot.slane %v297, %v301
      %v304 = vadd.f32 %v296, %v302
      %v305 = vpack.c.bf16 %v304, %v304
      %v306 = vld [vmem:[%s260] sm:$0xf]
      %v307 = vld [vmem:[%s260 + $0x4] sm:$0xf]
      %v308 = vld [vmem:[%s260 + $0x8] sm:$0xf]
      %v309 = vld [vmem:[%s260 + $0xc] sm:$0xf]
      %v310 = vld [vmem:[%s263] sm:$0x1]
      %v312 = vlaneseq
      %v313 = vshrl.u32 %v312, 7
      %v314 = vsub.s32 0, %v313
      %v315 = vrot.slane %v310, %v314
      %v321 = vunpack.c.l.b16 %v306
      %v322 = vunpack.c.l.b16 %v307
      %v323 = vunpack.c.l.b16 %v308
      %v324 = vunpack.c.l.b16 %v309
      %v325 = vpack.c.b16 %v322, %v321
      %v326 = vpack.c.b16 %v324, %v323
      %v330 = vsel %vm274, %v305, 0
      %332 = vmatprep.subr.bf16.mxu0 0
      %333 = vmatpush1.bf16.msra.mxu0 0
      %334 = vmatprep.subr.bf16.mxu0 0
      %335 = vmatpush1.bf16.msra.mxu0 0
      %336 = vmatprep.subr.bf16.mxu0 0
      %337 = vmatpush1.bf16.msra.mxu0 0
      %338 = vmatprep.subr.bf16.mxu0 0
      %339 = vmatpush1.bf16.msra.mxu0 0
      %340 = vmatprep.subr.bf16.mxu0 0
      %341 = vmatpush1.bf16.msra.mxu0 0
      %342 = vmatprep.subr.bf16.mxu0 0
      %343 = vmatpush1.bf16.msra.mxu0 0
      %344 = vmatprep.subr.bf16.mxu0 0
      %345 = vmatpush1.bf16.msra.mxu0 %v326
      %346 = vmatprep.subr.bf16.mxu0 0
      %347 = vmatpush1.bf16.msra.mxu0 %v325
      %348 = vmatprep.subr.bf16.mxu0 0
      %349 = vmatpush2.bf16.msra.mxu0 0
      %350 = vmatprep.subr.bf16.mxu0 0
      %351 = vmatpush2.bf16.msra.mxu0 0
      %352 = vmatprep.subr.bf16.mxu0 0
      %353 = vmatpush2.bf16.msra.mxu0 0
      %354 = vmatprep.subr.bf16.mxu0 0
      %355 = vmatpush2.bf16.msra.mxu0 0
      %356 = vmatprep.subr.bf16.mxu0 0
      %357 = vmatpush2.bf16.msra.mxu0 0
      %358 = vmatprep.subr.bf16.mxu0 0
      %359 = vmatpush2.bf16.msra.mxu0 0
      %360 = vmatprep.subr.bf16.mxu0 0
      %361 = vmatpush2.bf16.msra.mxu0 0
      %362 = vmatprep.subr.bf16.mxu0 0
      %363 = vmatpush2.bf16.msra.mxu0 0
      %364 = vmatprep.mubr.bf16.mxu0 0
      %365 = vmatmul.mubr.bf16.gmra.mxu0 %v330
      %v366 = vpop.f32.mrf.mxu0
      %v367 = vadd.f32 %v315, %v366
      %v368 = vpop.f32.mrf.mxu0
      %v369 = vpop.f32.mrf.mxu0
      %v370 = vpop.f32.mrf.mxu0
      %371 = vdwg.mxu0
      %v372 = vsub.f32 0.0, %v367
      %v373 = vmul.f32 %v372, 1.442695
      %v374 = vpow.pop %v373
      %v375 = vadd.f32 %v374, 1.0
      %v376 = vrcp.pop %v375
      %v377 = vmul.f32 1.0, %v376
      %v378 = vmul.f32 %v367, %v377
      %v379 = vpack.c.bf16 %v378, %v378
      %380 = vst [vmem:[%s270] sm:$0xf] %v379
      %p381 = scmp.lt.s32.totalorder %s20, 1
      %s382 = scalar_select %p381, %s20, 1
      %p383 = scmp.lt.s32.totalorder %s21, 0
      %s384 = scalar_select %p383, %s21, 0
      %s385 = sadd.s32 %s384, %s382
      %s386 = smul.addr %s385, 4
      %s387 = scalar_lea.vmem %s5, %s386
      // Predicated region
      $region41: #{conformer_forward.32} parent=39 // pred_check
        %p388 = pneg %p168
      $region42: #{conformer_forward.32} parent=39 // pred_check_branch
        %390 = sbr.rel (%p388) target = $region44
      $region43: #{conformer_forward.32} parent=39 // pred_region
        _
      $region44: #{conformer_forward.32} parent=39 // pred_fallthru
        _
    $region40: #{conformer_forward.32} parent=5 // pred_fallthru
      _
    %p391 = scmp.le.s32.totalorder 2, %s11
    // Predicated region
    $region45: #{conformer_forward.32} parent=5 // pred_check
      %p392 = pneg %p391
    $region46: #{conformer_forward.32} parent=5 // pred_check_branch
      %394 = sbr.rel (%p392) target = $region48
    $region47: #{conformer_forward.32} parent=5 // pred_region
      %s395 = ssub.s32 %s11, 2
      // Predicated region
      $region49: #{conformer_forward.32} parent=47 // pred_check
        %p396 = pneg %p174
      $region50: #{conformer_forward.32} parent=47 // pred_check_branch
        %398 = sbr.rel (%p396) target = $region52
      $region51: #{conformer_forward.32} parent=47 // pred_region
        %p399 = scmp.lt.s32.totalorder %s22, 1
        %s400 = scalar_select %p399, %s22, 1
        %p401 = scmp.lt.s32.totalorder %s23, 0
        %s402 = scalar_select %p401, %s23, 0
        %s403 = sadd.s32 %s402, %s400
        %s404 = smul.addr %s403, 4
        %s405 = scalar_lea.vmem %s5, %s404
      $region52: #{conformer_forward.32} parent=47 // pred_fallthru
        _
    $region48: #{conformer_forward.32} parent=5 // pred_fallthru
      _
  $region6: #{conformer_forward.32} parent=0 // loop_footer
    %s15 = sadd.s32 1, %s11
  $region7: #{conformer_forward.32} parent=0 // loop_footer_branch
    %10 = sbr.rel target = $region3
  $region8: #{conformer_forward.32} parent=0 // loop_exit
    _

// kernel: conformer_forward.34
$region0: #{conformer_forward.34}
  #allocation0 [shape = 'u32[]', space=smem, size = 0x4, offset = 0x4, fixed_abs, tag = 'smem constant byte address 0x4 - core index']
  #allocation1 [shape = 'u32[144,128]{1,0:T(1,128)}', space=vmem, size = 0x12000, scoped, tag = 'internal scratch']
  %s0 = inlined_call_operand.vmem [shape: bf16[16,32], index: 0, kind: input, shape index: {}]
  %s1 = inlined_call_operand.vmem [shape: f32[1,32], index: 1, kind: input, shape index: {}]
  %s2 = inlined_call_operand.vmem [shape: f32[1,32], index: 2, kind: input, shape index: {}]
  %s3 = inlined_call_operand.vmem [shape: bf16[32,96], index: 3, kind: input, shape index: {}]
  %s4 = inlined_call_operand.vmem [shape: f32[1,96], index: 4, kind: input, shape index: {}]
  %s5 = inlined_call_operand.vmem [shape: bf16[16,96], index: 5, kind: output, shape index: {}]
  %s6 = sld [smem:[#allocation0]]
  $region53: #{conformer_forward.34} parent=0
    _
  %s8 = ssub.s32 1, %s6
  %s9 = scalar_select 0, %s8, %s6
  loop: start=0, step=1, limit=4
  $region2: #{conformer_forward.34} parent=0 // loop_pre_header
    _
  $region3: #{conformer_forward.34} parent=0 // loop_header
    %s11 = sphi 0, %s15
    %p12 = scmp.ge.s32.totalorder %s11, 4
    %s18 = sphi 0, %s30
    %s19 = sphi 0, %s26
    %s20 = sphi 0, %s18
    %s21 = sphi 0, %s19
    %s22 = sphi 0, %s20
    %s23 = sphi 0, %s21
    %s33 = sphi 0, %s35
    %s36 = sphi 0, %s33
    %s37 = sphi 0, %s36
    %s53 = sphi 0, %s37
    %s57 = sphi 0, %s57
    %s59 = sphi 0, %s57
    %s60 = sphi 0, %s59
    %s74 = sphi 0, %s60
    %s78 = sphi 0, %s78
    %s80 = sphi 0, %s78
    %s81 = sphi 0, %s80
    %s95 = sphi 0, %s81
    %s101 = sphi 0, %s103
    %s104 = sphi 0, %s101
    %s105 = sphi 0, %s104
    %s121 = sphi 0, %s105
    %s127 = sphi 0, %s129
    %s130 = sphi 0, %s127
    %s131 = sphi 0, %s130
    %s147 = sphi 0, %s131
    %s155 = sphi 0, %s157
    %s158 = sphi 0, %s155
    %s159 = sphi 0, %s158
    %s175 = sphi 0, %s159
  $region4: #{conformer_forward.34} parent=0 // loop_header_branch
    %14 = sbr.rel (%p12) target = $region8
  $region5: #{conformer_forward.34} parent=0 // loop_body
    %s16 = ssub.s32 %s11, 1
    %s17 = ssub.s32 %s11, 2
    %s24 = sadd.s32 1, %s19
    %p25 = scmp.ge.s32.totalorder %s24, 1
    %s26 = scalar_select %p25, 0, %s24
    %s27 = sadd.s32 1, %s18
    %s28 = scalar_select %p25, %s27, %s18
    %p29 = scmp.ge.s32.totalorder %s28, 2
    %s30 = scalar_select %p29, 0, %s28
    %s31 = ssub.s32 %s18, %s30
    %p32 = scmp.eq.s32.totalorder %s31, 0
    %s34 = sadd.s32 %s33, 1
    %s35 = scalar_select %p32, %s33, %s34
    %p38 = pneg %p32
    %p39 = scmp.eq.s32.totalorder %s11, 1
    %p40 = por %p38, %p39
    %p41 = scmp.ne.s32.totalorder %s33, %s36
    %p42 = scmp.eq.s32.totalorder %s11, 0
    %p43 = por %p41, %p42
    %p44 = scmp.ne.s32.totalorder %s33, %s36
    %p45 = scmp.eq.s32.totalorder %s16, 1
    %p46 = por %p44, %p45
    %p47 = scmp.ne.s32.totalorder %s36, %s37
    %p48 = scmp.eq.s32.totalorder %s16, 0
    %p49 = por %p47, %p48
    %p50 = scmp.ne.s32.totalorder %s36, %s37
    %p51 = scmp.eq.s32.totalorder %s17, 1
    %p52 = por %p50, %p51
    %p54 = scmp.ne.s32.totalorder %s37, %s53
    %p55 = scmp.eq.s32.totalorder %s17, 0
    %p56 = por %p54, %p55
    %s58 = sadd.s32 %s57, 1
    %p61 = scmp.eq.s32.totalorder %s11, 1
    %p62 = scmp.ne.s32.totalorder %s57, %s59
    %p63 = scmp.eq.s32.totalorder %s11, 0
    %p64 = por %p62, %p63
    %p65 = scmp.ne.s32.totalorder %s57, %s59
    %p66 = scmp.eq.s32.totalorder %s16, 1
    %p67 = por %p65, %p66
    %p68 = scmp.ne.s32.totalorder %s59, %s60
    %p69 = scmp.eq.s32.totalorder %s16, 0
    %p70 = por %p68, %p69
    %p71 = scmp.ne.s32.totalorder %s59, %s60
    %p72 = scmp.eq.s32.totalorder %s17, 1
    %p73 = por %p71, %p72
    %p75 = scmp.ne.s32.totalorder %s60, %s74
    %p76 = scmp.eq.s32.totalorder %s17, 0
    %p77 = por %p75, %p76
    %s79 = sadd.s32 %s78, 1
    %p82 = scmp.eq.s32.totalorder %s11, 1
    %p83 = scmp.ne.s32.totalorder %s78, %s80
    %p84 = scmp.eq.s32.totalorder %s11, 0
    %p85 = por %p83, %p84
    %p86 = scmp.ne.s32.totalorder %s78, %s80
    %p87 = scmp.eq.s32.totalorder %s16, 1
    %p88 = por %p86, %p87
    %p89 = scmp.ne.s32.totalorder %s80, %s81
    %p90 = scmp.eq.s32.totalorder %s16, 0
    %p91 = por %p89, %p90
    %p92 = scmp.ne.s32.totalorder %s80, %s81
    %p93 = scmp.eq.s32.totalorder %s17, 1
    %p94 = por %p92, %p93
    %p96 = scmp.ne.s32.totalorder %s81, %s95
    %p97 = scmp.eq.s32.totalorder %s17, 0
    %p98 = por %p96, %p97
    %s99 = ssub.s32 %s19, %s26
    %p100 = scmp.eq.s32.totalorder %s99, 0
    %s102 = sadd.s32 %s101, 1
    %s103 = scalar_select %p100, %s101, %s102
    %p106 = pneg %p100
    %p107 = scmp.eq.s32.totalorder %s11, 1
    %p108 = por %p106, %p107
    %p109 = scmp.ne.s32.totalorder %s101, %s104
    %p110 = scmp.eq.s32.totalorder %s11, 0
    %p111 = por %p109, %p110
    %p112 = scmp.ne.s32.totalorder %s101, %s104
    %p113 = scmp.eq.s32.totalorder %s16, 1
    %p114 = por %p112, %p113
    %p115 = scmp.ne.s32.totalorder %s104, %s105
    %p116 = scmp.eq.s32.totalorder %s16, 0
    %p117 = por %p115, %p116
    %p118 = scmp.ne.s32.totalorder %s104, %s105
    %p119 = scmp.eq.s32.totalorder %s17, 1
    %p120 = por %p118, %p119
    %p122 = scmp.ne.s32.totalorder %s105, %s121
    %p123 = scmp.eq.s32.totalorder %s17, 0
    %p124 = por %p122, %p123
    %s125 = ssub.s32 %s19, %s26
    %p126 = scmp.eq.s32.totalorder %s125, 0
    %s128 = sadd.s32 %s127, 1
    %s129 = scalar_select %p126, %s127, %s128
    %p132 = pneg %p126
    %p133 = scmp.eq.s32.totalorder %s11, 1
    %p134 = por %p132, %p133
    %p135 = scmp.ne.s32.totalorder %s127, %s130
    %p136 = scmp.eq.s32.totalorder %s11, 0
    %p137 = por %p135, %p136
    %p138 = scmp.ne.s32.totalorder %s127, %s130
    %p139 = scmp.eq.s32.totalorder %s16, 1
    %p140 = por %p138, %p139
    %p141 = scmp.ne.s32.totalorder %s130, %s131
    %p142 = scmp.eq.s32.totalorder %s16, 0
    %p143 = por %p141, %p142
    %p144 = scmp.ne.s32.totalorder %s130, %s131
    %p145 = scmp.eq.s32.totalorder %s17, 1
    %p146 = por %p144, %p145
    %p148 = scmp.ne.s32.totalorder %s131, %s147
    %p149 = scmp.eq.s32.totalorder %s17, 0
    %p150 = por %p148, %p149
    %s151 = ssub.s32 %s18, %s30
    %s152 = ssub.s32 %s19, %s26
    %s153 = sor.u32 %s151, %s152
    %p154 = scmp.eq.s32.totalorder %s153, 0
    %s156 = sadd.s32 %s155, 1
    %s157 = scalar_select %p154, %s155, %s156
    %p160 = pneg %p154
    %p161 = scmp.eq.s32.totalorder %s11, 1
    %p162 = por %p160, %p161
    %p163 = scmp.ne.s32.totalorder %s155, %s158
    %p164 = scmp.eq.s32.totalorder %s11, 0
    %p165 = por %p163, %p164
    %p166 = scmp.ne.s32.totalorder %s155, %s158
    %p167 = scmp.eq.s32.totalorder %s16, 1
    %p168 = por %p166, %p167
    %p169 = scmp.ne.s32.totalorder %s158, %s159
    %p170 = scmp.eq.s32.totalorder %s16, 0
    %p171 = por %p169, %p170
    %p172 = scmp.ne.s32.totalorder %s158, %s159
    %p173 = scmp.eq.s32.totalorder %s17, 1
    %p174 = por %p172, %p173
    %p176 = scmp.ne.s32.totalorder %s159, %s175
    %p177 = scmp.eq.s32.totalorder %s17, 0
    %p178 = por %p176, %p177
    %p179 = scmp.le.s32.totalorder 1, %s11
    %p180 = scmp.lt.s32.totalorder %s11, 3
    %p181 = pnand %p179, %p180
    %p182 = pneg %p181
    // Predicated region
    $region9: #{conformer_forward.34} parent=5 // pred_check
      _
    $region10: #{conformer_forward.34} parent=5 // pred_check_branch
      %184 = sbr.rel (%p181) target = $region12
    $region11: #{conformer_forward.34} parent=5 // pred_region
      %s185 = ssub.s32 %s11, 1
      // Predicated region
      $region13: #{conformer_forward.34} parent=11 // pred_check
        %p186 = pneg %p70
      $region14: #{conformer_forward.34} parent=11 // pred_check_branch
        %188 = sbr.rel (%p186) target = $region16
      $region15: #{conformer_forward.34} parent=11 // pred_region
        _
      $region16: #{conformer_forward.34} parent=11 // pred_fallthru
        _
      // Predicated region
      $region17: #{conformer_forward.34} parent=11 // pred_check
        %p189 = pneg %p91
      $region18: #{conformer_forward.34} parent=11 // pred_check_branch
        %191 = sbr.rel (%p189) target = $region20
      $region19: #{conformer_forward.34} parent=11 // pred_region
        _
      $region20: #{conformer_forward.34} parent=11 // pred_fallthru
        _
      // Predicated region
      $region21: #{conformer_forward.34} parent=11 // pred_check
        %p192 = pneg %p117
      $region22: #{conformer_forward.34} parent=11 // pred_check_branch
        %194 = sbr.rel (%p192) target = $region24
      $region23: #{conformer_forward.34} parent=11 // pred_region
        %p195 = scmp.lt.s32.totalorder %s21, 0
        %s196 = scalar_select %p195, %s21, 0
        %s197 = smul.addr %s196, 4
        %s198 = scalar_lea.vmem %s3, %s197
      $region24: #{conformer_forward.34} parent=11 // pred_fallthru
        _
      // Predicated region
      $region25: #{conformer_forward.34} parent=11 // pred_check
        %p199 = pneg %p143
      $region26: #{conformer_forward.34} parent=11 // pred_check_branch
        %201 = sbr.rel (%p199) target = $region28
      $region27: #{conformer_forward.34} parent=11 // pred_region
        %p202 = scmp.lt.s32.totalorder %s21, 0
        %s203 = scalar_select %p202, %s21, 0
        %s204 = scalar_lea.vmem %s4, %s203
      $region28: #{conformer_forward.34} parent=11 // pred_fallthru
        _
    $region12: #{conformer_forward.34} parent=5 // pred_fallthru
      _
    %p205 = scmp.lt.s32.totalorder %s11, 2
    // Predicated region
    $region29: #{conformer_forward.34} parent=5 // pred_check
      %p206 = pneg %p205
    $region30: #{conformer_forward.34} parent=5 // pred_check_branch
      %208 = sbr.rel (%p206) target = $region32
    $region31: #{conformer_forward.34} parent=5 // pred_region
      // Predicated region
      $region33: #{conformer_forward.34} parent=31 // pred_check
        %p209 = pneg %p43
      $region34: #{conformer_forward.34} parent=31 // pred_check_branch
        %211 = sbr.rel (%p209) target = $region36
      $region35: #{conformer_forward.34} parent=31 // pred_region
        %p212 = scmp.lt.s32.totalorder %s18, 1
        %s213 = scalar_select %p212, %s18, 1
        %s214 = smul.addr %s213, 4
        %s215 = scalar_lea.vmem %s0, %s214
      $region36: #{conformer_forward.34} parent=31 // pred_fallthru
        _
    $region32: #{conformer_forward.34} parent=5 // pred_fallthru
      _
    %p216 = scmp.le.s32.totalorder 1, %s11
    %p217 = scmp.lt.s32.totalorder %s11, 3
    %p218 = pnand %p216, %p217
    %p219 = pneg %p218
    // Predicated region
    $region37: #{conformer_forward.34} parent=5 // pred_check
      _
    $region38: #{conformer_forward.34} parent=5 // pred_check_branch
      %221 = sbr.rel (%p218) target = $region40
    $region39: #{conformer_forward.34} parent=5 // pred_region
      %s222 = ssub.s32 %s11, 1
      %p223 = scmp.lt.s32.totalorder %s20, 1
      %s224 = scalar_select %p223, %s20, 1
      %s225 = smul.addr %s224, 4
      %s226 = scalar_lea.vmem %s0, %s225
      %p227 = pneg %p49
      %p228 = pneg %p46
      %p229 = pneg %p70
      %p230 = pneg %p67
      %p231 = pneg %p91
      %p232 = pneg %p88
      %p233 = scmp.lt.s32.totalorder %s21, 0
      %s234 = scalar_select %p233, %s21, 0
      %s235 = smul.addr %s234, 4
      %s236 = scalar_lea.vmem %s3, %s235
      %p237 = pneg %p117
      %p238 = pneg %p114
      %p239 = scmp.lt.s32.totalorder %s21, 0
      %s240 = scalar_select %p239, %s21, 0
      %s241 = scalar_lea.vmem %s4, %s240
      %p242 = pneg %p143
      %p243 = pneg %p140
      %p244 = pneg %p171
      %p245 = pneg %p168
      %p246 = scmp.lt.s32.totalorder %s20, 1
      %s247 = scalar_select %p246, %s20, 1
      %p248 = scmp.lt.s32.totalorder %s21, 0
      %s249 = scalar_select %p248, %s21, 0
      %s250 = sadd.s32 %s249, %s247
      %s251 = smul.addr %s250, 4
      %s252 = scalar_lea.vmem %s5, %s251
      %p253 = scmp.lt.s32.totalorder %s20, 1
      %s254 = scalar_select %p253, %s20, 1
      %s255 = smul.addr %s254, 4
      %s256 = scalar_lea.vmem %s0, %s255
      %p257 = scmp.lt.s32.totalorder %s21, 0
      %s258 = scalar_select %p257, %s21, 0
      %s259 = smul.addr %s258, 4
      %s260 = scalar_lea.vmem %s3, %s259
      %p261 = scmp.lt.s32.totalorder %s21, 0
      %s262 = scalar_select %p261, %s21, 0
      %s263 = scalar_lea.vmem %s4, %s262
      %p264 = scmp.lt.s32.totalorder %s20, 1
      %s265 = scalar_select %p264, %s20, 1
      %p266 = scmp.lt.s32.totalorder %s21, 0
      %s267 = scalar_select %p266, %s21, 0
      %s268 = sadd.s32 %s267, %s265
      %s269 = smul.addr %s268, 4
      %s270 = scalar_lea.vmem %s5, %s269
      %v272 = vld [vmem:[%s256] sm:$0xf]
      %v273 = vunpack.c.l.bf16 %v272
      %vm274 = vcmask 261120
      %v275 = vsel %vm274, %v273, 0.0
      %276 = vadd.xlane.f32.xlu0 %v275
      %v277 = vpop.xlane.xlu0 %276
      %v278 = vrcp.pop 32.0
      %v279 = vmul.f32 %v277, %v278
      %v280 = vsub.f32 %v273, %v279
      %v281 = vmul.f32 %v280, %v280
      %v282 = vsel %vm274, %v281, 0.0
      %283 = vadd.xlane.f32.xlu0 %v282
      %v284 = vpop.xlane.xlu0 %283
      %v285 = vmul.f32 %v284, %v278
      %v286 = vadd.f32 %v285, 1e-05
      %v287 = vrsqrt.pop %v286
      %v288 = vmul.f32 %v280, %v287
      %v289 = vld [vmem:[%s1] sm:$0x1]
      %v291 = vlaneseq
      %v292 = vshrl.u32 %v291, 7
      %v293 = vsub.s32 0, %v292
      %v294 = vrot.slane %v289, %v293
      %v296 = vmul.f32 %v288, %v294
      %v297 = vld [vmem:[%s2] sm:$0x1]
      %v299 = vlaneseq
      %v300 = vshrl.u32 %v299, 7
      %v301 = vsub.s32 0, %v300
      %v302 = vrot.slane %v297, %v301
      %v304 = vadd.f32 %v296, %v302
      %v305 = vpack.c.bf16 %v304, %v304
      %v306 = vld [vmem:[%s260] sm:$0xf]
      %v307 = vld [vmem:[%s260 + $0x4] sm:$0xf]
      %v308 = vld [vmem:[%s260 + $0x8] sm:$0xf]
      %v309 = vld [vmem:[%s260 + $0xc] sm:$0xf]
      %v310 = vld [vmem:[%s263] sm:$0x1]
      %v312 = vlaneseq
      %v313 = vshrl.u32 %v312, 7
      %v314 = vsub.s32 0, %v313
      %v315 = vrot.slane %v310, %v314
      %v321 = vunpack.c.l.b16 %v306
      %v322 = vunpack.c.l.b16 %v307
      %v323 = vunpack.c.l.b16 %v308
      %v324 = vunpack.c.l.b16 %v309
      %v325 = vpack.c.b16 %v322, %v321
      %v326 = vpack.c.b16 %v324, %v323
      %v330 = vsel %vm274, %v305, 0
      %332 = vmatprep.subr.bf16.mxu0 0
      %333 = vmatpush1.bf16.msra.mxu0 0
      %334 = vmatprep.subr.bf16.mxu0 0
      %335 = vmatpush1.bf16.msra.mxu0 0
      %336 = vmatprep.subr.bf16.mxu0 0
      %337 = vmatpush1.bf16.msra.mxu0 0
      %338 = vmatprep.subr.bf16.mxu0 0
      %339 = vmatpush1.bf16.msra.mxu0 0
      %340 = vmatprep.subr.bf16.mxu0 0
      %341 = vmatpush1.bf16.msra.mxu0 0
      %342 = vmatprep.subr.bf16.mxu0 0
      %343 = vmatpush1.bf16.msra.mxu0 0
      %344 = vmatprep.subr.bf16.mxu0 0
      %345 = vmatpush1.bf16.msra.mxu0 %v326
      %346 = vmatprep.subr.bf16.mxu0 0
      %347 = vmatpush1.bf16.msra.mxu0 %v325
      %348 = vmatprep.subr.bf16.mxu0 0
      %349 = vmatpush2.bf16.msra.mxu0 0
      %350 = vmatprep.subr.bf16.mxu0 0
      %351 = vmatpush2.bf16.msra.mxu0 0
      %352 = vmatprep.subr.bf16.mxu0 0
      %353 = vmatpush2.bf16.msra.mxu0 0
      %354 = vmatprep.subr.bf16.mxu0 0
      %355 = vmatpush2.bf16.msra.mxu0 0
      %356 = vmatprep.subr.bf16.mxu0 0
      %357 = vmatpush2.bf16.msra.mxu0 0
      %358 = vmatprep.subr.bf16.mxu0 0
      %359 = vmatpush2.bf16.msra.mxu0 0
      %360 = vmatprep.subr.bf16.mxu0 0
      %361 = vmatpush2.bf16.msra.mxu0 0
      %362 = vmatprep.subr.bf16.mxu0 0
      %363 = vmatpush2.bf16.msra.mxu0 0
      %364 = vmatprep.mubr.bf16.mxu0 0
      %365 = vmatmul.mubr.bf16.gmra.mxu0 %v330
      %v366 = vpop.f32.mrf.mxu0
      %v367 = vadd.f32 %v315, %v366
      %v368 = vpop.f32.mrf.mxu0
      %v369 = vpop.f32.mrf.mxu0
      %v370 = vpop.f32.mrf.mxu0
      %371 = vdwg.mxu0
      %v372 = vpack.c.bf16 %v367, %v367
      %vm373 = vcmask 781312
      %374 = vst.msk [vmem:[%s270] sm:$0xf] %vm373, %v372
      %p375 = scmp.lt.s32.totalorder %s20, 1
      %s376 = scalar_select %p375, %s20, 1
      %p377 = scmp.lt.s32.totalorder %s21, 0
      %s378 = scalar_select %p377, %s21, 0
      %s379 = sadd.s32 %s378, %s376
      %s380 = smul.addr %s379, 4
      %s381 = scalar_lea.vmem %s5, %s380
      // Predicated region
      $region41: #{conformer_forward.34} parent=39 // pred_check
        %p382 = pneg %p168
      $region42: #{conformer_forward.34} parent=39 // pred_check_branch
        %384 = sbr.rel (%p382) target = $region44
      $region43: #{conformer_forward.34} parent=39 // pred_region
        _
      $region44: #{conformer_forward.34} parent=39 // pred_fallthru
        _
    $region40: #{conformer_forward.34} parent=5 // pred_fallthru
      _
    %p385 = scmp.le.s32.totalorder 2, %s11
    // Predicated region
    $region45: #{conformer_forward.34} parent=5 // pred_check
      %p386 = pneg %p385
    $region46: #{conformer_forward.34} parent=5 // pred_check_branch
      %388 = sbr.rel (%p386) target = $region48
    $region47: #{conformer_forward.34} parent=5 // pred_region
      %s389 = ssub.s32 %s11, 2
      // Predicated region
      $region49: #{conformer_forward.34} parent=47 // pred_check
        %p390 = pneg %p174
      $region50: #{conformer_forward.34} parent=47 // pred_check_branch
        %392 = sbr.rel (%p390) target = $region52
      $region51: #{conformer_forward.34} parent=47 // pred_region
        %p393 = scmp.lt.s32.totalorder %s22, 1
        %s394 = scalar_select %p393, %s22, 1
        %p395 = scmp.lt.s32.totalorder %s23, 0
        %s396 = scalar_select %p395, %s23, 0
        %s397 = sadd.s32 %s396, %s394
        %s398 = smul.addr %s397, 4
        %s399 = scalar_lea.vmem %s5, %s398
      $region52: #{conformer_forward.34} parent=47 // pred_fallthru
        _
    $region48: #{conformer_forward.34} parent=5 // pred_fallthru
      _
  $region6: #{conformer_forward.34} parent=0 // loop_footer
    %s15 = sadd.s32 1, %s11
  $region7: #{conformer_forward.34} parent=0 // loop_footer_branch
    %10 = sbr.rel target = $region3
  $region8: #{conformer_forward.34} parent=0 // loop_exit
    _

// kernel: conformer_forward.35
$region0: #{conformer_forward.35}
  #allocation0 [shape = 'u32[]', space=smem, size = 0x4, offset = 0x4, fixed_abs, tag = 'smem constant byte address 0x4 - core index']
  #allocation1 [shape = 'u32[144,128]{1,0:T(1,128)}', space=vmem, size = 0x12000, scoped, tag = 'internal scratch']
  %s0 = inlined_call_operand.vmem [shape: bf16[8,32], index: 0, kind: input, shape index: {}]
  %s1 = inlined_call_operand.vmem [shape: bf16[32,32], index: 1, kind: input, shape index: {}]
  %s2 = inlined_call_operand.vmem [shape: f32[1,32], index: 2, kind: input, shape index: {}]
  %s3 = inlined_call_operand.vmem [shape: bf16[8,32], index: 3, kind: output, shape index: {}]
  %s4 = sld [smem:[#allocation0]]
  $region22: #{conformer_forward.35} parent=0
    _
  %s6 = ssub.s32 1, %s4
  %s7 = scalar_select 0, %s6, %s4
  // Predicated region
  $region2: #{conformer_forward.35} parent=0 // pred_check
    _
  $region3: #{conformer_forward.35} parent=0 // pred_check_branch
    %9 = sbr.rel (0) target = $region5
  $region4: #{conformer_forward.35} parent=0 // pred_region
    _
  $region5: #{conformer_forward.35} parent=0 // pred_fallthru
    _
  // Predicated region
  $region6: #{conformer_forward.35} parent=0 // pred_check
    _
  $region7: #{conformer_forward.35} parent=0 // pred_check_branch
    %11 = sbr.rel (0) target = $region9
  $region8: #{conformer_forward.35} parent=0 // pred_region
    _
  $region9: #{conformer_forward.35} parent=0 // pred_fallthru
    _
  // Predicated region
  $region10: #{conformer_forward.35} parent=0 // pred_check
    _
  $region11: #{conformer_forward.35} parent=0 // pred_check_branch
    %13 = sbr.rel (0) target = $region13
  $region12: #{conformer_forward.35} parent=0 // pred_region
    _
  $region13: #{conformer_forward.35} parent=0 // pred_fallthru
    _
  %v15 = vld [vmem:[%s0] sm:$0xf]
  %v16 = vld [vmem:[%s1] sm:$0xf]
  %v17 = vld [vmem:[%s1 + $0x4] sm:$0xf]
  %v18 = vld [vmem:[%s1 + $0x8] sm:$0xf]
  %v19 = vld [vmem:[%s1 + $0xc] sm:$0xf]
  %v20 = vld [vmem:[%s2] sm:$0x1]
  %v22 = vlaneseq
  %v23 = vshrl.u32 %v22, 7
  %v24 = vsub.s32 0, %v23
  %v25 = vrot.slane %v20, %v24
  %v31 = vunpack.c.l.b16 %v16
  %v32 = vunpack.c.l.b16 %v17
  %v33 = vunpack.c.l.b16 %v18
  %v34 = vunpack.c.l.b16 %v19
  %v35 = vpack.c.b16 %v32, %v31
  %v36 = vpack.c.b16 %v34, %v33
  %vm39 = vcmask 261120
  %v41 = vsel %vm39, %v15, 0
  %43 = vmatprep.subr.bf16.mxu0 0
  %44 = vmatpush1.bf16.msra.mxu0 0
  %45 = vmatprep.subr.bf16.mxu0 0
  %46 = vmatpush1.bf16.msra.mxu0 0
  %47 = vmatprep.subr.bf16.mxu0 0
  %48 = vmatpush1.bf16.msra.mxu0 0
  %49 = vmatprep.subr.bf16.mxu0 0
  %50 = vmatpush1.bf16.msra.mxu0 0
  %51 = vmatprep.subr.bf16.mxu0 0
  %52 = vmatpush1.bf16.msra.mxu0 0
  %53 = vmatprep.subr.bf16.mxu0 0
  %54 = vmatpush1.bf16.msra.mxu0 0
  %55 = vmatprep.subr.bf16.mxu0 0
  %56 = vmatpush1.bf16.msra.mxu0 %v36
  %57 = vmatprep.subr.bf16.mxu0 0
  %58 = vmatpush1.bf16.msra.mxu0 %v35
  %59 = vmatprep.subr.bf16.mxu0 0
  %60 = vmatpush2.bf16.msra.mxu0 0
  %61 = vmatprep.subr.bf16.mxu0 0
  %62 = vmatpush2.bf16.msra.mxu0 0
  %63 = vmatprep.subr.bf16.mxu0 0
  %64 = vmatpush2.bf16.msra.mxu0 0
  %65 = vmatprep.subr.bf16.mxu0 0
  %66 = vmatpush2.bf16.msra.mxu0 0
  %67 = vmatprep.subr.bf16.mxu0 0
  %68 = vmatpush2.bf16.msra.mxu0 0
  %69 = vmatprep.subr.bf16.mxu0 0
  %70 = vmatpush2.bf16.msra.mxu0 0
  %71 = vmatprep.subr.bf16.mxu0 0
  %72 = vmatpush2.bf16.msra.mxu0 0
  %73 = vmatprep.subr.bf16.mxu0 0
  %74 = vmatpush2.bf16.msra.mxu0 0
  %75 = vmatprep.mubr.bf16.mxu0 0
  %76 = vmatmul.mubr.bf16.gmra.mxu0 %v41
  %v77 = vpop.f32.mrf.mxu0
  %v78 = vadd.f32 %v25, %v77
  %v79 = vpop.f32.mrf.mxu0
  %v80 = vpop.f32.mrf.mxu0
  %v81 = vpop.f32.mrf.mxu0
  %82 = vdwg.mxu0
  %v83 = vpack.c.bf16 %v78, %v78
  %vm84 = vcmask 257024
  %85 = vst.msk [vmem:[%s3] sm:$0xf] %vm84, %v83
  // Predicated region
  $region14: #{conformer_forward.35} parent=0 // pred_check
    _
  $region15: #{conformer_forward.35} parent=0 // pred_check_branch
    %87 = sbr.rel (0) target = $region17
  $region16: #{conformer_forward.35} parent=0 // pred_region
    _
  $region17: #{conformer_forward.35} parent=0 // pred_fallthru
    _
  // Predicated region
  $region18: #{conformer_forward.35} parent=0 // pred_check
    _
  $region19: #{conformer_forward.35} parent=0 // pred_check_branch
    %89 = sbr.rel (0) target = $region21
  $region20: #{conformer_forward.35} parent=0 // pred_region
    _
  $region21: #{conformer_forward.35} parent=0 // pred_fallthru
    _

// kernel: conformer_forward.36
$region0: #{conformer_forward.36}
  #allocation0 [shape = 'u32[]', space=smem, size = 0x4, offset = 0x4, fixed_abs, tag = 'smem constant byte address 0x4 - core index']
  #allocation1 [shape = 'u32[144,128]{1,0:T(1,128)}', space=vmem, size = 0x12000, scoped, tag = 'internal scratch']
  %s0 = inlined_call_operand.vmem [shape: bf16[2,8,96], index: 0, kind: input, shape index: {}]
  %s1 = inlined_call_operand.vmem [shape: bf16[8,32], index: 1, kind: input, shape index: {}]
  %s2 = inlined_call_operand.vmem [shape: f32[4,8], index: 2, kind: input, shape index: {}]
  %s3 = inlined_call_operand.vmem [shape: bf16[2,4,8,8], index: 3, kind: output, shape index: {}]
  %s4 = sld [smem:[#allocation0]]
  $region45: #{conformer_forward.36} parent=0
    _
  %s6 = ssub.s32 1, %s4
  %s7 = scalar_select 0, %s6, %s4
  loop: start=0, step=1, limit=4
  $region2: #{conformer_forward.36} parent=0 // loop_pre_header
    _
  $region3: #{conformer_forward.36} parent=0 // loop_header
    %s9 = sphi 0, %s13
    %p10 = scmp.ge.s32.totalorder %s9, 4
    %s19 = sphi 0, %s21
    %s22 = sphi 0, %s19
    %s23 = sphi 0, %s22
    %s39 = sphi 0, %s23
    %s43 = sphi 0, %s43
    %s45 = sphi 0, %s43
    %s46 = sphi 0, %s45
    %s60 = sphi 0, %s46
    %s64 = sphi 0, %s64
    %s66 = sphi 0, %s64
    %s67 = sphi 0, %s66
    %s81 = sphi 0, %s67
    %s87 = sphi 0, %s89
    %s90 = sphi 0, %s87
    %s91 = sphi 0, %s90
    %s107 = sphi 0, %s91
  $region4: #{conformer_forward.36} parent=0 // loop_header_branch
    %12 = sbr.rel (%p10) target = $region8
  $region5: #{conformer_forward.36} parent=0 // loop_body
    %s14 = ssub.s32 %s9, 1
    %s15 = ssub.s32 %s9, 2
    %s16 = sadd.s32 %s9, 1
    %s17 = ssub.s32 %s9, %s16
    %p18 = scmp.eq.s32.totalorder %s17, 0
    %s20 = sadd.s32 %s19, 1
    %s21 = scalar_select %p18, %s19, %s20
    %p24 = pneg %p18
    %p25 = scmp.eq.s32.totalorder %s9, 1
    %p26 = por %p24, %p25
    %p27 = scmp.ne.s32.totalorder %s19, %s22
    %p28 = scmp.eq.s32.totalorder %s9, 0
    %p29 = por %p27, %p28
    %p30 = scmp.ne.s32.totalorder %s19, %s22
    %p31 = scmp.eq.s32.totalorder %s14, 1
    %p32 = por %p30, %p31
    %p33 = scmp.ne.s32.totalorder %s22, %s23
    %p34 = scmp.eq.s32.totalorder %s14, 0
    %p35 = por %p33, %p34
    %p36 = scmp.ne.s32.totalorder %s22, %s23
    %p37 = scmp.eq.s32.totalorder %s15, 1
    %p38 = por %p36, %p37
    %p40 = scmp.ne.s32.totalorder %s23, %s39
    %p41 = scmp.eq.s32.totalorder %s15, 0
    %p42 = por %p40, %p41
    %s44 = sadd.s32 %s43, 1
    %p47 = scmp.eq.s32.totalorder %s9, 1
    %p48 = scmp.ne.s32.totalorder %s43, %s45
    %p49 = scmp.eq.s32.totalorder %s9, 0
    %p50 = por %p48, %p49
    %p51 = scmp.ne.s32.totalorder %s43, %s45
    %p52 = scmp.eq.s32.totalorder %s14, 1
    %p53 = por %p51, %p52
    %p54 = scmp.ne.s32.totalorder %s45, %s46
    %p55 = scmp.eq.s32.totalorder %s14, 0
    %p56 = por %p54, %p55
    %p57 = scmp.ne.s32.totalorder %s45, %s46
    %p58 = scmp.eq.s32.totalorder %s15, 1
    %p59 = por %p57, %p58
    %p61 = scmp.ne.s32.totalorder %s46, %s60
    %p62 = scmp.eq.s32.totalorder %s15, 0
    %p63 = por %p61, %p62
    %s65 = sadd.s32 %s64, 1
    %p68 = scmp.eq.s32.totalorder %s9, 1
    %p69 = scmp.ne.s32.totalorder %s64, %s66
    %p70 = scmp.eq.s32.totalorder %s9, 0
    %p71 = por %p69, %p70
    %p72 = scmp.ne.s32.totalorder %s64, %s66
    %p73 = scmp.eq.s32.totalorder %s14, 1
    %p74 = por %p72, %p73
    %p75 = scmp.ne.s32.totalorder %s66, %s67
    %p76 = scmp.eq.s32.totalorder %s14, 0
    %p77 = por %p75, %p76
    %p78 = scmp.ne.s32.totalorder %s66, %s67
    %p79 = scmp.eq.s32.totalorder %s15, 1
    %p80 = por %p78, %p79
    %p82 = scmp.ne.s32.totalorder %s67, %s81
    %p83 = scmp.eq.s32.totalorder %s15, 0
    %p84 = por %p82, %p83
    %s85 = ssub.s32 %s9, %s16
    %p86 = scmp.eq.s32.totalorder %s85, 0
    %s88 = sadd.s32 %s87, 1
    %s89 = scalar_select %p86, %s87, %s88
    %p92 = pneg %p86
    %p93 = scmp.eq.s32.totalorder %s9, 1
    %p94 = por %p92, %p93
    %p95 = scmp.ne.s32.totalorder %s87, %s90
    %p96 = scmp.eq.s32.totalorder %s9, 0
    %p97 = por %p95, %p96
    %p98 = scmp.ne.s32.totalorder %s87, %s90
    %p99 = scmp.eq.s32.totalorder %s14, 1
    %p100 = por %p98, %p99
    %p101 = scmp.ne.s32.totalorder %s90, %s91
    %p102 = scmp.eq.s32.totalorder %s14, 0
    %p103 = por %p101, %p102
    %p104 = scmp.ne.s32.totalorder %s90, %s91
    %p105 = scmp.eq.s32.totalorder %s15, 1
    %p106 = por %p104, %p105
    %p108 = scmp.ne.s32.totalorder %s91, %s107
    %p109 = scmp.eq.s32.totalorder %s15, 0
    %p110 = por %p108, %p109
    %p111 = scmp.le.s32.totalorder 1, %s9
    %p112 = scmp.lt.s32.totalorder %s9, 3
    %p113 = pnand %p111, %p112
    %p114 = pneg %p113
    // Predicated region
    $region9: #{conformer_forward.36} parent=5 // pred_check
      _
    $region10: #{conformer_forward.36} parent=5 // pred_check_branch
      %116 = sbr.rel (%p113) target = $region12
    $region11: #{conformer_forward.36} parent=5 // pred_region
      %s117 = ssub.s32 %s9, 1
      // Predicated region
      $region13: #{conformer_forward.36} parent=11 // pred_check
        %p118 = pneg %p56
      $region14: #{conformer_forward.36} parent=11 // pred_check_branch
        %120 = sbr.rel (%p118) target = $region16
      $region15: #{conformer_forward.36} parent=11 // pred_region
        _
      $region16: #{conformer_forward.36} parent=11 // pred_fallthru
        _
      // Predicated region
      $region17: #{conformer_forward.36} parent=11 // pred_check
        %p121 = pneg %p77
      $region18: #{conformer_forward.36} parent=11 // pred_check_branch
        %123 = sbr.rel (%p121) target = $region20
      $region19: #{conformer_forward.36} parent=11 // pred_region
        _
      $region20: #{conformer_forward.36} parent=11 // pred_fallthru
        _
    $region12: #{conformer_forward.36} parent=5 // pred_fallthru
      _
    %p124 = scmp.lt.s32.totalorder %s9, 2
    // Predicated region
    $region21: #{conformer_forward.36} parent=5 // pred_check
      %p125 = pneg %p124
    $region22: #{conformer_forward.36} parent=5 // pred_check_branch
      %127 = sbr.rel (%p125) target = $region24
    $region23: #{conformer_forward.36} parent=5 // pred_region
      // Predicated region
      $region25: #{conformer_forward.36} parent=23 // pred_check
        %p128 = pneg %p29
      $region26: #{conformer_forward.36} parent=23 // pred_check_branch
        %130 = sbr.rel (%p128) target = $region28
      $region27: #{conformer_forward.36} parent=23 // pred_region
        %p131 = scmp.lt.s32.totalorder %s9, 1
        %s132 = scalar_select %p131, %s9, 1
        %s133 = smul.addr %s132, 4
        %s134 = scalar_lea.vmem %s0, %s133
      $region28: #{conformer_forward.36} parent=23 // pred_fallthru
        _
    $region24: #{conformer_forward.36} parent=5 // pred_fallthru
      _
    %p135 = scmp.le.s32.totalorder 1, %s9
    %p136 = scmp.lt.s32.totalorder %s9, 3
    %p137 = pnand %p135, %p136
    %p138 = pneg %p137
    // Predicated region
    $region29: #{conformer_forward.36} parent=5 // pred_check
      _
    $region30: #{conformer_forward.36} parent=5 // pred_check_branch
      %140 = sbr.rel (%p137) target = $region32
    $region31: #{conformer_forward.36} parent=5 // pred_region
      %s141 = ssub.s32 %s9, 1
      %p142 = scmp.lt.s32.totalorder %s14, 1
      %s143 = scalar_select %p142, %s14, 1
      %s144 = smul.addr %s143, 4
      %s145 = scalar_lea.vmem %s0, %s144
      %p146 = pneg %p35
      %p147 = pneg %p32
      %p148 = pneg %p56
      %p149 = pneg %p53
      %p150 = pneg %p77
      %p151 = pneg %p74
      %p152 = pneg %p103
      %p153 = pneg %p100
      %p154 = scmp.lt.s32.totalorder %s14, 1
      %s155 = scalar_select %p154, %s14, 1
      %s156 = smul.addr %s155, 4
      %s157 = smul.addr %s156, 4
      %s158 = scalar_lea.vmem %s3, %s157
      %p159 = scmp.lt.s32.totalorder %s14, 1
      %s160 = scalar_select %p159, %s14, 1
      %s161 = smul.addr %s160, 4
      %s162 = scalar_lea.vmem %s0, %s161
      %p163 = scmp.lt.s32.totalorder %s14, 1
      %s164 = scalar_select %p163, %s14, 1
      %s165 = smul.addr %s164, 4
      %s166 = smul.addr %s165, 4
      %s167 = scalar_lea.vmem %s3, %s166
      %v169 = vld [vmem:[%s162] sm:$0xf]
      %v170 = vunpack.c.l.bf16 %v169
      %v171 = vld [vmem:[%s2] sm:$0x1]
      %v172 = vlaneseq
      %v173 = vshrl.u32 %v172, 7
      %v174 = vsub.s32 0, %v173
      %v175 = vrot.slane %v171, %v174
      %v176 = vadd.f32 %v170, %v175
      %v177 = vpack.c.bf16 %v176, %v176
      %v178 = vld [vmem:[%s1] sm:$0xf]
      %vm179 = vcmask 64512
      %v181 = vsel %vm179, %v177, 0
      %v184 = vsel %vm179, %v178, 0
      %186 = vmatprep.subr.bf16.mxu0 0
      %187 = vmatpush1.bf16.xpose.msra.mxu0 0
      %188 = vmatprep.subr.bf16.mxu0 0
      %189 = vmatpush1.bf16.xpose.msra.mxu0 0
      %190 = vmatprep.subr.bf16.mxu0 0
      %191 = vmatpush1.bf16.xpose.msra.mxu0 0
      %192 = vmatprep.subr.bf16.mxu0 0
      %193 = vmatpush1.bf16.xpose.msra.mxu0 0
      %194 = vmatprep.subr.bf16.mxu0 0
      %195 = vmatpush1.bf16.xpose.msra.mxu0 0
      %196 = vmatprep.subr.bf16.mxu0 0
      %197 = vmatpush1.bf16.xpose.msra.mxu0 0
      %198 = vmatprep.subr.bf16.mxu0 0
      %199 = vmatpush1.bf16.xpose.msra.mxu0 0
      %200 = vmatprep.subr.bf16.mxu0 0
      %201 = vmatpush1.bf16.xpose.msra.mxu0 %v184
      %202 = vmatprep.subr.bf16.mxu0 0
      %203 = vmatpush2.bf16.xpose.msra.mxu0 0
      %204 = vmatprep.subr.bf16.mxu0 0
      %205 = vmatpush2.bf16.xpose.msra.mxu0 0
      %206 = vmatprep.subr.bf16.mxu0 0
      %207 = vmatpush2.bf16.xpose.msra.mxu0 0
      %208 = vmatprep.subr.bf16.mxu0 0
      %209 = vmatpush2.bf16.xpose.msra.mxu0 0
      %210 = vmatprep.subr.bf16.mxu0 0
      %211 = vmatpush2.bf16.xpose.msra.mxu0 0
      %212 = vmatprep.subr.bf16.mxu0 0
      %213 = vmatpush2.bf16.xpose.msra.mxu0 0
      %214 = vmatprep.subr.bf16.mxu0 0
      %215 = vmatpush2.bf16.xpose.msra.mxu0 0
      %216 = vmatprep.subr.bf16.mxu0 0
      %217 = vmatpush2.bf16.xpose.msra.mxu0 0
      %218 = vmatprep.mubr.bf16.mxu0 0
      %219 = vmatmul.mubr.bf16.gmra.mxu0 %v181
      %v220 = vpop.f32.mrf.mxu0
      %v221 = vadd.f32 0.0, %v220
      %v222 = vpop.f32.mrf.mxu0
      %v223 = vpop.f32.mrf.mxu0
      %v224 = vpop.f32.mrf.mxu0
      %225 = vdwg.mxu0
      %v226 = vpack.c.bf16 %v221, %v221
      %vm227 = vcmask 60416
      %228 = vst.msk [vmem:[%s167] sm:$0xf] %vm227, %v226
      %v229 = vld [vmem:[%s162] sm:$0xf]
      %v230 = vunpack.c.l.bf16 %v229
      %v231 = vld [vmem:[%s2 + $0x1] sm:$0x1]
      %v232 = vlaneseq
      %v233 = vshrl.u32 %v232, 7
      %v234 = vsub.s32 0, %v233
      %v235 = vrot.slane %v231, %v234
      %237 = vrot.lane.b32.xlu0 %v235, 8
      %v238 = vpop.permute.xlu0 %237
      %v240 = vadd.f32 %v230, %v238
      %v241 = vpack.c.bf16 %v240, %v240
      %v242 = vld [vmem:[%s1] sm:$0xf]
      %244 = vrot.lane.b32.xlu0 %v241, 120
      %v245 = vpop.permute.xlu0 %244
      %v247 = vunpack.c.l.b16 %v242
      %v248 = vpack.c.b16 %v247, %v247
      %249 = vrot.lane.b32.xlu0 %v248, 120
      %v250 = vpop.permute.xlu0 %249
      %v252 = vsel %vm179, %v245, 0
      %v255 = vsel %vm179, %v250, 0
      %257 = vmatprep.subr.bf16.mxu0 0
      %258 = vmatpush1.bf16.xpose.msra.mxu0 0
      %259 = vmatprep.subr.bf16.mxu0 0
      %260 = vmatpush1.bf16.xpose.msra.mxu0 0
      %261 = vmatprep.subr.bf16.mxu0 0
      %262 = vmatpush1.bf16.xpose.msra.mxu0 0
      %263 = vmatprep.subr.bf16.mxu0 0
      %264 = vmatpush1.bf16.xpose.msra.mxu0 0
      %265 = vmatprep.subr.bf16.mxu0 0
      %266 = vmatpush1.bf16.xpose.msra.mxu0 0
      %267 = vmatprep.subr.bf16.mxu0 0
      %268 = vmatpush1.bf16.xpose.msra.mxu0 0
      %269 = vmatprep.subr.bf16.mxu0 0
      %270 = vmatpush1.bf16.xpose.msra.mxu0 0
      %271 = vmatprep.subr.bf16.mxu0 0
      %272 = vmatpush1.bf16.xpose.msra.mxu0 %v255
      %273 = vmatprep.subr.bf16.mxu0 0
      %274 = vmatpush2.bf16.xpose.msra.mxu0 0
      %275 = vmatprep.subr.bf16.mxu0 0
      %276 = vmatpush2.bf16.xpose.msra.mxu0 0
      %277 = vmatprep.subr.bf16.mxu0 0
      %278 = vmatpush2.bf16.xpose.msra.mxu0 0
      %279 = vmatprep.subr.bf16.mxu0 0
      %280 = vmatpush2.bf16.xpose.msra.mxu0 0
      %281 = vmatprep.subr.bf16.mxu0 0
      %282 = vmatpush2.bf16.xpose.msra.mxu0 0
      %283 = vmatprep.subr.bf16.mxu0 0
      %284 = vmatpush2.bf16.xpose.msra.mxu0 0
      %285 = vmatprep.subr.bf16.mxu0 0
      %286 = vmatpush2.bf16.xpose.msra.mxu0 0
      %287 = vmatprep.subr.bf16.mxu0 0
      %288 = vmatpush2.bf16.xpose.msra.mxu0 0
      %289 = vmatprep.mubr.bf16.mxu0 0
      %290 = vmatmul.mubr.bf16.gmra.mxu0 %v252
      %v291 = vpop.f32.mrf.mxu0
      %v292 = vadd.f32 0.0, %v291
      %v293 = vpop.f32.mrf.mxu0
      %v294 = vpop.f32.mrf.mxu0
      %v295 = vpop.f32.mrf.mxu0
      %296 = vdwg.mxu0
      %v297 = vpack.c.bf16 %v292, %v292
      %s298 = scalar_lea.vmem %s167, 4
      %299 = vst.msk [vmem:[%s298] sm:$0xf] %vm227, %v297
      %v300 = vld [vmem:[%s162] sm:$0xf]
      %v301 = vunpack.c.l.bf16 %v300
      %v302 = vld [vmem:[%s2 + $0x2] sm:$0x1]
      %v303 = vlaneseq
      %v304 = vshrl.u32 %v303, 7
      %v305 = vsub.s32 0, %v304
      %v306 = vrot.slane %v302, %v305
      %308 = vrot.lane.b32.xlu0 %v306, 16
      %v309 = vpop.permute.xlu0 %308
      %v311 = vadd.f32 %v301, %v309
      %v312 = vpack.c.bf16 %v311, %v311
      %v313 = vld [vmem:[%s1] sm:$0xf]
      %315 = vrot.lane.b32.xlu0 %v312, 112
      %v316 = vpop.permute.xlu0 %315
      %v318 = vunpack.c.l.b16 %v313
      %v319 = vpack.c.b16 %v318, %v318
      %320 = vrot.lane.b32.xlu0 %v319, 112
      %v321 = vpop.permute.xlu0 %320
      %v323 = vsel %vm179, %v316, 0
      %v326 = vsel %vm179, %v321, 0
      %328 = vmatprep.subr.bf16.mxu0 0
      %329 = vmatpush1.bf16.xpose.msra.mxu0 0
      %330 = vmatprep.subr.bf16.mxu0 0
      %331 = vmatpush1.bf16.xpose.msra.mxu0 0
      %332 = vmatprep.subr.bf16.mxu0 0
      %333 = vmatpush1.bf16.xpose.msra.mxu0 0
      %334 = vmatprep.subr.bf16.mxu0 0
      %335 = vmatpush1.bf16.xpose.msra.mxu0 0
      %336 = vmatprep.subr.bf16.mxu0 0
      %337 = vmatpush1.bf16.xpose.msra.mxu0 0
      %338 = vmatprep.subr.bf16.mxu0 0
      %339 = vmatpush1.bf16.xpose.msra.mxu0 0
      %340 = vmatprep.subr.bf16.mxu0 0
      %341 = vmatpush1.bf16.xpose.msra.mxu0 0
      %342 = vmatprep.subr.bf16.mxu0 0
      %343 = vmatpush1.bf16.xpose.msra.mxu0 %v326
      %344 = vmatprep.subr.bf16.mxu0 0
      %345 = vmatpush2.bf16.xpose.msra.mxu0 0
      %346 = vmatprep.subr.bf16.mxu0 0
      %347 = vmatpush2.bf16.xpose.msra.mxu0 0
      %348 = vmatprep.subr.bf16.mxu0 0
      %349 = vmatpush2.bf16.xpose.msra.mxu0 0
      %350 = vmatprep.subr.bf16.mxu0 0
      %351 = vmatpush2.bf16.xpose.msra.mxu0 0
      %352 = vmatprep.subr.bf16.mxu0 0
      %353 = vmatpush2.bf16.xpose.msra.mxu0 0
      %354 = vmatprep.subr.bf16.mxu0 0
      %355 = vmatpush2.bf16.xpose.msra.mxu0 0
      %356 = vmatprep.subr.bf16.mxu0 0
      %357 = vmatpush2.bf16.xpose.msra.mxu0 0
      %358 = vmatprep.subr.bf16.mxu0 0
      %359 = vmatpush2.bf16.xpose.msra.mxu0 0
      %360 = vmatprep.mubr.bf16.mxu0 0
      %361 = vmatmul.mubr.bf16.gmra.mxu0 %v323
      %v362 = vpop.f32.mrf.mxu0
      %v363 = vadd.f32 0.0, %v362
      %v364 = vpop.f32.mrf.mxu0
      %v365 = vpop.f32.mrf.mxu0
      %v366 = vpop.f32.mrf.mxu0
      %367 = vdwg.mxu0
      %v368 = vpack.c.bf16 %v363, %v363
      %s369 = scalar_lea.vmem %s167, 8
      %370 = vst.msk [vmem:[%s369] sm:$0xf] %vm227, %v368
      %v371 = vld [vmem:[%s162] sm:$0xf]
      %v372 = vunpack.c.l.bf16 %v371
      %v373 = vld [vmem:[%s2 + $0x3] sm:$0x1]
      %v374 = vlaneseq
      %v375 = vshrl.u32 %v374, 7
      %v376 = vsub.s32 0, %v375
      %v377 = vrot.slane %v373, %v376
      %379 = vrot.lane.b32.xlu0 %v377, 24
      %v380 = vpop.permute.xlu0 %379
      %v382 = vadd.f32 %v372, %v380
      %v383 = vpack.c.bf16 %v382, %v382
      %v384 = vld [vmem:[%s1] sm:$0xf]
      %386 = vrot.lane.b32.xlu0 %v383, 104
      %v387 = vpop.permute.xlu0 %386
      %v389 = vunpack.c.l.b16 %v384
      %v390 = vpack.c.b16 %v389, %v389
      %391 = vrot.lane.b32.xlu0 %v390, 104
      %v392 = vpop.permute.xlu0 %391
      %v394 = vsel %vm179, %v387, 0
      %v397 = vsel %vm179, %v392, 0
      %399 = vmatprep.subr.bf16.mxu0 0
      %400 = vmatpush1.bf16.xpose.msra.mxu0 0
      %401 = vmatprep.subr.bf16.mxu0 0
      %402 = vmatpush1.bf16.xpose.msra.mxu0 0
      %403 = vmatprep.subr.bf16.mxu0 0
      %404 = vmatpush1.bf16.xpose.msra.mxu0 0
      %405 = vmatprep.subr.bf16.mxu0 0
      %406 = vmatpush1.bf16.xpose.msra.mxu0 0
      %407 = vmatprep.subr.bf16.mxu0 0
      %408 = vmatpush1.bf16.xpose.msra.mxu0 0
      %409 = vmatprep.subr.bf16.mxu0 0
      %410 = vmatpush1.bf16.xpose.msra.mxu0 0
      %411 = vmatprep.subr.bf16.mxu0 0
      %412 = vmatpush1.bf16.xpose.msra.mxu0 0
      %413 = vmatprep.subr.bf16.mxu0 0
      %414 = vmatpush1.bf16.xpose.msra.mxu0 %v397
      %415 = vmatprep.subr.bf16.mxu0 0
      %416 = vmatpush2.bf16.xpose.msra.mxu0 0
      %417 = vmatprep.subr.bf16.mxu0 0
      %418 = vmatpush2.bf16.xpose.msra.mxu0 0
      %419 = vmatprep.subr.bf16.mxu0 0
      %420 = vmatpush2.bf16.xpose.msra.mxu0 0
      %421 = vmatprep.subr.bf16.mxu0 0
      %422 = vmatpush2.bf16.xpose.msra.mxu0 0
      %423 = vmatprep.subr.bf16.mxu0 0
      %424 = vmatpush2.bf16.xpose.msra.mxu0 0
      %425 = vmatprep.subr.bf16.mxu0 0
      %426 = vmatpush2.bf16.xpose.msra.mxu0 0
      %427 = vmatprep.subr.bf16.mxu0 0
      %428 = vmatpush2.bf16.xpose.msra.mxu0 0
      %429 = vmatprep.subr.bf16.mxu0 0
      %430 = vmatpush2.bf16.xpose.msra.mxu0 0
      %431 = vmatprep.mubr.bf16.mxu0 0
      %432 = vmatmul.mubr.bf16.gmra.mxu0 %v394
      %v433 = vpop.f32.mrf.mxu0
      %v434 = vadd.f32 0.0, %v433
      %v435 = vpop.f32.mrf.mxu0
      %v436 = vpop.f32.mrf.mxu0
      %v437 = vpop.f32.mrf.mxu0
      %438 = vdwg.mxu0
      %v439 = vpack.c.bf16 %v434, %v434
      %s440 = scalar_lea.vmem %s167, 12
      %441 = vst.msk [vmem:[%s440] sm:$0xf] %vm227, %v439
      %p442 = scmp.lt.s32.totalorder %s14, 1
      %s443 = scalar_select %p442, %s14, 1
      %s444 = smul.addr %s443, 4
      %s445 = smul.addr %s444, 4
      %s446 = scalar_lea.vmem %s3, %s445
      // Predicated region
      $region33: #{conformer_forward.36} parent=31 // pred_check
        %p447 = pneg %p100
      $region34: #{conformer_forward.36} parent=31 // pred_check_branch
        %449 = sbr.rel (%p447) target = $region36
      $region35: #{conformer_forward.36} parent=31 // pred_region
        _
      $region36: #{conformer_forward.36} parent=31 // pred_fallthru
        _
    $region32: #{conformer_forward.36} parent=5 // pred_fallthru
      _
    %p450 = scmp.le.s32.totalorder 2, %s9
    // Predicated region
    $region37: #{conformer_forward.36} parent=5 // pred_check
      %p451 = pneg %p450
    $region38: #{conformer_forward.36} parent=5 // pred_check_branch
      %453 = sbr.rel (%p451) target = $region40
    $region39: #{conformer_forward.36} parent=5 // pred_region
      %s454 = ssub.s32 %s9, 2
      // Predicated region
      $region41: #{conformer_forward.36} parent=39 // pred_check
        %p455 = pneg %p106
      $region42: #{conformer_forward.36} parent=39 // pred_check_branch
        %457 = sbr.rel (%p455) target = $region44
      $region43: #{conformer_forward.36} parent=39 // pred_region
        %p458 = scmp.lt.s32.totalorder %s15, 1
        %s459 = scalar_select %p458, %s15, 1
        %s460 = smul.addr %s459, 4
        %s461 = smul.addr %s460, 4
        %s462 = scalar_lea.vmem %s3, %s461
      $region44: #{conformer_forward.36} parent=39 // pred_fallthru
        _
    $region40: #{conformer_forward.36} parent=5 // pred_fallthru
      _
  $region6: #{conformer_forward.36} parent=0 // loop_footer
    %s13 = sadd.s32 1, %s9
  $region7: #{conformer_forward.36} parent=0 // loop_footer_branch
    %8 = sbr.rel target = $region3
  $region8: #{conformer_forward.36} parent=0 // loop_exit
    _

// kernel: conformer_forward.38
$region0: #{conformer_forward.38}
  #allocation0 [shape = 'u32[]', space=smem, size = 0x4, offset = 0x4, fixed_abs, tag = 'smem constant byte address 0x4 - core index']
  #allocation1 [shape = 'u32[144,128]{1,0:T(1,128)}', space=vmem, size = 0x12000, scoped, tag = 'internal scratch']
  %s0 = inlined_call_operand.vmem [shape: bf16[16,32], index: 0, kind: input, shape index: {}]
  %s1 = inlined_call_operand.vmem [shape: bf16[32,32], index: 1, kind: input, shape index: {}]
  %s2 = inlined_call_operand.vmem [shape: f32[1,32], index: 2, kind: input, shape index: {}]
  %s3 = inlined_call_operand.vmem [shape: bf16[16,32], index: 3, kind: input, shape index: {}]
  %s4 = inlined_call_operand.vmem [shape: bf16[16,32], index: 4, kind: output, shape index: {}]
  %s5 = sld [smem:[#allocation0]]
  $region49: #{conformer_forward.38} parent=0
    _
  %s7 = ssub.s32 1, %s5
  %s8 = scalar_select 0, %s7, %s5
  loop: start=0, step=1, limit=4
  $region2: #{conformer_forward.38} parent=0 // loop_pre_header
    _
  $region3: #{conformer_forward.38} parent=0 // loop_header
    %s10 = sphi 0, %s14
    %p11 = scmp.ge.s32.totalorder %s10, 4
    %s17 = sphi 0, %s29
    %s18 = sphi 0, %s25
    %s19 = sphi 0, %s17
    %s20 = sphi 0, %s18
    %s21 = sphi 0, %s19
    %s22 = sphi 0, %s20
    %s32 = sphi 0, %s34
    %s35 = sphi 0, %s32
    %s36 = sphi 0, %s35
    %s52 = sphi 0, %s36
    %s58 = sphi 0, %s60
    %s61 = sphi 0, %s58
    %s62 = sphi 0, %s61
    %s78 = sphi 0, %s62
    %s84 = sphi 0, %s86
    %s87 = sphi 0, %s84
    %s88 = sphi 0, %s87
    %s104 = sphi 0, %s88
    %s112 = sphi 0, %s114
    %s115 = sphi 0, %s112
    %s116 = sphi 0, %s115
    %s132 = sphi 0, %s116
    %s140 = sphi 0, %s142
    %s143 = sphi 0, %s140
    %s144 = sphi 0, %s143
    %s160 = sphi 0, %s144
  $region4: #{conformer_forward.38} parent=0 // loop_header_branch
    %13 = sbr.rel (%p11) target = $region8
  $region5: #{conformer_forward.38} parent=0 // loop_body
    %s15 = ssub.s32 %s10, 1
    %s16 = ssub.s32 %s10, 2
    %s23 = sadd.s32 1, %s18
    %p24 = scmp.ge.s32.totalorder %s23, 1
    %s25 = scalar_select %p24, 0, %s23
    %s26 = sadd.s32 1, %s17
    %s27 = scalar_select %p24, %s26, %s17
    %p28 = scmp.ge.s32.totalorder %s27, 2
    %s29 = scalar_select %p28, 0, %s27
    %s30 = ssub.s32 %s17, %s29
    %p31 = scmp.eq.s32.totalorder %s30, 0
    %s33 = sadd.s32 %s32, 1
    %s34 = scalar_select %p31, %s32, %s33
    %p37 = pneg %p31
    %p38 = scmp.eq.s32.totalorder %s10, 1
    %p39 = por %p37, %p38
    %p40 = scmp.ne.s32.totalorder %s32, %s35
    %p41 = scmp.eq.s32.totalorder %s10, 0
    %p42 = por %p40, %p41
    %p43 = scmp.ne.s32.totalorder %s32, %s35
    %p44 = scmp.eq.s32.totalorder %s15, 1
    %p45 = por %p43, %p44
    %p46 = scmp.ne.s32.totalorder %s35, %s36
    %p47 = scmp.eq.s32.totalorder %s15, 0
    %p48 = por %p46, %p47
    %p49 = scmp.ne.s32.totalorder %s35, %s36
    %p50 = scmp.eq.s32.totalorder %s16, 1
    %p51 = por %p49, %p50
    %p53 = scmp.ne.s32.totalorder %s36, %s52
    %p54 = scmp.eq.s32.totalorder %s16, 0
    %p55 = por %p53, %p54
    %s56 = ssub.s32 %s18, %s25
    %p57 = scmp.eq.s32.totalorder %s56, 0
    %s59 = sadd.s32 %s58, 1
    %s60 = scalar_select %p57, %s58, %s59
    %p63 = pneg %p57
    %p64 = scmp.eq.s32.totalorder %s10, 1
    %p65 = por %p63, %p64
    %p66 = scmp.ne.s32.totalorder %s58, %s61
    %p67 = scmp.eq.s32.totalorder %s10, 0
    %p68 = por %p66, %p67
    %p69 = scmp.ne.s32.totalorder %s58, %s61
    %p70 = scmp.eq.s32.totalorder %s15, 1
    %p71 = por %p69, %p70
    %p72 = scmp.ne.s32.totalorder %s61, %s62
    %p73 = scmp.eq.s32.totalorder %s15, 0
    %p74 = por %p72, %p73
    %p75 = scmp.ne.s32.totalorder %s61, %s62
    %p76 = scmp.eq.s32.totalorder %s16, 1
    %p77 = por %p75, %p76
    %p79 = scmp.ne.s32.totalorder %s62, %s78
    %p80 = scmp.eq.s32.totalorder %s16, 0
    %p81 = por %p79, %p80
    %s82 = ssub.s32 %s18, %s25
    %p83 = scmp.eq.s32.totalorder %s82, 0
    %s85 = sadd.s32 %s84, 1
    %s86 = scalar_select %p83, %s84, %s85
    %p89 = pneg %p83
    %p90 = scmp.eq.s32.totalorder %s10, 1
    %p91 = por %p89, %p90
    %p92 = scmp.ne.s32.totalorder %s84, %s87
    %p93 = scmp.eq.s32.totalorder %s10, 0
    %p94 = por %p92, %p93
    %p95 = scmp.ne.s32.totalorder %s84, %s87
    %p96 = scmp.eq.s32.totalorder %s15, 1
    %p97 = por %p95, %p96
    %p98 = scmp.ne.s32.totalorder %s87, %s88
    %p99 = scmp.eq.s32.totalorder %s15, 0
    %p100 = por %p98, %p99
    %p101 = scmp.ne.s32.totalorder %s87, %s88
    %p102 = scmp.eq.s32.totalorder %s16, 1
    %p103 = por %p101, %p102
    %p105 = scmp.ne.s32.totalorder %s88, %s104
    %p106 = scmp.eq.s32.totalorder %s16, 0
    %p107 = por %p105, %p106
    %s108 = ssub.s32 %s17, %s29
    %s109 = ssub.s32 %s18, %s25
    %s110 = sor.u32 %s108, %s109
    %p111 = scmp.eq.s32.totalorder %s110, 0
    %s113 = sadd.s32 %s112, 1
    %s114 = scalar_select %p111, %s112, %s113
    %p117 = pneg %p111
    %p118 = scmp.eq.s32.totalorder %s10, 1
    %p119 = por %p117, %p118
    %p120 = scmp.ne.s32.totalorder %s112, %s115
    %p121 = scmp.eq.s32.totalorder %s10, 0
    %p122 = por %p120, %p121
    %p123 = scmp.ne.s32.totalorder %s112, %s115
    %p124 = scmp.eq.s32.totalorder %s15, 1
    %p125 = por %p123, %p124
    %p126 = scmp.ne.s32.totalorder %s115, %s116
    %p127 = scmp.eq.s32.totalorder %s15, 0
    %p128 = por %p126, %p127
    %p129 = scmp.ne.s32.totalorder %s115, %s116
    %p130 = scmp.eq.s32.totalorder %s16, 1
    %p131 = por %p129, %p130
    %p133 = scmp.ne.s32.totalorder %s116, %s132
    %p134 = scmp.eq.s32.totalorder %s16, 0
    %p135 = por %p133, %p134
    %s136 = ssub.s32 %s17, %s29
    %s137 = ssub.s32 %s18, %s25
    %s138 = sor.u32 %s136, %s137
    %p139 = scmp.eq.s32.totalorder %s138, 0
    %s141 = sadd.s32 %s140, 1
    %s142 = scalar_select %p139, %s140, %s141
    %p145 = pneg %p139
    %p146 = scmp.eq.s32.totalorder %s10, 1
    %p147 = por %p145, %p146
    %p148 = scmp.ne.s32.totalorder %s140, %s143
    %p149 = scmp.eq.s32.totalorder %s10, 0
    %p150 = por %p148, %p149
    %p151 = scmp.ne.s32.totalorder %s140, %s143
    %p152 = scmp.eq.s32.totalorder %s15, 1
    %p153 = por %p151, %p152
    %p154 = scmp.ne.s32.totalorder %s143, %s144
    %p155 = scmp.eq.s32.totalorder %s15, 0
    %p156 = por %p154, %p155
    %p157 = scmp.ne.s32.totalorder %s143, %s144
    %p158 = scmp.eq.s32.totalorder %s16, 1
    %p159 = por %p157, %p158
    %p161 = scmp.ne.s32.totalorder %s144, %s160
    %p162 = scmp.eq.s32.totalorder %s16, 0
    %p163 = por %p161, %p162
    %p164 = scmp.le.s32.totalorder 1, %s10
    %p165 = scmp.lt.s32.totalorder %s10, 3
    %p166 = pnand %p164, %p165
    %p167 = pneg %p166
    // Predicated region
    $region9: #{conformer_forward.38} parent=5 // pred_check
      _
    $region10: #{conformer_forward.38} parent=5 // pred_check_branch
      %169 = sbr.rel (%p166) target = $region12
    $region11: #{conformer_forward.38} parent=5 // pred_region
      %s170 = ssub.s32 %s10, 1
      // Predicated region
      $region13: #{conformer_forward.38} parent=11 // pred_check
        %p171 = pneg %p74
      $region14: #{conformer_forward.38} parent=11 // pred_check_branch
        %173 = sbr.rel (%p171) target = $region16
      $region15: #{conformer_forward.38} parent=11 // pred_region
        %p174 = scmp.lt.s32.totalorder %s20, 0
        %s175 = scalar_select %p174, %s20, 0
        %s176 = smul.addr %s175, 4
        %s177 = scalar_lea.vmem %s1, %s176
      $region16: #{conformer_forward.38} parent=11 // pred_fallthru
        _
      // Predicated region
      $region17: #{conformer_forward.38} parent=11 // pred_check
        %p178 = pneg %p100
      $region18: #{conformer_forward.38} parent=11 // pred_check_branch
        %180 = sbr.rel (%p178) target = $region20
      $region19: #{conformer_forward.38} parent=11 // pred_region
        %p181 = scmp.lt.s32.totalorder %s20, 0
        %s182 = scalar_select %p181, %s20, 0
        %s183 = scalar_lea.vmem %s2, %s182
      $region20: #{conformer_forward.38} parent=11 // pred_fallthru
        _
    $region12: #{conformer_forward.38} parent=5 // pred_fallthru
      _
    %p184 = scmp.lt.s32.totalorder %s10, 2
    // Predicated region
    $region21: #{conformer_forward.38} parent=5 // pred_check
      %p185 = pneg %p184
    $region22: #{conformer_forward.38} parent=5 // pred_check_branch
      %187 = sbr.rel (%p185) target = $region24
    $region23: #{conformer_forward.38} parent=5 // pred_region
      // Predicated region
      $region25: #{conformer_forward.38} parent=23 // pred_check
        %p188 = pneg %p42
      $region26: #{conformer_forward.38} parent=23 // pred_check_branch
        %190 = sbr.rel (%p188) target = $region28
      $region27: #{conformer_forward.38} parent=23 // pred_region
        %p191 = scmp.lt.s32.totalorder %s17, 1
        %s192 = scalar_select %p191, %s17, 1
        %s193 = smul.addr %s192, 4
        %s194 = scalar_lea.vmem %s0, %s193
      $region28: #{conformer_forward.38} parent=23 // pred_fallthru
        _
      // Predicated region
      $region29: #{conformer_forward.38} parent=23 // pred_check
        %p195 = pneg %p122
      $region30: #{conformer_forward.38} parent=23 // pred_check_branch
        %197 = sbr.rel (%p195) target = $region32
      $region31: #{conformer_forward.38} parent=23 // pred_region
        %p198 = scmp.lt.s32.totalorder %s17, 1
        %s199 = scalar_select %p198, %s17, 1
        %p200 = scmp.lt.s32.totalorder %s18, 0
        %s201 = scalar_select %p200, %s18, 0
        %s202 = sadd.s32 %s201, %s199
        %s203 = smul.addr %s202, 4
        %s204 = scalar_lea.vmem %s3, %s203
      $region32: #{conformer_forward.38} parent=23 // pred_fallthru
        _
    $region24: #{conformer_forward.38} parent=5 // pred_fallthru
      _
    %p205 = scmp.le.s32.totalorder 1, %s10
    %p206 = scmp.lt.s32.totalorder %s10, 3
    %p207 = pnand %p205, %p206
    %p208 = pneg %p207
    // Predicated region
    $region33: #{conformer_forward.38} parent=5 // pred_check
      _
    $region34: #{conformer_forward.38} parent=5 // pred_check_branch
      %210 = sbr.rel (%p207) target = $region36
    $region35: #{conformer_forward.38} parent=5 // pred_region
      %s211 = ssub.s32 %s10, 1
      %p212 = scmp.lt.s32.totalorder %s19, 1
      %s213 = scalar_select %p212, %s19, 1
      %s214 = smul.addr %s213, 4
      %s215 = scalar_lea.vmem %s0, %s214
      %p216 = pneg %p48
      %p217 = pneg %p45
      %p218 = scmp.lt.s32.totalorder %s20, 0
      %s219 = scalar_select %p218, %s20, 0
      %s220 = smul.addr %s219, 4
      %s221 = scalar_lea.vmem %s1, %s220
      %p222 = pneg %p74
      %p223 = pneg %p71
      %p224 = scmp.lt.s32.totalorder %s20, 0
      %s225 = scalar_select %p224, %s20, 0
      %s226 = scalar_lea.vmem %s2, %s225
      %p227 = pneg %p100
      %p228 = pneg %p97
      %p229 = scmp.lt.s32.totalorder %s19, 1
      %s230 = scalar_select %p229, %s19, 1
      %p231 = scmp.lt.s32.totalorder %s20, 0
      %s232 = scalar_select %p231, %s20, 0
      %s233 = sadd.s32 %s232, %s230
      %s234 = smul.addr %s233, 4
      %s235 = scalar_lea.vmem %s3, %s234
      %p236 = pneg %p128
      %p237 = pneg %p125
      %p238 = pneg %p156
      %p239 = pneg %p153
      %p240 = scmp.lt.s32.totalorder %s19, 1
      %s241 = scalar_select %p240, %s19, 1
      %p242 = scmp.lt.s32.totalorder %s20, 0
      %s243 = scalar_select %p242, %s20, 0
      %s244 = sadd.s32 %s243, %s241
      %s245 = smul.addr %s244, 4
      %s246 = scalar_lea.vmem %s4, %s245
      %p247 = scmp.lt.s32.totalorder %s19, 1
      %s248 = scalar_select %p247, %s19, 1
      %s249 = smul.addr %s248, 4
      %s250 = scalar_lea.vmem %s0, %s249
      %p251 = scmp.lt.s32.totalorder %s20, 0
      %s252 = scalar_select %p251, %s20, 0
      %s253 = smul.addr %s252, 4
      %s254 = scalar_lea.vmem %s1, %s253
      %p255 = scmp.lt.s32.totalorder %s20, 0
      %s256 = scalar_select %p255, %s20, 0
      %s257 = scalar_lea.vmem %s2, %s256
      %p258 = scmp.lt.s32.totalorder %s19, 1
      %s259 = scalar_select %p258, %s19, 1
      %p260 = scmp.lt.s32.totalorder %s20, 0
      %s261 = scalar_select %p260, %s20, 0
      %s262 = sadd.s32 %s261, %s259
      %s263 = smul.addr %s262, 4
      %s264 = scalar_lea.vmem %s3, %s263
      %p265 = scmp.lt.s32.totalorder %s19, 1
      %s266 = scalar_select %p265, %s19, 1
      %p267 = scmp.lt.s32.totalorder %s20, 0
      %s268 = scalar_select %p267, %s20, 0
      %s269 = sadd.s32 %s268, %s266
      %s270 = smul.addr %s269, 4
      %s271 = scalar_lea.vmem %s4, %s270
      %v273 = vld [vmem:[%s250] sm:$0xf]
      %v274 = vld [vmem:[%s254] sm:$0xf]
      %v275 = vld [vmem:[%s254 + $0x4] sm:$0xf]
      %v276 = vld [vmem:[%s254 + $0x8] sm:$0xf]
      %v277 = vld [vmem:[%s254 + $0xc] sm:$0xf]
      %v278 = vld [vmem:[%s257] sm:$0x1]
      %v280 = vlaneseq
      %v281 = vshrl.u32 %v280, 7
      %v282 = vsub.s32 0, %v281
      %v283 = vrot.slane %v278, %v282
      %v289 = vunpack.c.l.b16 %v274
      %v290 = vunpack.c.l.b16 %v275
      %v291 = vunpack.c.l.b16 %v276
      %v292 = vunpack.c.l.b16 %v277
      %v293 = vpack.c.b16 %v290, %v289
      %v294 = vpack.c.b16 %v292, %v291
      %vm297 = vcmask 261120
      %v299 = vsel %vm297, %v273, 0
      %301 = vmatprep.subr.bf16.mxu0 0
      %302 = vmatpush1.bf16.msra.mxu0 0
      %303 = vmatprep.subr.bf16.mxu0 0
      %304 = vmatpush1.bf16.msra.mxu0 0
      %305 = vmatprep.subr.bf16.mxu0 0
      %306 = vmatpush1.bf16.msra.mxu0 0
      %307 = vmatprep.subr.bf16.mxu0 0
      %308 = vmatpush1.bf16.msra.mxu0 0
      %309 = vmatprep.subr.bf16.mxu0 0
      %310 = vmatpush1.bf16.msra.mxu0 0
      %311 = vmatprep.subr.bf16.mxu0 0
      %312 = vmatpush1.bf16.msra.mxu0 0
      %313 = vmatprep.subr.bf16.mxu0 0
      %314 = vmatpush1.bf16.msra.mxu0 %v294
      %315 = vmatprep.subr.bf16.mxu0 0
      %316 = vmatpush1.bf16.msra.mxu0 %v293
      %317 = vmatprep.subr.bf16.mxu0 0
      %318 = vmatpush2.bf16.msra.mxu0 0
      %319 = vmatprep.subr.bf16.mxu0 0
      %320 = vmatpush2.bf16.msra.mxu0 0
      %321 = vmatprep.subr.bf16.mxu0 0
      %322 = vmatpush2.bf16.msra.mxu0 0
      %323 = vmatprep.subr.bf16.mxu0 0
      %324 = vmatpush2.bf16.msra.mxu0 0
      %325 = vmatprep.subr.bf16.mxu0 0
      %326 = vmatpush2.bf16.msra.mxu0 0
      %327 = vmatprep.subr.bf16.mxu0 0
      %328 = vmatpush2.bf16.msra.mxu0 0
      %329 = vmatprep.subr.bf16.mxu0 0
      %330 = vmatpush2.bf16.msra.mxu0 0
      %331 = vmatprep.subr.bf16.mxu0 0
      %332 = vmatpush2.bf16.msra.mxu0 0
      %333 = vmatprep.mubr.bf16.mxu0 0
      %334 = vmatmul.mubr.bf16.gmra.mxu0 %v299
      %v335 = vpop.f32.mrf.mxu0
      %v336 = vadd.f32 %v283, %v335
      %v337 = vpop.f32.mrf.mxu0
      %v338 = vpop.f32.mrf.mxu0
      %v339 = vpop.f32.mrf.mxu0
      %340 = vdwg.mxu0
      %v341 = vld [vmem:[%s264] sm:$0xf]
      %v342 = vunpack.c.l.bf16 %v341
      %v343 = vadd.f32 %v342, %v336
      %v344 = vpack.c.bf16 %v343, %v343
      %vm345 = vcmask 257024
      %346 = vst.msk [vmem:[%s271] sm:$0xf] %vm345, %v344
      %p347 = scmp.lt.s32.totalorder %s19, 1
      %s348 = scalar_select %p347, %s19, 1
      %p349 = scmp.lt.s32.totalorder %s20, 0
      %s350 = scalar_select %p349, %s20, 0
      %s351 = sadd.s32 %s350, %s348
      %s352 = smul.addr %s351, 4
      %s353 = scalar_lea.vmem %s4, %s352
      // Predicated region
      $region37: #{conformer_forward.38} parent=35 // pred_check
        %p354 = pneg %p153
      $region38: #{conformer_forward.38} parent=35 // pred_check_branch
        %356 = sbr.rel (%p354) target = $region40
      $region39: #{conformer_forward.38} parent=35 // pred_region
        _
      $region40: #{conformer_forward.38} parent=35 // pred_fallthru
        _
    $region36: #{conformer_forward.38} parent=5 // pred_fallthru
      _
    %p357 = scmp.le.s32.totalorder 2, %s10
    // Predicated region
    $region41: #{conformer_forward.38} parent=5 // pred_check
      %p358 = pneg %p357
    $region42: #{conformer_forward.38} parent=5 // pred_check_branch
      %360 = sbr.rel (%p358) target = $region44
    $region43: #{conformer_forward.38} parent=5 // pred_region
      %s361 = ssub.s32 %s10, 2
      // Predicated region
      $region45: #{conformer_forward.38} parent=43 // pred_check
        %p362 = pneg %p159
      $region46: #{conformer_forward.38} parent=43 // pred_check_branch
        %364 = sbr.rel (%p362) target = $region48
      $region47: #{conformer_forward.38} parent=43 // pred_region
        %p365 = scmp.lt.s32.totalorder %s21, 1
        %s366 = scalar_select %p365, %s21, 1
        %p367 = scmp.lt.s32.totalorder %s22, 0
        %s368 = scalar_select %p367, %s22, 0
        %s369 = sadd.s32 %s368, %s366
        %s370 = smul.addr %s369, 4
        %s371 = scalar_lea.vmem %s4, %s370
      $region48: #{conformer_forward.38} parent=43 // pred_fallthru
        _
    $region44: #{conformer_forward.38} parent=5 // pred_fallthru
      _
  $region6: #{conformer_forward.38} parent=0 // loop_footer
    %s14 = sadd.s32 1, %s10
  $region7: #{conformer_forward.38} parent=0 // loop_footer_branch
    %9 = sbr.rel target = $region3
  $region8: #{conformer_forward.38} parent=0 // loop_exit
    _

// kernel: conformer_forward.39
$region0: #{conformer_forward.39}
  #allocation0 [shape = 'u32[]', space=smem, size = 0x4, offset = 0x4, fixed_abs, tag = 'smem constant byte address 0x4 - core index']
  #allocation1 [shape = 'u32[144,128]{1,0:T(1,128)}', space=vmem, size = 0x12000, scoped, tag = 'internal scratch']
  %s0 = inlined_call_operand.vmem [shape: bf16[16,32], index: 0, kind: input, shape index: {}]
  %s1 = inlined_call_operand.vmem [shape: f32[1,32], index: 1, kind: input, shape index: {}]
  %s2 = inlined_call_operand.vmem [shape: f32[1,32], index: 2, kind: input, shape index: {}]
  %s3 = inlined_call_operand.vmem [shape: bf16[32,64], index: 3, kind: input, shape index: {}]
  %s4 = inlined_call_operand.vmem [shape: f32[1,64], index: 4, kind: input, shape index: {}]
  %s5 = inlined_call_operand.vmem [shape: bf16[16,32], index: 5, kind: output, shape index: {}]
  %s6 = sld [smem:[#allocation0]]
  $region53: #{conformer_forward.39} parent=0
    _
  %s8 = ssub.s32 1, %s6
  %s9 = scalar_select 0, %s8, %s6
  loop: start=0, step=1, limit=4
  $region2: #{conformer_forward.39} parent=0 // loop_pre_header
    _
  $region3: #{conformer_forward.39} parent=0 // loop_header
    %s11 = sphi 0, %s15
    %p12 = scmp.ge.s32.totalorder %s11, 4
    %s18 = sphi 0, %s30
    %s19 = sphi 0, %s26
    %s20 = sphi 0, %s18
    %s21 = sphi 0, %s19
    %s22 = sphi 0, %s20
    %s23 = sphi 0, %s21
    %s33 = sphi 0, %s35
    %s36 = sphi 0, %s33
    %s37 = sphi 0, %s36
    %s53 = sphi 0, %s37
    %s57 = sphi 0, %s57
    %s59 = sphi 0, %s57
    %s60 = sphi 0, %s59
    %s74 = sphi 0, %s60
    %s78 = sphi 0, %s78
    %s80 = sphi 0, %s78
    %s81 = sphi 0, %s80
    %s95 = sphi 0, %s81
    %s101 = sphi 0, %s103
    %s104 = sphi 0, %s101
    %s105 = sphi 0, %s104
    %s121 = sphi 0, %s105
    %s127 = sphi 0, %s129
    %s130 = sphi 0, %s127
    %s131 = sphi 0, %s130
    %s147 = sphi 0, %s131
    %s155 = sphi 0, %s157
    %s158 = sphi 0, %s155
    %s159 = sphi 0, %s158
    %s175 = sphi 0, %s159
  $region4: #{conformer_forward.39} parent=0 // loop_header_branch
    %14 = sbr.rel (%p12) target = $region8
  $region5: #{conformer_forward.39} parent=0 // loop_body
    %s16 = ssub.s32 %s11, 1
    %s17 = ssub.s32 %s11, 2
    %s24 = sadd.s32 1, %s19
    %p25 = scmp.ge.s32.totalorder %s24, 1
    %s26 = scalar_select %p25, 0, %s24
    %s27 = sadd.s32 1, %s18
    %s28 = scalar_select %p25, %s27, %s18
    %p29 = scmp.ge.s32.totalorder %s28, 2
    %s30 = scalar_select %p29, 0, %s28
    %s31 = ssub.s32 %s18, %s30
    %p32 = scmp.eq.s32.totalorder %s31, 0
    %s34 = sadd.s32 %s33, 1
    %s35 = scalar_select %p32, %s33, %s34
    %p38 = pneg %p32
    %p39 = scmp.eq.s32.totalorder %s11, 1
    %p40 = por %p38, %p39
    %p41 = scmp.ne.s32.totalorder %s33, %s36
    %p42 = scmp.eq.s32.totalorder %s11, 0
    %p43 = por %p41, %p42
    %p44 = scmp.ne.s32.totalorder %s33, %s36
    %p45 = scmp.eq.s32.totalorder %s16, 1
    %p46 = por %p44, %p45
    %p47 = scmp.ne.s32.totalorder %s36, %s37
    %p48 = scmp.eq.s32.totalorder %s16, 0
    %p49 = por %p47, %p48
    %p50 = scmp.ne.s32.totalorder %s36, %s37
    %p51 = scmp.eq.s32.totalorder %s17, 1
    %p52 = por %p50, %p51
    %p54 = scmp.ne.s32.totalorder %s37, %s53
    %p55 = scmp.eq.s32.totalorder %s17, 0
    %p56 = por %p54, %p55
    %s58 = sadd.s32 %s57, 1
    %p61 = scmp.eq.s32.totalorder %s11, 1
    %p62 = scmp.ne.s32.totalorder %s57, %s59
    %p63 = scmp.eq.s32.totalorder %s11, 0
    %p64 = por %p62, %p63
    %p65 = scmp.ne.s32.totalorder %s57, %s59
    %p66 = scmp.eq.s32.totalorder %s16, 1
    %p67 = por %p65, %p66
    %p68 = scmp.ne.s32.totalorder %s59, %s60
    %p69 = scmp.eq.s32.totalorder %s16, 0
    %p70 = por %p68, %p69
    %p71 = scmp.ne.s32.totalorder %s59, %s60
    %p72 = scmp.eq.s32.totalorder %s17, 1
    %p73 = por %p71, %p72
    %p75 = scmp.ne.s32.totalorder %s60, %s74
    %p76 = scmp.eq.s32.totalorder %s17, 0
    %p77 = por %p75, %p76
    %s79 = sadd.s32 %s78, 1
    %p82 = scmp.eq.s32.totalorder %s11, 1
    %p83 = scmp.ne.s32.totalorder %s78, %s80
    %p84 = scmp.eq.s32.totalorder %s11, 0
    %p85 = por %p83, %p84
    %p86 = scmp.ne.s32.totalorder %s78, %s80
    %p87 = scmp.eq.s32.totalorder %s16, 1
    %p88 = por %p86, %p87
    %p89 = scmp.ne.s32.totalorder %s80, %s81
    %p90 = scmp.eq.s32.totalorder %s16, 0
    %p91 = por %p89, %p90
    %p92 = scmp.ne.s32.totalorder %s80, %s81
    %p93 = scmp.eq.s32.totalorder %s17, 1
    %p94 = por %p92, %p93
    %p96 = scmp.ne.s32.totalorder %s81, %s95
    %p97 = scmp.eq.s32.totalorder %s17, 0
    %p98 = por %p96, %p97
    %s99 = ssub.s32 %s19, %s26
    %p100 = scmp.eq.s32.totalorder %s99, 0
    %s102 = sadd.s32 %s101, 1
    %s103 = scalar_select %p100, %s101, %s102
    %p106 = pneg %p100
    %p107 = scmp.eq.s32.totalorder %s11, 1
    %p108 = por %p106, %p107
    %p109 = scmp.ne.s32.totalorder %s101, %s104
    %p110 = scmp.eq.s32.totalorder %s11, 0
    %p111 = por %p109, %p110
    %p112 = scmp.ne.s32.totalorder %s101, %s104
    %p113 = scmp.eq.s32.totalorder %s16, 1
    %p114 = por %p112, %p113
    %p115 = scmp.ne.s32.totalorder %s104, %s105
    %p116 = scmp.eq.s32.totalorder %s16, 0
    %p117 = por %p115, %p116
    %p118 = scmp.ne.s32.totalorder %s104, %s105
    %p119 = scmp.eq.s32.totalorder %s17, 1
    %p120 = por %p118, %p119
    %p122 = scmp.ne.s32.totalorder %s105, %s121
    %p123 = scmp.eq.s32.totalorder %s17, 0
    %p124 = por %p122, %p123
    %s125 = ssub.s32 %s19, %s26
    %p126 = scmp.eq.s32.totalorder %s125, 0
    %s128 = sadd.s32 %s127, 1
    %s129 = scalar_select %p126, %s127, %s128
    %p132 = pneg %p126
    %p133 = scmp.eq.s32.totalorder %s11, 1
    %p134 = por %p132, %p133
    %p135 = scmp.ne.s32.totalorder %s127, %s130
    %p136 = scmp.eq.s32.totalorder %s11, 0
    %p137 = por %p135, %p136
    %p138 = scmp.ne.s32.totalorder %s127, %s130
    %p139 = scmp.eq.s32.totalorder %s16, 1
    %p140 = por %p138, %p139
    %p141 = scmp.ne.s32.totalorder %s130, %s131
    %p142 = scmp.eq.s32.totalorder %s16, 0
    %p143 = por %p141, %p142
    %p144 = scmp.ne.s32.totalorder %s130, %s131
    %p145 = scmp.eq.s32.totalorder %s17, 1
    %p146 = por %p144, %p145
    %p148 = scmp.ne.s32.totalorder %s131, %s147
    %p149 = scmp.eq.s32.totalorder %s17, 0
    %p150 = por %p148, %p149
    %s151 = ssub.s32 %s18, %s30
    %s152 = ssub.s32 %s19, %s26
    %s153 = sor.u32 %s151, %s152
    %p154 = scmp.eq.s32.totalorder %s153, 0
    %s156 = sadd.s32 %s155, 1
    %s157 = scalar_select %p154, %s155, %s156
    %p160 = pneg %p154
    %p161 = scmp.eq.s32.totalorder %s11, 1
    %p162 = por %p160, %p161
    %p163 = scmp.ne.s32.totalorder %s155, %s158
    %p164 = scmp.eq.s32.totalorder %s11, 0
    %p165 = por %p163, %p164
    %p166 = scmp.ne.s32.totalorder %s155, %s158
    %p167 = scmp.eq.s32.totalorder %s16, 1
    %p168 = por %p166, %p167
    %p169 = scmp.ne.s32.totalorder %s158, %s159
    %p170 = scmp.eq.s32.totalorder %s16, 0
    %p171 = por %p169, %p170
    %p172 = scmp.ne.s32.totalorder %s158, %s159
    %p173 = scmp.eq.s32.totalorder %s17, 1
    %p174 = por %p172, %p173
    %p176 = scmp.ne.s32.totalorder %s159, %s175
    %p177 = scmp.eq.s32.totalorder %s17, 0
    %p178 = por %p176, %p177
    %p179 = scmp.le.s32.totalorder 1, %s11
    %p180 = scmp.lt.s32.totalorder %s11, 3
    %p181 = pnand %p179, %p180
    %p182 = pneg %p181
    // Predicated region
    $region9: #{conformer_forward.39} parent=5 // pred_check
      _
    $region10: #{conformer_forward.39} parent=5 // pred_check_branch
      %184 = sbr.rel (%p181) target = $region12
    $region11: #{conformer_forward.39} parent=5 // pred_region
      %s185 = ssub.s32 %s11, 1
      // Predicated region
      $region13: #{conformer_forward.39} parent=11 // pred_check
        %p186 = pneg %p70
      $region14: #{conformer_forward.39} parent=11 // pred_check_branch
        %188 = sbr.rel (%p186) target = $region16
      $region15: #{conformer_forward.39} parent=11 // pred_region
        _
      $region16: #{conformer_forward.39} parent=11 // pred_fallthru
        _
      // Predicated region
      $region17: #{conformer_forward.39} parent=11 // pred_check
        %p189 = pneg %p91
      $region18: #{conformer_forward.39} parent=11 // pred_check_branch
        %191 = sbr.rel (%p189) target = $region20
      $region19: #{conformer_forward.39} parent=11 // pred_region
        _
      $region20: #{conformer_forward.39} parent=11 // pred_fallthru
        _
      // Predicated region
      $region21: #{conformer_forward.39} parent=11 // pred_check
        %p192 = pneg %p117
      $region22: #{conformer_forward.39} parent=11 // pred_check_branch
        %194 = sbr.rel (%p192) target = $region24
      $region23: #{conformer_forward.39} parent=11 // pred_region
        %p195 = scmp.lt.s32.totalorder %s21, 0
        %s196 = scalar_select %p195, %s21, 0
        %s197 = smul.addr %s196, 4
        %s198 = scalar_lea.vmem %s3, %s197
      $region24: #{conformer_forward.39} parent=11 // pred_fallthru
        _
      // Predicated region
      $region25: #{conformer_forward.39} parent=11 // pred_check
        %p199 = pneg %p143
      $region26: #{conformer_forward.39} parent=11 // pred_check_branch
        %201 = sbr.rel (%p199) target = $region28
      $region27: #{conformer_forward.39} parent=11 // pred_region
        %p202 = scmp.lt.s32.totalorder %s21, 0
        %s203 = scalar_select %p202, %s21, 0
        %s204 = scalar_lea.vmem %s4, %s203
      $region28: #{conformer_forward.39} parent=11 // pred_fallthru
        _
    $region12: #{conformer_forward.39} parent=5 // pred_fallthru
      _
    %p205 = scmp.lt.s32.totalorder %s11, 2
    // Predicated region
    $region29: #{conformer_forward.39} parent=5 // pred_check
      %p206 = pneg %p205
    $region30: #{conformer_forward.39} parent=5 // pred_check_branch
      %208 = sbr.rel (%p206) target = $region32
    $region31: #{conformer_forward.39} parent=5 // pred_region
      // Predicated region
      $region33: #{conformer_forward.39} parent=31 // pred_check
        %p209 = pneg %p43
      $region34: #{conformer_forward.39} parent=31 // pred_check_branch
        %211 = sbr.rel (%p209) target = $region36
      $region35: #{conformer_forward.39} parent=31 // pred_region
        %p212 = scmp.lt.s32.totalorder %s18, 1
        %s213 = scalar_select %p212, %s18, 1
        %s214 = smul.addr %s213, 4
        %s215 = scalar_lea.vmem %s0, %s214
      $region36: #{conformer_forward.39} parent=31 // pred_fallthru
        _
    $region32: #{conformer_forward.39} parent=5 // pred_fallthru
      _
    %p216 = scmp.le.s32.totalorder 1, %s11
    %p217 = scmp.lt.s32.totalorder %s11, 3
    %p218 = pnand %p216, %p217
    %p219 = pneg %p218
    // Predicated region
    $region37: #{conformer_forward.39} parent=5 // pred_check
      _
    $region38: #{conformer_forward.39} parent=5 // pred_check_branch
      %221 = sbr.rel (%p218) target = $region40
    $region39: #{conformer_forward.39} parent=5 // pred_region
      %s222 = ssub.s32 %s11, 1
      %p223 = scmp.lt.s32.totalorder %s20, 1
      %s224 = scalar_select %p223, %s20, 1
      %s225 = smul.addr %s224, 4
      %s226 = scalar_lea.vmem %s0, %s225
      %p227 = pneg %p49
      %p228 = pneg %p46
      %p229 = pneg %p70
      %p230 = pneg %p67
      %p231 = pneg %p91
      %p232 = pneg %p88
      %p233 = scmp.lt.s32.totalorder %s21, 0
      %s234 = scalar_select %p233, %s21, 0
      %s235 = smul.addr %s234, 4
      %s236 = scalar_lea.vmem %s3, %s235
      %p237 = pneg %p117
      %p238 = pneg %p114
      %p239 = scmp.lt.s32.totalorder %s21, 0
      %s240 = scalar_select %p239, %s21, 0
      %s241 = scalar_lea.vmem %s4, %s240
      %p242 = pneg %p143
      %p243 = pneg %p140
      %p244 = pneg %p171
      %p245 = pneg %p168
      %p246 = scmp.lt.s32.totalorder %s20, 1
      %s247 = scalar_select %p246, %s20, 1
      %p248 = scmp.lt.s32.totalorder %s21, 0
      %s249 = scalar_select %p248, %s21, 0
      %s250 = sadd.s32 %s249, %s247
      %s251 = smul.addr %s250, 4
      %s252 = scalar_lea.vmem %s5, %s251
      %p253 = scmp.lt.s32.totalorder %s20, 1
      %s254 = scalar_select %p253, %s20, 1
      %s255 = smul.addr %s254, 4
      %s256 = scalar_lea.vmem %s0, %s255
      %p257 = scmp.lt.s32.totalorder %s21, 0
      %s258 = scalar_select %p257, %s21, 0
      %s259 = smul.addr %s258, 4
      %s260 = scalar_lea.vmem %s3, %s259
      %p261 = scmp.lt.s32.totalorder %s21, 0
      %s262 = scalar_select %p261, %s21, 0
      %s263 = scalar_lea.vmem %s4, %s262
      %p264 = scmp.lt.s32.totalorder %s20, 1
      %s265 = scalar_select %p264, %s20, 1
      %p266 = scmp.lt.s32.totalorder %s21, 0
      %s267 = scalar_select %p266, %s21, 0
      %s268 = sadd.s32 %s267, %s265
      %s269 = smul.addr %s268, 4
      %s270 = scalar_lea.vmem %s5, %s269
      %v272 = vld [vmem:[%s256] sm:$0xf]
      %v273 = vunpack.c.l.bf16 %v272
      %vm274 = vcmask 261120
      %v275 = vsel %vm274, %v273, 0.0
      %276 = vadd.xlane.f32.xlu0 %v275
      %v277 = vpop.xlane.xlu0 %276
      %v278 = vrcp.pop 32.0
      %v279 = vmul.f32 %v277, %v278
      %v280 = vsub.f32 %v273, %v279
      %v281 = vmul.f32 %v280, %v280
      %v282 = vsel %vm274, %v281, 0.0
      %283 = vadd.xlane.f32.xlu0 %v282
      %v284 = vpop.xlane.xlu0 %283
      %v285 = vmul.f32 %v284, %v278
      %v286 = vadd.f32 %v285, 1e-05
      %v287 = vrsqrt.pop %v286
      %v288 = vmul.f32 %v280, %v287
      %v289 = vld [vmem:[%s1] sm:$0x1]
      %v291 = vlaneseq
      %v292 = vshrl.u32 %v291, 7
      %v293 = vsub.s32 0, %v292
      %v294 = vrot.slane %v289, %v293
      %v296 = vmul.f32 %v288, %v294
      %v297 = vld [vmem:[%s2] sm:$0x1]
      %v299 = vlaneseq
      %v300 = vshrl.u32 %v299, 7
      %v301 = vsub.s32 0, %v300
      %v302 = vrot.slane %v297, %v301
      %v304 = vadd.f32 %v296, %v302
      %v305 = vpack.c.bf16 %v304, %v304
      %v306 = vld [vmem:[%s260] sm:$0xf]
      %v307 = vld [vmem:[%s260 + $0x4] sm:$0xf]
      %v308 = vld [vmem:[%s260 + $0x8] sm:$0xf]
      %v309 = vld [vmem:[%s260 + $0xc] sm:$0xf]
      %v310 = vld [vmem:[%s263] sm:$0x1]
      %v312 = vlaneseq
      %v313 = vshrl.u32 %v312, 7
      %v314 = vsub.s32 0, %v313
      %v315 = vrot.slane %v310, %v314
      %v321 = vunpack.c.l.b16 %v306
      %v322 = vunpack.c.l.b16 %v307
      %v323 = vunpack.c.l.b16 %v308
      %v324 = vunpack.c.l.b16 %v309
      %v325 = vpack.c.b16 %v322, %v321
      %v326 = vpack.c.b16 %v324, %v323
      %v330 = vsel %vm274, %v305, 0
      %332 = vmatprep.subr.bf16.mxu0 0
      %333 = vmatpush1.bf16.msra.mxu0 0
      %334 = vmatprep.subr.bf16.mxu0 0
      %335 = vmatpush1.bf16.msra.mxu0 0
      %336 = vmatprep.subr.bf16.mxu0 0
      %337 = vmatpush1.bf16.msra.mxu0 0
      %338 = vmatprep.subr.bf16.mxu0 0
      %339 = vmatpush1.bf16.msra.mxu0 0
      %340 = vmatprep.subr.bf16.mxu0 0
      %341 = vmatpush1.bf16.msra.mxu0 0
      %342 = vmatprep.subr.bf16.mxu0 0
      %343 = vmatpush1.bf16.msra.mxu0 0
      %344 = vmatprep.subr.bf16.mxu0 0
      %345 = vmatpush1.bf16.msra.mxu0 %v326
      %346 = vmatprep.subr.bf16.mxu0 0
      %347 = vmatpush1.bf16.msra.mxu0 %v325
      %348 = vmatprep.subr.bf16.mxu0 0
      %349 = vmatpush2.bf16.msra.mxu0 0
      %350 = vmatprep.subr.bf16.mxu0 0
      %351 = vmatpush2.bf16.msra.mxu0 0
      %352 = vmatprep.subr.bf16.mxu0 0
      %353 = vmatpush2.bf16.msra.mxu0 0
      %354 = vmatprep.subr.bf16.mxu0 0
      %355 = vmatpush2.bf16.msra.mxu0 0
      %356 = vmatprep.subr.bf16.mxu0 0
      %357 = vmatpush2.bf16.msra.mxu0 0
      %358 = vmatprep.subr.bf16.mxu0 0
      %359 = vmatpush2.bf16.msra.mxu0 0
      %360 = vmatprep.subr.bf16.mxu0 0
      %361 = vmatpush2.bf16.msra.mxu0 0
      %362 = vmatprep.subr.bf16.mxu0 0
      %363 = vmatpush2.bf16.msra.mxu0 0
      %364 = vmatprep.mubr.bf16.mxu0 0
      %365 = vmatmul.mubr.bf16.gmra.mxu0 %v330
      %v366 = vpop.f32.mrf.mxu0
      %v367 = vadd.f32 %v315, %v366
      %v368 = vpop.f32.mrf.mxu0
      %v369 = vpop.f32.mrf.mxu0
      %v370 = vpop.f32.mrf.mxu0
      %371 = vdwg.mxu0
      %v372 = vsub.f32 0.0, %v367
      %v373 = vmul.f32 %v372, 1.442695
      %v374 = vpow.pop %v373
      %v375 = vadd.f32 %v374, 1.0
      %v376 = vrcp.pop %v375
      %v377 = vmul.f32 1.0, %v376
      %379 = vrot.lane.b32.xlu0 %v377, 96
      %v380 = vpop.permute.xlu0 %379
      %v382 = vmul.f32 %v367, %v380
      %v383 = vpack.c.bf16 %v382, %v382
      %vm384 = vcmask 257024
      %385 = vst.msk [vmem:[%s270] sm:$0xf] %vm384, %v383
      %p386 = scmp.lt.s32.totalorder %s20, 1
      %s387 = scalar_select %p386, %s20, 1
      %p388 = scmp.lt.s32.totalorder %s21, 0
      %s389 = scalar_select %p388, %s21, 0
      %s390 = sadd.s32 %s389, %s387
      %s391 = smul.addr %s390, 4
      %s392 = scalar_lea.vmem %s5, %s391
      // Predicated region
      $region41: #{conformer_forward.39} parent=39 // pred_check
        %p393 = pneg %p168
      $region42: #{conformer_forward.39} parent=39 // pred_check_branch
        %395 = sbr.rel (%p393) target = $region44
      $region43: #{conformer_forward.39} parent=39 // pred_region
        _
      $region44: #{conformer_forward.39} parent=39 // pred_fallthru
        _
    $region40: #{conformer_forward.39} parent=5 // pred_fallthru
      _
    %p396 = scmp.le.s32.totalorder 2, %s11
    // Predicated region
    $region45: #{conformer_forward.39} parent=5 // pred_check
      %p397 = pneg %p396
    $region46: #{conformer_forward.39} parent=5 // pred_check_branch
      %399 = sbr.rel (%p397) target = $region48
    $region47: #{conformer_forward.39} parent=5 // pred_region
      %s400 = ssub.s32 %s11, 2
      // Predicated region
      $region49: #{conformer_forward.39} parent=47 // pred_check
        %p401 = pneg %p174
      $region50: #{conformer_forward.39} parent=47 // pred_check_branch
        %403 = sbr.rel (%p401) target = $region52
      $region51: #{conformer_forward.39} parent=47 // pred_region
        %p404 = scmp.lt.s32.totalorder %s22, 1
        %s405 = scalar_select %p404, %s22, 1
        %p406 = scmp.lt.s32.totalorder %s23, 0
        %s407 = scalar_select %p406, %s23, 0
        %s408 = sadd.s32 %s407, %s405
        %s409 = smul.addr %s408, 4
        %s410 = scalar_lea.vmem %s5, %s409
      $region52: #{conformer_forward.39} parent=47 // pred_fallthru
        _
    $region48: #{conformer_forward.39} parent=5 // pred_fallthru
      _
  $region6: #{conformer_forward.39} parent=0 // loop_footer
    %s15 = sadd.s32 1, %s11
  $region7: #{conformer_forward.39} parent=0 // loop_footer_branch
    %10 = sbr.rel target = $region3
  $region8: #{conformer_forward.39} parent=0 // loop_exit
    _

// kernel: conformer_forward.37
$region0: #{conformer_forward.37}
  #allocation0 [shape = 'u32[]', space=smem, size = 0x4, offset = 0x4, fixed_abs, tag = 'smem constant byte address 0x4 - core index']
  #allocation1 [shape = 'u32[144,128]{1,0:T(1,128)}', space=vmem, size = 0x12000, scoped, tag = 'internal scratch']
  %s0 = inlined_call_operand.vmem [shape: bf16[2,8,96], index: 0, kind: input, shape index: {}]
  %s1 = inlined_call_operand.vmem [shape: bf16[2,4,8,8], index: 1, kind: input, shape index: {}]
  %s2 = inlined_call_operand.vmem [shape: f32[4,8], index: 2, kind: input, shape index: {}]
  %s3 = inlined_call_operand.vmem [shape: bf16[2,8,32], index: 3, kind: output, shape index: {}]
  %s4 = sld [smem:[#allocation0]]
  $region45: #{conformer_forward.37} parent=0
    _
  %s6 = ssub.s32 1, %s4
  %s7 = scalar_select 0, %s6, %s4
  loop: start=0, step=1, limit=4
  $region2: #{conformer_forward.37} parent=0 // loop_pre_header
    _
  $region3: #{conformer_forward.37} parent=0 // loop_header
    %s9 = sphi 0, %s13
    %p10 = scmp.ge.s32.totalorder %s9, 4
    %s19 = sphi 0, %s21
    %s22 = sphi 0, %s19
    %s23 = sphi 0, %s22
    %s39 = sphi 0, %s23
    %s45 = sphi 0, %s47
    %s48 = sphi 0, %s45
    %s49 = sphi 0, %s48
    %s65 = sphi 0, %s49
    %s69 = sphi 0, %s69
    %s71 = sphi 0, %s69
    %s72 = sphi 0, %s71
    %s86 = sphi 0, %s72
    %s92 = sphi 0, %s94
    %s95 = sphi 0, %s92
    %s96 = sphi 0, %s95
    %s112 = sphi 0, %s96
  $region4: #{conformer_forward.37} parent=0 // loop_header_branch
    %12 = sbr.rel (%p10) target = $region8
  $region5: #{conformer_forward.37} parent=0 // loop_body
    %s14 = ssub.s32 %s9, 1
    %s15 = ssub.s32 %s9, 2
    %s16 = sadd.s32 %s9, 1
    %s17 = ssub.s32 %s9, %s16
    %p18 = scmp.eq.s32.totalorder %s17, 0
    %s20 = sadd.s32 %s19, 1
    %s21 = scalar_select %p18, %s19, %s20
    %p24 = pneg %p18
    %p25 = scmp.eq.s32.totalorder %s9, 1
    %p26 = por %p24, %p25
    %p27 = scmp.ne.s32.totalorder %s19, %s22
    %p28 = scmp.eq.s32.totalorder %s9, 0
    %p29 = por %p27, %p28
    %p30 = scmp.ne.s32.totalorder %s19, %s22
    %p31 = scmp.eq.s32.totalorder %s14, 1
    %p32 = por %p30, %p31
    %p33 = scmp.ne.s32.totalorder %s22, %s23
    %p34 = scmp.eq.s32.totalorder %s14, 0
    %p35 = por %p33, %p34
    %p36 = scmp.ne.s32.totalorder %s22, %s23
    %p37 = scmp.eq.s32.totalorder %s15, 1
    %p38 = por %p36, %p37
    %p40 = scmp.ne.s32.totalorder %s23, %s39
    %p41 = scmp.eq.s32.totalorder %s15, 0
    %p42 = por %p40, %p41
    %s43 = ssub.s32 %s9, %s16
    %p44 = scmp.eq.s32.totalorder %s43, 0
    %s46 = sadd.s32 %s45, 1
    %s47 = scalar_select %p44, %s45, %s46
    %p50 = pneg %p44
    %p51 = scmp.eq.s32.totalorder %s9, 1
    %p52 = por %p50, %p51
    %p53 = scmp.ne.s32.totalorder %s45, %s48
    %p54 = scmp.eq.s32.totalorder %s9, 0
    %p55 = por %p53, %p54
    %p56 = scmp.ne.s32.totalorder %s45, %s48
    %p57 = scmp.eq.s32.totalorder %s14, 1
    %p58 = por %p56, %p57
    %p59 = scmp.ne.s32.totalorder %s48, %s49
    %p60 = scmp.eq.s32.totalorder %s14, 0
    %p61 = por %p59, %p60
    %p62 = scmp.ne.s32.totalorder %s48, %s49
    %p63 = scmp.eq.s32.totalorder %s15, 1
    %p64 = por %p62, %p63
    %p66 = scmp.ne.s32.totalorder %s49, %s65
    %p67 = scmp.eq.s32.totalorder %s15, 0
    %p68 = por %p66, %p67
    %s70 = sadd.s32 %s69, 1
    %p73 = scmp.eq.s32.totalorder %s9, 1
    %p74 = scmp.ne.s32.totalorder %s69, %s71
    %p75 = scmp.eq.s32.totalorder %s9, 0
    %p76 = por %p74, %p75
    %p77 = scmp.ne.s32.totalorder %s69, %s71
    %p78 = scmp.eq.s32.totalorder %s14, 1
    %p79 = por %p77, %p78
    %p80 = scmp.ne.s32.totalorder %s71, %s72
    %p81 = scmp.eq.s32.totalorder %s14, 0
    %p82 = por %p80, %p81
    %p83 = scmp.ne.s32.totalorder %s71, %s72
    %p84 = scmp.eq.s32.totalorder %s15, 1
    %p85 = por %p83, %p84
    %p87 = scmp.ne.s32.totalorder %s72, %s86
    %p88 = scmp.eq.s32.totalorder %s15, 0
    %p89 = por %p87, %p88
    %s90 = ssub.s32 %s9, %s16
    %p91 = scmp.eq.s32.totalorder %s90, 0
    %s93 = sadd.s32 %s92, 1
    %s94 = scalar_select %p91, %s92, %s93
    %p97 = pneg %p91
    %p98 = scmp.eq.s32.totalorder %s9, 1
    %p99 = por %p97, %p98
    %p100 = scmp.ne.s32.totalorder %s92, %s95
    %p101 = scmp.eq.s32.totalorder %s9, 0
    %p102 = por %p100, %p101
    %p103 = scmp.ne.s32.totalorder %s92, %s95
    %p104 = scmp.eq.s32.totalorder %s14, 1
    %p105 = por %p103, %p104
    %p106 = scmp.ne.s32.totalorder %s95, %s96
    %p107 = scmp.eq.s32.totalorder %s14, 0
    %p108 = por %p106, %p107
    %p109 = scmp.ne.s32.totalorder %s95, %s96
    %p110 = scmp.eq.s32.totalorder %s15, 1
    %p111 = por %p109, %p110
    %p113 = scmp.ne.s32.totalorder %s96, %s112
    %p114 = scmp.eq.s32.totalorder %s15, 0
    %p115 = por %p113, %p114
    %p116 = scmp.le.s32.totalorder 1, %s9
    %p117 = scmp.lt.s32.totalorder %s9, 3
    %p118 = pnand %p116, %p117
    %p119 = pneg %p118
    // Predicated region
    $region9: #{conformer_forward.37} parent=5 // pred_check
      _
    $region10: #{conformer_forward.37} parent=5 // pred_check_branch
      %121 = sbr.rel (%p118) target = $region12
    $region11: #{conformer_forward.37} parent=5 // pred_region
      %s122 = ssub.s32 %s9, 1
      // Predicated region
      $region13: #{conformer_forward.37} parent=11 // pred_check
        %p123 = pneg %p82
      $region14: #{conformer_forward.37} parent=11 // pred_check_branch
        %125 = sbr.rel (%p123) target = $region16
      $region15: #{conformer_forward.37} parent=11 // pred_region
        _
      $region16: #{conformer_forward.37} parent=11 // pred_fallthru
        _
    $region12: #{conformer_forward.37} parent=5 // pred_fallthru
      _
    %p126 = scmp.lt.s32.totalorder %s9, 2
    // Predicated region
    $region17: #{conformer_forward.37} parent=5 // pred_check
      %p127 = pneg %p126
    $region18: #{conformer_forward.37} parent=5 // pred_check_branch
      %129 = sbr.rel (%p127) target = $region20
    $region19: #{conformer_forward.37} parent=5 // pred_region
      // Predicated region
      $region21: #{conformer_forward.37} parent=19 // pred_check
        %p130 = pneg %p29
      $region22: #{conformer_forward.37} parent=19 // pred_check_branch
        %132 = sbr.rel (%p130) target = $region24
      $region23: #{conformer_forward.37} parent=19 // pred_region
        %p133 = scmp.lt.s32.totalorder %s9, 1
        %s134 = scalar_select %p133, %s9, 1
        %s135 = smul.addr %s134, 4
        %s136 = scalar_lea.vmem %s0, %s135
      $region24: #{conformer_forward.37} parent=19 // pred_fallthru
        _
      // Predicated region
      $region25: #{conformer_forward.37} parent=19 // pred_check
        %p137 = pneg %p55
      $region26: #{conformer_forward.37} parent=19 // pred_check_branch
        %139 = sbr.rel (%p137) target = $region28
      $region27: #{conformer_forward.37} parent=19 // pred_region
        %p140 = scmp.lt.s32.totalorder %s9, 1
        %s141 = scalar_select %p140, %s9, 1
        %s142 = smul.addr %s141, 4
        %s143 = smul.addr %s142, 4
        %s144 = scalar_lea.vmem %s1, %s143
      $region28: #{conformer_forward.37} parent=19 // pred_fallthru
        _
    $region20: #{conformer_forward.37} parent=5 // pred_fallthru
      _
    %p145 = scmp.le.s32.totalorder 1, %s9
    %p146 = scmp.lt.s32.totalorder %s9, 3
    %p147 = pnand %p145, %p146
    %p148 = pneg %p147
    // Predicated region
    $region29: #{conformer_forward.37} parent=5 // pred_check
      _
    $region30: #{conformer_forward.37} parent=5 // pred_check_branch
      %150 = sbr.rel (%p147) target = $region32
    $region31: #{conformer_forward.37} parent=5 // pred_region
      %s151 = ssub.s32 %s9, 1
      %p152 = scmp.lt.s32.totalorder %s14, 1
      %s153 = scalar_select %p152, %s14, 1
      %s154 = smul.addr %s153, 4
      %s155 = scalar_lea.vmem %s0, %s154
      %p156 = pneg %p35
      %p157 = pneg %p32
      %p158 = scmp.lt.s32.totalorder %s14, 1
      %s159 = scalar_select %p158, %s14, 1
      %s160 = smul.addr %s159, 4
      %s161 = smul.addr %s160, 4
      %s162 = scalar_lea.vmem %s1, %s161
      %p163 = pneg %p61
      %p164 = pneg %p58
      %p165 = pneg %p82
      %p166 = pneg %p79
      %p167 = pneg %p108
      %p168 = pneg %p105
      %p169 = scmp.lt.s32.totalorder %s14, 1
      %s170 = scalar_select %p169, %s14, 1
      %s171 = smul.addr %s170, 4
      %s172 = scalar_lea.vmem %s3, %s171
      %p173 = scmp.lt.s32.totalorder %s14, 1
      %s174 = scalar_select %p173, %s14, 1
      %s175 = smul.addr %s174, 4
      %s176 = scalar_lea.vmem %s0, %s175
      %p177 = scmp.lt.s32.totalorder %s14, 1
      %s178 = scalar_select %p177, %s14, 1
      %s179 = smul.addr %s178, 4
      %s180 = smul.addr %s179, 4
      %s181 = scalar_lea.vmem %s1, %s180
      %p182 = scmp.lt.s32.totalorder %s14, 1
      %s183 = scalar_select %p182, %s14, 1
      %s184 = smul.addr %s183, 4
      %s185 = scalar_lea.vmem %s3, %s184
      %v187 = vld [vmem:[%s176] sm:$0xf]
      %v188 = vunpack.c.l.bf16 %v187
      %v189 = vld [vmem:[%s2] sm:$0x1]
      %v190 = vlaneseq
      %v191 = vshrl.u32 %v190, 7
      %v192 = vsub.s32 0, %v191
      %v193 = vrot.slane %v189, %v192
      %v194 = vadd.f32 %v188, %v193
      %v195 = vpack.c.bf16 %v194, %v194
      %v196 = vld [vmem:[%s181] sm:$0xf]
      %v197 = vunpack.c.l.bf16 %v196
      %v199 = vunpack.c.l.b16 %v187
      %v200 = vpack.c.b16 %v199, %v199
      %201 = vrot.lane.b32.xlu0 %v200, 96
      %v202 = vpop.permute.xlu0 %201
      %vm203 = vcmask 64512
      %v205 = vsel %vm203, %v195, 0
      %v208 = vsel %vm203, %v202, 0
      %210 = vmatprep.subr.bf16.mxu0 0
      %211 = vmatpush1.bf16.xpose.msra.mxu0 0
      %212 = vmatprep.subr.bf16.mxu0 0
      %213 = vmatpush1.bf16.xpose.msra.mxu0 0
      %214 = vmatprep.subr.bf16.mxu0 0
      %215 = vmatpush1.bf16.xpose.msra.mxu0 0
      %216 = vmatprep.subr.bf16.mxu0 0
      %217 = vmatpush1.bf16.xpose.msra.mxu0 0
      %218 = vmatprep.subr.bf16.mxu0 0
      %219 = vmatpush1.bf16.xpose.msra.mxu0 0
      %220 = vmatprep.subr.bf16.mxu0 0
      %221 = vmatpush1.bf16.xpose.msra.mxu0 0
      %222 = vmatprep.subr.bf16.mxu0 0
      %223 = vmatpush1.bf16.xpose.msra.mxu0 0
      %224 = vmatprep.subr.bf16.mxu0 0
      %225 = vmatpush1.bf16.xpose.msra.mxu0 %v208
      %226 = vmatprep.subr.bf16.mxu0 0
      %227 = vmatpush2.bf16.xpose.msra.mxu0 0
      %228 = vmatprep.subr.bf16.mxu0 0
      %229 = vmatpush2.bf16.xpose.msra.mxu0 0
      %230 = vmatprep.subr.bf16.mxu0 0
      %231 = vmatpush2.bf16.xpose.msra.mxu0 0
      %232 = vmatprep.subr.bf16.mxu0 0
      %233 = vmatpush2.bf16.xpose.msra.mxu0 0
      %234 = vmatprep.subr.bf16.mxu0 0
      %235 = vmatpush2.bf16.xpose.msra.mxu0 0
      %236 = vmatprep.subr.bf16.mxu0 0
      %237 = vmatpush2.bf16.xpose.msra.mxu0 0
      %238 = vmatprep.subr.bf16.mxu0 0
      %239 = vmatpush2.bf16.xpose.msra.mxu0 0
      %240 = vmatprep.subr.bf16.mxu0 0
      %241 = vmatpush2.bf16.xpose.msra.mxu0 0
      %242 = vmatprep.mubr.bf16.mxu0 0
      %243 = vmatmul.mubr.bf16.gmra.mxu0 %v205
      %v244 = vpop.f32.mrf.mxu0
      %v245 = vadd.f32 %v197, %v244
      %v246 = vpop.f32.mrf.mxu0
      %v247 = vpop.f32.mrf.mxu0
      %v248 = vpop.f32.mrf.mxu0
      %249 = vdwg.mxu0
      %v250 = vmul.f32 %v245, 0.17677669
      %v251 = vsel %vm203, %v250, -inf
      %252 = vmax.xlane.f32.xlu0 %v251
      %v253 = vpop.xlane.xlu0 %252
      %v254 = vsub.f32 %v250, %v253
      %v255 = vmul.f32 %v254, 1.442695
      %v256 = vpow.pop %v255
      %v257 = vsel %vm203, %v256, 0.0
      %258 = vadd.xlane.f32.xlu0 %v257
      %v259 = vpop.xlane.xlu0 %258
      %v260 = vrcp.pop %v259
      %v261 = vmul.f32 %v256, %v260
      %v262 = vpack.c.bf16 %v261, %v261
      %263 = vrot.lane.b32.xlu0 %v200, 64
      %v264 = vpop.permute.xlu0 %263
      %v266 = vsel %vm203, %v262, 0
      %vm268 = vcmask 1043456
      %v270 = vsel %vm268, %v264, 0
      %272 = vmatprep.subr.bf16.mxu0 0
      %273 = vmatpush1.bf16.msra.mxu0 0
      %274 = vmatprep.subr.bf16.mxu0 0
      %275 = vmatpush1.bf16.msra.mxu0 0
      %276 = vmatprep.subr.bf16.mxu0 0
      %277 = vmatpush1.bf16.msra.mxu0 0
      %278 = vmatprep.subr.bf16.mxu0 0
      %279 = vmatpush1.bf16.msra.mxu0 0
      %280 = vmatprep.subr.bf16.mxu0 0
      %281 = vmatpush1.bf16.msra.mxu0 0
      %282 = vmatprep.subr.bf16.mxu0 0
      %283 = vmatpush1.bf16.msra.mxu0 0
      %284 = vmatprep.subr.bf16.mxu0 0
      %285 = vmatpush1.bf16.msra.mxu0 0
      %286 = vmatprep.subr.bf16.mxu0 0
      %287 = vmatpush1.bf16.msra.mxu0 %v270
      %288 = vmatprep.subr.bf16.mxu0 0
      %289 = vmatpush2.bf16.msra.mxu0 0
      %290 = vmatprep.subr.bf16.mxu0 0
      %291 = vmatpush2.bf16.msra.mxu0 0
      %292 = vmatprep.subr.bf16.mxu0 0
      %293 = vmatpush2.bf16.msra.mxu0 0
      %294 = vmatprep.subr.bf16.mxu0 0
      %295 = vmatpush2.bf16.msra.mxu0 0
      %296 = vmatprep.subr.bf16.mxu0 0
      %297 = vmatpush2.bf16.msra.mxu0 0
      %298 = vmatprep.subr.bf16.mxu0 0
      %299 = vmatpush2.bf16.msra.mxu0 0
      %300 = vmatprep.subr.bf16.mxu0 0
      %301 = vmatpush2.bf16.msra.mxu0 0
      %302 = vmatprep.subr.bf16.mxu0 0
      %303 = vmatpush2.bf16.msra.mxu0 0
      %304 = vmatprep.mubr.bf16.mxu0 0
      %305 = vmatmul.mubr.bf16.gmra.mxu0 %v266
      %v306 = vpop.f32.mrf.mxu0
      %v307 = vadd.f32 0.0, %v306
      %v308 = vpop.f32.mrf.mxu0
      %v309 = vpop.f32.mrf.mxu0
      %v310 = vpop.f32.mrf.mxu0
      %311 = vdwg.mxu0
      %v312 = vpack.c.bf16 %v307, %v307
      %vm313 = vcmask 60416
      %314 = vst.msk [vmem:[%s185] sm:$0xf] %vm313, %v312
      %v315 = vld [vmem:[%s176] sm:$0xf]
      %v316 = vunpack.c.l.bf16 %v315
      %v317 = vld [vmem:[%s2 + $0x1] sm:$0x1]
      %v318 = vlaneseq
      %v319 = vshrl.u32 %v318, 7
      %v320 = vsub.s32 0, %v319
      %v321 = vrot.slane %v317, %v320
      %323 = vrot.lane.b32.xlu0 %v321, 8
      %v324 = vpop.permute.xlu0 %323
      %v326 = vadd.f32 %v316, %v324
      %v327 = vpack.c.bf16 %v326, %v326
      %s328 = scalar_lea.vmem %s181, 4
      %v329 = vld [vmem:[%s328] sm:$0xf]
      %v330 = vunpack.c.l.bf16 %v329
      %332 = vrot.lane.b32.xlu0 %v327, 120
      %v333 = vpop.permute.xlu0 %332
      %v335 = vunpack.c.l.b16 %v315
      %v336 = vpack.c.b16 %v335, %v335
      %337 = vrot.lane.b32.xlu0 %v336, 88
      %v338 = vpop.permute.xlu0 %337
      %v340 = vsel %vm203, %v333, 0
      %v343 = vsel %vm203, %v338, 0
      %345 = vmatprep.subr.bf16.mxu0 0
      %346 = vmatpush1.bf16.xpose.msra.mxu0 0
      %347 = vmatprep.subr.bf16.mxu0 0
      %348 = vmatpush1.bf16.xpose.msra.mxu0 0
      %349 = vmatprep.subr.bf16.mxu0 0
      %350 = vmatpush1.bf16.xpose.msra.mxu0 0
      %351 = vmatprep.subr.bf16.mxu0 0
      %352 = vmatpush1.bf16.xpose.msra.mxu0 0
      %353 = vmatprep.subr.bf16.mxu0 0
      %354 = vmatpush1.bf16.xpose.msra.mxu0 0
      %355 = vmatprep.subr.bf16.mxu0 0
      %356 = vmatpush1.bf16.xpose.msra.mxu0 0
      %357 = vmatprep.subr.bf16.mxu0 0
      %358 = vmatpush1.bf16.xpose.msra.mxu0 0
      %359 = vmatprep.subr.bf16.mxu0 0
      %360 = vmatpush1.bf16.xpose.msra.mxu0 %v343
      %361 = vmatprep.subr.bf16.mxu0 0
      %362 = vmatpush2.bf16.xpose.msra.mxu0 0
      %363 = vmatprep.subr.bf16.mxu0 0
      %364 = vmatpush2.bf16.xpose.msra.mxu0 0
      %365 = vmatprep.subr.bf16.mxu0 0
      %366 = vmatpush2.bf16.xpose.msra.mxu0 0
      %367 = vmatprep.subr.bf16.mxu0 0
      %368 = vmatpush2.bf16.xpose.msra.mxu0 0
      %369 = vmatprep.subr.bf16.mxu0 0
      %370 = vmatpush2.bf16.xpose.msra.mxu0 0
      %371 = vmatprep.subr.bf16.mxu0 0
      %372 = vmatpush2.bf16.xpose.msra.mxu0 0
      %373 = vmatprep.subr.bf16.mxu0 0
      %374 = vmatpush2.bf16.xpose.msra.mxu0 0
      %375 = vmatprep.subr.bf16.mxu0 0
      %376 = vmatpush2.bf16.xpose.msra.mxu0 0
      %377 = vmatprep.mubr.bf16.mxu0 0
      %378 = vmatmul.mubr.bf16.gmra.mxu0 %v340
      %v379 = vpop.f32.mrf.mxu0
      %v380 = vadd.f32 %v330, %v379
      %v381 = vpop.f32.mrf.mxu0
      %v382 = vpop.f32.mrf.mxu0
      %v383 = vpop.f32.mrf.mxu0
      %384 = vdwg.mxu0
      %v385 = vmul.f32 %v380, 0.17677669
      %v386 = vsel %vm203, %v385, -inf
      %387 = vmax.xlane.f32.xlu0 %v386
      %v388 = vpop.xlane.xlu0 %387
      %v389 = vsub.f32 %v385, %v388
      %v390 = vmul.f32 %v389, 1.442695
      %v391 = vpow.pop %v390
      %v392 = vsel %vm203, %v391, 0.0
      %393 = vadd.xlane.f32.xlu0 %v392
      %v394 = vpop.xlane.xlu0 %393
      %v395 = vrcp.pop %v394
      %v396 = vmul.f32 %v391, %v395
      %v397 = vpack.c.bf16 %v396, %v396
      %398 = vrot.lane.b32.xlu0 %v336, 56
      %v399 = vpop.permute.xlu0 %398
      %v401 = vsel %vm203, %v397, 0
      %v404 = vsel %vm268, %v399, 0
      %406 = vmatprep.subr.bf16.mxu0 0
      %407 = vmatpush1.bf16.msra.mxu0 0
      %408 = vmatprep.subr.bf16.mxu0 0
      %409 = vmatpush1.bf16.msra.mxu0 0
      %410 = vmatprep.subr.bf16.mxu0 0
      %411 = vmatpush1.bf16.msra.mxu0 0
      %412 = vmatprep.subr.bf16.mxu0 0
      %413 = vmatpush1.bf16.msra.mxu0 0
      %414 = vmatprep.subr.bf16.mxu0 0
      %415 = vmatpush1.bf16.msra.mxu0 0
      %416 = vmatprep.subr.bf16.mxu0 0
      %417 = vmatpush1.bf16.msra.mxu0 0
      %418 = vmatprep.subr.bf16.mxu0 0
      %419 = vmatpush1.bf16.msra.mxu0 0
      %420 = vmatprep.subr.bf16.mxu0 0
      %421 = vmatpush1.bf16.msra.mxu0 %v404
      %422 = vmatprep.subr.bf16.mxu0 0
      %423 = vmatpush2.bf16.msra.mxu0 0
      %424 = vmatprep.subr.bf16.mxu0 0
      %425 = vmatpush2.bf16.msra.mxu0 0
      %426 = vmatprep.subr.bf16.mxu0 0
      %427 = vmatpush2.bf16.msra.mxu0 0
      %428 = vmatprep.subr.bf16.mxu0 0
      %429 = vmatpush2.bf16.msra.mxu0 0
      %430 = vmatprep.subr.bf16.mxu0 0
      %431 = vmatpush2.bf16.msra.mxu0 0
      %432 = vmatprep.subr.bf16.mxu0 0
      %433 = vmatpush2.bf16.msra.mxu0 0
      %434 = vmatprep.subr.bf16.mxu0 0
      %435 = vmatpush2.bf16.msra.mxu0 0
      %436 = vmatprep.subr.bf16.mxu0 0
      %437 = vmatpush2.bf16.msra.mxu0 0
      %438 = vmatprep.mubr.bf16.mxu0 0
      %439 = vmatmul.mubr.bf16.gmra.mxu0 %v401
      %v440 = vpop.f32.mrf.mxu0
      %v441 = vadd.f32 0.0, %v440
      %v442 = vpop.f32.mrf.mxu0
      %v443 = vpop.f32.mrf.mxu0
      %v444 = vpop.f32.mrf.mxu0
      %445 = vdwg.mxu0
      %v446 = vpack.c.bf16 %v441, %v441
      %v448 = vunpack.c.l.b16 %v446
      %v449 = vpack.c.b16 %v448, %v448
      %450 = vrot.lane.b32.xlu0 %v449, 8
      %v451 = vpop.permute.xlu0 %450
      %vm453 = vcmask 126016
      %454 = vst.msk [vmem:[%s185] sm:$0xf] %vm453, %v451
      %v455 = vld [vmem:[%s176] sm:$0xf]
      %v456 = vunpack.c.l.bf16 %v455
      %v457 = vld [vmem:[%s2 + $0x2] sm:$0x1]
      %v458 = vlaneseq
      %v459 = vshrl.u32 %v458, 7
      %v460 = vsub.s32 0, %v459
      %v461 = vrot.slane %v457, %v460
      %463 = vrot.lane.b32.xlu0 %v461, 16
      %v464 = vpop.permute.xlu0 %463
      %v466 = vadd.f32 %v456, %v464
      %v467 = vpack.c.bf16 %v466, %v466
      %s468 = scalar_lea.vmem %s181, 8
      %v469 = vld [vmem:[%s468] sm:$0xf]
      %v470 = vunpack.c.l.bf16 %v469
      %472 = vrot.lane.b32.xlu0 %v467, 112
      %v473 = vpop.permute.xlu0 %472
      %v475 = vunpack.c.l.b16 %v455
      %v476 = vpack.c.b16 %v475, %v475
      %477 = vrot.lane.b32.xlu0 %v476, 80
      %v478 = vpop.permute.xlu0 %477
      %v480 = vsel %vm203, %v473, 0
      %v483 = vsel %vm203, %v478, 0
      %485 = vmatprep.subr.bf16.mxu0 0
      %486 = vmatpush1.bf16.xpose.msra.mxu0 0
      %487 = vmatprep.subr.bf16.mxu0 0
      %488 = vmatpush1.bf16.xpose.msra.mxu0 0
      %489 = vmatprep.subr.bf16.mxu0 0
      %490 = vmatpush1.bf16.xpose.msra.mxu0 0
      %491 = vmatprep.subr.bf16.mxu0 0
      %492 = vmatpush1.bf16.xpose.msra.mxu0 0
      %493 = vmatprep.subr.bf16.mxu0 0
      %494 = vmatpush1.bf16.xpose.msra.mxu0 0
      %495 = vmatprep.subr.bf16.mxu0 0
      %496 = vmatpush1.bf16.xpose.msra.mxu0 0
      %497 = vmatprep.subr.bf16.mxu0 0
      %498 = vmatpush1.bf16.xpose.msra.mxu0 0
      %499 = vmatprep.subr.bf16.mxu0 0
      %500 = vmatpush1.bf16.xpose.msra.mxu0 %v483
      %501 = vmatprep.subr.bf16.mxu0 0
      %502 = vmatpush2.bf16.xpose.msra.mxu0 0
      %503 = vmatprep.subr.bf16.mxu0 0
      %504 = vmatpush2.bf16.xpose.msra.mxu0 0
      %505 = vmatprep.subr.bf16.mxu0 0
      %506 = vmatpush2.bf16.xpose.msra.mxu0 0
      %507 = vmatprep.subr.bf16.mxu0 0
      %508 = vmatpush2.bf16.xpose.msra.mxu0 0
      %509 = vmatprep.subr.bf16.mxu0 0
      %510 = vmatpush2.bf16.xpose.msra.mxu0 0
      %511 = vmatprep.subr.bf16.mxu0 0
      %512 = vmatpush2.bf16.xpose.msra.mxu0 0
      %513 = vmatprep.subr.bf16.mxu0 0
      %514 = vmatpush2.bf16.xpose.msra.mxu0 0
      %515 = vmatprep.subr.bf16.mxu0 0
      %516 = vmatpush2.bf16.xpose.msra.mxu0 0
      %517 = vmatprep.mubr.bf16.mxu0 0
      %518 = vmatmul.mubr.bf16.gmra.mxu0 %v480
      %v519 = vpop.f32.mrf.mxu0
      %v520 = vadd.f32 %v470, %v519
      %v521 = vpop.f32.mrf.mxu0
      %v522 = vpop.f32.mrf.mxu0
      %v523 = vpop.f32.mrf.mxu0
      %524 = vdwg.mxu0
      %v525 = vmul.f32 %v520, 0.17677669
      %v526 = vsel %vm203, %v525, -inf
      %527 = vmax.xlane.f32.xlu0 %v526
      %v528 = vpop.xlane.xlu0 %527
      %v529 = vsub.f32 %v525, %v528
      %v530 = vmul.f32 %v529, 1.442695
      %v531 = vpow.pop %v530
      %v532 = vsel %vm203, %v531, 0.0
      %533 = vadd.xlane.f32.xlu0 %v532
      %v534 = vpop.xlane.xlu0 %533
      %v535 = vrcp.pop %v534
      %v536 = vmul.f32 %v531, %v535
      %v537 = vpack.c.bf16 %v536, %v536
      %538 = vrot.lane.b32.xlu0 %v476, 48
      %v539 = vpop.permute.xlu0 %538
      %v541 = vsel %vm203, %v537, 0
      %v544 = vsel %vm268, %v539, 0
      %546 = vmatprep.subr.bf16.mxu0 0
      %547 = vmatpush1.bf16.msra.mxu0 0
      %548 = vmatprep.subr.bf16.mxu0 0
      %549 = vmatpush1.bf16.msra.mxu0 0
      %550 = vmatprep.subr.bf16.mxu0 0
      %551 = vmatpush1.bf16.msra.mxu0 0
      %552 = vmatprep.subr.bf16.mxu0 0
      %553 = vmatpush1.bf16.msra.mxu0 0
      %554 = vmatprep.subr.bf16.mxu0 0
      %555 = vmatpush1.bf16.msra.mxu0 0
      %556 = vmatprep.subr.bf16.mxu0 0
      %557 = vmatpush1.bf16.msra.mxu0 0
      %558 = vmatprep.subr.bf16.mxu0 0
      %559 = vmatpush1.bf16.msra.mxu0 0
      %560 = vmatprep.subr.bf16.mxu0 0
      %561 = vmatpush1.bf16.msra.mxu0 %v544
      %562 = vmatprep.subr.bf16.mxu0 0
      %563 = vmatpush2.bf16.msra.mxu0 0
      %564 = vmatprep.subr.bf16.mxu0 0
      %565 = vmatpush2.bf16.msra.mxu0 0
      %566 = vmatprep.subr.bf16.mxu0 0
      %567 = vmatpush2.bf16.msra.mxu0 0
      %568 = vmatprep.subr.bf16.mxu0 0
      %569 = vmatpush2.bf16.msra.mxu0 0
      %570 = vmatprep.subr.bf16.mxu0 0
      %571 = vmatpush2.bf16.msra.mxu0 0
      %572 = vmatprep.subr.bf16.mxu0 0
      %573 = vmatpush2.bf16.msra.mxu0 0
      %574 = vmatprep.subr.bf16.mxu0 0
      %575 = vmatpush2.bf16.msra.mxu0 0
      %576 = vmatprep.subr.bf16.mxu0 0
      %577 = vmatpush2.bf16.msra.mxu0 0
      %578 = vmatprep.mubr.bf16.mxu0 0
      %579 = vmatmul.mubr.bf16.gmra.mxu0 %v541
      %v580 = vpop.f32.mrf.mxu0
      %v581 = vadd.f32 0.0, %v580
      %v582 = vpop.f32.mrf.mxu0
      %v583 = vpop.f32.mrf.mxu0
      %v584 = vpop.f32.mrf.mxu0
      %585 = vdwg.mxu0
      %v586 = vpack.c.bf16 %v581, %v581
      %v588 = vunpack.c.l.b16 %v586
      %v589 = vpack.c.b16 %v588, %v588
      %590 = vrot.lane.b32.xlu0 %v589, 16
      %v591 = vpop.permute.xlu0 %590
      %vm593 = vcmask 191616
      %594 = vst.msk [vmem:[%s185] sm:$0xf] %vm593, %v591
      %v595 = vld [vmem:[%s176] sm:$0xf]
      %v596 = vunpack.c.l.bf16 %v595
      %v597 = vld [vmem:[%s2 + $0x3] sm:$0x1]
      %v598 = vlaneseq
      %v599 = vshrl.u32 %v598, 7
      %v600 = vsub.s32 0, %v599
      %v601 = vrot.slane %v597, %v600
      %603 = vrot.lane.b32.xlu0 %v601, 24
      %v604 = vpop.permute.xlu0 %603
      %v606 = vadd.f32 %v596, %v604
      %v607 = vpack.c.bf16 %v606, %v606
      %s608 = scalar_lea.vmem %s181, 12
      %v609 = vld [vmem:[%s608] sm:$0xf]
      %v610 = vunpack.c.l.bf16 %v609
      %612 = vrot.lane.b32.xlu0 %v607, 104
      %v613 = vpop.permute.xlu0 %612
      %v615 = vunpack.c.l.b16 %v595
      %v616 = vpack.c.b16 %v615, %v615
      %617 = vrot.lane.b32.xlu0 %v616, 72
      %v618 = vpop.permute.xlu0 %617
      %v620 = vsel %vm203, %v613, 0
      %v623 = vsel %vm203, %v618, 0
      %625 = vmatprep.subr.bf16.mxu0 0
      %626 = vmatpush1.bf16.xpose.msra.mxu0 0
      %627 = vmatprep.subr.bf16.mxu0 0
      %628 = vmatpush1.bf16.xpose.msra.mxu0 0
      %629 = vmatprep.subr.bf16.mxu0 0
      %630 = vmatpush1.bf16.xpose.msra.mxu0 0
      %631 = vmatprep.subr.bf16.mxu0 0
      %632 = vmatpush1.bf16.xpose.msra.mxu0 0
      %633 = vmatprep.subr.bf16.mxu0 0
      %634 = vmatpush1.bf16.xpose.msra.mxu0 0
      %635 = vmatprep.subr.bf16.mxu0 0
      %636 = vmatpush1.bf16.xpose.msra.mxu0 0
      %637 = vmatprep.subr.bf16.mxu0 0
      %638 = vmatpush1.bf16.xpose.msra.mxu0 0
      %639 = vmatprep.subr.bf16.mxu0 0
      %640 = vmatpush1.bf16.xpose.msra.mxu0 %v623
      %641 = vmatprep.subr.bf16.mxu0 0
      %642 = vmatpush2.bf16.xpose.msra.mxu0 0
      %643 = vmatprep.subr.bf16.mxu0 0
      %644 = vmatpush2.bf16.xpose.msra.mxu0 0
      %645 = vmatprep.subr.bf16.mxu0 0
      %646 = vmatpush2.bf16.xpose.msra.mxu0 0
      %647 = vmatprep.subr.bf16.mxu0 0
      %648 = vmatpush2.bf16.xpose.msra.mxu0 0
      %649 = vmatprep.subr.bf16.mxu0 0
      %650 = vmatpush2.bf16.xpose.msra.mxu0 0
      %651 = vmatprep.subr.bf16.mxu0 0
      %652 = vmatpush2.bf16.xpose.msra.mxu0 0
      %653 = vmatprep.subr.bf16.mxu0 0
      %654 = vmatpush2.bf16.xpose.msra.mxu0 0
      %655 = vmatprep.subr.bf16.mxu0 0
      %656 = vmatpush2.bf16.xpose.msra.mxu0 0
      %657 = vmatprep.mubr.bf16.mxu0 0
      %658 = vmatmul.mubr.bf16.gmra.mxu0 %v620
      %v659 = vpop.f32.mrf.mxu0
      %v660 = vadd.f32 %v610, %v659
      %v661 = vpop.f32.mrf.mxu0
      %v662 = vpop.f32.mrf.mxu0
      %v663 = vpop.f32.mrf.mxu0
      %664 = vdwg.mxu0
      %v665 = vmul.f32 %v660, 0.17677669
      %v666 = vsel %vm203, %v665, -inf
      %667 = vmax.xlane.f32.xlu0 %v666
      %v668 = vpop.xlane.xlu0 %667
      %v669 = vsub.f32 %v665, %v668
      %v670 = vmul.f32 %v669, 1.442695
      %v671 = vpow.pop %v670
      %v672 = vsel %vm203, %v671, 0.0
      %673 = vadd.xlane.f32.xlu0 %v672
      %v674 = vpop.xlane.xlu0 %673
      %v675 = vrcp.pop %v674
      %v676 = vmul.f32 %v671, %v675
      %v677 = vpack.c.bf16 %v676, %v676
      %678 = vrot.lane.b32.xlu0 %v616, 40
      %v679 = vpop.permute.xlu0 %678
      %v681 = vsel %vm203, %v677, 0
      %v684 = vsel %vm268, %v679, 0
      %686 = vmatprep.subr.bf16.mxu0 0
      %687 = vmatpush1.bf16.msra.mxu0 0
      %688 = vmatprep.subr.bf16.mxu0 0
      %689 = vmatpush1.bf16.msra.mxu0 0
      %690 = vmatprep.subr.bf16.mxu0 0
      %691 = vmatpush1.bf16.msra.mxu0 0
      %692 = vmatprep.subr.bf16.mxu0 0
      %693 = vmatpush1.bf16.msra.mxu0 0
      %694 = vmatprep.subr.bf16.mxu0 0
      %695 = vmatpush1.bf16.msra.mxu0 0
      %696 = vmatprep.subr.bf16.mxu0 0
      %697 = vmatpush1.bf16.msra.mxu0 0
      %698 = vmatprep.subr.bf16.mxu0 0
      %699 = vmatpush1.bf16.msra.mxu0 0
      %700 = vmatprep.subr.bf16.mxu0 0
      %701 = vmatpush1.bf16.msra.mxu0 %v684
      %702 = vmatprep.subr.bf16.mxu0 0
      %703 = vmatpush2.bf16.msra.mxu0 0
      %704 = vmatprep.subr.bf16.mxu0 0
      %705 = vmatpush2.bf16.msra.mxu0 0
      %706 = vmatprep.subr.bf16.mxu0 0
      %707 = vmatpush2.bf16.msra.mxu0 0
      %708 = vmatprep.subr.bf16.mxu0 0
      %709 = vmatpush2.bf16.msra.mxu0 0
      %710 = vmatprep.subr.bf16.mxu0 0
      %711 = vmatpush2.bf16.msra.mxu0 0
      %712 = vmatprep.subr.bf16.mxu0 0
      %713 = vmatpush2.bf16.msra.mxu0 0
      %714 = vmatprep.subr.bf16.mxu0 0
      %715 = vmatpush2.bf16.msra.mxu0 0
      %716 = vmatprep.subr.bf16.mxu0 0
      %717 = vmatpush2.bf16.msra.mxu0 0
      %718 = vmatprep.mubr.bf16.mxu0 0
      %719 = vmatmul.mubr.bf16.gmra.mxu0 %v681
      %v720 = vpop.f32.mrf.mxu0
      %v721 = vadd.f32 0.0, %v720
      %v722 = vpop.f32.mrf.mxu0
      %v723 = vpop.f32.mrf.mxu0
      %v724 = vpop.f32.mrf.mxu0
      %725 = vdwg.mxu0
      %v726 = vpack.c.bf16 %v721, %v721
      %v728 = vunpack.c.l.b16 %v726
      %v729 = vpack.c.b16 %v728, %v728
      %730 = vrot.lane.b32.xlu0 %v729, 24
      %v731 = vpop.permute.xlu0 %730
      %vm733 = vcmask 257216
      %734 = vst.msk [vmem:[%s185] sm:$0xf] %vm733, %v731
      %p735 = scmp.lt.s32.totalorder %s14, 1
      %s736 = scalar_select %p735, %s14, 1
      %s737 = smul.addr %s736, 4
      %s738 = scalar_lea.vmem %s3, %s737
      // Predicated region
      $region33: #{conformer_forward.37} parent=31 // pred_check
        %p739 = pneg %p105
      $region34: #{conformer_forward.37} parent=31 // pred_check_branch
        %741 = sbr.rel (%p739) target = $region36
      $region35: #{conformer_forward.37} parent=31 // pred_region
        _
      $region36: #{conformer_forward.37} parent=31 // pred_fallthru
        _
    $region32: #{conformer_forward.37} parent=5 // pred_fallthru
      _
    %p742 = scmp.le.s32.totalorder 2, %s9
    // Predicated region
    $region37: #{conformer_forward.37} parent=5 // pred_check
      %p743 = pneg %p742
    $region38: #{conformer_forward.37} parent=5 // pred_check_branch
      %745 = sbr.rel (%p743) target = $region40
    $region39: #{conformer_forward.37} parent=5 // pred_region
      %s746 = ssub.s32 %s9, 2
      // Predicated region
      $region41: #{conformer_forward.37} parent=39 // pred_check
        %p747 = pneg %p111
      $region42: #{conformer_forward.37} parent=39 // pred_check_branch
        %749 = sbr.rel (%p747) target = $region44
      $region43: #{conformer_forward.37} parent=39 // pred_region
        %p750 = scmp.lt.s32.totalorder %s15, 1
        %s751 = scalar_select %p750, %s15, 1
        %s752 = smul.addr %s751, 4
        %s753 = scalar_lea.vmem %s3, %s752
      $region44: #{conformer_forward.37} parent=39 // pred_fallthru
        _
    $region40: #{conformer_forward.37} parent=5 // pred_fallthru
      _
  $region6: #{conformer_forward.37} parent=0 // loop_footer
    %s13 = sadd.s32 1, %s9
  $region7: #{conformer_forward.37} parent=0 // loop_footer_branch
    %8 = sbr.rel target = $region3
  $region8: #{conformer_forward.37} parent=0 // loop_exit
    _

// kernel: conformer_forward.40
$region0: #{conformer_forward.40}
  #allocation0 [shape = 'u32[]', space=smem, size = 0x4, offset = 0x4, fixed_abs, tag = 'smem constant byte address 0x4 - core index']
  #allocation1 [shape = 'u32[144,128]{1,0:T(1,128)}', space=vmem, size = 0x12000, scoped, tag = 'internal scratch']
  %s0 = inlined_call_operand.vmem [shape: bf16[2,14,32], index: 0, kind: input, shape index: {}]
  %s1 = inlined_call_operand.vmem [shape: f32[7,32], index: 1, kind: input, shape index: {}]
  %s2 = inlined_call_operand.vmem [shape: f32[1,32], index: 2, kind: input, shape index: {}]
  %s3 = inlined_call_operand.vmem [shape: f32[1,32], index: 3, kind: input, shape index: {}]
  %s4 = inlined_call_operand.vmem [shape: f32[1,32], index: 4, kind: input, shape index: {}]
  %s5 = inlined_call_operand.vmem [shape: bf16[2,8,32], index: 5, kind: output, shape index: {}]
  %s6 = sld [smem:[#allocation0]]
  $region53: #{conformer_forward.40} parent=0
    _
  %s8 = ssub.s32 1, %s6
  %s9 = scalar_select 0, %s8, %s6
  loop: start=0, step=1, limit=4
  $region2: #{conformer_forward.40} parent=0 // loop_pre_header
    _
  $region3: #{conformer_forward.40} parent=0 // loop_header
    %s11 = sphi 0, %s15
    %p12 = scmp.ge.s32.totalorder %s11, 4
    %s21 = sphi 0, %s23
    %s24 = sphi 0, %s21
    %s25 = sphi 0, %s24
    %s41 = sphi 0, %s25
    %s45 = sphi 0, %s45
    %s47 = sphi 0, %s45
    %s48 = sphi 0, %s47
    %s62 = sphi 0, %s48
    %s66 = sphi 0, %s66
    %s68 = sphi 0, %s66
    %s69 = sphi 0, %s68
    %s83 = sphi 0, %s69
    %s87 = sphi 0, %s87
    %s89 = sphi 0, %s87
    %s90 = sphi 0, %s89
    %s104 = sphi 0, %s90
    %s108 = sphi 0, %s108
    %s110 = sphi 0, %s108
    %s111 = sphi 0, %s110
    %s125 = sphi 0, %s111
    %s131 = sphi 0, %s133
    %s134 = sphi 0, %s131
    %s135 = sphi 0, %s134
    %s151 = sphi 0, %s135
  $region4: #{conformer_forward.40} parent=0 // loop_header_branch
    %14 = sbr.rel (%p12) target = $region8
  $region5: #{conformer_forward.40} parent=0 // loop_body
    %s16 = ssub.s32 %s11, 1
    %s17 = ssub.s32 %s11, 2
    %s18 = sadd.s32 %s11, 1
    %s19 = ssub.s32 %s11, %s18
    %p20 = scmp.eq.s32.totalorder %s19, 0
    %s22 = sadd.s32 %s21, 1
    %s23 = scalar_select %p20, %s21, %s22
    %p26 = pneg %p20
    %p27 = scmp.eq.s32.totalorder %s11, 1
    %p28 = por %p26, %p27
    %p29 = scmp.ne.s32.totalorder %s21, %s24
    %p30 = scmp.eq.s32.totalorder %s11, 0
    %p31 = por %p29, %p30
    %p32 = scmp.ne.s32.totalorder %s21, %s24
    %p33 = scmp.eq.s32.totalorder %s16, 1
    %p34 = por %p32, %p33
    %p35 = scmp.ne.s32.totalorder %s24, %s25
    %p36 = scmp.eq.s32.totalorder %s16, 0
    %p37 = por %p35, %p36
    %p38 = scmp.ne.s32.totalorder %s24, %s25
    %p39 = scmp.eq.s32.totalorder %s17, 1
    %p40 = por %p38, %p39
    %p42 = scmp.ne.s32.totalorder %s25, %s41
    %p43 = scmp.eq.s32.totalorder %s17, 0
    %p44 = por %p42, %p43
    %s46 = sadd.s32 %s45, 1
    %p49 = scmp.eq.s32.totalorder %s11, 1
    %p50 = scmp.ne.s32.totalorder %s45, %s47
    %p51 = scmp.eq.s32.totalorder %s11, 0
    %p52 = por %p50, %p51
    %p53 = scmp.ne.s32.totalorder %s45, %s47
    %p54 = scmp.eq.s32.totalorder %s16, 1
    %p55 = por %p53, %p54
    %p56 = scmp.ne.s32.totalorder %s47, %s48
    %p57 = scmp.eq.s32.totalorder %s16, 0
    %p58 = por %p56, %p57
    %p59 = scmp.ne.s32.totalorder %s47, %s48
    %p60 = scmp.eq.s32.totalorder %s17, 1
    %p61 = por %p59, %p60
    %p63 = scmp.ne.s32.totalorder %s48, %s62
    %p64 = scmp.eq.s32.totalorder %s17, 0
    %p65 = por %p63, %p64
    %s67 = sadd.s32 %s66, 1
    %p70 = scmp.eq.s32.totalorder %s11, 1
    %p71 = scmp.ne.s32.totalorder %s66, %s68
    %p72 = scmp.eq.s32.totalorder %s11, 0
    %p73 = por %p71, %p72
    %p74 = scmp.ne.s32.totalorder %s66, %s68
    %p75 = scmp.eq.s32.totalorder %s16, 1
    %p76 = por %p74, %p75
    %p77 = scmp.ne.s32.totalorder %s68, %s69
    %p78 = scmp.eq.s32.totalorder %s16, 0
    %p79 = por %p77, %p78
    %p80 = scmp.ne.s32.totalorder %s68, %s69
    %p81 = scmp.eq.s32.totalorder %s17, 1
    %p82 = por %p80, %p81
    %p84 = scmp.ne.s32.totalorder %s69, %s83
    %p85 = scmp.eq.s32.totalorder %s17, 0
    %p86 = por %p84, %p85
    %s88 = sadd.s32 %s87, 1
    %p91 = scmp.eq.s32.totalorder %s11, 1
    %p92 = scmp.ne.s32.totalorder %s87, %s89
    %p93 = scmp.eq.s32.totalorder %s11, 0
    %p94 = por %p92, %p93
    %p95 = scmp.ne.s32.totalorder %s87, %s89
    %p96 = scmp.eq.s32.totalorder %s16, 1
    %p97 = por %p95, %p96
    %p98 = scmp.ne.s32.totalorder %s89, %s90
    %p99 = scmp.eq.s32.totalorder %s16, 0
    %p100 = por %p98, %p99
    %p101 = scmp.ne.s32.totalorder %s89, %s90
    %p102 = scmp.eq.s32.totalorder %s17, 1
    %p103 = por %p101, %p102
    %p105 = scmp.ne.s32.totalorder %s90, %s104
    %p106 = scmp.eq.s32.totalorder %s17, 0
    %p107 = por %p105, %p106
    %s109 = sadd.s32 %s108, 1
    %p112 = scmp.eq.s32.totalorder %s11, 1
    %p113 = scmp.ne.s32.totalorder %s108, %s110
    %p114 = scmp.eq.s32.totalorder %s11, 0
    %p115 = por %p113, %p114
    %p116 = scmp.ne.s32.totalorder %s108, %s110
    %p117 = scmp.eq.s32.totalorder %s16, 1
    %p118 = por %p116, %p117
    %p119 = scmp.ne.s32.totalorder %s110, %s111
    %p120 = scmp.eq.s32.totalorder %s16, 0
    %p121 = por %p119, %p120
    %p122 = scmp.ne.s32.totalorder %s110, %s111
    %p123 = scmp.eq.s32.totalorder %s17, 1
    %p124 = por %p122, %p123
    %p126 = scmp.ne.s32.totalorder %s111, %s125
    %p127 = scmp.eq.s32.totalorder %s17, 0
    %p128 = por %p126, %p127
    %s129 = ssub.s32 %s11, %s18
    %p130 = scmp.eq.s32.totalorder %s129, 0
    %s132 = sadd.s32 %s131, 1
    %s133 = scalar_select %p130, %s131, %s132
    %p136 = pneg %p130
    %p137 = scmp.eq.s32.totalorder %s11, 1
    %p138 = por %p136, %p137
    %p139 = scmp.ne.s32.totalorder %s131, %s134
    %p140 = scmp.eq.s32.totalorder %s11, 0
    %p141 = por %p139, %p140
    %p142 = scmp.ne.s32.totalorder %s131, %s134
    %p143 = scmp.eq.s32.totalorder %s16, 1
    %p144 = por %p142, %p143
    %p145 = scmp.ne.s32.totalorder %s134, %s135
    %p146 = scmp.eq.s32.totalorder %s16, 0
    %p147 = por %p145, %p146
    %p148 = scmp.ne.s32.totalorder %s134, %s135
    %p149 = scmp.eq.s32.totalorder %s17, 1
    %p150 = por %p148, %p149
    %p152 = scmp.ne.s32.totalorder %s135, %s151
    %p153 = scmp.eq.s32.totalorder %s17, 0
    %p154 = por %p152, %p153
    %p155 = scmp.le.s32.totalorder 1, %s11
    %p156 = scmp.lt.s32.totalorder %s11, 3
    %p157 = pnand %p155, %p156
    %p158 = pneg %p157
    // Predicated region
    $region9: #{conformer_forward.40} parent=5 // pred_check
      _
    $region10: #{conformer_forward.40} parent=5 // pred_check_branch
      %160 = sbr.rel (%p157) target = $region12
    $region11: #{conformer_forward.40} parent=5 // pred_region
      %s161 = ssub.s32 %s11, 1
      // Predicated region
      $region13: #{conformer_forward.40} parent=11 // pred_check
        %p162 = pneg %p58
      $region14: #{conformer_forward.40} parent=11 // pred_check_branch
        %164 = sbr.rel (%p162) target = $region16
      $region15: #{conformer_forward.40} parent=11 // pred_region
        _
      $region16: #{conformer_forward.40} parent=11 // pred_fallthru
        _
      // Predicated region
      $region17: #{conformer_forward.40} parent=11 // pred_check
        %p165 = pneg %p79
      $region18: #{conformer_forward.40} parent=11 // pred_check_branch
        %167 = sbr.rel (%p165) target = $region20
      $region19: #{conformer_forward.40} parent=11 // pred_region
        _
      $region20: #{conformer_forward.40} parent=11 // pred_fallthru
        _
      // Predicated region
      $region21: #{conformer_forward.40} parent=11 // pred_check
        %p168 = pneg %p100
      $region22: #{conformer_forward.40} parent=11 // pred_check_branch
        %170 = sbr.rel (%p168) target = $region24
      $region23: #{conformer_forward.40} parent=11 // pred_region
        _
      $region24: #{conformer_forward.40} parent=11 // pred_fallthru
        _
      // Predicated region
      $region25: #{conformer_forward.40} parent=11 // pred_check
        %p171 = pneg %p121
      $region26: #{conformer_forward.40} parent=11 // pred_check_branch
        %173 = sbr.rel (%p171) target = $region28
      $region27: #{conformer_forward.40} parent=11 // pred_region
        _
      $region28: #{conformer_forward.40} parent=11 // pred_fallthru
        _
    $region12: #{conformer_forward.40} parent=5 // pred_fallthru
      _
    %p174 = scmp.lt.s32.totalorder %s11, 2
    // Predicated region
    $region29: #{conformer_forward.40} parent=5 // pred_check
      %p175 = pneg %p174
    $region30: #{conformer_forward.40} parent=5 // pred_check_branch
      %177 = sbr.rel (%p175) target = $region32
    $region31: #{conformer_forward.40} parent=5 // pred_region
      // Predicated region
      $region33: #{conformer_forward.40} parent=31 // pred_check
        %p178 = pneg %p31
      $region34: #{conformer_forward.40} parent=31 // pred_check_branch
        %180 = sbr.rel (%p178) target = $region36
      $region35: #{conformer_forward.40} parent=31 // pred_region
        %p181 = scmp.lt.s32.totalorder %s11, 1
        %s182 = scalar_select %p181, %s11, 1
        %s183 = smul.addr %s182, 2
        %s184 = smul.addr %s183, 4
        %s185 = scalar_lea.vmem %s0, %s184
      $region36: #{conformer_forward.40} parent=31 // pred_fallthru
        _
    $region32: #{conformer_forward.40} parent=5 // pred_fallthru
      _
    %p186 = scmp.le.s32.totalorder 1, %s11
    %p187 = scmp.lt.s32.totalorder %s11, 3
    %p188 = pnand %p186, %p187
    %p189 = pneg %p188
    // Predicated region
    $region37: #{conformer_forward.40} parent=5 // pred_check
      _
    $region38: #{conformer_forward.40} parent=5 // pred_check_branch
      %191 = sbr.rel (%p188) target = $region40
    $region39: #{conformer_forward.40} parent=5 // pred_region
      %s192 = ssub.s32 %s11, 1
      %p193 = scmp.lt.s32.totalorder %s16, 1
      %s194 = scalar_select %p193, %s16, 1
      %s195 = smul.addr %s194, 2
      %s196 = smul.addr %s195, 4
      %s197 = scalar_lea.vmem %s0, %s196
      %p198 = pneg %p37
      %p199 = pneg %p34
      %p200 = pneg %p58
      %p201 = pneg %p55
      %p202 = pneg %p79
      %p203 = pneg %p76
      %p204 = pneg %p100
      %p205 = pneg %p97
      %p206 = pneg %p121
      %p207 = pneg %p118
      %p208 = pneg %p147
      %p209 = pneg %p144
      %p210 = scmp.lt.s32.totalorder %s16, 1
      %s211 = scalar_select %p210, %s16, 1
      %s212 = smul.addr %s211, 4
      %s213 = scalar_lea.vmem %s5, %s212
      %p214 = scmp.lt.s32.totalorder %s16, 1
      %s215 = scalar_select %p214, %s16, 1
      %s216 = smul.addr %s215, 2
      %s217 = smul.addr %s216, 4
      %s218 = scalar_lea.vmem %s0, %s217
      %p219 = scmp.lt.s32.totalorder %s16, 1
      %s220 = scalar_select %p219, %s16, 1
      %s221 = smul.addr %s220, 4
      %s222 = scalar_lea.vmem %s5, %s221
      %v223 = vld [vmem:[%s218] sm:$0xf]
      %v224 = vld [vmem:[%s218 + $0x4] sm:$0x7]
      %v225 = vunpack.c.l.bf16 %v223
      %v226 = vunpack.c.l.bf16 %v224
      %v227 = vld [vmem:[%s1] sm:$0x1]
      %v228 = vlaneseq
      %v229 = vshrl.u32 %v228, 7
      %v230 = vsub.s32 0, %v229
      %v231 = vrot.slane %v227, %v230
      %v232 = vmul.f32 %v225, %v231
      %v233 = vld [vmem:[%s1 + $0x1] sm:$0x1]
      %v234 = vlaneseq
      %v235 = vshrl.u32 %v234, 7
      %v236 = vsub.s32 0, %v235
      %v237 = vrot.slane %v233, %v236
      %v238 = vmul.f32 %v225, %v237
      %v239 = vmul.f32 %v226, %v237
      %vm242 = vcmask 1046528
      %v243 = vrot.slane %v238, 1
      %v244 = vrot.slane %v239, 1
      %v245 = vsel %vm242, %v243, %v244
      %v247 = vadd.f32 %v232, %v245
      %v248 = vld [vmem:[%s1 + $0x2] sm:$0x1]
      %v249 = vlaneseq
      %v250 = vshrl.u32 %v249, 7
      %v251 = vsub.s32 0, %v250
      %v252 = vrot.slane %v248, %v251
      %v253 = vmul.f32 %v225, %v252
      %v254 = vmul.f32 %v226, %v252
      %vm257 = vcmask 1045504
      %v258 = vrot.slane %v253, 2
      %v259 = vrot.slane %v254, 2
      %v260 = vsel %vm257, %v258, %v259
      %v262 = vadd.f32 %v247, %v260
      %v263 = vld [vmem:[%s1 + $0x3] sm:$0x1]
      %v264 = vlaneseq
      %v265 = vshrl.u32 %v264, 7
      %v266 = vsub.s32 0, %v265
      %v267 = vrot.slane %v263, %v266
      %v268 = vmul.f32 %v225, %v267
      %v269 = vmul.f32 %v226, %v267
      %vm272 = vcmask 1044480
      %v273 = vrot.slane %v268, 3
      %v274 = vrot.slane %v269, 3
      %v275 = vsel %vm272, %v273, %v274
      %v277 = vadd.f32 %v262, %v275
      %v278 = vld [vmem:[%s1 + $0x4] sm:$0x1]
      %v279 = vlaneseq
      %v280 = vshrl.u32 %v279, 7
      %v281 = vsub.s32 0, %v280
      %v282 = vrot.slane %v278, %v281
      %v283 = vmul.f32 %v225, %v282
      %v284 = vmul.f32 %v226, %v282
      %vm287 = vcmask 1043456
      %v288 = vrot.slane %v283, 4
      %v289 = vrot.slane %v284, 4
      %v290 = vsel %vm287, %v288, %v289
      %v292 = vadd.f32 %v277, %v290
      %v293 = vld [vmem:[%s1 + $0x5] sm:$0x1]
      %v294 = vlaneseq
      %v295 = vshrl.u32 %v294, 7
      %v296 = vsub.s32 0, %v295
      %v297 = vrot.slane %v293, %v296
      %v298 = vmul.f32 %v225, %v297
      %v299 = vmul.f32 %v226, %v297
      %vm302 = vcmask 1042432
      %v303 = vrot.slane %v298, 5
      %v304 = vrot.slane %v299, 5
      %v305 = vsel %vm302, %v303, %v304
      %v307 = vadd.f32 %v292, %v305
      %v308 = vld [vmem:[%s1 + $0x6] sm:$0x1]
      %v309 = vlaneseq
      %v310 = vshrl.u32 %v309, 7
      %v311 = vsub.s32 0, %v310
      %v312 = vrot.slane %v308, %v311
      %v313 = vmul.f32 %v225, %v312
      %v314 = vmul.f32 %v226, %v312
      %vm317 = vcmask 1041408
      %v318 = vrot.slane %v313, 6
      %v319 = vrot.slane %v314, 6
      %v320 = vsel %vm317, %v318, %v319
      %v322 = vadd.f32 %v307, %v320
      %v323 = vld [vmem:[%s2] sm:$0x1]
      %v325 = vlaneseq
      %v326 = vshrl.u32 %v325, 7
      %v327 = vsub.s32 0, %v326
      %v328 = vrot.slane %v323, %v327
      %v330 = vadd.f32 %v322, %v328
      %v331 = vld [vmem:[%s3] sm:$0x1]
      %v333 = vlaneseq
      %v334 = vshrl.u32 %v333, 7
      %v335 = vsub.s32 0, %v334
      %v336 = vrot.slane %v331, %v335
      %v338 = vmul.f32 %v330, %v336
      %v339 = vld [vmem:[%s4] sm:$0x1]
      %v341 = vlaneseq
      %v342 = vshrl.u32 %v341, 7
      %v343 = vsub.s32 0, %v342
      %v344 = vrot.slane %v339, %v343
      %v346 = vadd.f32 %v338, %v344
      %v347 = vsub.f32 0.0, %v346
      %v348 = vmul.f32 %v347, 1.442695
      %v349 = vpow.pop %v348
      %v350 = vadd.f32 %v349, 1.0
      %v351 = vrcp.pop %v350
      %v352 = vmul.f32 1.0, %v351
      %v353 = vmul.f32 %v346, %v352
      %v354 = vpack.c.bf16 %v353, %v353
      %vm355 = vcmask 257024
      %356 = vst.msk [vmem:[%s222] sm:$0xf] %vm355, %v354
      %p357 = scmp.lt.s32.totalorder %s16, 1
      %s358 = scalar_select %p357, %s16, 1
      %s359 = smul.addr %s358, 4
      %s360 = scalar_lea.vmem %s5, %s359
      // Predicated region
      $region41: #{conformer_forward.40} parent=39 // pred_check
        %p361 = pneg %p144
      $region42: #{conformer_forward.40} parent=39 // pred_check_branch
        %363 = sbr.rel (%p361) target = $region44
      $region43: #{conformer_forward.40} parent=39 // pred_region
        _
      $region44: #{conformer_forward.40} parent=39 // pred_fallthru
        _
    $region40: #{conformer_forward.40} parent=5 // pred_fallthru
      _
    %p364 = scmp.le.s32.totalorder 2, %s11
    // Predicated region
    $region45: #{conformer_forward.40} parent=5 // pred_check
      %p365 = pneg %p364
    $region46: #{conformer_forward.40} parent=5 // pred_check_branch
      %367 = sbr.rel (%p365) target = $region48
    $region47: #{conformer_forward.40} parent=5 // pred_region
      %s368 = ssub.s32 %s11, 2
      // Predicated region
      $region49: #{conformer_forward.40} parent=47 // pred_check
        %p369 = pneg %p150
      $region50: #{conformer_forward.40} parent=47 // pred_check_branch
        %371 = sbr.rel (%p369) target = $region52
      $region51: #{conformer_forward.40} parent=47 // pred_region
        %p372 = scmp.lt.s32.totalorder %s17, 1
        %s373 = scalar_select %p372, %s17, 1
        %s374 = smul.addr %s373, 4
        %s375 = scalar_lea.vmem %s5, %s374
      $region52: #{conformer_forward.40} parent=47 // pred_fallthru
        _
    $region48: #{conformer_forward.40} parent=5 // pred_fallthru
      _
  $region6: #{conformer_forward.40} parent=0 // loop_footer
    %s15 = sadd.s32 1, %s11
  $region7: #{conformer_forward.40} parent=0 // loop_footer_branch
    %10 = sbr.rel target = $region3
  $region8: #{conformer_forward.40} parent=0 // loop_exit
    _

// kernel: conformer_forward.44
$region0: #{conformer_forward.44}
  #allocation0 [shape = 'u32[]', space=smem, size = 0x4, offset = 0x4, fixed_abs, tag = 'smem constant byte address 0x4 - core index']
  #allocation1 [shape = 'u32[144,128]{1,0:T(1,128)}', space=vmem, size = 0x12000, scoped, tag = 'internal scratch']
  %s0 = inlined_call_operand.vmem [shape: bf16[16,32], index: 0, kind: input, shape index: {}]
  %s1 = inlined_call_operand.vmem [shape: f32[1,32], index: 1, kind: input, shape index: {}]
  %s2 = inlined_call_operand.vmem [shape: f32[1,32], index: 2, kind: input, shape index: {}]
  %s3 = inlined_call_operand.vmem [shape: bf16[16,32], index: 3, kind: output, shape index: {}]
  %s4 = sld [smem:[#allocation0]]
  $region45: #{conformer_forward.44} parent=0
    _
  %s6 = ssub.s32 1, %s4
  %s7 = scalar_select 0, %s6, %s4
  loop: start=0, step=1, limit=4
  $region2: #{conformer_forward.44} parent=0 // loop_pre_header
    _
  $region3: #{conformer_forward.44} parent=0 // loop_header
    %s9 = sphi 0, %s13
    %p10 = scmp.ge.s32.totalorder %s9, 4
    %s19 = sphi 0, %s21
    %s22 = sphi 0, %s19
    %s23 = sphi 0, %s22
    %s39 = sphi 0, %s23
    %s43 = sphi 0, %s43
    %s45 = sphi 0, %s43
    %s46 = sphi 0, %s45
    %s60 = sphi 0, %s46
    %s64 = sphi 0, %s64
    %s66 = sphi 0, %s64
    %s67 = sphi 0, %s66
    %s81 = sphi 0, %s67
    %s87 = sphi 0, %s89
    %s90 = sphi 0, %s87
    %s91 = sphi 0, %s90
    %s107 = sphi 0, %s91
  $region4: #{conformer_forward.44} parent=0 // loop_header_branch
    %12 = sbr.rel (%p10) target = $region8
  $region5: #{conformer_forward.44} parent=0 // loop_body
    %s14 = ssub.s32 %s9, 1
    %s15 = ssub.s32 %s9, 2
    %s16 = sadd.s32 %s9, 1
    %s17 = ssub.s32 %s9, %s16
    %p18 = scmp.eq.s32.totalorder %s17, 0
    %s20 = sadd.s32 %s19, 1
    %s21 = scalar_select %p18, %s19, %s20
    %p24 = pneg %p18
    %p25 = scmp.eq.s32.totalorder %s9, 1
    %p26 = por %p24, %p25
    %p27 = scmp.ne.s32.totalorder %s19, %s22
    %p28 = scmp.eq.s32.totalorder %s9, 0
    %p29 = por %p27, %p28
    %p30 = scmp.ne.s32.totalorder %s19, %s22
    %p31 = scmp.eq.s32.totalorder %s14, 1
    %p32 = por %p30, %p31
    %p33 = scmp.ne.s32.totalorder %s22, %s23
    %p34 = scmp.eq.s32.totalorder %s14, 0
    %p35 = por %p33, %p34
    %p36 = scmp.ne.s32.totalorder %s22, %s23
    %p37 = scmp.eq.s32.totalorder %s15, 1
    %p38 = por %p36, %p37
    %p40 = scmp.ne.s32.totalorder %s23, %s39
    %p41 = scmp.eq.s32.totalorder %s15, 0
    %p42 = por %p40, %p41
    %s44 = sadd.s32 %s43, 1
    %p47 = scmp.eq.s32.totalorder %s9, 1
    %p48 = scmp.ne.s32.totalorder %s43, %s45
    %p49 = scmp.eq.s32.totalorder %s9, 0
    %p50 = por %p48, %p49
    %p51 = scmp.ne.s32.totalorder %s43, %s45
    %p52 = scmp.eq.s32.totalorder %s14, 1
    %p53 = por %p51, %p52
    %p54 = scmp.ne.s32.totalorder %s45, %s46
    %p55 = scmp.eq.s32.totalorder %s14, 0
    %p56 = por %p54, %p55
    %p57 = scmp.ne.s32.totalorder %s45, %s46
    %p58 = scmp.eq.s32.totalorder %s15, 1
    %p59 = por %p57, %p58
    %p61 = scmp.ne.s32.totalorder %s46, %s60
    %p62 = scmp.eq.s32.totalorder %s15, 0
    %p63 = por %p61, %p62
    %s65 = sadd.s32 %s64, 1
    %p68 = scmp.eq.s32.totalorder %s9, 1
    %p69 = scmp.ne.s32.totalorder %s64, %s66
    %p70 = scmp.eq.s32.totalorder %s9, 0
    %p71 = por %p69, %p70
    %p72 = scmp.ne.s32.totalorder %s64, %s66
    %p73 = scmp.eq.s32.totalorder %s14, 1
    %p74 = por %p72, %p73
    %p75 = scmp.ne.s32.totalorder %s66, %s67
    %p76 = scmp.eq.s32.totalorder %s14, 0
    %p77 = por %p75, %p76
    %p78 = scmp.ne.s32.totalorder %s66, %s67
    %p79 = scmp.eq.s32.totalorder %s15, 1
    %p80 = por %p78, %p79
    %p82 = scmp.ne.s32.totalorder %s67, %s81
    %p83 = scmp.eq.s32.totalorder %s15, 0
    %p84 = por %p82, %p83
    %s85 = ssub.s32 %s9, %s16
    %p86 = scmp.eq.s32.totalorder %s85, 0
    %s88 = sadd.s32 %s87, 1
    %s89 = scalar_select %p86, %s87, %s88
    %p92 = pneg %p86
    %p93 = scmp.eq.s32.totalorder %s9, 1
    %p94 = por %p92, %p93
    %p95 = scmp.ne.s32.totalorder %s87, %s90
    %p96 = scmp.eq.s32.totalorder %s9, 0
    %p97 = por %p95, %p96
    %p98 = scmp.ne.s32.totalorder %s87, %s90
    %p99 = scmp.eq.s32.totalorder %s14, 1
    %p100 = por %p98, %p99
    %p101 = scmp.ne.s32.totalorder %s90, %s91
    %p102 = scmp.eq.s32.totalorder %s14, 0
    %p103 = por %p101, %p102
    %p104 = scmp.ne.s32.totalorder %s90, %s91
    %p105 = scmp.eq.s32.totalorder %s15, 1
    %p106 = por %p104, %p105
    %p108 = scmp.ne.s32.totalorder %s91, %s107
    %p109 = scmp.eq.s32.totalorder %s15, 0
    %p110 = por %p108, %p109
    %p111 = scmp.le.s32.totalorder 1, %s9
    %p112 = scmp.lt.s32.totalorder %s9, 3
    %p113 = pnand %p111, %p112
    %p114 = pneg %p113
    // Predicated region
    $region9: #{conformer_forward.44} parent=5 // pred_check
      _
    $region10: #{conformer_forward.44} parent=5 // pred_check_branch
      %116 = sbr.rel (%p113) target = $region12
    $region11: #{conformer_forward.44} parent=5 // pred_region
      %s117 = ssub.s32 %s9, 1
      // Predicated region
      $region13: #{conformer_forward.44} parent=11 // pred_check
        %p118 = pneg %p56
      $region14: #{conformer_forward.44} parent=11 // pred_check_branch
        %120 = sbr.rel (%p118) target = $region16
      $region15: #{conformer_forward.44} parent=11 // pred_region
        _
      $region16: #{conformer_forward.44} parent=11 // pred_fallthru
        _
      // Predicated region
      $region17: #{conformer_forward.44} parent=11 // pred_check
        %p121 = pneg %p77
      $region18: #{conformer_forward.44} parent=11 // pred_check_branch
        %123 = sbr.rel (%p121) target = $region20
      $region19: #{conformer_forward.44} parent=11 // pred_region
        _
      $region20: #{conformer_forward.44} parent=11 // pred_fallthru
        _
    $region12: #{conformer_forward.44} parent=5 // pred_fallthru
      _
    %p124 = scmp.lt.s32.totalorder %s9, 2
    // Predicated region
    $region21: #{conformer_forward.44} parent=5 // pred_check
      %p125 = pneg %p124
    $region22: #{conformer_forward.44} parent=5 // pred_check_branch
      %127 = sbr.rel (%p125) target = $region24
    $region23: #{conformer_forward.44} parent=5 // pred_region
      // Predicated region
      $region25: #{conformer_forward.44} parent=23 // pred_check
        %p128 = pneg %p29
      $region26: #{conformer_forward.44} parent=23 // pred_check_branch
        %130 = sbr.rel (%p128) target = $region28
      $region27: #{conformer_forward.44} parent=23 // pred_region
        %p131 = scmp.lt.s32.totalorder %s9, 1
        %s132 = scalar_select %p131, %s9, 1
        %s133 = smul.addr %s132, 4
        %s134 = scalar_lea.vmem %s0, %s133
      $region28: #{conformer_forward.44} parent=23 // pred_fallthru
        _
    $region24: #{conformer_forward.44} parent=5 // pred_fallthru
      _
    %p135 = scmp.le.s32.totalorder 1, %s9
    %p136 = scmp.lt.s32.totalorder %s9, 3
    %p137 = pnand %p135, %p136
    %p138 = pneg %p137
    // Predicated region
    $region29: #{conformer_forward.44} parent=5 // pred_check
      _
    $region30: #{conformer_forward.44} parent=5 // pred_check_branch
      %140 = sbr.rel (%p137) target = $region32
    $region31: #{conformer_forward.44} parent=5 // pred_region
      %s141 = ssub.s32 %s9, 1
      %p142 = scmp.lt.s32.totalorder %s14, 1
      %s143 = scalar_select %p142, %s14, 1
      %s144 = smul.addr %s143, 4
      %s145 = scalar_lea.vmem %s0, %s144
      %p146 = pneg %p35
      %p147 = pneg %p32
      %p148 = pneg %p56
      %p149 = pneg %p53
      %p150 = pneg %p77
      %p151 = pneg %p74
      %p152 = pneg %p103
      %p153 = pneg %p100
      %p154 = scmp.lt.s32.totalorder %s14, 1
      %s155 = scalar_select %p154, %s14, 1
      %s156 = smul.addr %s155, 4
      %s157 = scalar_lea.vmem %s3, %s156
      %p158 = scmp.lt.s32.totalorder %s14, 1
      %s159 = scalar_select %p158, %s14, 1
      %s160 = smul.addr %s159, 4
      %s161 = scalar_lea.vmem %s0, %s160
      %p162 = scmp.lt.s32.totalorder %s14, 1
      %s163 = scalar_select %p162, %s14, 1
      %s164 = smul.addr %s163, 4
      %s165 = scalar_lea.vmem %s3, %s164
      %v166 = vld [vmem:[%s161] sm:$0xf]
      %v167 = vunpack.c.l.bf16 %v166
      %vm168 = vcmask 261120
      %v169 = vsel %vm168, %v167, 0.0
      %170 = vadd.xlane.f32.xlu0 %v169
      %v171 = vpop.xlane.xlu0 %170
      %v172 = vrcp.pop 32.0
      %v173 = vmul.f32 %v171, %v172
      %v174 = vsub.f32 %v167, %v173
      %v175 = vmul.f32 %v174, %v174
      %v176 = vsel %vm168, %v175, 0.0
      %177 = vadd.xlane.f32.xlu0 %v176
      %v178 = vpop.xlane.xlu0 %177
      %v179 = vmul.f32 %v178, %v172
      %v180 = vadd.f32 %v179, 1e-05
      %v181 = vrsqrt.pop %v180
      %v182 = vmul.f32 %v174, %v181
      %v183 = vld [vmem:[%s1] sm:$0x1]
      %v185 = vlaneseq
      %v186 = vshrl.u32 %v185, 7
      %v187 = vsub.s32 0, %v186
      %v188 = vrot.slane %v183, %v187
      %v190 = vmul.f32 %v182, %v188
      %v191 = vld [vmem:[%s2] sm:$0x1]
      %v193 = vlaneseq
      %v194 = vshrl.u32 %v193, 7
      %v195 = vsub.s32 0, %v194
      %v196 = vrot.slane %v191, %v195
      %v198 = vadd.f32 %v190, %v196
      %v199 = vpack.c.bf16 %v198, %v198
      %vm200 = vcmask 257024
      %201 = vst.msk [vmem:[%s165] sm:$0xf] %vm200, %v199
      %p202 = scmp.lt.s32.totalorder %s14, 1
      %s203 = scalar_select %p202, %s14, 1
      %s204 = smul.addr %s203, 4
      %s205 = scalar_lea.vmem %s3, %s204
      // Predicated region
      $region33: #{conformer_forward.44} parent=31 // pred_check
        %p206 = pneg %p100
      $region34: #{conformer_forward.44} parent=31 // pred_check_branch
        %208 = sbr.rel (%p206) target = $region36
      $region35: #{conformer_forward.44} parent=31 // pred_region
        _
      $region36: #{conformer_forward.44} parent=31 // pred_fallthru
        _
    $region32: #{conformer_forward.44} parent=5 // pred_fallthru
      _
    %p209 = scmp.le.s32.totalorder 2, %s9
    // Predicated region
    $region37: #{conformer_forward.44} parent=5 // pred_check
      %p210 = pneg %p209
    $region38: #{conformer_forward.44} parent=5 // pred_check_branch
      %212 = sbr.rel (%p210) target = $region40
    $region39: #{conformer_forward.44} parent=5 // pred_region
      %s213 = ssub.s32 %s9, 2
      // Predicated region
      $region41: #{conformer_forward.44} parent=39 // pred_check
        %p214 = pneg %p106
      $region42: #{conformer_forward.44} parent=39 // pred_check_branch
        %216 = sbr.rel (%p214) target = $region44
      $region43: #{conformer_forward.44} parent=39 // pred_region
        %p217 = scmp.lt.s32.totalorder %s15, 1
        %s218 = scalar_select %p217, %s15, 1
        %s219 = smul.addr %s218, 4
        %s220 = scalar_lea.vmem %s3, %s219
      $region44: #{conformer_forward.44} parent=39 // pred_fallthru
        _
    $region40: #{conformer_forward.44} parent=5 // pred_fallthru
      _
  $region6: #{conformer_forward.44} parent=0 // loop_footer
    %s13 = sadd.s32 1, %s9
  $region7: #{conformer_forward.44} parent=0 // loop_footer_branch
    %8 = sbr.rel target = $region3
  $region8: #{conformer_forward.44} parent=0 // loop_exit
    _

</llo_original>
